<compile_context>
chip_gen: v5e
topology: v5e:2x2
jax: 0.10.0
libtpu: 0.0.40
codegen_flags: <defaults>
</compile_context>

<pallas_src>
import functools

import numpy as np
import jax
import jax.numpy as jnp
from jax import lax
from jax.experimental import pallas as pl
from jax.experimental.pallas import tpu as pltpu

C_IN = 64
C_MID = 64
C_OUT = 32
GROUPS = 32
BN_EPS = 1e-5
DILATIONS = (2, 3, 4)


# ----------------------------- Pallas kernel --------------------------------
def _attention_kernel(
    x_ref,
    w1_ref, b1_ref, t1_ref, g1_ref, c1_ref, e1_ref,
    w2_ref, b2_ref, t2_ref, g2_ref, c2_ref, e2_ref,
    w3_ref, b3_ref, t3_ref, g3_ref, c3_ref, e3_ref,
    out_ref,
    scr_ref,
    *, height, width, pad,
):
    hw = height * width

    # input block is NCHW-flat (64, HW): one transpose into (HW, 64) compute layout.
    xt = jnp.transpose(x_ref[0]).astype(jnp.float32)

    # column-validity masks for the dilated taps (only 6 distinct dx values),
    # computed once per grid step and reused by every branch.
    wcoord = lax.broadcasted_iota(jnp.int32, (hw, 1), 0) % width
    col_mask = {}
    for d in DILATIONS:
        col_mask[(d, -1)] = (wcoord >= d).astype(jnp.float32)
        col_mask[(d, +1)] = (wcoord < width - d).astype(jnp.float32)

    # zero only the halo rows of the shift scratch; the middle HW rows are fully
    # overwritten by every branch, the pads supply the conv's zero padding in dy.
    # (re-zeroed every grid step: per-core scratch may be uninitialized when the
    #  batch axis is sharded across TensorCores.)
    zeros_pad = jnp.zeros((pad, 2 * C_MID), jnp.float32)
    scr_ref[pl.ds(0, pad), :] = zeros_pad
    scr_ref[pl.ds(pad + hw, pad), :] = zeros_pad

    def matmul(a, w_ref, b_ref):
        # 1x1 conv (+ folded BN): bf16 MXU operands, f32 accumulation / bias.
        return jnp.dot(a.astype(jnp.bfloat16), w_ref[...],
                       preferred_element_type=jnp.float32) + b_ref[...]

    def grouped_dilated(ya, taps_ref, bg_ref, dil):
        # ya: (HW, 128) = [h | h_pair_swapped].  Grouped (2 ch/group) dilated
        # 3x3 conv on the VPU: 9 static padded-scratch slices * (1,128) rows.
        # Accumulate per kernel column (kj) so the dx-wrap mask is applied once
        # per column instead of once per tap.
        scr_ref[pl.ds(pad, hw), :] = ya
        taps = taps_ref[...]                      # (9, 128) f32
        col_acc = []
        for kj in range(3):
            acc = None
            for ki in range(3):
                idx = ki * 3 + kj
                shift = dil * (ki - 1) * width + dil * (kj - 1)
                shifted = scr_ref[pl.ds(pad + shift, hw), :]
                contrib = shifted * taps[idx:idx + 1, :]
                acc = contrib if acc is None else acc + contrib
            col_acc.append(acc)
        total = (col_acc[0] * col_mask[(dil, -1)]
                 + col_acc[1]
                 + col_acc[2] * col_mask[(dil, +1)])
        # fold "same-channel" and "partner-channel" halves, add grouped BN shift.
        return total[:, :C_MID] + total[:, C_MID:] + bg_ref[...]

    def branch(inp, w_ref, b_ref, t_ref, g_ref, c_ref, e_ref, dil, n_extra):
        # augmented first 1x1 conv (+BN): columns [h | h_swapped (| down)].
        y = matmul(inp, w_ref, b_ref)
        ya = jax.nn.relu(y[:, :2 * C_MID])
        g = jax.nn.relu(grouped_dilated(ya, t_ref, g_ref, dil))
        out = matmul(g, c_ref, e_ref)             # closing 1x1 conv (+BN)
        extra = y[:, 2 * C_MID:2 * C_MID + n_extra] if n_extra else None
        return out, extra

    o1, _ = branch(xt, w1_ref, b1_ref, t1_ref, g1_ref, c1_ref, e1_ref, 2, 0)
    b1 = jax.nn.relu(o1 + xt)
    o2, _ = branch(b1, w2_ref, b2_ref, t2_ref, g2_ref, c2_ref, e2_ref, 3, 0)
    b2 = jax.nn.relu(o2 + b1)
    o3, dn = branch(b2, w3_ref, b3_ref, t3_ref, g3_ref, c3_ref, e3_ref, 4, C_OUT)
    y = jax.nn.sigmoid(o3 + dn)                   # (HW, 32)

    # lane-dense store: NCHW layout (32, HW), last dim HW >= 128.
    out_ref[0] = jnp.transpose(y).astype(out_ref.dtype)


# ----------------------------- wrapper ---------------------------------------
def attention_forward(x_nchw, kernel_args):
    n, c, h, w = x_nchw.shape
    assert c == C_IN
    hw = h * w
    x_flat = x_nchw.reshape(n, c, hw)             # NCHW-flat, no XLA transpose
    # halo (in flattened pixels) for the padded shift scratch, 8-row aligned
    pad = ((max(DILATIONS) * (w + 1) + 7) // 8) * 8

    in_specs = [pl.BlockSpec((1, c, hw), lambda i: (i, 0, 0))]
    for a in kernel_args:
        in_specs.append(pl.BlockSpec(a.shape, lambda i, _nd=a.ndim: (0,) * _nd))
    out_spec = pl.BlockSpec((1, C_OUT, hw), lambda i: (i, 0, 0))

    kernel = functools.partial(_attention_kernel, height=h, width=w, pad=pad)
    out = pl.pallas_call(
        kernel,
        out_shape=jax.ShapeDtypeStruct((n, C_OUT, hw), jnp.float32),
        grid_spec=pltpu.PrefetchScalarGridSpec(
            num_scalar_prefetch=0,
            grid=(n,),
            in_specs=in_specs,
            out_specs=out_spec,
            scratch_shapes=[pltpu.VMEM((hw + 2 * pad, 2 * C_MID), jnp.float32)],
        ),
        compiler_params=pltpu.CompilerParams(
            dimension_semantics=("parallel",),
            vmem_limit_bytes=32 * 1024 * 1024,
        ),
    )(x_flat, *kernel_args)
    return out.reshape(n, C_OUT, h, w)            # no transpose needed


# -------------------- parameter init (deterministic) -------------------------
def _bn_params(key, c):
    k1, k2, k3, k4 = jax.random.split(key, 4)
    gamma = jax.random.uniform(k1, (c,), jnp.float32, 0.9, 1.1)
    beta = 0.02 * jax.random.normal(k2, (c,), jnp.float32)
    mean = 0.02 * jax.random.normal(k3, (c,), jnp.float32)
    var = jax.random.uniform(k4, (c,), jnp.float32, 0.9, 1.1)
    return (gamma, beta, mean, var)


def init_raw_params(key):
    keys = iter(jax.random.split(key, 40))

    def conv_w(shape, scale=0.05):
        return scale * jax.random.normal(next(keys), shape, jnp.float32)

    def block(c_last):
        return dict(
            w_a=conv_w((C_MID, C_IN, 1, 1)), bn_a=_bn_params(next(keys), C_MID),
            w_g=conv_w((C_MID, C_MID // GROUPS, 3, 3)), bn_g=_bn_params(next(keys), C_MID),
            w_c=conv_w((c_last, C_MID, 1, 1)), bn_c=_bn_params(next(keys), c_last),
        )

    return dict(
        block1=block(64), block2=block(64), block3=block(32),
        down_w=conv_w((32, C_MID, 1, 1)), down_bn=_bn_params(next(keys), 32),
    )


# ----------------------- fold BN into conv weights ---------------------------
def _fold_bn(bn):
    gamma, beta, mean, var = bn
    scale = gamma / jnp.sqrt(var + BN_EPS)
    shift = beta - mean * scale
    return scale, shift


def _fold_1x1(w, bn):
    scale, shift = _fold_bn(bn)
    wm = np.asarray(w[:, :, 0, 0] * scale[:, None], np.float32).T   # (Cin, Cout)
    b = np.asarray(shift, np.float32).reshape(1, -1)
    return wm, b


def _fold_grouped_vpu(w, bn):
    # grouped conv (2 ch/group) as per-tap per-output-channel weight rows:
    # lanes [0:64) = same-channel weight, lanes [64:128) = partner-channel weight.
    scale, shift = _fold_bn(bn)
    w_np = np.asarray(w, np.float32)              # (64, 2, 3, 3)
    scale_np = np.asarray(scale, np.float32)
    c_out = w_np.shape[0]
    A = np.zeros((9, c_out), np.float32)
    B = np.zeros((9, c_out), np.float32)
    for co in range(c_out):
        lo = co % 2
        A[:, co] = w_np[co, lo].reshape(9) * scale_np[co]
        B[:, co] = w_np[co, 1 - lo].reshape(9) * scale_np[co]
    wtap = np.concatenate([A, B], axis=1)         # (9, 128)
    bg = np.asarray(shift, np.float32).reshape(1, c_out)
    return wtap, bg


_PAIR_PERM = np.arange(C_MID) ^ 1                 # channel pair-swap permutation


def build_kernel_args(raw):
    args = []
    for name, has_down in (("block1", False), ("block2", False), ("block3", True)):
        p = raw[name]
        wa, ba = _fold_1x1(p["w_a"], p["bn_a"])                 # (64,64), (1,64)
        w_aug = np.concatenate([wa, wa[:, _PAIR_PERM]], axis=1)  # [h | h_swapped]
        b_aug = np.concatenate([ba, ba[:, _PAIR_PERM]], axis=1)
        if has_down:                                            # fuse `down` into block3's first matmul
            wd, bd = _fold_1x1(raw["down_w"], raw["down_bn"])   # (64,32), (1,32)
            w_aug = np.concatenate([w_aug, wd], axis=1)         # (64,160)
            b_aug = np.concatenate([b_aug, bd], axis=1)         # (1,160)
        wt, bg = _fold_grouped_vpu(p["w_g"], p["bn_g"])         # (9,128), (1,64)
        wc, bc = _fold_1x1(p["w_c"], p["bn_c"])
        args += [
            jnp.asarray(w_aug, jnp.bfloat16), jnp.asarray(b_aug, jnp.float32),
            jnp.asarray(wt, jnp.float32), jnp.asarray(bg, jnp.float32),
            jnp.asarray(wc, jnp.bfloat16), jnp.asarray(bc, jnp.float32),
        ]
    return args


# ----------------------- pure-JAX reference (for checking) -------------------
def reference_forward(x, raw):
    dn = ("NCHW", "OIHW", "NCHW")

    def bn_apply(y, bn):
        gamma, beta, mean, var = bn
        inv = gamma / jnp.sqrt(var + BN_EPS)
        return y * inv[None, :, None, None] + (beta - mean * inv)[None, :, None, None]

    def conv1x1(y, w):
        return lax.conv_general_dilated(y, w, (1, 1), "VALID", dimension_numbers=dn,
                                        precision=lax.Precision.HIGHEST)

    def gconv(y, w, d):
        return lax.conv_general_dilated(y, w, (1, 1), ((d, d), (d, d)),
                                        rhs_dilation=(d, d),
                                        feature_group_count=GROUPS,
                                        dimension_numbers=dn,
                                        precision=lax.Precision.HIGHEST)

    def block(inp, p, d):
        y = jax.nn.relu(bn_apply(conv1x1(inp, p["w_a"]), p["bn_a"]))
        y = jax.nn.relu(bn_apply(gconv(y, p["w_g"], d), p["bn_g"]))
        return bn_apply(conv1x1(y, p["w_c"]), p["bn_c"])

    b1 = jax.nn.relu(block(x, raw["block1"], 2) + x)
    b2 = jax.nn.relu(block(b1, raw["block2"], 3) + b1)
    b3 = jax.nn.sigmoid(block(b2, raw["block3"], 4)
                        + bn_apply(conv1x1(b2, raw["down_w"]), raw["down_bn"]))
    return b3


# ----------------------------------- main -------------------------------------
if __name__ == "__main__":
    key = jax.random.PRNGKey(0)
    kx, kp = jax.random.split(key)
    # _AttentionModule requires 64 input channels; small batch/spatial sizes.
    x = jax.random.normal(kx, (2, 64, 16, 16), jnp.float32)

    raw = init_raw_params(kp)
    kargs = build_kernel_args(raw)

    out = attention_forward(x, kargs)
    out = jax.block_until_ready(out)
    assert out.shape == (2, 32, 16, 16), out.shape

    ref = reference_forward(x, raw)
    max_err = float(jnp.max(jnp.abs(out - ref)))
    # bf16 MXU operands (f32 accumulate) -> looser tolerance than the pure-f32 path.
    if max_err > 2e-2:
        raise AssertionError(f"kernel/reference mismatch: max abs err = {max_err}")
    print("KERNEL_OK")
</pallas_src>

<mosaic_0001>
module attributes {stable_mosaic.version = 11 : i64} {
  func.func @_attention_kernel(%arg0: i32, %arg1: memref<1x64x256xf32, #tpu.memory_space<vmem>>, %arg2: memref<64x128xbf16, #tpu.memory_space<vmem>>, %arg3: memref<1x128xf32, #tpu.memory_space<vmem>>, %arg4: memref<9x128xf32, #tpu.memory_space<vmem>>, %arg5: memref<1x64xf32, #tpu.memory_space<vmem>>, %arg6: memref<64x64xbf16, #tpu.memory_space<vmem>>, %arg7: memref<1x64xf32, #tpu.memory_space<vmem>>, %arg8: memref<64x128xbf16, #tpu.memory_space<vmem>>, %arg9: memref<1x128xf32, #tpu.memory_space<vmem>>, %arg10: memref<9x128xf32, #tpu.memory_space<vmem>>, %arg11: memref<1x64xf32, #tpu.memory_space<vmem>>, %arg12: memref<64x64xbf16, #tpu.memory_space<vmem>>, %arg13: memref<1x64xf32, #tpu.memory_space<vmem>>, %arg14: memref<64x160xbf16, #tpu.memory_space<vmem>>, %arg15: memref<1x160xf32, #tpu.memory_space<vmem>>, %arg16: memref<9x128xf32, #tpu.memory_space<vmem>>, %arg17: memref<1x64xf32, #tpu.memory_space<vmem>>, %arg18: memref<64x32xbf16, #tpu.memory_space<vmem>>, %arg19: memref<1x32xf32, #tpu.memory_space<vmem>>, %arg20: memref<1x32x256xf32, #tpu.memory_space<vmem>>, %arg21: memref<400x128xf32, #tpu.memory_space<vmem>>) attributes {dimension_semantics = [#tpu.dimension_semantics<parallel>], iteration_bounds = array<i64: 2>, scalar_prefetch = 0 : i64, scratch_operands = 1 : i64, tpu.core_type = #tpu.core_type<tc>, window_params = [{transform_indices = @transform_0, window_bounds = array<i64: 1, 64, 256>}, {pipeline_mode = #tpu.pipeline_mode<synchronous>, transform_indices = @transform_1, window_bounds = array<i64: 64, 128>}, {pipeline_mode = #tpu.pipeline_mode<synchronous>, transform_indices = @transform_2, window_bounds = array<i64: 1, 128>}, {pipeline_mode = #tpu.pipeline_mode<synchronous>, transform_indices = @transform_3, window_bounds = array<i64: 9, 128>}, {pipeline_mode = #tpu.pipeline_mode<synchronous>, transform_indices = @transform_4, window_bounds = array<i64: 1, 64>}, {pipeline_mode = #tpu.pipeline_mode<synchronous>, transform_indices = @transform_5, window_bounds = array<i64: 64, 64>}, {pipeline_mode = #tpu.pipeline_mode<synchronous>, transform_indices = @transform_6, window_bounds = array<i64: 1, 64>}, {pipeline_mode = #tpu.pipeline_mode<synchronous>, transform_indices = @transform_7, window_bounds = array<i64: 64, 128>}, {pipeline_mode = #tpu.pipeline_mode<synchronous>, transform_indices = @transform_8, window_bounds = array<i64: 1, 128>}, {pipeline_mode = #tpu.pipeline_mode<synchronous>, transform_indices = @transform_9, window_bounds = array<i64: 9, 128>}, {pipeline_mode = #tpu.pipeline_mode<synchronous>, transform_indices = @transform_10, window_bounds = array<i64: 1, 64>}, {pipeline_mode = #tpu.pipeline_mode<synchronous>, transform_indices = @transform_11, window_bounds = array<i64: 64, 64>}, {pipeline_mode = #tpu.pipeline_mode<synchronous>, transform_indices = @transform_12, window_bounds = array<i64: 1, 64>}, {pipeline_mode = #tpu.pipeline_mode<synchronous>, transform_indices = @transform_13, window_bounds = array<i64: 64, 160>}, {pipeline_mode = #tpu.pipeline_mode<synchronous>, transform_indices = @transform_14, window_bounds = array<i64: 1, 160>}, {pipeline_mode = #tpu.pipeline_mode<synchronous>, transform_indices = @transform_15, window_bounds = array<i64: 9, 128>}, {pipeline_mode = #tpu.pipeline_mode<synchronous>, transform_indices = @transform_16, window_bounds = array<i64: 1, 64>}, {pipeline_mode = #tpu.pipeline_mode<synchronous>, transform_indices = @transform_17, window_bounds = array<i64: 64, 32>}, {pipeline_mode = #tpu.pipeline_mode<synchronous>, transform_indices = @transform_18, window_bounds = array<i64: 1, 32>}, {transform_indices = @transform_19, window_bounds = array<i64: 1, 32, 256>}]} {
    %c0 = arith.constant 0 : index
    %c0_0 = arith.constant 0 : index
    %c0_1 = arith.constant 0 : index
    %0 = vector.load %arg1[%c0, %c0_0, %c0_1] : memref<1x64x256xf32, #tpu.memory_space<vmem>>, vector<1x64x256xf32>
    %1 = vector.shape_cast %0 : vector<1x64x256xf32> to vector<64x256xf32>
    %2 = tpu.transpose %1, [1, 0] : vector<64x256xf32> -> vector<256x64xf32>
    %3 = tpu.iota {dimensions = array<i32: 0>} : vector<256x1xi32>
    %c16_i32 = arith.constant 16 : i32
    %c0_i32 = arith.constant 0 : i32
    %4 = arith.cmpi eq, %c16_i32, %c0_i32 : i32
    %c1_i32 = arith.constant 1 : i32
    %5 = arith.select %4, %c1_i32, %c16_i32 : i32
    %6 = vector.broadcast %5 : i32 to vector<256x1xi32>
    %7 = arith.remsi %3, %6 : vector<256x1xi32>
    %c0_i32_2 = arith.constant 0 : i32
    %8 = vector.broadcast %c0_i32_2 : i32 to vector<256x1xi32>
    %9 = arith.cmpi ne, %7, %8 : vector<256x1xi32>
    %c0_i32_3 = arith.constant 0 : i32
    %10 = vector.broadcast %c0_i32_3 : i32 to vector<256x1xi32>
    %11 = arith.cmpi slt, %7, %10 : vector<256x1xi32>
    %c0_i32_4 = arith.constant 0 : i32
    %12 = arith.cmpi slt, %5, %c0_i32_4 : i32
    %13 = vector.broadcast %12 : i1 to vector<256x1xi1>
    %14 = vector.broadcast %13 : vector<256x1xi1> to vector<256x1xi1>
    %15 = arith.xori %11, %14 : vector<256x1xi1>
    %16 = arith.andi %15, %9 : vector<256x1xi1>
    %17 = vector.broadcast %5 : i32 to vector<256x1xi32>
    %18 = arith.addi %7, %17 : vector<256x1xi32>
    %19 = arith.select %16, %18, %7 : vector<256x1xi1>, vector<256x1xi32>
    %c2_i32 = arith.constant 2 : i32
    %20 = vector.broadcast %c2_i32 : i32 to vector<256x1xi32>
    %21 = arith.cmpi sge, %19, %20 : vector<256x1xi32>
    %22 = arith.extui %21 : vector<256x1xi1> to vector<256x1xi32>
    %23 = arith.sitofp %22 : vector<256x1xi32> to vector<256x1xf32>
    %c14_i32 = arith.constant 14 : i32
    %24 = vector.broadcast %c14_i32 : i32 to vector<256x1xi32>
    %25 = arith.cmpi slt, %19, %24 : vector<256x1xi32>
    %26 = arith.extui %25 : vector<256x1xi1> to vector<256x1xi32>
    %27 = arith.sitofp %26 : vector<256x1xi32> to vector<256x1xf32>
    %c3_i32 = arith.constant 3 : i32
    %28 = vector.broadcast %c3_i32 : i32 to vector<256x1xi32>
    %29 = arith.cmpi sge, %19, %28 : vector<256x1xi32>
    %30 = arith.extui %29 : vector<256x1xi1> to vector<256x1xi32>
    %31 = arith.sitofp %30 : vector<256x1xi32> to vector<256x1xf32>
    %c13_i32 = arith.constant 13 : i32
    %32 = vector.broadcast %c13_i32 : i32 to vector<256x1xi32>
    %33 = arith.cmpi slt, %19, %32 : vector<256x1xi32>
    %34 = arith.extui %33 : vector<256x1xi1> to vector<256x1xi32>
    %35 = arith.sitofp %34 : vector<256x1xi32> to vector<256x1xf32>
    %c4_i32 = arith.constant 4 : i32
    %36 = vector.broadcast %c4_i32 : i32 to vector<256x1xi32>
    %37 = arith.cmpi sge, %19, %36 : vector<256x1xi32>
    %38 = arith.extui %37 : vector<256x1xi1> to vector<256x1xi32>
    %39 = arith.sitofp %38 : vector<256x1xi32> to vector<256x1xf32>
    %c12_i32 = arith.constant 12 : i32
    %40 = vector.broadcast %c12_i32 : i32 to vector<256x1xi32>
    %41 = arith.cmpi slt, %19, %40 : vector<256x1xi32>
    %42 = arith.extui %41 : vector<256x1xi1> to vector<256x1xi32>
    %43 = arith.sitofp %42 : vector<256x1xi32> to vector<256x1xf32>
    %cst = arith.constant 0.000000e+00 : f32
    %44 = vector.broadcast %cst : f32 to vector<72x128xf32>
    %c0_5 = arith.constant 0 : index
    %c0_6 = arith.constant 0 : index
    %45 = vector.load %arg21[%c0_5, %c0_6] : memref<400x128xf32, #tpu.memory_space<vmem>>, vector<72x128xf32>
    tpu.vector_store %arg21[%c0_5, %c0_6], %44 {strides = array<i32>} : memref<400x128xf32, #tpu.memory_space<vmem>>, vector<72x128xf32>,
    %c328 = arith.constant 328 : index
    %c0_7 = arith.constant 0 : index
    %46 = vector.load %arg21[%c328, %c0_7] : memref<400x128xf32, #tpu.memory_space<vmem>>, vector<72x128xf32>
    tpu.vector_store %arg21[%c328, %c0_7], %44 {strides = array<i32>} : memref<400x128xf32, #tpu.memory_space<vmem>>, vector<72x128xf32>,
    %47 = arith.truncf %2 : vector<256x64xf32> to vector<256x64xbf16>
    %c0_8 = arith.constant 0 : index
    %c0_9 = arith.constant 0 : index
    %48 = vector.load %arg2[%c0_8, %c0_9] : memref<64x128xbf16, #tpu.memory_space<vmem>>, vector<64x128xbf16>
    %cst_10 = arith.constant dense<0.000000e+00> : vector<256x128xf32>
    %49 = tpu.matmul %47, %48, %cst_10 {dimension_numbers = #tpu.dot_dimension_numbers<[1], [0], [0], [1], [0, 0, 1, 1], [], []>} : vector<256x64xbf16>, vector<64x128xbf16>, vector<256x128xf32> -> vector<256x128xf32>
    %c0_11 = arith.constant 0 : index
    %c0_12 = arith.constant 0 : index
    %50 = vector.load %arg3[%c0_11, %c0_12] : memref<1x128xf32, #tpu.memory_space<vmem>>, vector<1x128xf32>
    %51 = vector.broadcast %50 : vector<1x128xf32> to vector<256x128xf32>
    %52 = arith.addf %49, %51 : vector<256x128xf32>
    %cst_13 = arith.constant 0.000000e+00 : f32
    %53 = vector.broadcast %cst_13 : f32 to vector<256x128xf32>
    %54 = arith.maximumf %52, %53 : vector<256x128xf32>
    %c72 = arith.constant 72 : index
    %c0_14 = arith.constant 0 : index
    %55 = vector.load %arg21[%c72, %c0_14] : memref<400x128xf32, #tpu.memory_space<vmem>>, vector<256x128xf32>
    tpu.vector_store %arg21[%c72, %c0_14], %54 {strides = array<i32>} : memref<400x128xf32, #tpu.memory_space<vmem>>, vector<256x128xf32>,
    %c0_15 = arith.constant 0 : index
    %c0_16 = arith.constant 0 : index
    %56 = vector.load %arg4[%c0_15, %c0_16] : memref<9x128xf32, #tpu.memory_space<vmem>>, vector<9x128xf32>
    %c38 = arith.constant 38 : index
    %c0_17 = arith.constant 0 : index
    %57 = vector.load %arg21[%c38, %c0_17] : memref<400x128xf32, #tpu.memory_space<vmem>>, vector<256x128xf32>
    %58 = vector.extract_strided_slice %56 {offsets = [0, 0], sizes = [1, 128], strides = [1, 1]} : vector<9x128xf32> to vector<1x128xf32>
    %59 = vector.broadcast %58 : vector<1x128xf32> to vector<256x128xf32>
    %60 = arith.mulf %57, %59 : vector<256x128xf32>
    %c70 = arith.constant 70 : index
    %c0_18 = arith.constant 0 : index
    %61 = vector.load %arg21[%c70, %c0_18] : memref<400x128xf32, #tpu.memory_space<vmem>>, vector<256x128xf32>
    %62 = vector.extract_strided_slice %56 {offsets = [3, 0], sizes = [1, 128], strides = [1, 1]} : vector<9x128xf32> to vector<1x128xf32>
    %63 = vector.broadcast %62 : vector<1x128xf32> to vector<256x128xf32>
    %64 = arith.mulf %61, %63 : vector<256x128xf32>
    %65 = arith.addf %60, %64 : vector<256x128xf32>
    %c102 = arith.constant 102 : index
    %c0_19 = arith.constant 0 : index
    %66 = vector.load %arg21[%c102, %c0_19] : memref<400x128xf32, #tpu.memory_space<vmem>>, vector<256x128xf32>
    %67 = vector.extract_strided_slice %56 {offsets = [6, 0], sizes = [1, 128], strides = [1, 1]} : vector<9x128xf32> to vector<1x128xf32>
    %68 = vector.broadcast %67 : vector<1x128xf32> to vector<256x128xf32>
    %69 = arith.mulf %66, %68 : vector<256x128xf32>
    %70 = arith.addf %65, %69 : vector<256x128xf32>
    %c40 = arith.constant 40 : index
    %c0_20 = arith.constant 0 : index
    %71 = vector.load %arg21[%c40, %c0_20] : memref<400x128xf32, #tpu.memory_space<vmem>>, vector<256x128xf32>
    %72 = vector.extract_strided_slice %56 {offsets = [1, 0], sizes = [1, 128], strides = [1, 1]} : vector<9x128xf32> to vector<1x128xf32>
    %73 = vector.broadcast %72 : vector<1x128xf32> to vector<256x128xf32>
    %74 = arith.mulf %71, %73 : vector<256x128xf32>
    %c72_21 = arith.constant 72 : index
    %c0_22 = arith.constant 0 : index
    %75 = vector.load %arg21[%c72_21, %c0_22] : memref<400x128xf32, #tpu.memory_space<vmem>>, vector<256x128xf32>
    %76 = vector.extract_strided_slice %56 {offsets = [4, 0], sizes = [1, 128], strides = [1, 1]} : vector<9x128xf32> to vector<1x128xf32>
    %77 = vector.broadcast %76 : vector<1x128xf32> to vector<256x128xf32>
    %78 = arith.mulf %75, %77 : vector<256x128xf32>
    %79 = arith.addf %74, %78 : vector<256x128xf32>
    %c104 = arith.constant 104 : index
    %c0_23 = arith.constant 0 : index
    %80 = vector.load %arg21[%c104, %c0_23] : memref<400x128xf32, #tpu.memory_space<vmem>>, vector<256x128xf32>
    %81 = vector.extract_strided_slice %56 {offsets = [7, 0], sizes = [1, 128], strides = [1, 1]} : vector<9x128xf32> to vector<1x128xf32>
    %82 = vector.broadcast %81 : vector<1x128xf32> to vector<256x128xf32>
    %83 = arith.mulf %80, %82 : vector<256x128xf32>
    %84 = arith.addf %79, %83 : vector<256x128xf32>
    %c42 = arith.constant 42 : index
    %c0_24 = arith.constant 0 : index
    %85 = vector.load %arg21[%c42, %c0_24] : memref<400x128xf32, #tpu.memory_space<vmem>>, vector<256x128xf32>
    %86 = vector.extract_strided_slice %56 {offsets = [2, 0], sizes = [1, 128], strides = [1, 1]} : vector<9x128xf32> to vector<1x128xf32>
    %87 = vector.broadcast %86 : vector<1x128xf32> to vector<256x128xf32>
    %88 = arith.mulf %85, %87 : vector<256x128xf32>
    %c74 = arith.constant 74 : index
    %c0_25 = arith.constant 0 : index
    %89 = vector.load %arg21[%c74, %c0_25] : memref<400x128xf32, #tpu.memory_space<vmem>>, vector<256x128xf32>
    %90 = vector.extract_strided_slice %56 {offsets = [5, 0], sizes = [1, 128], strides = [1, 1]} : vector<9x128xf32> to vector<1x128xf32>
    %91 = vector.broadcast %90 : vector<1x128xf32> to vector<256x128xf32>
    %92 = arith.mulf %89, %91 : vector<256x128xf32>
    %93 = arith.addf %88, %92 : vector<256x128xf32>
    %c106 = arith.constant 106 : index
    %c0_26 = arith.constant 0 : index
    %94 = vector.load %arg21[%c106, %c0_26] : memref<400x128xf32, #tpu.memory_space<vmem>>, vector<256x128xf32>
    %95 = vector.extract_strided_slice %56 {offsets = [8, 0], sizes = [1, 128], strides = [1, 1]} : vector<9x128xf32> to vector<1x128xf32>
    %96 = vector.broadcast %95 : vector<1x128xf32> to vector<256x128xf32>
    %97 = arith.mulf %94, %96 : vector<256x128xf32>
    %98 = arith.addf %93, %97 : vector<256x128xf32>
    %99 = vector.broadcast %23 : vector<256x1xf32> to vector<256x128xf32>
    %100 = arith.mulf %70, %99 : vector<256x128xf32>
    %101 = arith.addf %100, %84 : vector<256x128xf32>
    %102 = vector.broadcast %27 : vector<256x1xf32> to vector<256x128xf32>
    %103 = arith.mulf %98, %102 : vector<256x128xf32>
    %104 = arith.addf %101, %103 : vector<256x128xf32>
    %105 = vector.extract_strided_slice %104 {offsets = [0, 0], sizes = [256, 64], strides = [1, 1]} : vector<256x128xf32> to vector<256x64xf32>
    %106 = vector.extract_strided_slice %104 {offsets = [0, 64], sizes = [256, 64], strides = [1, 1]} : vector<256x128xf32> to vector<256x64xf32>
    %107 = arith.addf %105, %106 : vector<256x64xf32>
    %c0_27 = arith.constant 0 : index
    %c0_28 = arith.constant 0 : index
    %108 = vector.load %arg5[%c0_27, %c0_28] : memref<1x64xf32, #tpu.memory_space<vmem>>, vector<1x64xf32>
    %109 = vector.broadcast %108 : vector<1x64xf32> to vector<256x64xf32>
    %110 = arith.addf %107, %109 : vector<256x64xf32>
    %cst_29 = arith.constant 0.000000e+00 : f32
    %111 = vector.broadcast %cst_29 : f32 to vector<256x64xf32>
    %112 = arith.maximumf %110, %111 : vector<256x64xf32>
    %113 = arith.truncf %112 : vector<256x64xf32> to vector<256x64xbf16>
    %c0_30 = arith.constant 0 : index
    %c0_31 = arith.constant 0 : index
    %114 = vector.load %arg6[%c0_30, %c0_31] : memref<64x64xbf16, #tpu.memory_space<vmem>>, vector<64x64xbf16>
    %cst_32 = arith.constant dense<0.000000e+00> : vector<256x64xf32>
    %115 = tpu.matmul %113, %114, %cst_32 {dimension_numbers = #tpu.dot_dimension_numbers<[1], [0], [0], [1], [0, 0, 1, 1], [], []>} : vector<256x64xbf16>, vector<64x64xbf16>, vector<256x64xf32> -> vector<256x64xf32>
    %c0_33 = arith.constant 0 : index
    %c0_34 = arith.constant 0 : index
    %116 = vector.load %arg7[%c0_33, %c0_34] : memref<1x64xf32, #tpu.memory_space<vmem>>, vector<1x64xf32>
    %117 = vector.broadcast %116 : vector<1x64xf32> to vector<256x64xf32>
    %118 = arith.addf %115, %117 : vector<256x64xf32>
    %119 = arith.addf %118, %2 : vector<256x64xf32>
    %cst_35 = arith.constant 0.000000e+00 : f32
    %120 = vector.broadcast %cst_35 : f32 to vector<256x64xf32>
    %121 = arith.maximumf %119, %120 : vector<256x64xf32>
    %122 = arith.truncf %121 : vector<256x64xf32> to vector<256x64xbf16>
    %c0_36 = arith.constant 0 : index
    %c0_37 = arith.constant 0 : index
    %123 = vector.load %arg8[%c0_36, %c0_37] : memref<64x128xbf16, #tpu.memory_space<vmem>>, vector<64x128xbf16>
    %cst_38 = arith.constant dense<0.000000e+00> : vector<256x128xf32>
    %124 = tpu.matmul %122, %123, %cst_38 {dimension_numbers = #tpu.dot_dimension_numbers<[1], [0], [0], [1], [0, 0, 1, 1], [], []>} : vector<256x64xbf16>, vector<64x128xbf16>, vector<256x128xf32> -> vector<256x128xf32>
    %c0_39 = arith.constant 0 : index
    %c0_40 = arith.constant 0 : index
    %125 = vector.load %arg9[%c0_39, %c0_40] : memref<1x128xf32, #tpu.memory_space<vmem>>, vector<1x128xf32>
    %126 = vector.broadcast %125 : vector<1x128xf32> to vector<256x128xf32>
    %127 = arith.addf %124, %126 : vector<256x128xf32>
    %cst_41 = arith.constant 0.000000e+00 : f32
    %128 = vector.broadcast %cst_41 : f32 to vector<256x128xf32>
    %129 = arith.maximumf %127, %128 : vector<256x128xf32>
    %c72_42 = arith.constant 72 : index
    %c0_43 = arith.constant 0 : index
    %130 = vector.load %arg21[%c72_42, %c0_43] : memref<400x128xf32, #tpu.memory_space<vmem>>, vector<256x128xf32>
    tpu.vector_store %arg21[%c72_42, %c0_43], %129 {strides = array<i32>} : memref<400x128xf32, #tpu.memory_space<vmem>>, vector<256x128xf32>,
    %c0_44 = arith.constant 0 : index
    %c0_45 = arith.constant 0 : index
    %131 = vector.load %arg10[%c0_44, %c0_45] : memref<9x128xf32, #tpu.memory_space<vmem>>, vector<9x128xf32>
    %c21 = arith.constant 21 : index
    %c0_46 = arith.constant 0 : index
    %132 = vector.load %arg21[%c21, %c0_46] : memref<400x128xf32, #tpu.memory_space<vmem>>, vector<256x128xf32>
    %133 = vector.extract_strided_slice %131 {offsets = [0, 0], sizes = [1, 128], strides = [1, 1]} : vector<9x128xf32> to vector<1x128xf32>
    %134 = vector.broadcast %133 : vector<1x128xf32> to vector<256x128xf32>
    %135 = arith.mulf %132, %134 : vector<256x128xf32>
    %c69 = arith.constant 69 : index
    %c0_47 = arith.constant 0 : index
    %136 = vector.load %arg21[%c69, %c0_47] : memref<400x128xf32, #tpu.memory_space<vmem>>, vector<256x128xf32>
    %137 = vector.extract_strided_slice %131 {offsets = [3, 0], sizes = [1, 128], strides = [1, 1]} : vector<9x128xf32> to vector<1x128xf32>
    %138 = vector.broadcast %137 : vector<1x128xf32> to vector<256x128xf32>
    %139 = arith.mulf %136, %138 : vector<256x128xf32>
    %140 = arith.addf %135, %139 : vector<256x128xf32>
    %c117 = arith.constant 117 : index
    %c0_48 = arith.constant 0 : index
    %141 = vector.load %arg21[%c117, %c0_48] : memref<400x128xf32, #tpu.memory_space<vmem>>, vector<256x128xf32>
    %142 = vector.extract_strided_slice %131 {offsets = [6, 0], sizes = [1, 128], strides = [1, 1]} : vector<9x128xf32> to vector<1x128xf32>
    %143 = vector.broadcast %142 : vector<1x128xf32> to vector<256x128xf32>
    %144 = arith.mulf %141, %143 : vector<256x128xf32>
    %145 = arith.addf %140, %144 : vector<256x128xf32>
    %c24 = arith.constant 24 : index
    %c0_49 = arith.constant 0 : index
    %146 = vector.load %arg21[%c24, %c0_49] : memref<400x128xf32, #tpu.memory_space<vmem>>, vector<256x128xf32>
    %147 = vector.extract_strided_slice %131 {offsets = [1, 0], sizes = [1, 128], strides = [1, 1]} : vector<9x128xf32> to vector<1x128xf32>
    %148 = vector.broadcast %147 : vector<1x128xf32> to vector<256x128xf32>
    %149 = arith.mulf %146, %148 : vector<256x128xf32>
    %c72_50 = arith.constant 72 : index
    %c0_51 = arith.constant 0 : index
    %150 = vector.load %arg21[%c72_50, %c0_51] : memref<400x128xf32, #tpu.memory_space<vmem>>, vector<256x128xf32>
    %151 = vector.extract_strided_slice %131 {offsets = [4, 0], sizes = [1, 128], strides = [1, 1]} : vector<9x128xf32> to vector<1x128xf32>
    %152 = vector.broadcast %151 : vector<1x128xf32> to vector<256x128xf32>
    %153 = arith.mulf %150, %152 : vector<256x128xf32>
    %154 = arith.addf %149, %153 : vector<256x128xf32>
    %c120 = arith.constant 120 : index
    %c0_52 = arith.constant 0 : index
    %155 = vector.load %arg21[%c120, %c0_52] : memref<400x128xf32, #tpu.memory_space<vmem>>, vector<256x128xf32>
    %156 = vector.extract_strided_slice %131 {offsets = [7, 0], sizes = [1, 128], strides = [1, 1]} : vector<9x128xf32> to vector<1x128xf32>
    %157 = vector.broadcast %156 : vector<1x128xf32> to vector<256x128xf32>
    %158 = arith.mulf %155, %157 : vector<256x128xf32>
    %159 = arith.addf %154, %158 : vector<256x128xf32>
    %c27 = arith.constant 27 : index
    %c0_53 = arith.constant 0 : index
    %160 = vector.load %arg21[%c27, %c0_53] : memref<400x128xf32, #tpu.memory_space<vmem>>, vector<256x128xf32>
    %161 = vector.extract_strided_slice %131 {offsets = [2, 0], sizes = [1, 128], strides = [1, 1]} : vector<9x128xf32> to vector<1x128xf32>
    %162 = vector.broadcast %161 : vector<1x128xf32> to vector<256x128xf32>
    %163 = arith.mulf %160, %162 : vector<256x128xf32>
    %c75 = arith.constant 75 : index
    %c0_54 = arith.constant 0 : index
    %164 = vector.load %arg21[%c75, %c0_54] : memref<400x128xf32, #tpu.memory_space<vmem>>, vector<256x128xf32>
    %165 = vector.extract_strided_slice %131 {offsets = [5, 0], sizes = [1, 128], strides = [1, 1]} : vector<9x128xf32> to vector<1x128xf32>
    %166 = vector.broadcast %165 : vector<1x128xf32> to vector<256x128xf32>
    %167 = arith.mulf %164, %166 : vector<256x128xf32>
    %168 = arith.addf %163, %167 : vector<256x128xf32>
    %c123 = arith.constant 123 : index
    %c0_55 = arith.constant 0 : index
    %169 = vector.load %arg21[%c123, %c0_55] : memref<400x128xf32, #tpu.memory_space<vmem>>, vector<256x128xf32>
    %170 = vector.extract_strided_slice %131 {offsets = [8, 0], sizes = [1, 128], strides = [1, 1]} : vector<9x128xf32> to vector<1x128xf32>
    %171 = vector.broadcast %170 : vector<1x128xf32> to vector<256x128xf32>
    %172 = arith.mulf %169, %171 : vector<256x128xf32>
    %173 = arith.addf %168, %172 : vector<256x128xf32>
    %174 = vector.broadcast %31 : vector<256x1xf32> to vector<256x128xf32>
    %175 = arith.mulf %145, %174 : vector<256x128xf32>
    %176 = arith.addf %175, %159 : vector<256x128xf32>
    %177 = vector.broadcast %35 : vector<256x1xf32> to vector<256x128xf32>
    %178 = arith.mulf %173, %177 : vector<256x128xf32>
    %179 = arith.addf %176, %178 : vector<256x128xf32>
    %180 = vector.extract_strided_slice %179 {offsets = [0, 0], sizes = [256, 64], strides = [1, 1]} : vector<256x128xf32> to vector<256x64xf32>
    %181 = vector.extract_strided_slice %179 {offsets = [0, 64], sizes = [256, 64], strides = [1, 1]} : vector<256x128xf32> to vector<256x64xf32>
    %182 = arith.addf %180, %181 : vector<256x64xf32>
    %c0_56 = arith.constant 0 : index
    %c0_57 = arith.constant 0 : index
    %183 = vector.load %arg11[%c0_56, %c0_57] : memref<1x64xf32, #tpu.memory_space<vmem>>, vector<1x64xf32>
    %184 = vector.broadcast %183 : vector<1x64xf32> to vector<256x64xf32>
    %185 = arith.addf %182, %184 : vector<256x64xf32>
    %cst_58 = arith.constant 0.000000e+00 : f32
    %186 = vector.broadcast %cst_58 : f32 to vector<256x64xf32>
    %187 = arith.maximumf %185, %186 : vector<256x64xf32>
    %188 = arith.truncf %187 : vector<256x64xf32> to vector<256x64xbf16>
    %c0_59 = arith.constant 0 : index
    %c0_60 = arith.constant 0 : index
    %189 = vector.load %arg12[%c0_59, %c0_60] : memref<64x64xbf16, #tpu.memory_space<vmem>>, vector<64x64xbf16>
    %cst_61 = arith.constant dense<0.000000e+00> : vector<256x64xf32>
    %190 = tpu.matmul %188, %189, %cst_61 {dimension_numbers = #tpu.dot_dimension_numbers<[1], [0], [0], [1], [0, 0, 1, 1], [], []>} : vector<256x64xbf16>, vector<64x64xbf16>, vector<256x64xf32> -> vector<256x64xf32>
    %c0_62 = arith.constant 0 : index
    %c0_63 = arith.constant 0 : index
    %191 = vector.load %arg13[%c0_62, %c0_63] : memref<1x64xf32, #tpu.memory_space<vmem>>, vector<1x64xf32>
    %192 = vector.broadcast %191 : vector<1x64xf32> to vector<256x64xf32>
    %193 = arith.addf %190, %192 : vector<256x64xf32>
    %194 = arith.addf %193, %121 : vector<256x64xf32>
    %cst_64 = arith.constant 0.000000e+00 : f32
    %195 = vector.broadcast %cst_64 : f32 to vector<256x64xf32>
    %196 = arith.maximumf %194, %195 : vector<256x64xf32>
    %197 = arith.truncf %196 : vector<256x64xf32> to vector<256x64xbf16>
    %c0_65 = arith.constant 0 : index
    %c0_66 = arith.constant 0 : index
    %198 = vector.load %arg14[%c0_65, %c0_66] : memref<64x160xbf16, #tpu.memory_space<vmem>>, vector<64x160xbf16>
    %cst_67 = arith.constant dense<0.000000e+00> : vector<256x160xf32>
    %199 = tpu.matmul %197, %198, %cst_67 {dimension_numbers = #tpu.dot_dimension_numbers<[1], [0], [0], [1], [0, 0, 1, 1], [], []>} : vector<256x64xbf16>, vector<64x160xbf16>, vector<256x160xf32> -> vector<256x160xf32>
    %c0_68 = arith.constant 0 : index
    %c0_69 = arith.constant 0 : index
    %200 = vector.load %arg15[%c0_68, %c0_69] : memref<1x160xf32, #tpu.memory_space<vmem>>, vector<1x160xf32>
    %201 = vector.broadcast %200 : vector<1x160xf32> to vector<256x160xf32>
    %202 = arith.addf %199, %201 : vector<256x160xf32>
    %203 = vector.extract_strided_slice %202 {offsets = [0, 0], sizes = [256, 128], strides = [1, 1]} : vector<256x160xf32> to vector<256x128xf32>
    %cst_70 = arith.constant 0.000000e+00 : f32
    %204 = vector.broadcast %cst_70 : f32 to vector<256x128xf32>
    %205 = arith.maximumf %203, %204 : vector<256x128xf32>
    %c72_71 = arith.constant 72 : index
    %c0_72 = arith.constant 0 : index
    %206 = vector.load %arg21[%c72_71, %c0_72] : memref<400x128xf32, #tpu.memory_space<vmem>>, vector<256x128xf32>
    tpu.vector_store %arg21[%c72_71, %c0_72], %205 {strides = array<i32>} : memref<400x128xf32, #tpu.memory_space<vmem>>, vector<256x128xf32>,
    %c0_73 = arith.constant 0 : index
    %c0_74 = arith.constant 0 : index
    %207 = vector.load %arg16[%c0_73, %c0_74] : memref<9x128xf32, #tpu.memory_space<vmem>>, vector<9x128xf32>
    %c4 = arith.constant 4 : index
    %c0_75 = arith.constant 0 : index
    %208 = vector.load %arg21[%c4, %c0_75] : memref<400x128xf32, #tpu.memory_space<vmem>>, vector<256x128xf32>
    %209 = vector.extract_strided_slice %207 {offsets = [0, 0], sizes = [1, 128], strides = [1, 1]} : vector<9x128xf32> to vector<1x128xf32>
    %210 = vector.broadcast %209 : vector<1x128xf32> to vector<256x128xf32>
    %211 = arith.mulf %208, %210 : vector<256x128xf32>
    %c68 = arith.constant 68 : index
    %c0_76 = arith.constant 0 : index
    %212 = vector.load %arg21[%c68, %c0_76] : memref<400x128xf32, #tpu.memory_space<vmem>>, vector<256x128xf32>
    %213 = vector.extract_strided_slice %207 {offsets = [3, 0], sizes = [1, 128], strides = [1, 1]} : vector<9x128xf32> to vector<1x128xf32>
    %214 = vector.broadcast %213 : vector<1x128xf32> to vector<256x128xf32>
    %215 = arith.mulf %212, %214 : vector<256x128xf32>
    %216 = arith.addf %211, %215 : vector<256x128xf32>
    %c132 = arith.constant 132 : index
    %c0_77 = arith.constant 0 : index
    %217 = vector.load %arg21[%c132, %c0_77] : memref<400x128xf32, #tpu.memory_space<vmem>>, vector<256x128xf32>
    %218 = vector.extract_strided_slice %207 {offsets = [6, 0], sizes = [1, 128], strides = [1, 1]} : vector<9x128xf32> to vector<1x128xf32>
    %219 = vector.broadcast %218 : vector<1x128xf32> to vector<256x128xf32>
    %220 = arith.mulf %217, %219 : vector<256x128xf32>
    %221 = arith.addf %216, %220 : vector<256x128xf32>
    %c8 = arith.constant 8 : index
    %c0_78 = arith.constant 0 : index
    %222 = vector.load %arg21[%c8, %c0_78] : memref<400x128xf32, #tpu.memory_space<vmem>>, vector<256x128xf32>
    %223 = vector.extract_strided_slice %207 {offsets = [1, 0], sizes = [1, 128], strides = [1, 1]} : vector<9x128xf32> to vector<1x128xf32>
    %224 = vector.broadcast %223 : vector<1x128xf32> to vector<256x128xf32>
    %225 = arith.mulf %222, %224 : vector<256x128xf32>
    %c72_79 = arith.constant 72 : index
    %c0_80 = arith.constant 0 : index
    %226 = vector.load %arg21[%c72_79, %c0_80] : memref<400x128xf32, #tpu.memory_space<vmem>>, vector<256x128xf32>
    %227 = vector.extract_strided_slice %207 {offsets = [4, 0], sizes = [1, 128], strides = [1, 1]} : vector<9x128xf32> to vector<1x128xf32>
    %228 = vector.broadcast %227 : vector<1x128xf32> to vector<256x128xf32>
    %229 = arith.mulf %226, %228 : vector<256x128xf32>
    %230 = arith.addf %225, %229 : vector<256x128xf32>
    %c136 = arith.constant 136 : index
    %c0_81 = arith.constant 0 : index
    %231 = vector.load %arg21[%c136, %c0_81] : memref<400x128xf32, #tpu.memory_space<vmem>>, vector<256x128xf32>
    %232 = vector.extract_strided_slice %207 {offsets = [7, 0], sizes = [1, 128], strides = [1, 1]} : vector<9x128xf32> to vector<1x128xf32>
    %233 = vector.broadcast %232 : vector<1x128xf32> to vector<256x128xf32>
    %234 = arith.mulf %231, %233 : vector<256x128xf32>
    %235 = arith.addf %230, %234 : vector<256x128xf32>
    %c12 = arith.constant 12 : index
    %c0_82 = arith.constant 0 : index
    %236 = vector.load %arg21[%c12, %c0_82] : memref<400x128xf32, #tpu.memory_space<vmem>>, vector<256x128xf32>
    %237 = vector.extract_strided_slice %207 {offsets = [2, 0], sizes = [1, 128], strides = [1, 1]} : vector<9x128xf32> to vector<1x128xf32>
    %238 = vector.broadcast %237 : vector<1x128xf32> to vector<256x128xf32>
    %239 = arith.mulf %236, %238 : vector<256x128xf32>
    %c76 = arith.constant 76 : index
    %c0_83 = arith.constant 0 : index
    %240 = vector.load %arg21[%c76, %c0_83] : memref<400x128xf32, #tpu.memory_space<vmem>>, vector<256x128xf32>
    %241 = vector.extract_strided_slice %207 {offsets = [5, 0], sizes = [1, 128], strides = [1, 1]} : vector<9x128xf32> to vector<1x128xf32>
    %242 = vector.broadcast %241 : vector<1x128xf32> to vector<256x128xf32>
    %243 = arith.mulf %240, %242 : vector<256x128xf32>
    %244 = arith.addf %239, %243 : vector<256x128xf32>
    %c140 = arith.constant 140 : index
    %c0_84 = arith.constant 0 : index
    %245 = vector.load %arg21[%c140, %c0_84] : memref<400x128xf32, #tpu.memory_space<vmem>>, vector<256x128xf32>
    %246 = vector.extract_strided_slice %207 {offsets = [8, 0], sizes = [1, 128], strides = [1, 1]} : vector<9x128xf32> to vector<1x128xf32>
    %247 = vector.broadcast %246 : vector<1x128xf32> to vector<256x128xf32>
    %248 = arith.mulf %245, %247 : vector<256x128xf32>
    %249 = arith.addf %244, %248 : vector<256x128xf32>
    %250 = vector.broadcast %39 : vector<256x1xf32> to vector<256x128xf32>
    %251 = arith.mulf %221, %250 : vector<256x128xf32>
    %252 = arith.addf %251, %235 : vector<256x128xf32>
    %253 = vector.broadcast %43 : vector<256x1xf32> to vector<256x128xf32>
    %254 = arith.mulf %249, %253 : vector<256x128xf32>
    %255 = arith.addf %252, %254 : vector<256x128xf32>
    %256 = vector.extract_strided_slice %255 {offsets = [0, 0], sizes = [256, 64], strides = [1, 1]} : vector<256x128xf32> to vector<256x64xf32>
    %257 = vector.extract_strided_slice %255 {offsets = [0, 64], sizes = [256, 64], strides = [1, 1]} : vector<256x128xf32> to vector<256x64xf32>
    %258 = arith.addf %256, %257 : vector<256x64xf32>
    %c0_85 = arith.constant 0 : index
    %c0_86 = arith.constant 0 : index
    %259 = vector.load %arg17[%c0_85, %c0_86] : memref<1x64xf32, #tpu.memory_space<vmem>>, vector<1x64xf32>
    %260 = vector.broadcast %259 : vector<1x64xf32> to vector<256x64xf32>
    %261 = arith.addf %258, %260 : vector<256x64xf32>
    %cst_87 = arith.constant 0.000000e+00 : f32
    %262 = vector.broadcast %cst_87 : f32 to vector<256x64xf32>
    %263 = arith.maximumf %261, %262 : vector<256x64xf32>
    %264 = arith.truncf %263 : vector<256x64xf32> to vector<256x64xbf16>
    %c0_88 = arith.constant 0 : index
    %c0_89 = arith.constant 0 : index
    %265 = vector.load %arg18[%c0_88, %c0_89] : memref<64x32xbf16, #tpu.memory_space<vmem>>, vector<64x32xbf16>
    %cst_90 = arith.constant dense<0.000000e+00> : vector<256x32xf32>
    %266 = tpu.matmul %264, %265, %cst_90 {dimension_numbers = #tpu.dot_dimension_numbers<[1], [0], [0], [1], [0, 0, 1, 1], [], []>} : vector<256x64xbf16>, vector<64x32xbf16>, vector<256x32xf32> -> vector<256x32xf32>
    %c0_91 = arith.constant 0 : index
    %c0_92 = arith.constant 0 : index
    %267 = vector.load %arg19[%c0_91, %c0_92] : memref<1x32xf32, #tpu.memory_space<vmem>>, vector<1x32xf32>
    %268 = vector.broadcast %267 : vector<1x32xf32> to vector<256x32xf32>
    %269 = arith.addf %266, %268 : vector<256x32xf32>
    %270 = vector.extract_strided_slice %202 {offsets = [0, 128], sizes = [256, 32], strides = [1, 1]} : vector<256x160xf32> to vector<256x32xf32>
    %271 = arith.addf %269, %270 : vector<256x32xf32>
    %272 = arith.negf %271 : vector<256x32xf32>
    %273 = math.exp %272 : vector<256x32xf32>
    %cst_93 = arith.constant 1.000000e+00 : f32
    %274 = vector.broadcast %cst_93 : f32 to vector<256x32xf32>
    %275 = arith.addf %274, %273 : vector<256x32xf32>
    %276 = arith.divf %274, %275 : vector<256x32xf32>
    %277 = tpu.transpose %276, [1, 0] : vector<256x32xf32> -> vector<32x256xf32>
    %c0_94 = arith.constant 0 : index
    %c0_95 = arith.constant 0 : index
    %c0_96 = arith.constant 0 : index
    %278 = vector.load %arg20[%c0_94, %c0_95, %c0_96] : memref<1x32x256xf32, #tpu.memory_space<vmem>>, vector<1x32x256xf32>
    %279 = vector.shape_cast %278 : vector<1x32x256xf32> to vector<32x256xf32>
    %280 = vector.shape_cast %277 : vector<32x256xf32> to vector<1x32x256xf32>
    tpu.vector_store %arg20[%c0_94, %c0_95, %c0_96], %280 {strides = array<i32>} : memref<1x32x256xf32, #tpu.memory_space<vmem>>, vector<1x32x256xf32>,
    return
  }
  func.func @transform_0(%arg0: i32) -> (i32, i32, i32) {
    %c0_i32 = arith.constant 0 : i32
    %c0_i32_0 = arith.constant 0 : i32
    %c0_i32_1 = arith.constant 0 : i32
    return %arg0, %c0_i32, %c0_i32_0 : i32, i32, i32
  }
  func.func @transform_1(%arg0: i32) -> (i32, i32) {
    %c0_i32 = arith.constant 0 : i32
    %c0_i32_0 = arith.constant 0 : i32
    %c0_i32_1 = arith.constant 0 : i32
    return %c0_i32, %c0_i32_0 : i32, i32
  }
  func.func @transform_2(%arg0: i32) -> (i32, i32) {
    %c0_i32 = arith.constant 0 : i32
    %c0_i32_0 = arith.constant 0 : i32
    %c0_i32_1 = arith.constant 0 : i32
    return %c0_i32, %c0_i32_0 : i32, i32
  }
  func.func @transform_3(%arg0: i32) -> (i32, i32) {
    %c0_i32 = arith.constant 0 : i32
    %c0_i32_0 = arith.constant 0 : i32
    %c0_i32_1 = arith.constant 0 : i32
    return %c0_i32, %c0_i32_0 : i32, i32
  }
  func.func @transform_4(%arg0: i32) -> (i32, i32) {
    %c0_i32 = arith.constant 0 : i32
    %c0_i32_0 = arith.constant 0 : i32
    %c0_i32_1 = arith.constant 0 : i32
    return %c0_i32, %c0_i32_0 : i32, i32
  }
  func.func @transform_5(%arg0: i32) -> (i32, i32) {
    %c0_i32 = arith.constant 0 : i32
    %c0_i32_0 = arith.constant 0 : i32
    %c0_i32_1 = arith.constant 0 : i32
    return %c0_i32, %c0_i32_0 : i32, i32
  }
  func.func @transform_6(%arg0: i32) -> (i32, i32) {
    %c0_i32 = arith.constant 0 : i32
    %c0_i32_0 = arith.constant 0 : i32
    %c0_i32_1 = arith.constant 0 : i32
    return %c0_i32, %c0_i32_0 : i32, i32
  }
  func.func @transform_7(%arg0: i32) -> (i32, i32) {
    %c0_i32 = arith.constant 0 : i32
    %c0_i32_0 = arith.constant 0 : i32
    %c0_i32_1 = arith.constant 0 : i32
    return %c0_i32, %c0_i32_0 : i32, i32
  }
  func.func @transform_8(%arg0: i32) -> (i32, i32) {
    %c0_i32 = arith.constant 0 : i32
    %c0_i32_0 = arith.constant 0 : i32
    %c0_i32_1 = arith.constant 0 : i32
    return %c0_i32, %c0_i32_0 : i32, i32
  }
  func.func @transform_9(%arg0: i32) -> (i32, i32) {
    %c0_i32 = arith.constant 0 : i32
    %c0_i32_0 = arith.constant 0 : i32
    %c0_i32_1 = arith.constant 0 : i32
    return %c0_i32, %c0_i32_0 : i32, i32
  }
  func.func @transform_10(%arg0: i32) -> (i32, i32) {
    %c0_i32 = arith.constant 0 : i32
    %c0_i32_0 = arith.constant 0 : i32
    %c0_i32_1 = arith.constant 0 : i32
    return %c0_i32, %c0_i32_0 : i32, i32
  }
  func.func @transform_11(%arg0: i32) -> (i32, i32) {
    %c0_i32 = arith.constant 0 : i32
    %c0_i32_0 = arith.constant 0 : i32
    %c0_i32_1 = arith.constant 0 : i32
    return %c0_i32, %c0_i32_0 : i32, i32
  }
  func.func @transform_12(%arg0: i32) -> (i32, i32) {
    %c0_i32 = arith.constant 0 : i32
    %c0_i32_0 = arith.constant 0 : i32
    %c0_i32_1 = arith.constant 0 : i32
    return %c0_i32, %c0_i32_0 : i32, i32
  }
  func.func @transform_13(%arg0: i32) -> (i32, i32) {
    %c0_i32 = arith.constant 0 : i32
    %c0_i32_0 = arith.constant 0 : i32
    %c0_i32_1 = arith.constant 0 : i32
    return %c0_i32, %c0_i32_0 : i32, i32
  }
  func.func @transform_14(%arg0: i32) -> (i32, i32) {
    %c0_i32 = arith.constant 0 : i32
    %c0_i32_0 = arith.constant 0 : i32
    %c0_i32_1 = arith.constant 0 : i32
    return %c0_i32, %c0_i32_0 : i32, i32
  }
  func.func @transform_15(%arg0: i32) -> (i32, i32) {
    %c0_i32 = arith.constant 0 : i32
    %c0_i32_0 = arith.constant 0 : i32
    %c0_i32_1 = arith.constant 0 : i32
    return %c0_i32, %c0_i32_0 : i32, i32
  }
  func.func @transform_16(%arg0: i32) -> (i32, i32) {
    %c0_i32 = arith.constant 0 : i32
    %c0_i32_0 = arith.constant 0 : i32
    %c0_i32_1 = arith.constant 0 : i32
    return %c0_i32, %c0_i32_0 : i32, i32
  }
  func.func @transform_17(%arg0: i32) -> (i32, i32) {
    %c0_i32 = arith.constant 0 : i32
    %c0_i32_0 = arith.constant 0 : i32
    %c0_i32_1 = arith.constant 0 : i32
    return %c0_i32, %c0_i32_0 : i32, i32
  }
  func.func @transform_18(%arg0: i32) -> (i32, i32) {
    %c0_i32 = arith.constant 0 : i32
    %c0_i32_0 = arith.constant 0 : i32
    %c0_i32_1 = arith.constant 0 : i32
    return %c0_i32, %c0_i32_0 : i32, i32
  }
  func.func @transform_19(%arg0: i32) -> (i32, i32, i32) {
    %c0_i32 = arith.constant 0 : i32
    %c0_i32_0 = arith.constant 0 : i32
    %c0_i32_1 = arith.constant 0 : i32
    return %arg0, %c0_i32, %c0_i32_0 : i32, i32, i32
  }
}

</mosaic_0001>

<llo_original>
// kernel: tpu_custom_call.1
$region0: #{tpu_custom_call.1}
  #allocation0 [shape = 'u32[]', space=smem, size = 0x4, offset = 0x4, fixed_abs, tag = 'smem constant byte address 0x4 - core index']
  #allocation1 [shape = 'u32[72,128]{1,0:T(1,128)}', space=vmem, size = 0x9000, scoped, tag = 'internal scratch']
  #allocation2 [shape = 'f32[400,128]{1,0:T(8,128)}', space=vmem, size = 0x32000, scoped, tag = 'scratch operand']
  %s0 = inlined_call_operand.hbm [shape: f32[2,64,256], index: 0, kind: input, shape index: {}]
  %s1 = inlined_call_operand.vmem [shape: bf16[64,128], index: 1, kind: input, shape index: {}]
  %s2 = inlined_call_operand.hbm [shape: f32[1,128], index: 2, kind: input, shape index: {}]
  %s3 = inlined_call_operand.vmem [shape: f32[9,128], index: 3, kind: input, shape index: {}]
  %s4 = inlined_call_operand.hbm [shape: f32[1,64], index: 4, kind: input, shape index: {}]
  %s5 = inlined_call_operand.hbm [shape: bf16[64,64], index: 5, kind: input, shape index: {}]
  %s6 = inlined_call_operand.hbm [shape: f32[1,64], index: 6, kind: input, shape index: {}]
  %s7 = inlined_call_operand.hbm [shape: bf16[64,128], index: 7, kind: input, shape index: {}]
  %s8 = inlined_call_operand.hbm [shape: f32[1,128], index: 8, kind: input, shape index: {}]
  %s9 = inlined_call_operand.hbm [shape: f32[9,128], index: 9, kind: input, shape index: {}]
  %s10 = inlined_call_operand.hbm [shape: f32[1,64], index: 10, kind: input, shape index: {}]
  %s11 = inlined_call_operand.hbm [shape: bf16[64,64], index: 11, kind: input, shape index: {}]
  %s12 = inlined_call_operand.hbm [shape: f32[1,64], index: 12, kind: input, shape index: {}]
  %s13 = inlined_call_operand.hbm [shape: bf16[64,160], index: 13, kind: input, shape index: {}]
  %s14 = inlined_call_operand.hbm [shape: f32[1,160], index: 14, kind: input, shape index: {}]
  %s15 = inlined_call_operand.hbm [shape: f32[9,128], index: 15, kind: input, shape index: {}]
  %s16 = inlined_call_operand.hbm [shape: f32[1,64], index: 16, kind: input, shape index: {}]
  %s17 = inlined_call_operand.vmem [shape: bf16[64,32], index: 17, kind: input, shape index: {}]
  %s18 = inlined_call_operand.vmem [shape: f32[1,32], index: 18, kind: input, shape index: {}]
  %s19 = inlined_call_operand.hbm [shape: f32[2,32,256], index: 19, kind: output, shape index: {}]
  %s20 = sld [smem:[#allocation0]]
  $region169: #{tpu_custom_call.1} parent=0
    _
  %s22 = ssub.s32 1, %s20
  %s23 = scalar_select 0, %s22, %s20
  $region1: #{tpu_custom_call.1} parent=0
    #allocation3 [shape = 'u8[131072]{0}', space=vmem, size = 0x20000, scoped, tag = 'input window, operand 0']
    #allocation4 [shape = 's32[2]{0}', space=sflag, size = 0x8, scoped, tag = 'scoped memory for tpu_custom_call.1']
    #allocation5 [shape = 's32[2]{0}', space=sflag, size = 0x8, scoped, tag = 'scoped memory for tpu_custom_call.1']
    #allocation6 [shape = 'u8[512]{0}', space=vmem, size = 0x400, scoped, tag = 'input window, operand 2, single buffered']
    #allocation7 [shape = 's32[1]{0}', space=sflag, size = 0x4, scoped, tag = 'scoped memory for tpu_custom_call.1']
    #allocation8 [shape = 'u8[512]{0}', space=vmem, size = 0x400, scoped, tag = 'input window, operand 4, single buffered']
    #allocation9 [shape = 'u8[16384]{0}', space=vmem, size = 0x4000, scoped, tag = 'input window, operand 5, single buffered']
    #allocation10 [shape = 's32[1]{0}', space=sflag, size = 0x4, scoped, tag = 'scoped memory for tpu_custom_call.1']
    #allocation11 [shape = 'u8[512]{0}', space=vmem, size = 0x400, scoped, tag = 'input window, operand 6, single buffered']
    #allocation12 [shape = 'u8[16384]{0}', space=vmem, size = 0x4000, scoped, tag = 'input window, operand 7, single buffered']
    #allocation13 [shape = 's32[1]{0}', space=sflag, size = 0x4, scoped, tag = 'scoped memory for tpu_custom_call.1']
    #allocation14 [shape = 'u8[512]{0}', space=vmem, size = 0x400, scoped, tag = 'input window, operand 8, single buffered']
    #allocation15 [shape = 'u8[8192]{0}', space=vmem, size = 0x2000, scoped, tag = 'input window, operand 9, single buffered']
    #allocation16 [shape = 's32[1]{0}', space=sflag, size = 0x4, scoped, tag = 'scoped memory for tpu_custom_call.1']
    #allocation17 [shape = 'u8[512]{0}', space=vmem, size = 0x400, scoped, tag = 'input window, operand 10, single buffered']
    #allocation18 [shape = 'u8[16384]{0}', space=vmem, size = 0x4000, scoped, tag = 'input window, operand 11, single buffered']
    #allocation19 [shape = 's32[1]{0}', space=sflag, size = 0x4, scoped, tag = 'scoped memory for tpu_custom_call.1']
    #allocation20 [shape = 'u8[512]{0}', space=vmem, size = 0x400, scoped, tag = 'input window, operand 12, single buffered']
    #allocation21 [shape = 'u8[32768]{0}', space=vmem, size = 0x8000, scoped, tag = 'input window, operand 13, single buffered']
    #allocation22 [shape = 's32[1]{0}', space=sflag, size = 0x4, scoped, tag = 'scoped memory for tpu_custom_call.1']
    #allocation23 [shape = 'u8[1024]{0}', space=vmem, size = 0x400, scoped, tag = 'input window, operand 14, single buffered']
    #allocation24 [shape = 'u8[8192]{0}', space=vmem, size = 0x2000, scoped, tag = 'input window, operand 15, single buffered']
    #allocation25 [shape = 's32[1]{0}', space=sflag, size = 0x4, scoped, tag = 'scoped memory for tpu_custom_call.1']
    #allocation26 [shape = 'u8[512]{0}', space=vmem, size = 0x400, scoped, tag = 'input window, operand 16, single buffered']
    #allocation27 [shape = 'u8[65536]{0}', space=vmem, size = 0x10000, scoped, tag = 'output window, operand 0']
    %24 = vsyncpa [#allocation4], 0
    %s25 = scalar_lea.sflag [#allocation4], 1
    %26 = vsyncpa %s25, 0
    %27 = vsyncpa [#allocation7], 0
    %28 = vsyncpa [#allocation10], 0
    %29 = vsyncpa [#allocation13], 0
    %30 = vsyncpa [#allocation16], 0
    %31 = vsyncpa [#allocation19], 0
    %32 = vsyncpa [#allocation22], 0
    %33 = vsyncpa [#allocation25], 0
    %34 = vsyncpa [#allocation5], 0
    %s35 = scalar_lea.sflag [#allocation5], 1
    %36 = vsyncpa %s35, 0
    loop: start=0, step=1, limit=4
    $region2: #{tpu_custom_call.1} parent=1 // loop_pre_header
      _
    $region3: #{tpu_custom_call.1} parent=1 // loop_header
      %s38 = sphi 0, %s42
      %p39 = scmp.ge.s32.totalorder %s38, 4
      %s48 = sphi 0, %s50
      %s51 = sphi 0, %s48
      %s52 = sphi 0, %s51
      %s68 = sphi 0, %s52
      %s72 = sphi 0, %s72
      %s74 = sphi 0, %s72
      %s75 = sphi 0, %s74
      %s89 = sphi 0, %s75
      %s93 = sphi 0, %s93
      %s95 = sphi 0, %s93
      %s96 = sphi 0, %s95
      %s110 = sphi 0, %s96
      %s114 = sphi 0, %s114
      %s116 = sphi 0, %s114
      %s117 = sphi 0, %s116
      %s131 = sphi 0, %s117
      %s135 = sphi 0, %s135
      %s137 = sphi 0, %s135
      %s138 = sphi 0, %s137
      %s152 = sphi 0, %s138
      %s156 = sphi 0, %s156
      %s158 = sphi 0, %s156
      %s159 = sphi 0, %s158
      %s173 = sphi 0, %s159
      %s177 = sphi 0, %s177
      %s179 = sphi 0, %s177
      %s180 = sphi 0, %s179
      %s194 = sphi 0, %s180
      %s198 = sphi 0, %s198
      %s200 = sphi 0, %s198
      %s201 = sphi 0, %s200
      %s215 = sphi 0, %s201
      %s219 = sphi 0, %s219
      %s221 = sphi 0, %s219
      %s222 = sphi 0, %s221
      %s236 = sphi 0, %s222
      %s240 = sphi 0, %s240
      %s242 = sphi 0, %s240
      %s243 = sphi 0, %s242
      %s257 = sphi 0, %s243
      %s261 = sphi 0, %s261
      %s263 = sphi 0, %s261
      %s264 = sphi 0, %s263
      %s278 = sphi 0, %s264
      %s282 = sphi 0, %s282
      %s284 = sphi 0, %s282
      %s285 = sphi 0, %s284
      %s299 = sphi 0, %s285
      %s303 = sphi 0, %s303
      %s305 = sphi 0, %s303
      %s306 = sphi 0, %s305
      %s320 = sphi 0, %s306
      %s324 = sphi 0, %s324
      %s326 = sphi 0, %s324
      %s327 = sphi 0, %s326
      %s341 = sphi 0, %s327
      %s345 = sphi 0, %s345
      %s347 = sphi 0, %s345
      %s348 = sphi 0, %s347
      %s362 = sphi 0, %s348
      %s366 = sphi 0, %s366
      %s368 = sphi 0, %s366
      %s369 = sphi 0, %s368
      %s383 = sphi 0, %s369
      %s387 = sphi 0, %s387
      %s389 = sphi 0, %s387
      %s390 = sphi 0, %s389
      %s404 = sphi 0, %s390
      %s408 = sphi 0, %s408
      %s410 = sphi 0, %s408
      %s411 = sphi 0, %s410
      %s425 = sphi 0, %s411
      %s429 = sphi 0, %s429
      %s431 = sphi 0, %s429
      %s432 = sphi 0, %s431
      %s446 = sphi 0, %s432
      %s452 = sphi 0, %s454
      %s455 = sphi 0, %s452
      %s456 = sphi 0, %s455
      %s472 = sphi 0, %s456
    $region4: #{tpu_custom_call.1} parent=1 // loop_header_branch
      %41 = sbr.rel (%p39) target = $region8
    $region5: #{tpu_custom_call.1} parent=1 // loop_body
      %s43 = ssub.s32 %s38, 1
      %s44 = ssub.s32 %s38, 2
      %s45 = sadd.s32 %s38, 1
      %s46 = ssub.s32 %s38, %s45
      %p47 = scmp.eq.s32.totalorder %s46, 0
      %s49 = sadd.s32 %s48, 1
      %s50 = scalar_select %p47, %s48, %s49
      %p53 = pneg %p47
      %p54 = scmp.eq.s32.totalorder %s38, 1
      %p55 = por %p53, %p54
      %p56 = scmp.ne.s32.totalorder %s48, %s51
      %p57 = scmp.eq.s32.totalorder %s38, 0
      %p58 = por %p56, %p57
      %p59 = scmp.ne.s32.totalorder %s48, %s51
      %p60 = scmp.eq.s32.totalorder %s43, 1
      %p61 = por %p59, %p60
      %p62 = scmp.ne.s32.totalorder %s51, %s52
      %p63 = scmp.eq.s32.totalorder %s43, 0
      %p64 = por %p62, %p63
      %p65 = scmp.ne.s32.totalorder %s51, %s52
      %p66 = scmp.eq.s32.totalorder %s44, 1
      %p67 = por %p65, %p66
      %p69 = scmp.ne.s32.totalorder %s52, %s68
      %p70 = scmp.eq.s32.totalorder %s44, 0
      %p71 = por %p69, %p70
      %s73 = sadd.s32 %s72, 1
      %p76 = scmp.eq.s32.totalorder %s38, 1
      %p77 = scmp.ne.s32.totalorder %s72, %s74
      %p78 = scmp.eq.s32.totalorder %s38, 0
      %p79 = por %p77, %p78
      %p80 = scmp.ne.s32.totalorder %s72, %s74
      %p81 = scmp.eq.s32.totalorder %s43, 1
      %p82 = por %p80, %p81
      %p83 = scmp.ne.s32.totalorder %s74, %s75
      %p84 = scmp.eq.s32.totalorder %s43, 0
      %p85 = por %p83, %p84
      %p86 = scmp.ne.s32.totalorder %s74, %s75
      %p87 = scmp.eq.s32.totalorder %s44, 1
      %p88 = por %p86, %p87
      %p90 = scmp.ne.s32.totalorder %s75, %s89
      %p91 = scmp.eq.s32.totalorder %s44, 0
      %p92 = por %p90, %p91
      %s94 = sadd.s32 %s93, 1
      %p97 = scmp.eq.s32.totalorder %s38, 1
      %p98 = scmp.ne.s32.totalorder %s93, %s95
      %p99 = scmp.eq.s32.totalorder %s38, 0
      %p100 = por %p98, %p99
      %p101 = scmp.ne.s32.totalorder %s93, %s95
      %p102 = scmp.eq.s32.totalorder %s43, 1
      %p103 = por %p101, %p102
      %p104 = scmp.ne.s32.totalorder %s95, %s96
      %p105 = scmp.eq.s32.totalorder %s43, 0
      %p106 = por %p104, %p105
      %p107 = scmp.ne.s32.totalorder %s95, %s96
      %p108 = scmp.eq.s32.totalorder %s44, 1
      %p109 = por %p107, %p108
      %p111 = scmp.ne.s32.totalorder %s96, %s110
      %p112 = scmp.eq.s32.totalorder %s44, 0
      %p113 = por %p111, %p112
      %s115 = sadd.s32 %s114, 1
      %p118 = scmp.eq.s32.totalorder %s38, 1
      %p119 = scmp.ne.s32.totalorder %s114, %s116
      %p120 = scmp.eq.s32.totalorder %s38, 0
      %p121 = por %p119, %p120
      %p122 = scmp.ne.s32.totalorder %s114, %s116
      %p123 = scmp.eq.s32.totalorder %s43, 1
      %p124 = por %p122, %p123
      %p125 = scmp.ne.s32.totalorder %s116, %s117
      %p126 = scmp.eq.s32.totalorder %s43, 0
      %p127 = por %p125, %p126
      %p128 = scmp.ne.s32.totalorder %s116, %s117
      %p129 = scmp.eq.s32.totalorder %s44, 1
      %p130 = por %p128, %p129
      %p132 = scmp.ne.s32.totalorder %s117, %s131
      %p133 = scmp.eq.s32.totalorder %s44, 0
      %p134 = por %p132, %p133
      %s136 = sadd.s32 %s135, 1
      %p139 = scmp.eq.s32.totalorder %s38, 1
      %p140 = scmp.ne.s32.totalorder %s135, %s137
      %p141 = scmp.eq.s32.totalorder %s38, 0
      %p142 = por %p140, %p141
      %p143 = scmp.ne.s32.totalorder %s135, %s137
      %p144 = scmp.eq.s32.totalorder %s43, 1
      %p145 = por %p143, %p144
      %p146 = scmp.ne.s32.totalorder %s137, %s138
      %p147 = scmp.eq.s32.totalorder %s43, 0
      %p148 = por %p146, %p147
      %p149 = scmp.ne.s32.totalorder %s137, %s138
      %p150 = scmp.eq.s32.totalorder %s44, 1
      %p151 = por %p149, %p150
      %p153 = scmp.ne.s32.totalorder %s138, %s152
      %p154 = scmp.eq.s32.totalorder %s44, 0
      %p155 = por %p153, %p154
      %s157 = sadd.s32 %s156, 1
      %p160 = scmp.eq.s32.totalorder %s38, 1
      %p161 = scmp.ne.s32.totalorder %s156, %s158
      %p162 = scmp.eq.s32.totalorder %s38, 0
      %p163 = por %p161, %p162
      %p164 = scmp.ne.s32.totalorder %s156, %s158
      %p165 = scmp.eq.s32.totalorder %s43, 1
      %p166 = por %p164, %p165
      %p167 = scmp.ne.s32.totalorder %s158, %s159
      %p168 = scmp.eq.s32.totalorder %s43, 0
      %p169 = por %p167, %p168
      %p170 = scmp.ne.s32.totalorder %s158, %s159
      %p171 = scmp.eq.s32.totalorder %s44, 1
      %p172 = por %p170, %p171
      %p174 = scmp.ne.s32.totalorder %s159, %s173
      %p175 = scmp.eq.s32.totalorder %s44, 0
      %p176 = por %p174, %p175
      %s178 = sadd.s32 %s177, 1
      %p181 = scmp.eq.s32.totalorder %s38, 1
      %p182 = scmp.ne.s32.totalorder %s177, %s179
      %p183 = scmp.eq.s32.totalorder %s38, 0
      %p184 = por %p182, %p183
      %p185 = scmp.ne.s32.totalorder %s177, %s179
      %p186 = scmp.eq.s32.totalorder %s43, 1
      %p187 = por %p185, %p186
      %p188 = scmp.ne.s32.totalorder %s179, %s180
      %p189 = scmp.eq.s32.totalorder %s43, 0
      %p190 = por %p188, %p189
      %p191 = scmp.ne.s32.totalorder %s179, %s180
      %p192 = scmp.eq.s32.totalorder %s44, 1
      %p193 = por %p191, %p192
      %p195 = scmp.ne.s32.totalorder %s180, %s194
      %p196 = scmp.eq.s32.totalorder %s44, 0
      %p197 = por %p195, %p196
      %s199 = sadd.s32 %s198, 1
      %p202 = scmp.eq.s32.totalorder %s38, 1
      %p203 = scmp.ne.s32.totalorder %s198, %s200
      %p204 = scmp.eq.s32.totalorder %s38, 0
      %p205 = por %p203, %p204
      %p206 = scmp.ne.s32.totalorder %s198, %s200
      %p207 = scmp.eq.s32.totalorder %s43, 1
      %p208 = por %p206, %p207
      %p209 = scmp.ne.s32.totalorder %s200, %s201
      %p210 = scmp.eq.s32.totalorder %s43, 0
      %p211 = por %p209, %p210
      %p212 = scmp.ne.s32.totalorder %s200, %s201
      %p213 = scmp.eq.s32.totalorder %s44, 1
      %p214 = por %p212, %p213
      %p216 = scmp.ne.s32.totalorder %s201, %s215
      %p217 = scmp.eq.s32.totalorder %s44, 0
      %p218 = por %p216, %p217
      %s220 = sadd.s32 %s219, 1
      %p223 = scmp.eq.s32.totalorder %s38, 1
      %p224 = scmp.ne.s32.totalorder %s219, %s221
      %p225 = scmp.eq.s32.totalorder %s38, 0
      %p226 = por %p224, %p225
      %p227 = scmp.ne.s32.totalorder %s219, %s221
      %p228 = scmp.eq.s32.totalorder %s43, 1
      %p229 = por %p227, %p228
      %p230 = scmp.ne.s32.totalorder %s221, %s222
      %p231 = scmp.eq.s32.totalorder %s43, 0
      %p232 = por %p230, %p231
      %p233 = scmp.ne.s32.totalorder %s221, %s222
      %p234 = scmp.eq.s32.totalorder %s44, 1
      %p235 = por %p233, %p234
      %p237 = scmp.ne.s32.totalorder %s222, %s236
      %p238 = scmp.eq.s32.totalorder %s44, 0
      %p239 = por %p237, %p238
      %s241 = sadd.s32 %s240, 1
      %p244 = scmp.eq.s32.totalorder %s38, 1
      %p245 = scmp.ne.s32.totalorder %s240, %s242
      %p246 = scmp.eq.s32.totalorder %s38, 0
      %p247 = por %p245, %p246
      %p248 = scmp.ne.s32.totalorder %s240, %s242
      %p249 = scmp.eq.s32.totalorder %s43, 1
      %p250 = por %p248, %p249
      %p251 = scmp.ne.s32.totalorder %s242, %s243
      %p252 = scmp.eq.s32.totalorder %s43, 0
      %p253 = por %p251, %p252
      %p254 = scmp.ne.s32.totalorder %s242, %s243
      %p255 = scmp.eq.s32.totalorder %s44, 1
      %p256 = por %p254, %p255
      %p258 = scmp.ne.s32.totalorder %s243, %s257
      %p259 = scmp.eq.s32.totalorder %s44, 0
      %p260 = por %p258, %p259
      %s262 = sadd.s32 %s261, 1
      %p265 = scmp.eq.s32.totalorder %s38, 1
      %p266 = scmp.ne.s32.totalorder %s261, %s263
      %p267 = scmp.eq.s32.totalorder %s38, 0
      %p268 = por %p266, %p267
      %p269 = scmp.ne.s32.totalorder %s261, %s263
      %p270 = scmp.eq.s32.totalorder %s43, 1
      %p271 = por %p269, %p270
      %p272 = scmp.ne.s32.totalorder %s263, %s264
      %p273 = scmp.eq.s32.totalorder %s43, 0
      %p274 = por %p272, %p273
      %p275 = scmp.ne.s32.totalorder %s263, %s264
      %p276 = scmp.eq.s32.totalorder %s44, 1
      %p277 = por %p275, %p276
      %p279 = scmp.ne.s32.totalorder %s264, %s278
      %p280 = scmp.eq.s32.totalorder %s44, 0
      %p281 = por %p279, %p280
      %s283 = sadd.s32 %s282, 1
      %p286 = scmp.eq.s32.totalorder %s38, 1
      %p287 = scmp.ne.s32.totalorder %s282, %s284
      %p288 = scmp.eq.s32.totalorder %s38, 0
      %p289 = por %p287, %p288
      %p290 = scmp.ne.s32.totalorder %s282, %s284
      %p291 = scmp.eq.s32.totalorder %s43, 1
      %p292 = por %p290, %p291
      %p293 = scmp.ne.s32.totalorder %s284, %s285
      %p294 = scmp.eq.s32.totalorder %s43, 0
      %p295 = por %p293, %p294
      %p296 = scmp.ne.s32.totalorder %s284, %s285
      %p297 = scmp.eq.s32.totalorder %s44, 1
      %p298 = por %p296, %p297
      %p300 = scmp.ne.s32.totalorder %s285, %s299
      %p301 = scmp.eq.s32.totalorder %s44, 0
      %p302 = por %p300, %p301
      %s304 = sadd.s32 %s303, 1
      %p307 = scmp.eq.s32.totalorder %s38, 1
      %p308 = scmp.ne.s32.totalorder %s303, %s305
      %p309 = scmp.eq.s32.totalorder %s38, 0
      %p310 = por %p308, %p309
      %p311 = scmp.ne.s32.totalorder %s303, %s305
      %p312 = scmp.eq.s32.totalorder %s43, 1
      %p313 = por %p311, %p312
      %p314 = scmp.ne.s32.totalorder %s305, %s306
      %p315 = scmp.eq.s32.totalorder %s43, 0
      %p316 = por %p314, %p315
      %p317 = scmp.ne.s32.totalorder %s305, %s306
      %p318 = scmp.eq.s32.totalorder %s44, 1
      %p319 = por %p317, %p318
      %p321 = scmp.ne.s32.totalorder %s306, %s320
      %p322 = scmp.eq.s32.totalorder %s44, 0
      %p323 = por %p321, %p322
      %s325 = sadd.s32 %s324, 1
      %p328 = scmp.eq.s32.totalorder %s38, 1
      %p329 = scmp.ne.s32.totalorder %s324, %s326
      %p330 = scmp.eq.s32.totalorder %s38, 0
      %p331 = por %p329, %p330
      %p332 = scmp.ne.s32.totalorder %s324, %s326
      %p333 = scmp.eq.s32.totalorder %s43, 1
      %p334 = por %p332, %p333
      %p335 = scmp.ne.s32.totalorder %s326, %s327
      %p336 = scmp.eq.s32.totalorder %s43, 0
      %p337 = por %p335, %p336
      %p338 = scmp.ne.s32.totalorder %s326, %s327
      %p339 = scmp.eq.s32.totalorder %s44, 1
      %p340 = por %p338, %p339
      %p342 = scmp.ne.s32.totalorder %s327, %s341
      %p343 = scmp.eq.s32.totalorder %s44, 0
      %p344 = por %p342, %p343
      %s346 = sadd.s32 %s345, 1
      %p349 = scmp.eq.s32.totalorder %s38, 1
      %p350 = scmp.ne.s32.totalorder %s345, %s347
      %p351 = scmp.eq.s32.totalorder %s38, 0
      %p352 = por %p350, %p351
      %p353 = scmp.ne.s32.totalorder %s345, %s347
      %p354 = scmp.eq.s32.totalorder %s43, 1
      %p355 = por %p353, %p354
      %p356 = scmp.ne.s32.totalorder %s347, %s348
      %p357 = scmp.eq.s32.totalorder %s43, 0
      %p358 = por %p356, %p357
      %p359 = scmp.ne.s32.totalorder %s347, %s348
      %p360 = scmp.eq.s32.totalorder %s44, 1
      %p361 = por %p359, %p360
      %p363 = scmp.ne.s32.totalorder %s348, %s362
      %p364 = scmp.eq.s32.totalorder %s44, 0
      %p365 = por %p363, %p364
      %s367 = sadd.s32 %s366, 1
      %p370 = scmp.eq.s32.totalorder %s38, 1
      %p371 = scmp.ne.s32.totalorder %s366, %s368
      %p372 = scmp.eq.s32.totalorder %s38, 0
      %p373 = por %p371, %p372
      %p374 = scmp.ne.s32.totalorder %s366, %s368
      %p375 = scmp.eq.s32.totalorder %s43, 1
      %p376 = por %p374, %p375
      %p377 = scmp.ne.s32.totalorder %s368, %s369
      %p378 = scmp.eq.s32.totalorder %s43, 0
      %p379 = por %p377, %p378
      %p380 = scmp.ne.s32.totalorder %s368, %s369
      %p381 = scmp.eq.s32.totalorder %s44, 1
      %p382 = por %p380, %p381
      %p384 = scmp.ne.s32.totalorder %s369, %s383
      %p385 = scmp.eq.s32.totalorder %s44, 0
      %p386 = por %p384, %p385
      %s388 = sadd.s32 %s387, 1
      %p391 = scmp.eq.s32.totalorder %s38, 1
      %p392 = scmp.ne.s32.totalorder %s387, %s389
      %p393 = scmp.eq.s32.totalorder %s38, 0
      %p394 = por %p392, %p393
      %p395 = scmp.ne.s32.totalorder %s387, %s389
      %p396 = scmp.eq.s32.totalorder %s43, 1
      %p397 = por %p395, %p396
      %p398 = scmp.ne.s32.totalorder %s389, %s390
      %p399 = scmp.eq.s32.totalorder %s43, 0
      %p400 = por %p398, %p399
      %p401 = scmp.ne.s32.totalorder %s389, %s390
      %p402 = scmp.eq.s32.totalorder %s44, 1
      %p403 = por %p401, %p402
      %p405 = scmp.ne.s32.totalorder %s390, %s404
      %p406 = scmp.eq.s32.totalorder %s44, 0
      %p407 = por %p405, %p406
      %s409 = sadd.s32 %s408, 1
      %p412 = scmp.eq.s32.totalorder %s38, 1
      %p413 = scmp.ne.s32.totalorder %s408, %s410
      %p414 = scmp.eq.s32.totalorder %s38, 0
      %p415 = por %p413, %p414
      %p416 = scmp.ne.s32.totalorder %s408, %s410
      %p417 = scmp.eq.s32.totalorder %s43, 1
      %p418 = por %p416, %p417
      %p419 = scmp.ne.s32.totalorder %s410, %s411
      %p420 = scmp.eq.s32.totalorder %s43, 0
      %p421 = por %p419, %p420
      %p422 = scmp.ne.s32.totalorder %s410, %s411
      %p423 = scmp.eq.s32.totalorder %s44, 1
      %p424 = por %p422, %p423
      %p426 = scmp.ne.s32.totalorder %s411, %s425
      %p427 = scmp.eq.s32.totalorder %s44, 0
      %p428 = por %p426, %p427
      %s430 = sadd.s32 %s429, 1
      %p433 = scmp.eq.s32.totalorder %s38, 1
      %p434 = scmp.ne.s32.totalorder %s429, %s431
      %p435 = scmp.eq.s32.totalorder %s38, 0
      %p436 = por %p434, %p435
      %p437 = scmp.ne.s32.totalorder %s429, %s431
      %p438 = scmp.eq.s32.totalorder %s43, 1
      %p439 = por %p437, %p438
      %p440 = scmp.ne.s32.totalorder %s431, %s432
      %p441 = scmp.eq.s32.totalorder %s43, 0
      %p442 = por %p440, %p441
      %p443 = scmp.ne.s32.totalorder %s431, %s432
      %p444 = scmp.eq.s32.totalorder %s44, 1
      %p445 = por %p443, %p444
      %p447 = scmp.ne.s32.totalorder %s432, %s446
      %p448 = scmp.eq.s32.totalorder %s44, 0
      %p449 = por %p447, %p448
      %s450 = ssub.s32 %s38, %s45
      %p451 = scmp.eq.s32.totalorder %s450, 0
      %s453 = sadd.s32 %s452, 1
      %s454 = scalar_select %p451, %s452, %s453
      %p457 = pneg %p451
      %p458 = scmp.eq.s32.totalorder %s38, 1
      %p459 = por %p457, %p458
      %p460 = scmp.ne.s32.totalorder %s452, %s455
      %p461 = scmp.eq.s32.totalorder %s38, 0
      %p462 = por %p460, %p461
      %p463 = scmp.ne.s32.totalorder %s452, %s455
      %p464 = scmp.eq.s32.totalorder %s43, 1
      %p465 = por %p463, %p464
      %p466 = scmp.ne.s32.totalorder %s455, %s456
      %p467 = scmp.eq.s32.totalorder %s43, 0
      %p468 = por %p466, %p467
      %p469 = scmp.ne.s32.totalorder %s455, %s456
      %p470 = scmp.eq.s32.totalorder %s44, 1
      %p471 = por %p469, %p470
      %p473 = scmp.ne.s32.totalorder %s456, %s472
      %p474 = scmp.eq.s32.totalorder %s44, 0
      %p475 = por %p473, %p474
      %p476 = scmp.le.s32.totalorder 1, %s38
      %p477 = scmp.lt.s32.totalorder %s38, 3
      %p478 = pnand %p476, %p477
      %p479 = pneg %p478
      // Predicated region
      $region9: #{tpu_custom_call.1} parent=5 // pred_check
        _
      $region10: #{tpu_custom_call.1} parent=5 // pred_check_branch
        %481 = sbr.rel (%p478) target = $region12
      $region11: #{tpu_custom_call.1} parent=5 // pred_region
        %s482 = ssub.s32 %s38, 1
        // Predicated region
        $region13: #{tpu_custom_call.1} parent=11 // pred_check
          %p483 = pneg %p85
        $region14: #{tpu_custom_call.1} parent=11 // pred_check_branch
          %485 = sbr.rel (%p483) target = $region16
        $region15: #{tpu_custom_call.1} parent=11 // pred_region
          _
        $region16: #{tpu_custom_call.1} parent=11 // pred_fallthru
          _
        // Predicated region
        $region17: #{tpu_custom_call.1} parent=11 // pred_check
          %p486 = pneg %p106
        $region18: #{tpu_custom_call.1} parent=11 // pred_check_branch
          %488 = sbr.rel (%p486) target = $region20
        $region19: #{tpu_custom_call.1} parent=11 // pred_region
          %490 = vsyncadd [#allocation7], 0
          %s492 = sshll.u32 %s2, 4
          %s493 = int_to_ptr.hbm [resolvable:$true] %s492
          %s494 = sshll.u32 [#allocation6], 4
          %s495 = int_to_ptr.vmem [resolvable:$true] %s494
          %497 = dma.hbm_to_vmem [thread:$0]  %s493, 16, %s495, [#allocation7]
        $region20: #{tpu_custom_call.1} parent=11 // pred_fallthru
          _
        // Predicated region
        $region21: #{tpu_custom_call.1} parent=11 // pred_check
          %p498 = pneg %p127
        $region22: #{tpu_custom_call.1} parent=11 // pred_check_branch
          %500 = sbr.rel (%p498) target = $region24
        $region23: #{tpu_custom_call.1} parent=11 // pred_region
          _
        $region24: #{tpu_custom_call.1} parent=11 // pred_fallthru
          _
        // Predicated region
        $region25: #{tpu_custom_call.1} parent=11 // pred_check
          %p501 = pneg %p148
        $region26: #{tpu_custom_call.1} parent=11 // pred_check_branch
          %503 = sbr.rel (%p501) target = $region28
        $region27: #{tpu_custom_call.1} parent=11 // pred_region
          %505 = vsyncadd [#allocation7], 0
          %s507 = sshll.u32 %s4, 4
          %s508 = int_to_ptr.hbm [resolvable:$true] %s507
          %s509 = sshll.u32 [#allocation8], 4
          %s510 = int_to_ptr.vmem [resolvable:$true] %s509
          %512 = dma.hbm_to_vmem [thread:$0]  %s508, 16, %s510, [#allocation7]
        $region28: #{tpu_custom_call.1} parent=11 // pred_fallthru
          _
        // Predicated region
        $region29: #{tpu_custom_call.1} parent=11 // pred_check
          %p513 = pneg %p169
        $region30: #{tpu_custom_call.1} parent=11 // pred_check_branch
          %515 = sbr.rel (%p513) target = $region32
        $region31: #{tpu_custom_call.1} parent=11 // pred_region
          %517 = vsyncadd [#allocation10], 0
          %s518 = sshll.u32 %s5, 4
          %s519 = int_to_ptr.hbm [resolvable:$true] %s518
          %s520 = sshll.u32 [#allocation9], 4
          %s521 = int_to_ptr.vmem [resolvable:$true] %s520
          %526 = dma.hbm_to_vmem [thread:$0]  %s519, 512, %s521, [#allocation10], 64, 64, 4
        $region32: #{tpu_custom_call.1} parent=11 // pred_fallthru
          _
        // Predicated region
        $region33: #{tpu_custom_call.1} parent=11 // pred_check
          %p527 = pneg %p190
        $region34: #{tpu_custom_call.1} parent=11 // pred_check_branch
          %529 = sbr.rel (%p527) target = $region36
        $region35: #{tpu_custom_call.1} parent=11 // pred_region
          %531 = vsyncadd [#allocation10], 0
          %s533 = sshll.u32 %s6, 4
          %s534 = int_to_ptr.hbm [resolvable:$true] %s533
          %s535 = sshll.u32 [#allocation11], 4
          %s536 = int_to_ptr.vmem [resolvable:$true] %s535
          %538 = dma.hbm_to_vmem [thread:$0]  %s534, 16, %s536, [#allocation10]
        $region36: #{tpu_custom_call.1} parent=11 // pred_fallthru
          _
        // Predicated region
        $region37: #{tpu_custom_call.1} parent=11 // pred_check
          %p539 = pneg %p211
        $region38: #{tpu_custom_call.1} parent=11 // pred_check_branch
          %541 = sbr.rel (%p539) target = $region40
        $region39: #{tpu_custom_call.1} parent=11 // pred_region
          %543 = vsyncadd [#allocation13], 0
          %s544 = sshll.u32 %s7, 4
          %s545 = int_to_ptr.hbm [resolvable:$true] %s544
          %s546 = sshll.u32 [#allocation12], 4
          %s547 = int_to_ptr.vmem [resolvable:$true] %s546
          %552 = dma.hbm_to_vmem [thread:$0]  %s545, 512, %s547, [#allocation13], 64, 64, 4
        $region40: #{tpu_custom_call.1} parent=11 // pred_fallthru
          _
        // Predicated region
        $region41: #{tpu_custom_call.1} parent=11 // pred_check
          %p553 = pneg %p232
        $region42: #{tpu_custom_call.1} parent=11 // pred_check_branch
          %555 = sbr.rel (%p553) target = $region44
        $region43: #{tpu_custom_call.1} parent=11 // pred_region
          %557 = vsyncadd [#allocation13], 0
          %s559 = sshll.u32 %s8, 4
          %s560 = int_to_ptr.hbm [resolvable:$true] %s559
          %s561 = sshll.u32 [#allocation14], 4
          %s562 = int_to_ptr.vmem [resolvable:$true] %s561
          %564 = dma.hbm_to_vmem [thread:$0]  %s560, 16, %s562, [#allocation13]
        $region44: #{tpu_custom_call.1} parent=11 // pred_fallthru
          _
        // Predicated region
        $region45: #{tpu_custom_call.1} parent=11 // pred_check
          %p565 = pneg %p253
        $region46: #{tpu_custom_call.1} parent=11 // pred_check_branch
          %567 = sbr.rel (%p565) target = $region48
        $region47: #{tpu_custom_call.1} parent=11 // pred_region
          %569 = vsyncadd [#allocation16], 0
          %s570 = sshll.u32 %s9, 4
          %s571 = int_to_ptr.hbm [resolvable:$true] %s570
          %s572 = sshll.u32 [#allocation15], 4
          %s573 = int_to_ptr.vmem [resolvable:$true] %s572
          %578 = dma.hbm_to_vmem [thread:$0]  %s571, 256, %s573, [#allocation16], 128, 128, 8
        $region48: #{tpu_custom_call.1} parent=11 // pred_fallthru
          _
        // Predicated region
        $region49: #{tpu_custom_call.1} parent=11 // pred_check
          %p579 = pneg %p274
        $region50: #{tpu_custom_call.1} parent=11 // pred_check_branch
          %581 = sbr.rel (%p579) target = $region52
        $region51: #{tpu_custom_call.1} parent=11 // pred_region
          %583 = vsyncadd [#allocation16], 0
          %s585 = sshll.u32 %s10, 4
          %s586 = int_to_ptr.hbm [resolvable:$true] %s585
          %s587 = sshll.u32 [#allocation17], 4
          %s588 = int_to_ptr.vmem [resolvable:$true] %s587
          %590 = dma.hbm_to_vmem [thread:$0]  %s586, 16, %s588, [#allocation16]
        $region52: #{tpu_custom_call.1} parent=11 // pred_fallthru
          _
        // Predicated region
        $region53: #{tpu_custom_call.1} parent=11 // pred_check
          %p591 = pneg %p295
        $region54: #{tpu_custom_call.1} parent=11 // pred_check_branch
          %593 = sbr.rel (%p591) target = $region56
        $region55: #{tpu_custom_call.1} parent=11 // pred_region
          %595 = vsyncadd [#allocation19], 0
          %s596 = sshll.u32 %s11, 4
          %s597 = int_to_ptr.hbm [resolvable:$true] %s596
          %s598 = sshll.u32 [#allocation18], 4
          %s599 = int_to_ptr.vmem [resolvable:$true] %s598
          %604 = dma.hbm_to_vmem [thread:$0]  %s597, 512, %s599, [#allocation19], 64, 64, 4
        $region56: #{tpu_custom_call.1} parent=11 // pred_fallthru
          _
        // Predicated region
        $region57: #{tpu_custom_call.1} parent=11 // pred_check
          %p605 = pneg %p316
        $region58: #{tpu_custom_call.1} parent=11 // pred_check_branch
          %607 = sbr.rel (%p605) target = $region60
        $region59: #{tpu_custom_call.1} parent=11 // pred_region
          %609 = vsyncadd [#allocation19], 0
          %s611 = sshll.u32 %s12, 4
          %s612 = int_to_ptr.hbm [resolvable:$true] %s611
          %s613 = sshll.u32 [#allocation20], 4
          %s614 = int_to_ptr.vmem [resolvable:$true] %s613
          %616 = dma.hbm_to_vmem [thread:$0]  %s612, 16, %s614, [#allocation19]
        $region60: #{tpu_custom_call.1} parent=11 // pred_fallthru
          _
        // Predicated region
        $region61: #{tpu_custom_call.1} parent=11 // pred_check
          %p617 = pneg %p337
        $region62: #{tpu_custom_call.1} parent=11 // pred_check_branch
          %619 = sbr.rel (%p617) target = $region64
        $region63: #{tpu_custom_call.1} parent=11 // pred_region
          %621 = vsyncadd [#allocation22], 0
          %s622 = sshll.u32 %s13, 4
          %s623 = int_to_ptr.hbm [resolvable:$true] %s622
          %s624 = sshll.u32 [#allocation21], 4
          %s625 = int_to_ptr.vmem [resolvable:$true] %s624
          %630 = dma.hbm_to_vmem [thread:$0]  %s623, 1024, %s625, [#allocation22], 128, 128, 8
        $region64: #{tpu_custom_call.1} parent=11 // pred_fallthru
          _
        // Predicated region
        $region65: #{tpu_custom_call.1} parent=11 // pred_check
          %p631 = pneg %p358
        $region66: #{tpu_custom_call.1} parent=11 // pred_check_branch
          %633 = sbr.rel (%p631) target = $region68
        $region67: #{tpu_custom_call.1} parent=11 // pred_region
          %635 = vsyncadd [#allocation22], 0
          %s637 = sshll.u32 %s14, 4
          %s638 = int_to_ptr.hbm [resolvable:$true] %s637
          %s639 = sshll.u32 [#allocation23], 4
          %s640 = int_to_ptr.vmem [resolvable:$true] %s639
          %642 = dma.hbm_to_vmem [thread:$0]  %s638, 32, %s640, [#allocation22]
        $region68: #{tpu_custom_call.1} parent=11 // pred_fallthru
          _
        // Predicated region
        $region69: #{tpu_custom_call.1} parent=11 // pred_check
          %p643 = pneg %p379
        $region70: #{tpu_custom_call.1} parent=11 // pred_check_branch
          %645 = sbr.rel (%p643) target = $region72
        $region71: #{tpu_custom_call.1} parent=11 // pred_region
          %647 = vsyncadd [#allocation25], 0
          %s648 = sshll.u32 %s15, 4
          %s649 = int_to_ptr.hbm [resolvable:$true] %s648
          %s650 = sshll.u32 [#allocation24], 4
          %s651 = int_to_ptr.vmem [resolvable:$true] %s650
          %656 = dma.hbm_to_vmem [thread:$0]  %s649, 256, %s651, [#allocation25], 128, 128, 8
        $region72: #{tpu_custom_call.1} parent=11 // pred_fallthru
          _
        // Predicated region
        $region73: #{tpu_custom_call.1} parent=11 // pred_check
          %p657 = pneg %p400
        $region74: #{tpu_custom_call.1} parent=11 // pred_check_branch
          %659 = sbr.rel (%p657) target = $region76
        $region75: #{tpu_custom_call.1} parent=11 // pred_region
          %661 = vsyncadd [#allocation25], 0
          %s663 = sshll.u32 %s16, 4
          %s664 = int_to_ptr.hbm [resolvable:$true] %s663
          %s665 = sshll.u32 [#allocation26], 4
          %s666 = int_to_ptr.vmem [resolvable:$true] %s665
          %668 = dma.hbm_to_vmem [thread:$0]  %s664, 16, %s666, [#allocation25]
        $region76: #{tpu_custom_call.1} parent=11 // pred_fallthru
          _
        // Predicated region
        $region77: #{tpu_custom_call.1} parent=11 // pred_check
          %p669 = pneg %p421
        $region78: #{tpu_custom_call.1} parent=11 // pred_check_branch
          %671 = sbr.rel (%p669) target = $region80
        $region79: #{tpu_custom_call.1} parent=11 // pred_region
          _
        $region80: #{tpu_custom_call.1} parent=11 // pred_fallthru
          _
        // Predicated region
        $region81: #{tpu_custom_call.1} parent=11 // pred_check
          %p672 = pneg %p442
        $region82: #{tpu_custom_call.1} parent=11 // pred_check_branch
          %674 = sbr.rel (%p672) target = $region84
        $region83: #{tpu_custom_call.1} parent=11 // pred_region
          _
        $region84: #{tpu_custom_call.1} parent=11 // pred_fallthru
          _
      $region12: #{tpu_custom_call.1} parent=5 // pred_fallthru
        _
      %p675 = scmp.lt.s32.totalorder %s38, 2
      // Predicated region
      $region85: #{tpu_custom_call.1} parent=5 // pred_check
        %p676 = pneg %p675
      $region86: #{tpu_custom_call.1} parent=5 // pred_check_branch
        %678 = sbr.rel (%p676) target = $region88
      $region87: #{tpu_custom_call.1} parent=5 // pred_region
        // Predicated region
        $region89: #{tpu_custom_call.1} parent=87 // pred_check
          %p679 = pneg %p58
        $region90: #{tpu_custom_call.1} parent=87 // pred_check_branch
          %681 = sbr.rel (%p679) target = $region92
        $region91: #{tpu_custom_call.1} parent=87 // pred_region
          %s682 = sand.u32 %s48, 1
          %s683 = scalar_lea.sflag [#allocation4], %s682
          %s684 = sand.u32 %s48, 1
          %s685 = smul.addr %s684, 128
          %s686 = scalar_lea.vmem [#allocation3], %s685
          %688 = vsyncadd %s683, 0
          %s689 = smul.addr %s38, 16
          %s690 = smul.addr %s689, 8
          %s691 = scalar_lea.hbm %s0, %s690
          %s692 = sshll.u32 %s691, 4
          %s693 = int_to_ptr.hbm [resolvable:$true] %s692
          %s694 = sshll.u32 %s686, 4
          %s695 = int_to_ptr.vmem [resolvable:$true] %s694
          %700 = dma.hbm_to_vmem [thread:$0]  %s693, 2048, %s695, %s683, 256, 256, 16
        $region92: #{tpu_custom_call.1} parent=87 // pred_fallthru
          _
      $region88: #{tpu_custom_call.1} parent=5 // pred_fallthru
        _
      %p701 = scmp.le.s32.totalorder 1, %s38
      %p702 = scmp.lt.s32.totalorder %s38, 3
      %p703 = pnand %p701, %p702
      %p704 = pneg %p703
      // Predicated region
      $region93: #{tpu_custom_call.1} parent=5 // pred_check
        _
      $region94: #{tpu_custom_call.1} parent=5 // pred_check_branch
        %706 = sbr.rel (%p703) target = $region96
      $region95: #{tpu_custom_call.1} parent=5 // pred_region
        %s707 = ssub.s32 %s38, 1
        %s708 = sand.u32 %s51, 1
        %s709 = scalar_lea.sflag [#allocation4], %s708
        %s710 = sand.u32 %s51, 1
        %s711 = smul.addr %s710, 128
        %s712 = scalar_lea.vmem [#allocation3], %s711
        // Predicated region
        $region97: #{tpu_custom_call.1} parent=95 // pred_check
          %p713 = pneg %p64
        $region98: #{tpu_custom_call.1} parent=95 // pred_check_branch
          %715 = sbr.rel (%p713) target = $region100
        $region99: #{tpu_custom_call.1} parent=95 // pred_region
          %717 = dma.done %s709, 2048
        $region100: #{tpu_custom_call.1} parent=95 // pred_fallthru
          _
        // Predicated region
        $region101: #{tpu_custom_call.1} parent=95 // pred_check
          %p718 = pneg %p106
        $region102: #{tpu_custom_call.1} parent=95 // pred_check_branch
          %720 = sbr.rel (%p718) target = $region104
        $region103: #{tpu_custom_call.1} parent=95 // pred_region
          %722 = dma.done [#allocation7], 16
        $region104: #{tpu_custom_call.1} parent=95 // pred_fallthru
          _
        // Predicated region
        $region105: #{tpu_custom_call.1} parent=95 // pred_check
          %p723 = pneg %p148
        $region106: #{tpu_custom_call.1} parent=95 // pred_check_branch
          %725 = sbr.rel (%p723) target = $region108
        $region107: #{tpu_custom_call.1} parent=95 // pred_region
          %727 = dma.done [#allocation7], 16
        $region108: #{tpu_custom_call.1} parent=95 // pred_fallthru
          _
        // Predicated region
        $region109: #{tpu_custom_call.1} parent=95 // pred_check
          %p728 = pneg %p169
        $region110: #{tpu_custom_call.1} parent=95 // pred_check_branch
          %730 = sbr.rel (%p728) target = $region112
        $region111: #{tpu_custom_call.1} parent=95 // pred_region
          %732 = dma.done [#allocation10], 512
        $region112: #{tpu_custom_call.1} parent=95 // pred_fallthru
          _
        // Predicated region
        $region113: #{tpu_custom_call.1} parent=95 // pred_check
          %p733 = pneg %p190
        $region114: #{tpu_custom_call.1} parent=95 // pred_check_branch
          %735 = sbr.rel (%p733) target = $region116
        $region115: #{tpu_custom_call.1} parent=95 // pred_region
          %737 = dma.done [#allocation10], 16
        $region116: #{tpu_custom_call.1} parent=95 // pred_fallthru
          _
        // Predicated region
        $region117: #{tpu_custom_call.1} parent=95 // pred_check
          %p738 = pneg %p211
        $region118: #{tpu_custom_call.1} parent=95 // pred_check_branch
          %740 = sbr.rel (%p738) target = $region120
        $region119: #{tpu_custom_call.1} parent=95 // pred_region
          %742 = dma.done [#allocation13], 512
        $region120: #{tpu_custom_call.1} parent=95 // pred_fallthru
          _
        // Predicated region
        $region121: #{tpu_custom_call.1} parent=95 // pred_check
          %p743 = pneg %p232
        $region122: #{tpu_custom_call.1} parent=95 // pred_check_branch
          %745 = sbr.rel (%p743) target = $region124
        $region123: #{tpu_custom_call.1} parent=95 // pred_region
          %747 = dma.done [#allocation13], 16
        $region124: #{tpu_custom_call.1} parent=95 // pred_fallthru
          _
        // Predicated region
        $region125: #{tpu_custom_call.1} parent=95 // pred_check
          %p748 = pneg %p253
        $region126: #{tpu_custom_call.1} parent=95 // pred_check_branch
          %750 = sbr.rel (%p748) target = $region128
        $region127: #{tpu_custom_call.1} parent=95 // pred_region
          %752 = dma.done [#allocation16], 256
        $region128: #{tpu_custom_call.1} parent=95 // pred_fallthru
          _
        // Predicated region
        $region129: #{tpu_custom_call.1} parent=95 // pred_check
          %p753 = pneg %p274
        $region130: #{tpu_custom_call.1} parent=95 // pred_check_branch
          %755 = sbr.rel (%p753) target = $region132
        $region131: #{tpu_custom_call.1} parent=95 // pred_region
          %757 = dma.done [#allocation16], 16
        $region132: #{tpu_custom_call.1} parent=95 // pred_fallthru
          _
        // Predicated region
        $region133: #{tpu_custom_call.1} parent=95 // pred_check
          %p758 = pneg %p295
        $region134: #{tpu_custom_call.1} parent=95 // pred_check_branch
          %760 = sbr.rel (%p758) target = $region136
        $region135: #{tpu_custom_call.1} parent=95 // pred_region
          %762 = dma.done [#allocation19], 512
        $region136: #{tpu_custom_call.1} parent=95 // pred_fallthru
          _
        // Predicated region
        $region137: #{tpu_custom_call.1} parent=95 // pred_check
          %p763 = pneg %p316
        $region138: #{tpu_custom_call.1} parent=95 // pred_check_branch
          %765 = sbr.rel (%p763) target = $region140
        $region139: #{tpu_custom_call.1} parent=95 // pred_region
          %767 = dma.done [#allocation19], 16
        $region140: #{tpu_custom_call.1} parent=95 // pred_fallthru
          _
        // Predicated region
        $region141: #{tpu_custom_call.1} parent=95 // pred_check
          %p768 = pneg %p337
        $region142: #{tpu_custom_call.1} parent=95 // pred_check_branch
          %770 = sbr.rel (%p768) target = $region144
        $region143: #{tpu_custom_call.1} parent=95 // pred_region
          %772 = dma.done [#allocation22], 1024
        $region144: #{tpu_custom_call.1} parent=95 // pred_fallthru
          _
        // Predicated region
        $region145: #{tpu_custom_call.1} parent=95 // pred_check
          %p773 = pneg %p358
        $region146: #{tpu_custom_call.1} parent=95 // pred_check_branch
          %775 = sbr.rel (%p773) target = $region148
        $region147: #{tpu_custom_call.1} parent=95 // pred_region
          %777 = dma.done [#allocation22], 32
        $region148: #{tpu_custom_call.1} parent=95 // pred_fallthru
          _
        // Predicated region
        $region149: #{tpu_custom_call.1} parent=95 // pred_check
          %p778 = pneg %p379
        $region150: #{tpu_custom_call.1} parent=95 // pred_check_branch
          %780 = sbr.rel (%p778) target = $region152
        $region151: #{tpu_custom_call.1} parent=95 // pred_region
          %782 = dma.done [#allocation25], 256
        $region152: #{tpu_custom_call.1} parent=95 // pred_fallthru
          _
        // Predicated region
        $region153: #{tpu_custom_call.1} parent=95 // pred_check
          %p783 = pneg %p400
        $region154: #{tpu_custom_call.1} parent=95 // pred_check_branch
          %785 = sbr.rel (%p783) target = $region156
        $region155: #{tpu_custom_call.1} parent=95 // pred_region
          %787 = dma.done [#allocation25], 16
        $region156: #{tpu_custom_call.1} parent=95 // pred_fallthru
          _
        %s788 = sand.u32 %s51, 1
        %s789 = scalar_lea.sflag [#allocation4], %s788
        %s790 = sand.u32 %s51, 1
        %s791 = smul.addr %s790, 128
        %s792 = scalar_lea.vmem [#allocation3], %s791
        %p793 = pneg %p64
        %p794 = pneg %p61
        %p795 = pneg %p85
        %p796 = pneg %p82
        %p797 = pneg %p106
        %p798 = pneg %p103
        %p799 = pneg %p127
        %p800 = pneg %p124
        %p801 = pneg %p148
        %p802 = pneg %p145
        %p803 = pneg %p169
        %p804 = pneg %p166
        %p805 = pneg %p190
        %p806 = pneg %p187
        %p807 = pneg %p211
        %p808 = pneg %p208
        %p809 = pneg %p232
        %p810 = pneg %p229
        %p811 = pneg %p253
        %p812 = pneg %p250
        %p813 = pneg %p274
        %p814 = pneg %p271
        %p815 = pneg %p295
        %p816 = pneg %p292
        %p817 = pneg %p316
        %p818 = pneg %p313
        %p819 = pneg %p337
        %p820 = pneg %p334
        %p821 = pneg %p358
        %p822 = pneg %p355
        %p823 = pneg %p379
        %p824 = pneg %p376
        %p825 = pneg %p400
        %p826 = pneg %p397
        %p827 = pneg %p421
        %p828 = pneg %p418
        %p829 = pneg %p442
        %p830 = pneg %p439
        %p831 = pneg %p468
        %p832 = pneg %p465
        %s833 = sand.u32 %s455, 1
        %s834 = scalar_lea.sflag [#allocation5], %s833
        %s835 = sand.u32 %s455, 1
        %s836 = smul.addr %s835, 64
        %s837 = scalar_lea.vmem [#allocation27], %s836
        %v839 = vld [vmem:[%s712] sm:$0xff]
        %v840 = vld [vmem:[%s712 + $0x8] sm:$0xff]
        %v841 = vld [vmem:[%s712 + $0x10] sm:$0xff]
        %v842 = vld [vmem:[%s712 + $0x18] sm:$0xff]
        %v843 = vld [vmem:[%s712 + $0x20] sm:$0xff]
        %v844 = vld [vmem:[%s712 + $0x28] sm:$0xff]
        %v845 = vld [vmem:[%s712 + $0x30] sm:$0xff]
        %v846 = vld [vmem:[%s712 + $0x38] sm:$0xff]
        %v847 = vld [vmem:[%s712 + $0x40] sm:$0xff]
        %v848 = vld [vmem:[%s712 + $0x48] sm:$0xff]
        %v849 = vld [vmem:[%s712 + $0x50] sm:$0xff]
        %v850 = vld [vmem:[%s712 + $0x58] sm:$0xff]
        %v851 = vld [vmem:[%s712 + $0x60] sm:$0xff]
        %v852 = vld [vmem:[%s712 + $0x68] sm:$0xff]
        %v853 = vld [vmem:[%s712 + $0x70] sm:$0xff]
        %v854 = vld [vmem:[%s712 + $0x78] sm:$0xff]
        %855 = vxpose.xlu0.b32.start [1/16] %v839, 128
        %856 = vxpose.xlu0.b32.cont [2/16] %v841, 128
        %857 = vxpose.xlu0.b32.cont [3/16] %v843, 128
        %858 = vxpose.xlu0.b32.cont [4/16] %v845, 128
        %859 = vxpose.xlu0.b32.cont [5/16] %v847, 128
        %860 = vxpose.xlu0.b32.cont [6/16] %v849, 128
        %861 = vxpose.xlu0.b32.cont [7/16] %v851, 128
        %862 = vxpose.xlu0.b32.cont [8/16] %v853, 128
        %863 = vxpose.xlu0.b32.cont [9/16] 0.0, 128
        %864 = vxpose.xlu0.b32.cont [10/16] 0.0, 128
        %865 = vxpose.xlu0.b32.cont [11/16] 0.0, 128
        %866 = vxpose.xlu0.b32.cont [12/16] 0.0, 128
        %867 = vxpose.xlu0.b32.cont [13/16] 0.0, 128
        %868 = vxpose.xlu0.b32.cont [14/16] 0.0, 128
        %869 = vxpose.xlu0.b32.cont [15/16] 0.0, 128
        %870 = vxpose.xlu0.b32.end [16/16] 0.0, 128
        %v871 = vpop.trf.xlu0
        %v872 = vpop.trf.xlu0
        %v873 = vpop.trf.xlu0
        %v874 = vpop.trf.xlu0
        %v875 = vpop.trf.xlu0
        %v876 = vpop.trf.xlu0
        %v877 = vpop.trf.xlu0
        %v878 = vpop.trf.xlu0
        %v879 = vpop.trf.xlu0
        %v880 = vpop.trf.xlu0
        %v881 = vpop.trf.xlu0
        %v882 = vpop.trf.xlu0
        %v883 = vpop.trf.xlu0
        %v884 = vpop.trf.xlu0
        %v885 = vpop.trf.xlu0
        %v886 = vpop.trf.xlu0
        %887 = vxpose.xlu0.b32.start [1/16] %v840, 128
        %888 = vxpose.xlu0.b32.cont [2/16] %v842, 128
        %889 = vxpose.xlu0.b32.cont [3/16] %v844, 128
        %890 = vxpose.xlu0.b32.cont [4/16] %v846, 128
        %891 = vxpose.xlu0.b32.cont [5/16] %v848, 128
        %892 = vxpose.xlu0.b32.cont [6/16] %v850, 128
        %893 = vxpose.xlu0.b32.cont [7/16] %v852, 128
        %894 = vxpose.xlu0.b32.cont [8/16] %v854, 128
        %895 = vxpose.xlu0.b32.cont [9/16] 0.0, 128
        %896 = vxpose.xlu0.b32.cont [10/16] 0.0, 128
        %897 = vxpose.xlu0.b32.cont [11/16] 0.0, 128
        %898 = vxpose.xlu0.b32.cont [12/16] 0.0, 128
        %899 = vxpose.xlu0.b32.cont [13/16] 0.0, 128
        %900 = vxpose.xlu0.b32.cont [14/16] 0.0, 128
        %901 = vxpose.xlu0.b32.cont [15/16] 0.0, 128
        %902 = vxpose.xlu0.b32.end [16/16] 0.0, 128
        %v903 = vpop.trf.xlu0
        %v904 = vpop.trf.xlu0
        %v905 = vpop.trf.xlu0
        %v906 = vpop.trf.xlu0
        %v907 = vpop.trf.xlu0
        %v908 = vpop.trf.xlu0
        %v909 = vpop.trf.xlu0
        %v910 = vpop.trf.xlu0
        %v911 = vpop.trf.xlu0
        %v912 = vpop.trf.xlu0
        %v913 = vpop.trf.xlu0
        %v914 = vpop.trf.xlu0
        %v915 = vpop.trf.xlu0
        %v916 = vpop.trf.xlu0
        %v917 = vpop.trf.xlu0
        %v918 = vpop.trf.xlu0
        %v919 = vlaneseq
        %v920 = vshrl.u32 %v919, 7
        %v921 = vadd.s32 %v920, 8
        %v922 = vadd.s32 %v920, 16
        %v923 = vadd.s32 %v920, 24
        %v924 = vadd.s32 %v920, 32
        %v925 = vadd.s32 %v920, 40
        %v926 = vadd.s32 %v920, 48
        %v927 = vadd.s32 %v920, 56
        %v928 = vadd.s32 %v920, 64
        %v929 = vadd.s32 %v920, 72
        %v930 = vadd.s32 %v920, 80
        %v931 = vadd.s32 %v920, 88
        %v932 = vadd.s32 %v920, 96
        %v933 = vadd.s32 %v920, 104
        %v934 = vadd.s32 %v920, 112
        %v935 = vadd.s32 %v920, 120
        %v936 = vadd.s32 %v920, 128
        %v937 = vadd.s32 %v920, 136
        %v938 = vadd.s32 %v920, 144
        %v939 = vadd.s32 %v920, 152
        %v940 = vadd.s32 %v920, 160
        %v941 = vadd.s32 %v920, 168
        %v942 = vadd.s32 %v920, 176
        %v943 = vadd.s32 %v920, 184
        %v944 = vadd.s32 %v920, 192
        %v945 = vadd.s32 %v920, 200
        %v946 = vadd.s32 %v920, 208
        %v947 = vadd.s32 %v920, 216
        %v948 = vadd.s32 %v920, 224
        %v949 = vadd.s32 %v920, 232
        %v950 = vadd.s32 %v920, 240
        %v951 = vadd.s32 %v920, 248
        %vm952 = vcmp.lt.s32.totalorder %v920, 0
        %v953 = vsub.s32 0, %v920
        %v954 = vsel %vm952, %v953, %v920
        %v955 = vshrl.u32 %v954, 4
        %v956 = vand.u32 %v954, 15
        %v957 = vsub.s32 0, %v956
        %v958 = vsel %vm952, %v957, %v956
        %vm959 = vcmp.lt.s32.totalorder %v921, 0
        %v960 = vsub.s32 0, %v921
        %v961 = vsel %vm959, %v960, %v921
        %v962 = vshrl.u32 %v961, 4
        %v963 = vand.u32 %v961, 15
        %v964 = vsub.s32 0, %v963
        %v965 = vsel %vm959, %v964, %v963
        %vm966 = vcmp.lt.s32.totalorder %v922, 0
        %v967 = vsub.s32 0, %v922
        %v968 = vsel %vm966, %v967, %v922
        %v969 = vshrl.u32 %v968, 4
        %v970 = vand.u32 %v968, 15
        %v971 = vsub.s32 0, %v970
        %v972 = vsel %vm966, %v971, %v970
        %vm973 = vcmp.lt.s32.totalorder %v923, 0
        %v974 = vsub.s32 0, %v923
        %v975 = vsel %vm973, %v974, %v923
        %v976 = vshrl.u32 %v975, 4
        %v977 = vand.u32 %v975, 15
        %v978 = vsub.s32 0, %v977
        %v979 = vsel %vm973, %v978, %v977
        %vm980 = vcmp.lt.s32.totalorder %v924, 0
        %v981 = vsub.s32 0, %v924
        %v982 = vsel %vm980, %v981, %v924
        %v983 = vshrl.u32 %v982, 4
        %v984 = vand.u32 %v982, 15
        %v985 = vsub.s32 0, %v984
        %v986 = vsel %vm980, %v985, %v984
        %vm987 = vcmp.lt.s32.totalorder %v925, 0
        %v988 = vsub.s32 0, %v925
        %v989 = vsel %vm987, %v988, %v925
        %v990 = vshrl.u32 %v989, 4
        %v991 = vand.u32 %v989, 15
        %v992 = vsub.s32 0, %v991
        %v993 = vsel %vm987, %v992, %v991
        %vm994 = vcmp.lt.s32.totalorder %v926, 0
        %v995 = vsub.s32 0, %v926
        %v996 = vsel %vm994, %v995, %v926
        %v997 = vshrl.u32 %v996, 4
        %v998 = vand.u32 %v996, 15
        %v999 = vsub.s32 0, %v998
        %v1000 = vsel %vm994, %v999, %v998
        %vm1001 = vcmp.lt.s32.totalorder %v927, 0
        %v1002 = vsub.s32 0, %v927
        %v1003 = vsel %vm1001, %v1002, %v927
        %v1004 = vshrl.u32 %v1003, 4
        %v1005 = vand.u32 %v1003, 15
        %v1006 = vsub.s32 0, %v1005
        %v1007 = vsel %vm1001, %v1006, %v1005
        %vm1008 = vcmp.lt.s32.totalorder %v928, 0
        %v1009 = vsub.s32 0, %v928
        %v1010 = vsel %vm1008, %v1009, %v928
        %v1011 = vshrl.u32 %v1010, 4
        %v1012 = vand.u32 %v1010, 15
        %v1013 = vsub.s32 0, %v1012
        %v1014 = vsel %vm1008, %v1013, %v1012
        %vm1015 = vcmp.lt.s32.totalorder %v929, 0
        %v1016 = vsub.s32 0, %v929
        %v1017 = vsel %vm1015, %v1016, %v929
        %v1018 = vshrl.u32 %v1017, 4
        %v1019 = vand.u32 %v1017, 15
        %v1020 = vsub.s32 0, %v1019
        %v1021 = vsel %vm1015, %v1020, %v1019
        %vm1022 = vcmp.lt.s32.totalorder %v930, 0
        %v1023 = vsub.s32 0, %v930
        %v1024 = vsel %vm1022, %v1023, %v930
        %v1025 = vshrl.u32 %v1024, 4
        %v1026 = vand.u32 %v1024, 15
        %v1027 = vsub.s32 0, %v1026
        %v1028 = vsel %vm1022, %v1027, %v1026
        %vm1029 = vcmp.lt.s32.totalorder %v931, 0
        %v1030 = vsub.s32 0, %v931
        %v1031 = vsel %vm1029, %v1030, %v931
        %v1032 = vshrl.u32 %v1031, 4
        %v1033 = vand.u32 %v1031, 15
        %v1034 = vsub.s32 0, %v1033
        %v1035 = vsel %vm1029, %v1034, %v1033
        %vm1036 = vcmp.lt.s32.totalorder %v932, 0
        %v1037 = vsub.s32 0, %v932
        %v1038 = vsel %vm1036, %v1037, %v932
        %v1039 = vshrl.u32 %v1038, 4
        %v1040 = vand.u32 %v1038, 15
        %v1041 = vsub.s32 0, %v1040
        %v1042 = vsel %vm1036, %v1041, %v1040
        %vm1043 = vcmp.lt.s32.totalorder %v933, 0
        %v1044 = vsub.s32 0, %v933
        %v1045 = vsel %vm1043, %v1044, %v933
        %v1046 = vshrl.u32 %v1045, 4
        %v1047 = vand.u32 %v1045, 15
        %v1048 = vsub.s32 0, %v1047
        %v1049 = vsel %vm1043, %v1048, %v1047
        %vm1050 = vcmp.lt.s32.totalorder %v934, 0
        %v1051 = vsub.s32 0, %v934
        %v1052 = vsel %vm1050, %v1051, %v934
        %v1053 = vshrl.u32 %v1052, 4
        %v1054 = vand.u32 %v1052, 15
        %v1055 = vsub.s32 0, %v1054
        %v1056 = vsel %vm1050, %v1055, %v1054
        %vm1057 = vcmp.lt.s32.totalorder %v935, 0
        %v1058 = vsub.s32 0, %v935
        %v1059 = vsel %vm1057, %v1058, %v935
        %v1060 = vshrl.u32 %v1059, 4
        %v1061 = vand.u32 %v1059, 15
        %v1062 = vsub.s32 0, %v1061
        %v1063 = vsel %vm1057, %v1062, %v1061
        %vm1064 = vcmp.lt.s32.totalorder %v936, 0
        %v1065 = vsub.s32 0, %v936
        %v1066 = vsel %vm1064, %v1065, %v936
        %v1067 = vshrl.u32 %v1066, 4
        %v1068 = vand.u32 %v1066, 15
        %v1069 = vsub.s32 0, %v1068
        %v1070 = vsel %vm1064, %v1069, %v1068
        %vm1071 = vcmp.lt.s32.totalorder %v937, 0
        %v1072 = vsub.s32 0, %v937
        %v1073 = vsel %vm1071, %v1072, %v937
        %v1074 = vshrl.u32 %v1073, 4
        %v1075 = vand.u32 %v1073, 15
        %v1076 = vsub.s32 0, %v1075
        %v1077 = vsel %vm1071, %v1076, %v1075
        %vm1078 = vcmp.lt.s32.totalorder %v938, 0
        %v1079 = vsub.s32 0, %v938
        %v1080 = vsel %vm1078, %v1079, %v938
        %v1081 = vshrl.u32 %v1080, 4
        %v1082 = vand.u32 %v1080, 15
        %v1083 = vsub.s32 0, %v1082
        %v1084 = vsel %vm1078, %v1083, %v1082
        %vm1085 = vcmp.lt.s32.totalorder %v939, 0
        %v1086 = vsub.s32 0, %v939
        %v1087 = vsel %vm1085, %v1086, %v939
        %v1088 = vshrl.u32 %v1087, 4
        %v1089 = vand.u32 %v1087, 15
        %v1090 = vsub.s32 0, %v1089
        %v1091 = vsel %vm1085, %v1090, %v1089
        %vm1092 = vcmp.lt.s32.totalorder %v940, 0
        %v1093 = vsub.s32 0, %v940
        %v1094 = vsel %vm1092, %v1093, %v940
        %v1095 = vshrl.u32 %v1094, 4
        %v1096 = vand.u32 %v1094, 15
        %v1097 = vsub.s32 0, %v1096
        %v1098 = vsel %vm1092, %v1097, %v1096
        %vm1099 = vcmp.lt.s32.totalorder %v941, 0
        %v1100 = vsub.s32 0, %v941
        %v1101 = vsel %vm1099, %v1100, %v941
        %v1102 = vshrl.u32 %v1101, 4
        %v1103 = vand.u32 %v1101, 15
        %v1104 = vsub.s32 0, %v1103
        %v1105 = vsel %vm1099, %v1104, %v1103
        %vm1106 = vcmp.lt.s32.totalorder %v942, 0
        %v1107 = vsub.s32 0, %v942
        %v1108 = vsel %vm1106, %v1107, %v942
        %v1109 = vshrl.u32 %v1108, 4
        %v1110 = vand.u32 %v1108, 15
        %v1111 = vsub.s32 0, %v1110
        %v1112 = vsel %vm1106, %v1111, %v1110
        %vm1113 = vcmp.lt.s32.totalorder %v943, 0
        %v1114 = vsub.s32 0, %v943
        %v1115 = vsel %vm1113, %v1114, %v943
        %v1116 = vshrl.u32 %v1115, 4
        %v1117 = vand.u32 %v1115, 15
        %v1118 = vsub.s32 0, %v1117
        %v1119 = vsel %vm1113, %v1118, %v1117
        %vm1120 = vcmp.lt.s32.totalorder %v944, 0
        %v1121 = vsub.s32 0, %v944
        %v1122 = vsel %vm1120, %v1121, %v944
        %v1123 = vshrl.u32 %v1122, 4
        %v1124 = vand.u32 %v1122, 15
        %v1125 = vsub.s32 0, %v1124
        %v1126 = vsel %vm1120, %v1125, %v1124
        %vm1127 = vcmp.lt.s32.totalorder %v945, 0
        %v1128 = vsub.s32 0, %v945
        %v1129 = vsel %vm1127, %v1128, %v945
        %v1130 = vshrl.u32 %v1129, 4
        %v1131 = vand.u32 %v1129, 15
        %v1132 = vsub.s32 0, %v1131
        %v1133 = vsel %vm1127, %v1132, %v1131
        %vm1134 = vcmp.lt.s32.totalorder %v946, 0
        %v1135 = vsub.s32 0, %v946
        %v1136 = vsel %vm1134, %v1135, %v946
        %v1137 = vshrl.u32 %v1136, 4
        %v1138 = vand.u32 %v1136, 15
        %v1139 = vsub.s32 0, %v1138
        %v1140 = vsel %vm1134, %v1139, %v1138
        %vm1141 = vcmp.lt.s32.totalorder %v947, 0
        %v1142 = vsub.s32 0, %v947
        %v1143 = vsel %vm1141, %v1142, %v947
        %v1144 = vshrl.u32 %v1143, 4
        %v1145 = vand.u32 %v1143, 15
        %v1146 = vsub.s32 0, %v1145
        %v1147 = vsel %vm1141, %v1146, %v1145
        %vm1148 = vcmp.lt.s32.totalorder %v948, 0
        %v1149 = vsub.s32 0, %v948
        %v1150 = vsel %vm1148, %v1149, %v948
        %v1151 = vshrl.u32 %v1150, 4
        %v1152 = vand.u32 %v1150, 15
        %v1153 = vsub.s32 0, %v1152
        %v1154 = vsel %vm1148, %v1153, %v1152
        %vm1155 = vcmp.lt.s32.totalorder %v949, 0
        %v1156 = vsub.s32 0, %v949
        %v1157 = vsel %vm1155, %v1156, %v949
        %v1158 = vshrl.u32 %v1157, 4
        %v1159 = vand.u32 %v1157, 15
        %v1160 = vsub.s32 0, %v1159
        %v1161 = vsel %vm1155, %v1160, %v1159
        %vm1162 = vcmp.lt.s32.totalorder %v950, 0
        %v1163 = vsub.s32 0, %v950
        %v1164 = vsel %vm1162, %v1163, %v950
        %v1165 = vshrl.u32 %v1164, 4
        %v1166 = vand.u32 %v1164, 15
        %v1167 = vsub.s32 0, %v1166
        %v1168 = vsel %vm1162, %v1167, %v1166
        %vm1169 = vcmp.lt.s32.totalorder %v951, 0
        %v1170 = vsub.s32 0, %v951
        %v1171 = vsel %vm1169, %v1170, %v951
        %v1172 = vshrl.u32 %v1171, 4
        %v1173 = vand.u32 %v1171, 15
        %v1174 = vsub.s32 0, %v1173
        %v1175 = vsel %vm1169, %v1174, %v1173
        %vm1176 = vcmp.ne.s32.totalorder %v958, 0
        %vm1177 = vcmp.ne.s32.totalorder %v965, 0
        %vm1178 = vcmp.ne.s32.totalorder %v972, 0
        %vm1179 = vcmp.ne.s32.totalorder %v979, 0
        %vm1180 = vcmp.ne.s32.totalorder %v986, 0
        %vm1181 = vcmp.ne.s32.totalorder %v993, 0
        %vm1182 = vcmp.ne.s32.totalorder %v1000, 0
        %vm1183 = vcmp.ne.s32.totalorder %v1007, 0
        %vm1184 = vcmp.ne.s32.totalorder %v1014, 0
        %vm1185 = vcmp.ne.s32.totalorder %v1021, 0
        %vm1186 = vcmp.ne.s32.totalorder %v1028, 0
        %vm1187 = vcmp.ne.s32.totalorder %v1035, 0
        %vm1188 = vcmp.ne.s32.totalorder %v1042, 0
        %vm1189 = vcmp.ne.s32.totalorder %v1049, 0
        %vm1190 = vcmp.ne.s32.totalorder %v1056, 0
        %vm1191 = vcmp.ne.s32.totalorder %v1063, 0
        %vm1192 = vcmp.ne.s32.totalorder %v1070, 0
        %vm1193 = vcmp.ne.s32.totalorder %v1077, 0
        %vm1194 = vcmp.ne.s32.totalorder %v1084, 0
        %vm1195 = vcmp.ne.s32.totalorder %v1091, 0
        %vm1196 = vcmp.ne.s32.totalorder %v1098, 0
        %vm1197 = vcmp.ne.s32.totalorder %v1105, 0
        %vm1198 = vcmp.ne.s32.totalorder %v1112, 0
        %vm1199 = vcmp.ne.s32.totalorder %v1119, 0
        %vm1200 = vcmp.ne.s32.totalorder %v1126, 0
        %vm1201 = vcmp.ne.s32.totalorder %v1133, 0
        %vm1202 = vcmp.ne.s32.totalorder %v1140, 0
        %vm1203 = vcmp.ne.s32.totalorder %v1147, 0
        %vm1204 = vcmp.ne.s32.totalorder %v1154, 0
        %vm1205 = vcmp.ne.s32.totalorder %v1161, 0
        %vm1206 = vcmp.ne.s32.totalorder %v1168, 0
        %vm1207 = vcmp.ne.s32.totalorder %v1175, 0
        %vm1208 = vcmp.lt.s32.totalorder %v958, 0
        %vm1209 = vcmp.lt.s32.totalorder %v965, 0
        %vm1210 = vcmp.lt.s32.totalorder %v972, 0
        %vm1211 = vcmp.lt.s32.totalorder %v979, 0
        %vm1212 = vcmp.lt.s32.totalorder %v986, 0
        %vm1213 = vcmp.lt.s32.totalorder %v993, 0
        %vm1214 = vcmp.lt.s32.totalorder %v1000, 0
        %vm1215 = vcmp.lt.s32.totalorder %v1007, 0
        %vm1216 = vcmp.lt.s32.totalorder %v1014, 0
        %vm1217 = vcmp.lt.s32.totalorder %v1021, 0
        %vm1218 = vcmp.lt.s32.totalorder %v1028, 0
        %vm1219 = vcmp.lt.s32.totalorder %v1035, 0
        %vm1220 = vcmp.lt.s32.totalorder %v1042, 0
        %vm1221 = vcmp.lt.s32.totalorder %v1049, 0
        %vm1222 = vcmp.lt.s32.totalorder %v1056, 0
        %vm1223 = vcmp.lt.s32.totalorder %v1063, 0
        %vm1224 = vcmp.lt.s32.totalorder %v1070, 0
        %vm1225 = vcmp.lt.s32.totalorder %v1077, 0
        %vm1226 = vcmp.lt.s32.totalorder %v1084, 0
        %vm1227 = vcmp.lt.s32.totalorder %v1091, 0
        %vm1228 = vcmp.lt.s32.totalorder %v1098, 0
        %vm1229 = vcmp.lt.s32.totalorder %v1105, 0
        %vm1230 = vcmp.lt.s32.totalorder %v1112, 0
        %vm1231 = vcmp.lt.s32.totalorder %v1119, 0
        %vm1232 = vcmp.lt.s32.totalorder %v1126, 0
        %vm1233 = vcmp.lt.s32.totalorder %v1133, 0
        %vm1234 = vcmp.lt.s32.totalorder %v1140, 0
        %vm1235 = vcmp.lt.s32.totalorder %v1147, 0
        %vm1236 = vcmp.lt.s32.totalorder %v1154, 0
        %vm1237 = vcmp.lt.s32.totalorder %v1161, 0
        %vm1238 = vcmp.lt.s32.totalorder %v1168, 0
        %vm1239 = vcmp.lt.s32.totalorder %v1175, 0
        %vm1240 = vmand %vm1208, %vm1176
        %vm1241 = vmand %vm1209, %vm1177
        %vm1242 = vmand %vm1210, %vm1178
        %vm1243 = vmand %vm1211, %vm1179
        %vm1244 = vmand %vm1212, %vm1180
        %vm1245 = vmand %vm1213, %vm1181
        %vm1246 = vmand %vm1214, %vm1182
        %vm1247 = vmand %vm1215, %vm1183
        %vm1248 = vmand %vm1216, %vm1184
        %vm1249 = vmand %vm1217, %vm1185
        %vm1250 = vmand %vm1218, %vm1186
        %vm1251 = vmand %vm1219, %vm1187
        %vm1252 = vmand %vm1220, %vm1188
        %vm1253 = vmand %vm1221, %vm1189
        %vm1254 = vmand %vm1222, %vm1190
        %vm1255 = vmand %vm1223, %vm1191
        %vm1256 = vmand %vm1224, %vm1192
        %vm1257 = vmand %vm1225, %vm1193
        %vm1258 = vmand %vm1226, %vm1194
        %vm1259 = vmand %vm1227, %vm1195
        %vm1260 = vmand %vm1228, %vm1196
        %vm1261 = vmand %vm1229, %vm1197
        %vm1262 = vmand %vm1230, %vm1198
        %vm1263 = vmand %vm1231, %vm1199
        %vm1264 = vmand %vm1232, %vm1200
        %vm1265 = vmand %vm1233, %vm1201
        %vm1266 = vmand %vm1234, %vm1202
        %vm1267 = vmand %vm1235, %vm1203
        %vm1268 = vmand %vm1236, %vm1204
        %vm1269 = vmand %vm1237, %vm1205
        %vm1270 = vmand %vm1238, %vm1206
        %vm1271 = vmand %vm1239, %vm1207
        %v1272 = vadd.s32 %v958, 16
        %v1273 = vadd.s32 %v965, 16
        %v1274 = vadd.s32 %v972, 16
        %v1275 = vadd.s32 %v979, 16
        %v1276 = vadd.s32 %v986, 16
        %v1277 = vadd.s32 %v993, 16
        %v1278 = vadd.s32 %v1000, 16
        %v1279 = vadd.s32 %v1007, 16
        %v1280 = vadd.s32 %v1014, 16
        %v1281 = vadd.s32 %v1021, 16
        %v1282 = vadd.s32 %v1028, 16
        %v1283 = vadd.s32 %v1035, 16
        %v1284 = vadd.s32 %v1042, 16
        %v1285 = vadd.s32 %v1049, 16
        %v1286 = vadd.s32 %v1056, 16
        %v1287 = vadd.s32 %v1063, 16
        %v1288 = vadd.s32 %v1070, 16
        %v1289 = vadd.s32 %v1077, 16
        %v1290 = vadd.s32 %v1084, 16
        %v1291 = vadd.s32 %v1091, 16
        %v1292 = vadd.s32 %v1098, 16
        %v1293 = vadd.s32 %v1105, 16
        %v1294 = vadd.s32 %v1112, 16
        %v1295 = vadd.s32 %v1119, 16
        %v1296 = vadd.s32 %v1126, 16
        %v1297 = vadd.s32 %v1133, 16
        %v1298 = vadd.s32 %v1140, 16
        %v1299 = vadd.s32 %v1147, 16
        %v1300 = vadd.s32 %v1154, 16
        %v1301 = vadd.s32 %v1161, 16
        %v1302 = vadd.s32 %v1168, 16
        %v1303 = vadd.s32 %v1175, 16
        %v1304 = vsel %vm1240, %v1272, %v958
        %v1305 = vsel %vm1241, %v1273, %v965
        %v1306 = vsel %vm1242, %v1274, %v972
        %v1307 = vsel %vm1243, %v1275, %v979
        %v1308 = vsel %vm1244, %v1276, %v986
        %v1309 = vsel %vm1245, %v1277, %v993
        %v1310 = vsel %vm1246, %v1278, %v1000
        %v1311 = vsel %vm1247, %v1279, %v1007
        %v1312 = vsel %vm1248, %v1280, %v1014
        %v1313 = vsel %vm1249, %v1281, %v1021
        %v1314 = vsel %vm1250, %v1282, %v1028
        %v1315 = vsel %vm1251, %v1283, %v1035
        %v1316 = vsel %vm1252, %v1284, %v1042
        %v1317 = vsel %vm1253, %v1285, %v1049
        %v1318 = vsel %vm1254, %v1286, %v1056
        %v1319 = vsel %vm1255, %v1287, %v1063
        %v1320 = vsel %vm1256, %v1288, %v1070
        %v1321 = vsel %vm1257, %v1289, %v1077
        %v1322 = vsel %vm1258, %v1290, %v1084
        %v1323 = vsel %vm1259, %v1291, %v1091
        %v1324 = vsel %vm1260, %v1292, %v1098
        %v1325 = vsel %vm1261, %v1293, %v1105
        %v1326 = vsel %vm1262, %v1294, %v1112
        %v1327 = vsel %vm1263, %v1295, %v1119
        %v1328 = vsel %vm1264, %v1296, %v1126
        %v1329 = vsel %vm1265, %v1297, %v1133
        %v1330 = vsel %vm1266, %v1298, %v1140
        %v1331 = vsel %vm1267, %v1299, %v1147
        %v1332 = vsel %vm1268, %v1300, %v1154
        %v1333 = vsel %vm1269, %v1301, %v1161
        %v1334 = vsel %vm1270, %v1302, %v1168
        %v1335 = vsel %vm1271, %v1303, %v1175
        %vm1336 = vcmp.ge.s32.totalorder %v1304, 2
        %vm1337 = vcmp.ge.s32.totalorder %v1305, 2
        %vm1338 = vcmp.ge.s32.totalorder %v1306, 2
        %vm1339 = vcmp.ge.s32.totalorder %v1307, 2
        %vm1340 = vcmp.ge.s32.totalorder %v1308, 2
        %vm1341 = vcmp.ge.s32.totalorder %v1309, 2
        %vm1342 = vcmp.ge.s32.totalorder %v1310, 2
        %vm1343 = vcmp.ge.s32.totalorder %v1311, 2
        %vm1344 = vcmp.ge.s32.totalorder %v1312, 2
        %vm1345 = vcmp.ge.s32.totalorder %v1313, 2
        %vm1346 = vcmp.ge.s32.totalorder %v1314, 2
        %vm1347 = vcmp.ge.s32.totalorder %v1315, 2
        %vm1348 = vcmp.ge.s32.totalorder %v1316, 2
        %vm1349 = vcmp.ge.s32.totalorder %v1317, 2
        %vm1350 = vcmp.ge.s32.totalorder %v1318, 2
        %vm1351 = vcmp.ge.s32.totalorder %v1319, 2
        %vm1352 = vcmp.ge.s32.totalorder %v1320, 2
        %vm1353 = vcmp.ge.s32.totalorder %v1321, 2
        %vm1354 = vcmp.ge.s32.totalorder %v1322, 2
        %vm1355 = vcmp.ge.s32.totalorder %v1323, 2
        %vm1356 = vcmp.ge.s32.totalorder %v1324, 2
        %vm1357 = vcmp.ge.s32.totalorder %v1325, 2
        %vm1358 = vcmp.ge.s32.totalorder %v1326, 2
        %vm1359 = vcmp.ge.s32.totalorder %v1327, 2
        %vm1360 = vcmp.ge.s32.totalorder %v1328, 2
        %vm1361 = vcmp.ge.s32.totalorder %v1329, 2
        %vm1362 = vcmp.ge.s32.totalorder %v1330, 2
        %vm1363 = vcmp.ge.s32.totalorder %v1331, 2
        %vm1364 = vcmp.ge.s32.totalorder %v1332, 2
        %vm1365 = vcmp.ge.s32.totalorder %v1333, 2
        %vm1366 = vcmp.ge.s32.totalorder %v1334, 2
        %vm1367 = vcmp.ge.s32.totalorder %v1335, 2
        %v1368 = vsel %vm1336, 1, 0
        %v1369 = vsel %vm1337, 1, 0
        %v1370 = vsel %vm1338, 1, 0
        %v1371 = vsel %vm1339, 1, 0
        %v1372 = vsel %vm1340, 1, 0
        %v1373 = vsel %vm1341, 1, 0
        %v1374 = vsel %vm1342, 1, 0
        %v1375 = vsel %vm1343, 1, 0
        %v1376 = vsel %vm1344, 1, 0
        %v1377 = vsel %vm1345, 1, 0
        %v1378 = vsel %vm1346, 1, 0
        %v1379 = vsel %vm1347, 1, 0
        %v1380 = vsel %vm1348, 1, 0
        %v1381 = vsel %vm1349, 1, 0
        %v1382 = vsel %vm1350, 1, 0
        %v1383 = vsel %vm1351, 1, 0
        %v1384 = vsel %vm1352, 1, 0
        %v1385 = vsel %vm1353, 1, 0
        %v1386 = vsel %vm1354, 1, 0
        %v1387 = vsel %vm1355, 1, 0
        %v1388 = vsel %vm1356, 1, 0
        %v1389 = vsel %vm1357, 1, 0
        %v1390 = vsel %vm1358, 1, 0
        %v1391 = vsel %vm1359, 1, 0
        %v1392 = vsel %vm1360, 1, 0
        %v1393 = vsel %vm1361, 1, 0
        %v1394 = vsel %vm1362, 1, 0
        %v1395 = vsel %vm1363, 1, 0
        %v1396 = vsel %vm1364, 1, 0
        %v1397 = vsel %vm1365, 1, 0
        %v1398 = vsel %vm1366, 1, 0
        %v1399 = vsel %vm1367, 1, 0
        %v1400 = vcvt.s32.f32 %v1368
        %v1401 = vcvt.s32.f32 %v1369
        %v1402 = vcvt.s32.f32 %v1370
        %v1403 = vcvt.s32.f32 %v1371
        %v1404 = vcvt.s32.f32 %v1372
        %v1405 = vcvt.s32.f32 %v1373
        %v1406 = vcvt.s32.f32 %v1374
        %v1407 = vcvt.s32.f32 %v1375
        %v1408 = vcvt.s32.f32 %v1376
        %v1409 = vcvt.s32.f32 %v1377
        %v1410 = vcvt.s32.f32 %v1378
        %v1411 = vcvt.s32.f32 %v1379
        %v1412 = vcvt.s32.f32 %v1380
        %v1413 = vcvt.s32.f32 %v1381
        %v1414 = vcvt.s32.f32 %v1382
        %v1415 = vcvt.s32.f32 %v1383
        %v1416 = vcvt.s32.f32 %v1384
        %v1417 = vcvt.s32.f32 %v1385
        %v1418 = vcvt.s32.f32 %v1386
        %v1419 = vcvt.s32.f32 %v1387
        %v1420 = vcvt.s32.f32 %v1388
        %v1421 = vcvt.s32.f32 %v1389
        %v1422 = vcvt.s32.f32 %v1390
        %v1423 = vcvt.s32.f32 %v1391
        %v1424 = vcvt.s32.f32 %v1392
        %v1425 = vcvt.s32.f32 %v1393
        %v1426 = vcvt.s32.f32 %v1394
        %v1427 = vcvt.s32.f32 %v1395
        %v1428 = vcvt.s32.f32 %v1396
        %v1429 = vcvt.s32.f32 %v1397
        %v1430 = vcvt.s32.f32 %v1398
        %v1431 = vcvt.s32.f32 %v1399
        %vm1432 = vcmp.lt.s32.totalorder %v1304, 14
        %vm1433 = vcmp.lt.s32.totalorder %v1305, 14
        %vm1434 = vcmp.lt.s32.totalorder %v1306, 14
        %vm1435 = vcmp.lt.s32.totalorder %v1307, 14
        %vm1436 = vcmp.lt.s32.totalorder %v1308, 14
        %vm1437 = vcmp.lt.s32.totalorder %v1309, 14
        %vm1438 = vcmp.lt.s32.totalorder %v1310, 14
        %vm1439 = vcmp.lt.s32.totalorder %v1311, 14
        %vm1440 = vcmp.lt.s32.totalorder %v1312, 14
        %vm1441 = vcmp.lt.s32.totalorder %v1313, 14
        %vm1442 = vcmp.lt.s32.totalorder %v1314, 14
        %vm1443 = vcmp.lt.s32.totalorder %v1315, 14
        %vm1444 = vcmp.lt.s32.totalorder %v1316, 14
        %vm1445 = vcmp.lt.s32.totalorder %v1317, 14
        %vm1446 = vcmp.lt.s32.totalorder %v1318, 14
        %vm1447 = vcmp.lt.s32.totalorder %v1319, 14
        %vm1448 = vcmp.lt.s32.totalorder %v1320, 14
        %vm1449 = vcmp.lt.s32.totalorder %v1321, 14
        %vm1450 = vcmp.lt.s32.totalorder %v1322, 14
        %vm1451 = vcmp.lt.s32.totalorder %v1323, 14
        %vm1452 = vcmp.lt.s32.totalorder %v1324, 14
        %vm1453 = vcmp.lt.s32.totalorder %v1325, 14
        %vm1454 = vcmp.lt.s32.totalorder %v1326, 14
        %vm1455 = vcmp.lt.s32.totalorder %v1327, 14
        %vm1456 = vcmp.lt.s32.totalorder %v1328, 14
        %vm1457 = vcmp.lt.s32.totalorder %v1329, 14
        %vm1458 = vcmp.lt.s32.totalorder %v1330, 14
        %vm1459 = vcmp.lt.s32.totalorder %v1331, 14
        %vm1460 = vcmp.lt.s32.totalorder %v1332, 14
        %vm1461 = vcmp.lt.s32.totalorder %v1333, 14
        %vm1462 = vcmp.lt.s32.totalorder %v1334, 14
        %vm1463 = vcmp.lt.s32.totalorder %v1335, 14
        %v1464 = vsel %vm1432, 1, 0
        %v1465 = vsel %vm1433, 1, 0
        %v1466 = vsel %vm1434, 1, 0
        %v1467 = vsel %vm1435, 1, 0
        %v1468 = vsel %vm1436, 1, 0
        %v1469 = vsel %vm1437, 1, 0
        %v1470 = vsel %vm1438, 1, 0
        %v1471 = vsel %vm1439, 1, 0
        %v1472 = vsel %vm1440, 1, 0
        %v1473 = vsel %vm1441, 1, 0
        %v1474 = vsel %vm1442, 1, 0
        %v1475 = vsel %vm1443, 1, 0
        %v1476 = vsel %vm1444, 1, 0
        %v1477 = vsel %vm1445, 1, 0
        %v1478 = vsel %vm1446, 1, 0
        %v1479 = vsel %vm1447, 1, 0
        %v1480 = vsel %vm1448, 1, 0
        %v1481 = vsel %vm1449, 1, 0
        %v1482 = vsel %vm1450, 1, 0
        %v1483 = vsel %vm1451, 1, 0
        %v1484 = vsel %vm1452, 1, 0
        %v1485 = vsel %vm1453, 1, 0
        %v1486 = vsel %vm1454, 1, 0
        %v1487 = vsel %vm1455, 1, 0
        %v1488 = vsel %vm1456, 1, 0
        %v1489 = vsel %vm1457, 1, 0
        %v1490 = vsel %vm1458, 1, 0
        %v1491 = vsel %vm1459, 1, 0
        %v1492 = vsel %vm1460, 1, 0
        %v1493 = vsel %vm1461, 1, 0
        %v1494 = vsel %vm1462, 1, 0
        %v1495 = vsel %vm1463, 1, 0
        %v1496 = vcvt.s32.f32 %v1464
        %v1497 = vcvt.s32.f32 %v1465
        %v1498 = vcvt.s32.f32 %v1466
        %v1499 = vcvt.s32.f32 %v1467
        %v1500 = vcvt.s32.f32 %v1468
        %v1501 = vcvt.s32.f32 %v1469
        %v1502 = vcvt.s32.f32 %v1470
        %v1503 = vcvt.s32.f32 %v1471
        %v1504 = vcvt.s32.f32 %v1472
        %v1505 = vcvt.s32.f32 %v1473
        %v1506 = vcvt.s32.f32 %v1474
        %v1507 = vcvt.s32.f32 %v1475
        %v1508 = vcvt.s32.f32 %v1476
        %v1509 = vcvt.s32.f32 %v1477
        %v1510 = vcvt.s32.f32 %v1478
        %v1511 = vcvt.s32.f32 %v1479
        %v1512 = vcvt.s32.f32 %v1480
        %v1513 = vcvt.s32.f32 %v1481
        %v1514 = vcvt.s32.f32 %v1482
        %v1515 = vcvt.s32.f32 %v1483
        %v1516 = vcvt.s32.f32 %v1484
        %v1517 = vcvt.s32.f32 %v1485
        %v1518 = vcvt.s32.f32 %v1486
        %v1519 = vcvt.s32.f32 %v1487
        %v1520 = vcvt.s32.f32 %v1488
        %v1521 = vcvt.s32.f32 %v1489
        %v1522 = vcvt.s32.f32 %v1490
        %v1523 = vcvt.s32.f32 %v1491
        %v1524 = vcvt.s32.f32 %v1492
        %v1525 = vcvt.s32.f32 %v1493
        %v1526 = vcvt.s32.f32 %v1494
        %v1527 = vcvt.s32.f32 %v1495
        %vm1528 = vcmp.ge.s32.totalorder %v1304, 3
        %vm1529 = vcmp.ge.s32.totalorder %v1305, 3
        %vm1530 = vcmp.ge.s32.totalorder %v1306, 3
        %vm1531 = vcmp.ge.s32.totalorder %v1307, 3
        %vm1532 = vcmp.ge.s32.totalorder %v1308, 3
        %vm1533 = vcmp.ge.s32.totalorder %v1309, 3
        %vm1534 = vcmp.ge.s32.totalorder %v1310, 3
        %vm1535 = vcmp.ge.s32.totalorder %v1311, 3
        %vm1536 = vcmp.ge.s32.totalorder %v1312, 3
        %vm1537 = vcmp.ge.s32.totalorder %v1313, 3
        %vm1538 = vcmp.ge.s32.totalorder %v1314, 3
        %vm1539 = vcmp.ge.s32.totalorder %v1315, 3
        %vm1540 = vcmp.ge.s32.totalorder %v1316, 3
        %vm1541 = vcmp.ge.s32.totalorder %v1317, 3
        %vm1542 = vcmp.ge.s32.totalorder %v1318, 3
        %vm1543 = vcmp.ge.s32.totalorder %v1319, 3
        %vm1544 = vcmp.ge.s32.totalorder %v1320, 3
        %vm1545 = vcmp.ge.s32.totalorder %v1321, 3
        %vm1546 = vcmp.ge.s32.totalorder %v1322, 3
        %vm1547 = vcmp.ge.s32.totalorder %v1323, 3
        %vm1548 = vcmp.ge.s32.totalorder %v1324, 3
        %vm1549 = vcmp.ge.s32.totalorder %v1325, 3
        %vm1550 = vcmp.ge.s32.totalorder %v1326, 3
        %vm1551 = vcmp.ge.s32.totalorder %v1327, 3
        %vm1552 = vcmp.ge.s32.totalorder %v1328, 3
        %vm1553 = vcmp.ge.s32.totalorder %v1329, 3
        %vm1554 = vcmp.ge.s32.totalorder %v1330, 3
        %vm1555 = vcmp.ge.s32.totalorder %v1331, 3
        %vm1556 = vcmp.ge.s32.totalorder %v1332, 3
        %vm1557 = vcmp.ge.s32.totalorder %v1333, 3
        %vm1558 = vcmp.ge.s32.totalorder %v1334, 3
        %vm1559 = vcmp.ge.s32.totalorder %v1335, 3
        %v1560 = vsel %vm1528, 1, 0
        %v1561 = vsel %vm1529, 1, 0
        %v1562 = vsel %vm1530, 1, 0
        %v1563 = vsel %vm1531, 1, 0
        %v1564 = vsel %vm1532, 1, 0
        %v1565 = vsel %vm1533, 1, 0
        %v1566 = vsel %vm1534, 1, 0
        %v1567 = vsel %vm1535, 1, 0
        %v1568 = vsel %vm1536, 1, 0
        %v1569 = vsel %vm1537, 1, 0
        %v1570 = vsel %vm1538, 1, 0
        %v1571 = vsel %vm1539, 1, 0
        %v1572 = vsel %vm1540, 1, 0
        %v1573 = vsel %vm1541, 1, 0
        %v1574 = vsel %vm1542, 1, 0
        %v1575 = vsel %vm1543, 1, 0
        %v1576 = vsel %vm1544, 1, 0
        %v1577 = vsel %vm1545, 1, 0
        %v1578 = vsel %vm1546, 1, 0
        %v1579 = vsel %vm1547, 1, 0
        %v1580 = vsel %vm1548, 1, 0
        %v1581 = vsel %vm1549, 1, 0
        %v1582 = vsel %vm1550, 1, 0
        %v1583 = vsel %vm1551, 1, 0
        %v1584 = vsel %vm1552, 1, 0
        %v1585 = vsel %vm1553, 1, 0
        %v1586 = vsel %vm1554, 1, 0
        %v1587 = vsel %vm1555, 1, 0
        %v1588 = vsel %vm1556, 1, 0
        %v1589 = vsel %vm1557, 1, 0
        %v1590 = vsel %vm1558, 1, 0
        %v1591 = vsel %vm1559, 1, 0
        %v1592 = vcvt.s32.f32 %v1560
        %v1593 = vcvt.s32.f32 %v1561
        %v1594 = vcvt.s32.f32 %v1562
        %v1595 = vcvt.s32.f32 %v1563
        %v1596 = vcvt.s32.f32 %v1564
        %v1597 = vcvt.s32.f32 %v1565
        %v1598 = vcvt.s32.f32 %v1566
        %v1599 = vcvt.s32.f32 %v1567
        %v1600 = vcvt.s32.f32 %v1568
        %v1601 = vcvt.s32.f32 %v1569
        %v1602 = vcvt.s32.f32 %v1570
        %v1603 = vcvt.s32.f32 %v1571
        %v1604 = vcvt.s32.f32 %v1572
        %v1605 = vcvt.s32.f32 %v1573
        %v1606 = vcvt.s32.f32 %v1574
        %v1607 = vcvt.s32.f32 %v1575
        %v1608 = vcvt.s32.f32 %v1576
        %v1609 = vcvt.s32.f32 %v1577
        %v1610 = vcvt.s32.f32 %v1578
        %v1611 = vcvt.s32.f32 %v1579
        %v1612 = vcvt.s32.f32 %v1580
        %v1613 = vcvt.s32.f32 %v1581
        %v1614 = vcvt.s32.f32 %v1582
        %v1615 = vcvt.s32.f32 %v1583
        %v1616 = vcvt.s32.f32 %v1584
        %v1617 = vcvt.s32.f32 %v1585
        %v1618 = vcvt.s32.f32 %v1586
        %v1619 = vcvt.s32.f32 %v1587
        %v1620 = vcvt.s32.f32 %v1588
        %v1621 = vcvt.s32.f32 %v1589
        %v1622 = vcvt.s32.f32 %v1590
        %v1623 = vcvt.s32.f32 %v1591
        %vm1624 = vcmp.lt.s32.totalorder %v1304, 13
        %vm1625 = vcmp.lt.s32.totalorder %v1305, 13
        %vm1626 = vcmp.lt.s32.totalorder %v1306, 13
        %vm1627 = vcmp.lt.s32.totalorder %v1307, 13
        %vm1628 = vcmp.lt.s32.totalorder %v1308, 13
        %vm1629 = vcmp.lt.s32.totalorder %v1309, 13
        %vm1630 = vcmp.lt.s32.totalorder %v1310, 13
        %vm1631 = vcmp.lt.s32.totalorder %v1311, 13
        %vm1632 = vcmp.lt.s32.totalorder %v1312, 13
        %vm1633 = vcmp.lt.s32.totalorder %v1313, 13
        %vm1634 = vcmp.lt.s32.totalorder %v1314, 13
        %vm1635 = vcmp.lt.s32.totalorder %v1315, 13
        %vm1636 = vcmp.lt.s32.totalorder %v1316, 13
        %vm1637 = vcmp.lt.s32.totalorder %v1317, 13
        %vm1638 = vcmp.lt.s32.totalorder %v1318, 13
        %vm1639 = vcmp.lt.s32.totalorder %v1319, 13
        %vm1640 = vcmp.lt.s32.totalorder %v1320, 13
        %vm1641 = vcmp.lt.s32.totalorder %v1321, 13
        %vm1642 = vcmp.lt.s32.totalorder %v1322, 13
        %vm1643 = vcmp.lt.s32.totalorder %v1323, 13
        %vm1644 = vcmp.lt.s32.totalorder %v1324, 13
        %vm1645 = vcmp.lt.s32.totalorder %v1325, 13
        %vm1646 = vcmp.lt.s32.totalorder %v1326, 13
        %vm1647 = vcmp.lt.s32.totalorder %v1327, 13
        %vm1648 = vcmp.lt.s32.totalorder %v1328, 13
        %vm1649 = vcmp.lt.s32.totalorder %v1329, 13
        %vm1650 = vcmp.lt.s32.totalorder %v1330, 13
        %vm1651 = vcmp.lt.s32.totalorder %v1331, 13
        %vm1652 = vcmp.lt.s32.totalorder %v1332, 13
        %vm1653 = vcmp.lt.s32.totalorder %v1333, 13
        %vm1654 = vcmp.lt.s32.totalorder %v1334, 13
        %vm1655 = vcmp.lt.s32.totalorder %v1335, 13
        %v1656 = vsel %vm1624, 1, 0
        %v1657 = vsel %vm1625, 1, 0
        %v1658 = vsel %vm1626, 1, 0
        %v1659 = vsel %vm1627, 1, 0
        %v1660 = vsel %vm1628, 1, 0
        %v1661 = vsel %vm1629, 1, 0
        %v1662 = vsel %vm1630, 1, 0
        %v1663 = vsel %vm1631, 1, 0
        %v1664 = vsel %vm1632, 1, 0
        %v1665 = vsel %vm1633, 1, 0
        %v1666 = vsel %vm1634, 1, 0
        %v1667 = vsel %vm1635, 1, 0
        %v1668 = vsel %vm1636, 1, 0
        %v1669 = vsel %vm1637, 1, 0
        %v1670 = vsel %vm1638, 1, 0
        %v1671 = vsel %vm1639, 1, 0
        %v1672 = vsel %vm1640, 1, 0
        %v1673 = vsel %vm1641, 1, 0
        %v1674 = vsel %vm1642, 1, 0
        %v1675 = vsel %vm1643, 1, 0
        %v1676 = vsel %vm1644, 1, 0
        %v1677 = vsel %vm1645, 1, 0
        %v1678 = vsel %vm1646, 1, 0
        %v1679 = vsel %vm1647, 1, 0
        %v1680 = vsel %vm1648, 1, 0
        %v1681 = vsel %vm1649, 1, 0
        %v1682 = vsel %vm1650, 1, 0
        %v1683 = vsel %vm1651, 1, 0
        %v1684 = vsel %vm1652, 1, 0
        %v1685 = vsel %vm1653, 1, 0
        %v1686 = vsel %vm1654, 1, 0
        %v1687 = vsel %vm1655, 1, 0
        %v1688 = vcvt.s32.f32 %v1656
        %v1689 = vcvt.s32.f32 %v1657
        %v1690 = vcvt.s32.f32 %v1658
        %v1691 = vcvt.s32.f32 %v1659
        %v1692 = vcvt.s32.f32 %v1660
        %v1693 = vcvt.s32.f32 %v1661
        %v1694 = vcvt.s32.f32 %v1662
        %v1695 = vcvt.s32.f32 %v1663
        %v1696 = vcvt.s32.f32 %v1664
        %v1697 = vcvt.s32.f32 %v1665
        %v1698 = vcvt.s32.f32 %v1666
        %v1699 = vcvt.s32.f32 %v1667
        %v1700 = vcvt.s32.f32 %v1668
        %v1701 = vcvt.s32.f32 %v1669
        %v1702 = vcvt.s32.f32 %v1670
        %v1703 = vcvt.s32.f32 %v1671
        %v1704 = vcvt.s32.f32 %v1672
        %v1705 = vcvt.s32.f32 %v1673
        %v1706 = vcvt.s32.f32 %v1674
        %v1707 = vcvt.s32.f32 %v1675
        %v1708 = vcvt.s32.f32 %v1676
        %v1709 = vcvt.s32.f32 %v1677
        %v1710 = vcvt.s32.f32 %v1678
        %v1711 = vcvt.s32.f32 %v1679
        %v1712 = vcvt.s32.f32 %v1680
        %v1713 = vcvt.s32.f32 %v1681
        %v1714 = vcvt.s32.f32 %v1682
        %v1715 = vcvt.s32.f32 %v1683
        %v1716 = vcvt.s32.f32 %v1684
        %v1717 = vcvt.s32.f32 %v1685
        %v1718 = vcvt.s32.f32 %v1686
        %v1719 = vcvt.s32.f32 %v1687
        %vm1720 = vcmp.ge.s32.totalorder %v1304, 4
        %vm1721 = vcmp.ge.s32.totalorder %v1305, 4
        %vm1722 = vcmp.ge.s32.totalorder %v1306, 4
        %vm1723 = vcmp.ge.s32.totalorder %v1307, 4
        %vm1724 = vcmp.ge.s32.totalorder %v1308, 4
        %vm1725 = vcmp.ge.s32.totalorder %v1309, 4
        %vm1726 = vcmp.ge.s32.totalorder %v1310, 4
        %vm1727 = vcmp.ge.s32.totalorder %v1311, 4
        %vm1728 = vcmp.ge.s32.totalorder %v1312, 4
        %vm1729 = vcmp.ge.s32.totalorder %v1313, 4
        %vm1730 = vcmp.ge.s32.totalorder %v1314, 4
        %vm1731 = vcmp.ge.s32.totalorder %v1315, 4
        %vm1732 = vcmp.ge.s32.totalorder %v1316, 4
        %vm1733 = vcmp.ge.s32.totalorder %v1317, 4
        %vm1734 = vcmp.ge.s32.totalorder %v1318, 4
        %vm1735 = vcmp.ge.s32.totalorder %v1319, 4
        %vm1736 = vcmp.ge.s32.totalorder %v1320, 4
        %vm1737 = vcmp.ge.s32.totalorder %v1321, 4
        %vm1738 = vcmp.ge.s32.totalorder %v1322, 4
        %vm1739 = vcmp.ge.s32.totalorder %v1323, 4
        %vm1740 = vcmp.ge.s32.totalorder %v1324, 4
        %vm1741 = vcmp.ge.s32.totalorder %v1325, 4
        %vm1742 = vcmp.ge.s32.totalorder %v1326, 4
        %vm1743 = vcmp.ge.s32.totalorder %v1327, 4
        %vm1744 = vcmp.ge.s32.totalorder %v1328, 4
        %vm1745 = vcmp.ge.s32.totalorder %v1329, 4
        %vm1746 = vcmp.ge.s32.totalorder %v1330, 4
        %vm1747 = vcmp.ge.s32.totalorder %v1331, 4
        %vm1748 = vcmp.ge.s32.totalorder %v1332, 4
        %vm1749 = vcmp.ge.s32.totalorder %v1333, 4
        %vm1750 = vcmp.ge.s32.totalorder %v1334, 4
        %vm1751 = vcmp.ge.s32.totalorder %v1335, 4
        %v1752 = vsel %vm1720, 1, 0
        %v1753 = vsel %vm1721, 1, 0
        %v1754 = vsel %vm1722, 1, 0
        %v1755 = vsel %vm1723, 1, 0
        %v1756 = vsel %vm1724, 1, 0
        %v1757 = vsel %vm1725, 1, 0
        %v1758 = vsel %vm1726, 1, 0
        %v1759 = vsel %vm1727, 1, 0
        %v1760 = vsel %vm1728, 1, 0
        %v1761 = vsel %vm1729, 1, 0
        %v1762 = vsel %vm1730, 1, 0
        %v1763 = vsel %vm1731, 1, 0
        %v1764 = vsel %vm1732, 1, 0
        %v1765 = vsel %vm1733, 1, 0
        %v1766 = vsel %vm1734, 1, 0
        %v1767 = vsel %vm1735, 1, 0
        %v1768 = vsel %vm1736, 1, 0
        %v1769 = vsel %vm1737, 1, 0
        %v1770 = vsel %vm1738, 1, 0
        %v1771 = vsel %vm1739, 1, 0
        %v1772 = vsel %vm1740, 1, 0
        %v1773 = vsel %vm1741, 1, 0
        %v1774 = vsel %vm1742, 1, 0
        %v1775 = vsel %vm1743, 1, 0
        %v1776 = vsel %vm1744, 1, 0
        %v1777 = vsel %vm1745, 1, 0
        %v1778 = vsel %vm1746, 1, 0
        %v1779 = vsel %vm1747, 1, 0
        %v1780 = vsel %vm1748, 1, 0
        %v1781 = vsel %vm1749, 1, 0
        %v1782 = vsel %vm1750, 1, 0
        %v1783 = vsel %vm1751, 1, 0
        %v1784 = vcvt.s32.f32 %v1752
        %v1785 = vcvt.s32.f32 %v1753
        %v1786 = vcvt.s32.f32 %v1754
        %v1787 = vcvt.s32.f32 %v1755
        %v1788 = vcvt.s32.f32 %v1756
        %v1789 = vcvt.s32.f32 %v1757
        %v1790 = vcvt.s32.f32 %v1758
        %v1791 = vcvt.s32.f32 %v1759
        %v1792 = vcvt.s32.f32 %v1760
        %v1793 = vcvt.s32.f32 %v1761
        %v1794 = vcvt.s32.f32 %v1762
        %v1795 = vcvt.s32.f32 %v1763
        %v1796 = vcvt.s32.f32 %v1764
        %v1797 = vcvt.s32.f32 %v1765
        %v1798 = vcvt.s32.f32 %v1766
        %v1799 = vcvt.s32.f32 %v1767
        %v1800 = vcvt.s32.f32 %v1768
        %v1801 = vcvt.s32.f32 %v1769
        %v1802 = vcvt.s32.f32 %v1770
        %v1803 = vcvt.s32.f32 %v1771
        %v1804 = vcvt.s32.f32 %v1772
        %v1805 = vcvt.s32.f32 %v1773
        %v1806 = vcvt.s32.f32 %v1774
        %v1807 = vcvt.s32.f32 %v1775
        %v1808 = vcvt.s32.f32 %v1776
        %v1809 = vcvt.s32.f32 %v1777
        %v1810 = vcvt.s32.f32 %v1778
        %v1811 = vcvt.s32.f32 %v1779
        %v1812 = vcvt.s32.f32 %v1780
        %v1813 = vcvt.s32.f32 %v1781
        %v1814 = vcvt.s32.f32 %v1782
        %v1815 = vcvt.s32.f32 %v1783
        %vm1816 = vcmp.lt.s32.totalorder %v1304, 12
        %vm1817 = vcmp.lt.s32.totalorder %v1305, 12
        %vm1818 = vcmp.lt.s32.totalorder %v1306, 12
        %vm1819 = vcmp.lt.s32.totalorder %v1307, 12
        %vm1820 = vcmp.lt.s32.totalorder %v1308, 12
        %vm1821 = vcmp.lt.s32.totalorder %v1309, 12
        %vm1822 = vcmp.lt.s32.totalorder %v1310, 12
        %vm1823 = vcmp.lt.s32.totalorder %v1311, 12
        %vm1824 = vcmp.lt.s32.totalorder %v1312, 12
        %vm1825 = vcmp.lt.s32.totalorder %v1313, 12
        %vm1826 = vcmp.lt.s32.totalorder %v1314, 12
        %vm1827 = vcmp.lt.s32.totalorder %v1315, 12
        %vm1828 = vcmp.lt.s32.totalorder %v1316, 12
        %vm1829 = vcmp.lt.s32.totalorder %v1317, 12
        %vm1830 = vcmp.lt.s32.totalorder %v1318, 12
        %vm1831 = vcmp.lt.s32.totalorder %v1319, 12
        %vm1832 = vcmp.lt.s32.totalorder %v1320, 12
        %vm1833 = vcmp.lt.s32.totalorder %v1321, 12
        %vm1834 = vcmp.lt.s32.totalorder %v1322, 12
        %vm1835 = vcmp.lt.s32.totalorder %v1323, 12
        %vm1836 = vcmp.lt.s32.totalorder %v1324, 12
        %vm1837 = vcmp.lt.s32.totalorder %v1325, 12
        %vm1838 = vcmp.lt.s32.totalorder %v1326, 12
        %vm1839 = vcmp.lt.s32.totalorder %v1327, 12
        %vm1840 = vcmp.lt.s32.totalorder %v1328, 12
        %vm1841 = vcmp.lt.s32.totalorder %v1329, 12
        %vm1842 = vcmp.lt.s32.totalorder %v1330, 12
        %vm1843 = vcmp.lt.s32.totalorder %v1331, 12
        %vm1844 = vcmp.lt.s32.totalorder %v1332, 12
        %vm1845 = vcmp.lt.s32.totalorder %v1333, 12
        %vm1846 = vcmp.lt.s32.totalorder %v1334, 12
        %vm1847 = vcmp.lt.s32.totalorder %v1335, 12
        %v1848 = vsel %vm1816, 1, 0
        %v1849 = vsel %vm1817, 1, 0
        %v1850 = vsel %vm1818, 1, 0
        %v1851 = vsel %vm1819, 1, 0
        %v1852 = vsel %vm1820, 1, 0
        %v1853 = vsel %vm1821, 1, 0
        %v1854 = vsel %vm1822, 1, 0
        %v1855 = vsel %vm1823, 1, 0
        %v1856 = vsel %vm1824, 1, 0
        %v1857 = vsel %vm1825, 1, 0
        %v1858 = vsel %vm1826, 1, 0
        %v1859 = vsel %vm1827, 1, 0
        %v1860 = vsel %vm1828, 1, 0
        %v1861 = vsel %vm1829, 1, 0
        %v1862 = vsel %vm1830, 1, 0
        %v1863 = vsel %vm1831, 1, 0
        %v1864 = vsel %vm1832, 1, 0
        %v1865 = vsel %vm1833, 1, 0
        %v1866 = vsel %vm1834, 1, 0
        %v1867 = vsel %vm1835, 1, 0
        %v1868 = vsel %vm1836, 1, 0
        %v1869 = vsel %vm1837, 1, 0
        %v1870 = vsel %vm1838, 1, 0
        %v1871 = vsel %vm1839, 1, 0
        %v1872 = vsel %vm1840, 1, 0
        %v1873 = vsel %vm1841, 1, 0
        %v1874 = vsel %vm1842, 1, 0
        %v1875 = vsel %vm1843, 1, 0
        %v1876 = vsel %vm1844, 1, 0
        %v1877 = vsel %vm1845, 1, 0
        %v1878 = vsel %vm1846, 1, 0
        %v1879 = vsel %vm1847, 1, 0
        %v1880 = vcvt.s32.f32 %v1848
        %v1881 = vcvt.s32.f32 %v1849
        %v1882 = vcvt.s32.f32 %v1850
        %v1883 = vcvt.s32.f32 %v1851
        %v1884 = vcvt.s32.f32 %v1852
        %v1885 = vcvt.s32.f32 %v1853
        %v1886 = vcvt.s32.f32 %v1854
        %v1887 = vcvt.s32.f32 %v1855
        %v1888 = vcvt.s32.f32 %v1856
        %v1889 = vcvt.s32.f32 %v1857
        %v1890 = vcvt.s32.f32 %v1858
        %v1891 = vcvt.s32.f32 %v1859
        %v1892 = vcvt.s32.f32 %v1860
        %v1893 = vcvt.s32.f32 %v1861
        %v1894 = vcvt.s32.f32 %v1862
        %v1895 = vcvt.s32.f32 %v1863
        %v1896 = vcvt.s32.f32 %v1864
        %v1897 = vcvt.s32.f32 %v1865
        %v1898 = vcvt.s32.f32 %v1866
        %v1899 = vcvt.s32.f32 %v1867
        %v1900 = vcvt.s32.f32 %v1868
        %v1901 = vcvt.s32.f32 %v1869
        %v1902 = vcvt.s32.f32 %v1870
        %v1903 = vcvt.s32.f32 %v1871
        %v1904 = vcvt.s32.f32 %v1872
        %v1905 = vcvt.s32.f32 %v1873
        %v1906 = vcvt.s32.f32 %v1874
        %v1907 = vcvt.s32.f32 %v1875
        %v1908 = vcvt.s32.f32 %v1876
        %v1909 = vcvt.s32.f32 %v1877
        %v1910 = vcvt.s32.f32 %v1878
        %v1911 = vcvt.s32.f32 %v1879
        %1912 = vst [vmem:[#allocation2] sm:$0xff] 0.0
        %1913 = vst [vmem:[#allocation2 + $0x8] sm:$0xff] 0.0
        %1914 = vst [vmem:[#allocation2 + $0x10] sm:$0xff] 0.0
        %1915 = vst [vmem:[#allocation2 + $0x18] sm:$0xff] 0.0
        %1916 = vst [vmem:[#allocation2 + $0x20] sm:$0xff] 0.0
        %1917 = vst [vmem:[#allocation2 + $0x28] sm:$0xff] 0.0
        %1918 = vst [vmem:[#allocation2 + $0x30] sm:$0xff] 0.0
        %1919 = vst [vmem:[#allocation2 + $0x38] sm:$0xff] 0.0
        %1920 = vst [vmem:[#allocation2 + $0x40] sm:$0xff] 0.0
        %1921 = vst [vmem:[#allocation2 + $0x148] sm:$0xff] 0.0
        %1922 = vst [vmem:[#allocation2 + $0x150] sm:$0xff] 0.0
        %1923 = vst [vmem:[#allocation2 + $0x158] sm:$0xff] 0.0
        %1924 = vst [vmem:[#allocation2 + $0x160] sm:$0xff] 0.0
        %1925 = vst [vmem:[#allocation2 + $0x168] sm:$0xff] 0.0
        %1926 = vst [vmem:[#allocation2 + $0x170] sm:$0xff] 0.0
        %1927 = vst [vmem:[#allocation2 + $0x178] sm:$0xff] 0.0
        %1928 = vst [vmem:[#allocation2 + $0x180] sm:$0xff] 0.0
        %1929 = vst [vmem:[#allocation2 + $0x188] sm:$0xff] 0.0
        %v1930 = vpack.c.bf16 %v872, %v871
        %v1931 = vpack.c.bf16 %v874, %v873
        %v1932 = vpack.c.bf16 %v876, %v875
        %v1933 = vpack.c.bf16 %v878, %v877
        %v1934 = vpack.c.bf16 %v880, %v879
        %v1935 = vpack.c.bf16 %v882, %v881
        %v1936 = vpack.c.bf16 %v884, %v883
        %v1937 = vpack.c.bf16 %v886, %v885
        %v1938 = vpack.c.bf16 %v904, %v903
        %v1939 = vpack.c.bf16 %v906, %v905
        %v1940 = vpack.c.bf16 %v908, %v907
        %v1941 = vpack.c.bf16 %v910, %v909
        %v1942 = vpack.c.bf16 %v912, %v911
        %v1943 = vpack.c.bf16 %v914, %v913
        %v1944 = vpack.c.bf16 %v916, %v915
        %v1945 = vpack.c.bf16 %v918, %v917
        %v1946 = vld [vmem:[%s1] sm:$0xf]
        %v1947 = vld [vmem:[%s1 + $0x4] sm:$0xf]
        %v1948 = vld [vmem:[%s1 + $0x8] sm:$0xf]
        %v1949 = vld [vmem:[%s1 + $0xc] sm:$0xf]
        %v1950 = vld [vmem:[%s1 + $0x10] sm:$0xf]
        %v1951 = vld [vmem:[%s1 + $0x14] sm:$0xf]
        %v1952 = vld [vmem:[%s1 + $0x18] sm:$0xf]
        %v1953 = vld [vmem:[%s1 + $0x1c] sm:$0xf]
        %v1954 = vld [vmem:[#allocation6] sm:$0x1]
        %v1956 = vperm.slane %v1954, 0
        %v1966 = vunpack.c.l.b16 %v1946
        %v1967 = vunpack.c.l.b16 %v1947
        %v1968 = vunpack.c.l.b16 %v1948
        %v1969 = vunpack.c.l.b16 %v1949
        %v1970 = vunpack.c.l.b16 %v1950
        %v1971 = vunpack.c.l.b16 %v1951
        %v1972 = vunpack.c.l.b16 %v1952
        %v1973 = vunpack.c.l.b16 %v1953
        %v1974 = vpack.c.b16 %v1967, %v1966
        %v1975 = vpack.c.b16 %v1969, %v1968
        %v1976 = vpack.c.b16 %v1971, %v1970
        %v1977 = vpack.c.b16 %v1973, %v1972
        %vm1982 = vcmask 523264
        %v1984 = vsel %vm1982, %v1930, 0
        %v1987 = vsel %vm1982, %v1931, 0
        %v1990 = vsel %vm1982, %v1932, 0
        %v1993 = vsel %vm1982, %v1933, 0
        %v1996 = vsel %vm1982, %v1934, 0
        %v1999 = vsel %vm1982, %v1935, 0
        %v2002 = vsel %vm1982, %v1936, 0
        %v2005 = vsel %vm1982, %v1937, 0
        %v2008 = vsel %vm1982, %v1938, 0
        %v2011 = vsel %vm1982, %v1939, 0
        %v2014 = vsel %vm1982, %v1940, 0
        %v2017 = vsel %vm1982, %v1941, 0
        %v2020 = vsel %vm1982, %v1942, 0
        %v2023 = vsel %vm1982, %v1943, 0
        %v2026 = vsel %vm1982, %v1944, 0
        %v2029 = vsel %vm1982, %v1945, 0
        %2031 = vmatpush.bf16.msra.mxu0 0
        %2032 = vmatpush.bf16.msra.mxu0 0
        %2033 = vmatpush.bf16.msra.mxu0 0
        %2034 = vmatpush.bf16.msra.mxu0 0
        %2035 = vmatpush.bf16.msra.mxu0 %v1977
        %2036 = vmatpush.bf16.msra.mxu0 %v1976
        %2037 = vmatpush.bf16.msra.mxu0 %v1975
        %2038 = vmatpush.bf16.msra.mxu0 %v1974
        %2039 = vmatmul.bf16.gmra.mxu0 %v1984
        %v2040 = vpop.f32.mrf.mxu0
        %v2041 = vadd.f32 %v1956, %v2040
        %v2042 = vpop.f32.mrf.mxu0
        %v2043 = vadd.f32 %v1956, %v2042
        %2044 = vmatmul.bf16.gmra.mxu0 %v1987
        %v2045 = vpop.f32.mrf.mxu0
        %v2046 = vadd.f32 %v1956, %v2045
        %v2047 = vpop.f32.mrf.mxu0
        %v2048 = vadd.f32 %v1956, %v2047
        %2049 = vmatmul.bf16.gmra.mxu0 %v1990
        %v2050 = vpop.f32.mrf.mxu0
        %v2051 = vadd.f32 %v1956, %v2050
        %v2052 = vpop.f32.mrf.mxu0
        %v2053 = vadd.f32 %v1956, %v2052
        %2054 = vmatmul.bf16.gmra.mxu0 %v1993
        %v2055 = vpop.f32.mrf.mxu0
        %v2056 = vadd.f32 %v1956, %v2055
        %v2057 = vpop.f32.mrf.mxu0
        %v2058 = vadd.f32 %v1956, %v2057
        %2059 = vmatmul.bf16.gmra.mxu0 %v1996
        %v2060 = vpop.f32.mrf.mxu0
        %v2061 = vadd.f32 %v1956, %v2060
        %v2062 = vpop.f32.mrf.mxu0
        %v2063 = vadd.f32 %v1956, %v2062
        %2064 = vmatmul.bf16.gmra.mxu0 %v1999
        %v2065 = vpop.f32.mrf.mxu0
        %v2066 = vadd.f32 %v1956, %v2065
        %v2067 = vpop.f32.mrf.mxu0
        %v2068 = vadd.f32 %v1956, %v2067
        %2069 = vmatmul.bf16.gmra.mxu0 %v2002
        %v2070 = vpop.f32.mrf.mxu0
        %v2071 = vadd.f32 %v1956, %v2070
        %v2072 = vpop.f32.mrf.mxu0
        %v2073 = vadd.f32 %v1956, %v2072
        %2074 = vmatmul.bf16.gmra.mxu0 %v2005
        %v2075 = vpop.f32.mrf.mxu0
        %v2076 = vadd.f32 %v1956, %v2075
        %v2077 = vpop.f32.mrf.mxu0
        %v2078 = vadd.f32 %v1956, %v2077
        %2079 = vmatmul.bf16.gmra.mxu0 %v2008
        %v2080 = vpop.f32.mrf.mxu0
        %v2081 = vadd.f32 %v1956, %v2080
        %v2082 = vpop.f32.mrf.mxu0
        %v2083 = vadd.f32 %v1956, %v2082
        %2084 = vmatmul.bf16.gmra.mxu0 %v2011
        %v2085 = vpop.f32.mrf.mxu0
        %v2086 = vadd.f32 %v1956, %v2085
        %v2087 = vpop.f32.mrf.mxu0
        %v2088 = vadd.f32 %v1956, %v2087
        %2089 = vmatmul.bf16.gmra.mxu0 %v2014
        %v2090 = vpop.f32.mrf.mxu0
        %v2091 = vadd.f32 %v1956, %v2090
        %v2092 = vpop.f32.mrf.mxu0
        %v2093 = vadd.f32 %v1956, %v2092
        %2094 = vmatmul.bf16.gmra.mxu0 %v2017
        %v2095 = vpop.f32.mrf.mxu0
        %v2096 = vadd.f32 %v1956, %v2095
        %v2097 = vpop.f32.mrf.mxu0
        %v2098 = vadd.f32 %v1956, %v2097
        %2099 = vmatmul.bf16.gmra.mxu0 %v2020
        %v2100 = vpop.f32.mrf.mxu0
        %v2101 = vadd.f32 %v1956, %v2100
        %v2102 = vpop.f32.mrf.mxu0
        %v2103 = vadd.f32 %v1956, %v2102
        %2104 = vmatmul.bf16.gmra.mxu0 %v2023
        %v2105 = vpop.f32.mrf.mxu0
        %v2106 = vadd.f32 %v1956, %v2105
        %v2107 = vpop.f32.mrf.mxu0
        %v2108 = vadd.f32 %v1956, %v2107
        %2109 = vmatmul.bf16.gmra.mxu0 %v2026
        %v2110 = vpop.f32.mrf.mxu0
        %v2111 = vadd.f32 %v1956, %v2110
        %v2112 = vpop.f32.mrf.mxu0
        %v2113 = vadd.f32 %v1956, %v2112
        %2114 = vmatmul.bf16.gmra.mxu0 %v2029
        %v2115 = vpop.f32.mrf.mxu0
        %v2116 = vadd.f32 %v1956, %v2115
        %v2117 = vpop.f32.mrf.mxu0
        %v2118 = vadd.f32 %v1956, %v2117
        %2119 = vdwg.mxu0
        %v2120 = vmax.f32 %v2041, 0.0
        %v2121 = vmax.f32 %v2043, 0.0
        %v2122 = vmax.f32 %v2046, 0.0
        %v2123 = vmax.f32 %v2048, 0.0
        %v2124 = vmax.f32 %v2051, 0.0
        %v2125 = vmax.f32 %v2053, 0.0
        %v2126 = vmax.f32 %v2056, 0.0
        %v2127 = vmax.f32 %v2058, 0.0
        %v2128 = vmax.f32 %v2061, 0.0
        %v2129 = vmax.f32 %v2063, 0.0
        %v2130 = vmax.f32 %v2066, 0.0
        %v2131 = vmax.f32 %v2068, 0.0
        %v2132 = vmax.f32 %v2071, 0.0
        %v2133 = vmax.f32 %v2073, 0.0
        %v2134 = vmax.f32 %v2076, 0.0
        %v2135 = vmax.f32 %v2078, 0.0
        %v2136 = vmax.f32 %v2081, 0.0
        %v2137 = vmax.f32 %v2083, 0.0
        %v2138 = vmax.f32 %v2086, 0.0
        %v2139 = vmax.f32 %v2088, 0.0
        %v2140 = vmax.f32 %v2091, 0.0
        %v2141 = vmax.f32 %v2093, 0.0
        %v2142 = vmax.f32 %v2096, 0.0
        %v2143 = vmax.f32 %v2098, 0.0
        %v2144 = vmax.f32 %v2101, 0.0
        %v2145 = vmax.f32 %v2103, 0.0
        %v2146 = vmax.f32 %v2106, 0.0
        %v2147 = vmax.f32 %v2108, 0.0
        %v2148 = vmax.f32 %v2111, 0.0
        %v2149 = vmax.f32 %v2113, 0.0
        %v2150 = vmax.f32 %v2116, 0.0
        %v2151 = vmax.f32 %v2118, 0.0
        %2152 = vst [vmem:[#allocation2 + $0x48] sm:$0xff] %v2120
        %2153 = vst [vmem:[#allocation2 + $0x50] sm:$0xff] %v2121
        %2154 = vst [vmem:[#allocation2 + $0x58] sm:$0xff] %v2122
        %2155 = vst [vmem:[#allocation2 + $0x60] sm:$0xff] %v2123
        %2156 = vst [vmem:[#allocation2 + $0x68] sm:$0xff] %v2124
        %2157 = vst [vmem:[#allocation2 + $0x70] sm:$0xff] %v2125
        %2158 = vst [vmem:[#allocation2 + $0x78] sm:$0xff] %v2126
        %2159 = vst [vmem:[#allocation2 + $0x80] sm:$0xff] %v2127
        %2160 = vst [vmem:[#allocation2 + $0x88] sm:$0xff] %v2128
        %2161 = vst [vmem:[#allocation2 + $0x90] sm:$0xff] %v2129
        %2162 = vst [vmem:[#allocation2 + $0x98] sm:$0xff] %v2130
        %2163 = vst [vmem:[#allocation2 + $0xa0] sm:$0xff] %v2131
        %2164 = vst [vmem:[#allocation2 + $0xa8] sm:$0xff] %v2132
        %2165 = vst [vmem:[#allocation2 + $0xb0] sm:$0xff] %v2133
        %2166 = vst [vmem:[#allocation2 + $0xb8] sm:$0xff] %v2134
        %2167 = vst [vmem:[#allocation2 + $0xc0] sm:$0xff] %v2135
        %2168 = vst [vmem:[#allocation2 + $0xc8] sm:$0xff] %v2136
        %2169 = vst [vmem:[#allocation2 + $0xd0] sm:$0xff] %v2137
        %2170 = vst [vmem:[#allocation2 + $0xd8] sm:$0xff] %v2138
        %2171 = vst [vmem:[#allocation2 + $0xe0] sm:$0xff] %v2139
        %2172 = vst [vmem:[#allocation2 + $0xe8] sm:$0xff] %v2140
        %2173 = vst [vmem:[#allocation2 + $0xf0] sm:$0xff] %v2141
        %2174 = vst [vmem:[#allocation2 + $0xf8] sm:$0xff] %v2142
        %2175 = vst [vmem:[#allocation2 + $0x100] sm:$0xff] %v2143
        %2176 = vst [vmem:[#allocation2 + $0x108] sm:$0xff] %v2144
        %2177 = vst [vmem:[#allocation2 + $0x110] sm:$0xff] %v2145
        %2178 = vst [vmem:[#allocation2 + $0x118] sm:$0xff] %v2146
        %2179 = vst [vmem:[#allocation2 + $0x120] sm:$0xff] %v2147
        %2180 = vst [vmem:[#allocation2 + $0x128] sm:$0xff] %v2148
        %2181 = vst [vmem:[#allocation2 + $0x130] sm:$0xff] %v2149
        %2182 = vst [vmem:[#allocation2 + $0x138] sm:$0xff] %v2150
        %2183 = vst [vmem:[#allocation2 + $0x140] sm:$0xff] %v2151
        %v2184 = vld [vmem:[%s3] sm:$0xff]
        %v2185 = vld [vmem:[%s3 + $0x8] sm:$0x1]
        %v2186 = vld [vmem:[#allocation2 + $0x26] sm:$0xff]
        %v2187 = vld [vmem:[#allocation2 + $0x2e] sm:$0xff]
        %v2188 = vld [vmem:[#allocation2 + $0x36] sm:$0xff]
        %v2189 = vld [vmem:[#allocation2 + $0x3e] sm:$0xff]
        %v2190 = vld [vmem:[#allocation2 + $0x46] sm:$0xff]
        %v2191 = vld [vmem:[#allocation2 + $0x4e] sm:$0xff]
        %v2192 = vld [vmem:[#allocation2 + $0x56] sm:$0xff]
        %v2193 = vld [vmem:[#allocation2 + $0x5e] sm:$0xff]
        %v2194 = vld [vmem:[#allocation2 + $0x66] sm:$0xff]
        %v2195 = vld [vmem:[#allocation2 + $0x6e] sm:$0xff]
        %v2196 = vld [vmem:[#allocation2 + $0x76] sm:$0xff]
        %v2197 = vld [vmem:[#allocation2 + $0x7e] sm:$0xff]
        %v2198 = vld [vmem:[#allocation2 + $0x86] sm:$0xff]
        %v2199 = vld [vmem:[#allocation2 + $0x8e] sm:$0xff]
        %v2200 = vld [vmem:[#allocation2 + $0x96] sm:$0xff]
        %v2201 = vld [vmem:[#allocation2 + $0x9e] sm:$0xff]
        %v2202 = vld [vmem:[#allocation2 + $0xa6] sm:$0xff]
        %v2203 = vld [vmem:[#allocation2 + $0xae] sm:$0xff]
        %v2204 = vld [vmem:[#allocation2 + $0xb6] sm:$0xff]
        %v2205 = vld [vmem:[#allocation2 + $0xbe] sm:$0xff]
        %v2206 = vld [vmem:[#allocation2 + $0xc6] sm:$0xff]
        %v2207 = vld [vmem:[#allocation2 + $0xce] sm:$0xff]
        %v2208 = vld [vmem:[#allocation2 + $0xd6] sm:$0xff]
        %v2209 = vld [vmem:[#allocation2 + $0xde] sm:$0xff]
        %v2210 = vld [vmem:[#allocation2 + $0xe6] sm:$0xff]
        %v2211 = vld [vmem:[#allocation2 + $0xee] sm:$0xff]
        %v2212 = vld [vmem:[#allocation2 + $0xf6] sm:$0xff]
        %v2213 = vld [vmem:[#allocation2 + $0xfe] sm:$0xff]
        %v2214 = vld [vmem:[#allocation2 + $0x106] sm:$0xff]
        %v2215 = vld [vmem:[#allocation2 + $0x10e] sm:$0xff]
        %v2216 = vld [vmem:[#allocation2 + $0x116] sm:$0xff]
        %v2217 = vld [vmem:[#allocation2 + $0x11e] sm:$0xff]
        %v2218 = vperm.slane %v2184, 0
        %v2219 = vmul.f32 %v2186, %v2218
        %v2220 = vmul.f32 %v2187, %v2218
        %v2221 = vmul.f32 %v2188, %v2218
        %v2222 = vmul.f32 %v2189, %v2218
        %v2223 = vmul.f32 %v2190, %v2218
        %v2224 = vmul.f32 %v2191, %v2218
        %v2225 = vmul.f32 %v2192, %v2218
        %v2226 = vmul.f32 %v2193, %v2218
        %v2227 = vmul.f32 %v2194, %v2218
        %v2228 = vmul.f32 %v2195, %v2218
        %v2229 = vmul.f32 %v2196, %v2218
        %v2230 = vmul.f32 %v2197, %v2218
        %v2231 = vmul.f32 %v2198, %v2218
        %v2232 = vmul.f32 %v2199, %v2218
        %v2233 = vmul.f32 %v2200, %v2218
        %v2234 = vmul.f32 %v2201, %v2218
        %v2235 = vmul.f32 %v2202, %v2218
        %v2236 = vmul.f32 %v2203, %v2218
        %v2237 = vmul.f32 %v2204, %v2218
        %v2238 = vmul.f32 %v2205, %v2218
        %v2239 = vmul.f32 %v2206, %v2218
        %v2240 = vmul.f32 %v2207, %v2218
        %v2241 = vmul.f32 %v2208, %v2218
        %v2242 = vmul.f32 %v2209, %v2218
        %v2243 = vmul.f32 %v2210, %v2218
        %v2244 = vmul.f32 %v2211, %v2218
        %v2245 = vmul.f32 %v2212, %v2218
        %v2246 = vmul.f32 %v2213, %v2218
        %v2247 = vmul.f32 %v2214, %v2218
        %v2248 = vmul.f32 %v2215, %v2218
        %v2249 = vmul.f32 %v2216, %v2218
        %v2250 = vmul.f32 %v2217, %v2218
        %v2251 = vld [vmem:[#allocation2 + $0x126] sm:$0xff]
        %v2252 = vld [vmem:[#allocation2 + $0x12e] sm:$0xff]
        %v2253 = vld [vmem:[#allocation2 + $0x136] sm:$0xff]
        %v2254 = vld [vmem:[#allocation2 + $0x13e] sm:$0xff]
        %v2255 = vperm.slane %v2184, 3
        %v2256 = vmul.f32 %v2190, %v2255
        %v2257 = vmul.f32 %v2191, %v2255
        %v2258 = vmul.f32 %v2192, %v2255
        %v2259 = vmul.f32 %v2193, %v2255
        %v2260 = vmul.f32 %v2194, %v2255
        %v2261 = vmul.f32 %v2195, %v2255
        %v2262 = vmul.f32 %v2196, %v2255
        %v2263 = vmul.f32 %v2197, %v2255
        %v2264 = vmul.f32 %v2198, %v2255
        %v2265 = vmul.f32 %v2199, %v2255
        %v2266 = vmul.f32 %v2200, %v2255
        %v2267 = vmul.f32 %v2201, %v2255
        %v2268 = vmul.f32 %v2202, %v2255
        %v2269 = vmul.f32 %v2203, %v2255
        %v2270 = vmul.f32 %v2204, %v2255
        %v2271 = vmul.f32 %v2205, %v2255
        %v2272 = vmul.f32 %v2206, %v2255
        %v2273 = vmul.f32 %v2207, %v2255
        %v2274 = vmul.f32 %v2208, %v2255
        %v2275 = vmul.f32 %v2209, %v2255
        %v2276 = vmul.f32 %v2210, %v2255
        %v2277 = vmul.f32 %v2211, %v2255
        %v2278 = vmul.f32 %v2212, %v2255
        %v2279 = vmul.f32 %v2213, %v2255
        %v2280 = vmul.f32 %v2214, %v2255
        %v2281 = vmul.f32 %v2215, %v2255
        %v2282 = vmul.f32 %v2216, %v2255
        %v2283 = vmul.f32 %v2217, %v2255
        %v2284 = vmul.f32 %v2251, %v2255
        %v2285 = vmul.f32 %v2252, %v2255
        %v2286 = vmul.f32 %v2253, %v2255
        %v2287 = vmul.f32 %v2254, %v2255
        %v2288 = vadd.f32 %v2219, %v2256
        %v2289 = vadd.f32 %v2220, %v2257
        %v2290 = vadd.f32 %v2221, %v2258
        %v2291 = vadd.f32 %v2222, %v2259
        %v2292 = vadd.f32 %v2223, %v2260
        %v2293 = vadd.f32 %v2224, %v2261
        %v2294 = vadd.f32 %v2225, %v2262
        %v2295 = vadd.f32 %v2226, %v2263
        %v2296 = vadd.f32 %v2227, %v2264
        %v2297 = vadd.f32 %v2228, %v2265
        %v2298 = vadd.f32 %v2229, %v2266
        %v2299 = vadd.f32 %v2230, %v2267
        %v2300 = vadd.f32 %v2231, %v2268
        %v2301 = vadd.f32 %v2232, %v2269
        %v2302 = vadd.f32 %v2233, %v2270
        %v2303 = vadd.f32 %v2234, %v2271
        %v2304 = vadd.f32 %v2235, %v2272
        %v2305 = vadd.f32 %v2236, %v2273
        %v2306 = vadd.f32 %v2237, %v2274
        %v2307 = vadd.f32 %v2238, %v2275
        %v2308 = vadd.f32 %v2239, %v2276
        %v2309 = vadd.f32 %v2240, %v2277
        %v2310 = vadd.f32 %v2241, %v2278
        %v2311 = vadd.f32 %v2242, %v2279
        %v2312 = vadd.f32 %v2243, %v2280
        %v2313 = vadd.f32 %v2244, %v2281
        %v2314 = vadd.f32 %v2245, %v2282
        %v2315 = vadd.f32 %v2246, %v2283
        %v2316 = vadd.f32 %v2247, %v2284
        %v2317 = vadd.f32 %v2248, %v2285
        %v2318 = vadd.f32 %v2249, %v2286
        %v2319 = vadd.f32 %v2250, %v2287
        %v2320 = vld [vmem:[#allocation2 + $0x146] sm:$0xff]
        %v2321 = vld [vmem:[#allocation2 + $0x14e] sm:$0xff]
        %v2322 = vld [vmem:[#allocation2 + $0x156] sm:$0xff]
        %v2323 = vld [vmem:[#allocation2 + $0x15e] sm:$0xff]
        %v2324 = vperm.slane %v2184, 6
        %v2325 = vmul.f32 %v2194, %v2324
        %v2326 = vmul.f32 %v2195, %v2324
        %v2327 = vmul.f32 %v2196, %v2324
        %v2328 = vmul.f32 %v2197, %v2324
        %v2329 = vmul.f32 %v2198, %v2324
        %v2330 = vmul.f32 %v2199, %v2324
        %v2331 = vmul.f32 %v2200, %v2324
        %v2332 = vmul.f32 %v2201, %v2324
        %v2333 = vmul.f32 %v2202, %v2324
        %v2334 = vmul.f32 %v2203, %v2324
        %v2335 = vmul.f32 %v2204, %v2324
        %v2336 = vmul.f32 %v2205, %v2324
        %v2337 = vmul.f32 %v2206, %v2324
        %v2338 = vmul.f32 %v2207, %v2324
        %v2339 = vmul.f32 %v2208, %v2324
        %v2340 = vmul.f32 %v2209, %v2324
        %v2341 = vmul.f32 %v2210, %v2324
        %v2342 = vmul.f32 %v2211, %v2324
        %v2343 = vmul.f32 %v2212, %v2324
        %v2344 = vmul.f32 %v2213, %v2324
        %v2345 = vmul.f32 %v2214, %v2324
        %v2346 = vmul.f32 %v2215, %v2324
        %v2347 = vmul.f32 %v2216, %v2324
        %v2348 = vmul.f32 %v2217, %v2324
        %v2349 = vmul.f32 %v2251, %v2324
        %v2350 = vmul.f32 %v2252, %v2324
        %v2351 = vmul.f32 %v2253, %v2324
        %v2352 = vmul.f32 %v2254, %v2324
        %v2353 = vmul.f32 %v2320, %v2324
        %v2354 = vmul.f32 %v2321, %v2324
        %v2355 = vmul.f32 %v2322, %v2324
        %v2356 = vmul.f32 %v2323, %v2324
        %v2357 = vadd.f32 %v2288, %v2325
        %v2358 = vadd.f32 %v2289, %v2326
        %v2359 = vadd.f32 %v2290, %v2327
        %v2360 = vadd.f32 %v2291, %v2328
        %v2361 = vadd.f32 %v2292, %v2329
        %v2362 = vadd.f32 %v2293, %v2330
        %v2363 = vadd.f32 %v2294, %v2331
        %v2364 = vadd.f32 %v2295, %v2332
        %v2365 = vadd.f32 %v2296, %v2333
        %v2366 = vadd.f32 %v2297, %v2334
        %v2367 = vadd.f32 %v2298, %v2335
        %v2368 = vadd.f32 %v2299, %v2336
        %v2369 = vadd.f32 %v2300, %v2337
        %v2370 = vadd.f32 %v2301, %v2338
        %v2371 = vadd.f32 %v2302, %v2339
        %v2372 = vadd.f32 %v2303, %v2340
        %v2373 = vadd.f32 %v2304, %v2341
        %v2374 = vadd.f32 %v2305, %v2342
        %v2375 = vadd.f32 %v2306, %v2343
        %v2376 = vadd.f32 %v2307, %v2344
        %v2377 = vadd.f32 %v2308, %v2345
        %v2378 = vadd.f32 %v2309, %v2346
        %v2379 = vadd.f32 %v2310, %v2347
        %v2380 = vadd.f32 %v2311, %v2348
        %v2381 = vadd.f32 %v2312, %v2349
        %v2382 = vadd.f32 %v2313, %v2350
        %v2383 = vadd.f32 %v2314, %v2351
        %v2384 = vadd.f32 %v2315, %v2352
        %v2385 = vadd.f32 %v2316, %v2353
        %v2386 = vadd.f32 %v2317, %v2354
        %v2387 = vadd.f32 %v2318, %v2355
        %v2388 = vadd.f32 %v2319, %v2356
        %v2389 = vld [vmem:[#allocation2 + $0x28] sm:$0xff]
        %v2390 = vld [vmem:[#allocation2 + $0x30] sm:$0xff]
        %v2391 = vld [vmem:[#allocation2 + $0x38] sm:$0xff]
        %v2392 = vld [vmem:[#allocation2 + $0x40] sm:$0xff]
        %v2393 = vld [vmem:[#allocation2 + $0x48] sm:$0xff]
        %v2394 = vld [vmem:[#allocation2 + $0x50] sm:$0xff]
        %v2395 = vld [vmem:[#allocation2 + $0x58] sm:$0xff]
        %v2396 = vld [vmem:[#allocation2 + $0x60] sm:$0xff]
        %v2397 = vld [vmem:[#allocation2 + $0x68] sm:$0xff]
        %v2398 = vld [vmem:[#allocation2 + $0x70] sm:$0xff]
        %v2399 = vld [vmem:[#allocation2 + $0x78] sm:$0xff]
        %v2400 = vld [vmem:[#allocation2 + $0x80] sm:$0xff]
        %v2401 = vld [vmem:[#allocation2 + $0x88] sm:$0xff]
        %v2402 = vld [vmem:[#allocation2 + $0x90] sm:$0xff]
        %v2403 = vld [vmem:[#allocation2 + $0x98] sm:$0xff]
        %v2404 = vld [vmem:[#allocation2 + $0xa0] sm:$0xff]
        %v2405 = vld [vmem:[#allocation2 + $0xa8] sm:$0xff]
        %v2406 = vld [vmem:[#allocation2 + $0xb0] sm:$0xff]
        %v2407 = vld [vmem:[#allocation2 + $0xb8] sm:$0xff]
        %v2408 = vld [vmem:[#allocation2 + $0xc0] sm:$0xff]
        %v2409 = vld [vmem:[#allocation2 + $0xc8] sm:$0xff]
        %v2410 = vld [vmem:[#allocation2 + $0xd0] sm:$0xff]
        %v2411 = vld [vmem:[#allocation2 + $0xd8] sm:$0xff]
        %v2412 = vld [vmem:[#allocation2 + $0xe0] sm:$0xff]
        %v2413 = vld [vmem:[#allocation2 + $0xe8] sm:$0xff]
        %v2414 = vld [vmem:[#allocation2 + $0xf0] sm:$0xff]
        %v2415 = vld [vmem:[#allocation2 + $0xf8] sm:$0xff]
        %v2416 = vld [vmem:[#allocation2 + $0x100] sm:$0xff]
        %v2417 = vld [vmem:[#allocation2 + $0x108] sm:$0xff]
        %v2418 = vld [vmem:[#allocation2 + $0x110] sm:$0xff]
        %v2419 = vld [vmem:[#allocation2 + $0x118] sm:$0xff]
        %v2420 = vld [vmem:[#allocation2 + $0x120] sm:$0xff]
        %v2421 = vperm.slane %v2184, 1
        %v2422 = vmul.f32 %v2389, %v2421
        %v2423 = vmul.f32 %v2390, %v2421
        %v2424 = vmul.f32 %v2391, %v2421
        %v2425 = vmul.f32 %v2392, %v2421
        %v2426 = vmul.f32 %v2393, %v2421
        %v2427 = vmul.f32 %v2394, %v2421
        %v2428 = vmul.f32 %v2395, %v2421
        %v2429 = vmul.f32 %v2396, %v2421
        %v2430 = vmul.f32 %v2397, %v2421
        %v2431 = vmul.f32 %v2398, %v2421
        %v2432 = vmul.f32 %v2399, %v2421
        %v2433 = vmul.f32 %v2400, %v2421
        %v2434 = vmul.f32 %v2401, %v2421
        %v2435 = vmul.f32 %v2402, %v2421
        %v2436 = vmul.f32 %v2403, %v2421
        %v2437 = vmul.f32 %v2404, %v2421
        %v2438 = vmul.f32 %v2405, %v2421
        %v2439 = vmul.f32 %v2406, %v2421
        %v2440 = vmul.f32 %v2407, %v2421
        %v2441 = vmul.f32 %v2408, %v2421
        %v2442 = vmul.f32 %v2409, %v2421
        %v2443 = vmul.f32 %v2410, %v2421
        %v2444 = vmul.f32 %v2411, %v2421
        %v2445 = vmul.f32 %v2412, %v2421
        %v2446 = vmul.f32 %v2413, %v2421
        %v2447 = vmul.f32 %v2414, %v2421
        %v2448 = vmul.f32 %v2415, %v2421
        %v2449 = vmul.f32 %v2416, %v2421
        %v2450 = vmul.f32 %v2417, %v2421
        %v2451 = vmul.f32 %v2418, %v2421
        %v2452 = vmul.f32 %v2419, %v2421
        %v2453 = vmul.f32 %v2420, %v2421
        %v2454 = vld [vmem:[#allocation2 + $0x128] sm:$0xff]
        %v2455 = vld [vmem:[#allocation2 + $0x130] sm:$0xff]
        %v2456 = vld [vmem:[#allocation2 + $0x138] sm:$0xff]
        %v2457 = vld [vmem:[#allocation2 + $0x140] sm:$0xff]
        %v2458 = vperm.slane %v2184, 4
        %v2459 = vmul.f32 %v2393, %v2458
        %v2460 = vmul.f32 %v2394, %v2458
        %v2461 = vmul.f32 %v2395, %v2458
        %v2462 = vmul.f32 %v2396, %v2458
        %v2463 = vmul.f32 %v2397, %v2458
        %v2464 = vmul.f32 %v2398, %v2458
        %v2465 = vmul.f32 %v2399, %v2458
        %v2466 = vmul.f32 %v2400, %v2458
        %v2467 = vmul.f32 %v2401, %v2458
        %v2468 = vmul.f32 %v2402, %v2458
        %v2469 = vmul.f32 %v2403, %v2458
        %v2470 = vmul.f32 %v2404, %v2458
        %v2471 = vmul.f32 %v2405, %v2458
        %v2472 = vmul.f32 %v2406, %v2458
        %v2473 = vmul.f32 %v2407, %v2458
        %v2474 = vmul.f32 %v2408, %v2458
        %v2475 = vmul.f32 %v2409, %v2458
        %v2476 = vmul.f32 %v2410, %v2458
        %v2477 = vmul.f32 %v2411, %v2458
        %v2478 = vmul.f32 %v2412, %v2458
        %v2479 = vmul.f32 %v2413, %v2458
        %v2480 = vmul.f32 %v2414, %v2458
        %v2481 = vmul.f32 %v2415, %v2458
        %v2482 = vmul.f32 %v2416, %v2458
        %v2483 = vmul.f32 %v2417, %v2458
        %v2484 = vmul.f32 %v2418, %v2458
        %v2485 = vmul.f32 %v2419, %v2458
        %v2486 = vmul.f32 %v2420, %v2458
        %v2487 = vmul.f32 %v2454, %v2458
        %v2488 = vmul.f32 %v2455, %v2458
        %v2489 = vmul.f32 %v2456, %v2458
        %v2490 = vmul.f32 %v2457, %v2458
        %v2491 = vadd.f32 %v2422, %v2459
        %v2492 = vadd.f32 %v2423, %v2460
        %v2493 = vadd.f32 %v2424, %v2461
        %v2494 = vadd.f32 %v2425, %v2462
        %v2495 = vadd.f32 %v2426, %v2463
        %v2496 = vadd.f32 %v2427, %v2464
        %v2497 = vadd.f32 %v2428, %v2465
        %v2498 = vadd.f32 %v2429, %v2466
        %v2499 = vadd.f32 %v2430, %v2467
        %v2500 = vadd.f32 %v2431, %v2468
        %v2501 = vadd.f32 %v2432, %v2469
        %v2502 = vadd.f32 %v2433, %v2470
        %v2503 = vadd.f32 %v2434, %v2471
        %v2504 = vadd.f32 %v2435, %v2472
        %v2505 = vadd.f32 %v2436, %v2473
        %v2506 = vadd.f32 %v2437, %v2474
        %v2507 = vadd.f32 %v2438, %v2475
        %v2508 = vadd.f32 %v2439, %v2476
        %v2509 = vadd.f32 %v2440, %v2477
        %v2510 = vadd.f32 %v2441, %v2478
        %v2511 = vadd.f32 %v2442, %v2479
        %v2512 = vadd.f32 %v2443, %v2480
        %v2513 = vadd.f32 %v2444, %v2481
        %v2514 = vadd.f32 %v2445, %v2482
        %v2515 = vadd.f32 %v2446, %v2483
        %v2516 = vadd.f32 %v2447, %v2484
        %v2517 = vadd.f32 %v2448, %v2485
        %v2518 = vadd.f32 %v2449, %v2486
        %v2519 = vadd.f32 %v2450, %v2487
        %v2520 = vadd.f32 %v2451, %v2488
        %v2521 = vadd.f32 %v2452, %v2489
        %v2522 = vadd.f32 %v2453, %v2490
        %v2523 = vld [vmem:[#allocation2 + $0x148] sm:$0xff]
        %v2524 = vld [vmem:[#allocation2 + $0x150] sm:$0xff]
        %v2525 = vld [vmem:[#allocation2 + $0x158] sm:$0xff]
        %v2526 = vld [vmem:[#allocation2 + $0x160] sm:$0xff]
        %v2527 = vperm.slane %v2184, 7
        %v2528 = vmul.f32 %v2397, %v2527
        %v2529 = vmul.f32 %v2398, %v2527
        %v2530 = vmul.f32 %v2399, %v2527
        %v2531 = vmul.f32 %v2400, %v2527
        %v2532 = vmul.f32 %v2401, %v2527
        %v2533 = vmul.f32 %v2402, %v2527
        %v2534 = vmul.f32 %v2403, %v2527
        %v2535 = vmul.f32 %v2404, %v2527
        %v2536 = vmul.f32 %v2405, %v2527
        %v2537 = vmul.f32 %v2406, %v2527
        %v2538 = vmul.f32 %v2407, %v2527
        %v2539 = vmul.f32 %v2408, %v2527
        %v2540 = vmul.f32 %v2409, %v2527
        %v2541 = vmul.f32 %v2410, %v2527
        %v2542 = vmul.f32 %v2411, %v2527
        %v2543 = vmul.f32 %v2412, %v2527
        %v2544 = vmul.f32 %v2413, %v2527
        %v2545 = vmul.f32 %v2414, %v2527
        %v2546 = vmul.f32 %v2415, %v2527
        %v2547 = vmul.f32 %v2416, %v2527
        %v2548 = vmul.f32 %v2417, %v2527
        %v2549 = vmul.f32 %v2418, %v2527
        %v2550 = vmul.f32 %v2419, %v2527
        %v2551 = vmul.f32 %v2420, %v2527
        %v2552 = vmul.f32 %v2454, %v2527
        %v2553 = vmul.f32 %v2455, %v2527
        %v2554 = vmul.f32 %v2456, %v2527
        %v2555 = vmul.f32 %v2457, %v2527
        %v2556 = vmul.f32 %v2523, %v2527
        %v2557 = vmul.f32 %v2524, %v2527
        %v2558 = vmul.f32 %v2525, %v2527
        %v2559 = vmul.f32 %v2526, %v2527
        %v2560 = vadd.f32 %v2491, %v2528
        %v2561 = vadd.f32 %v2492, %v2529
        %v2562 = vadd.f32 %v2493, %v2530
        %v2563 = vadd.f32 %v2494, %v2531
        %v2564 = vadd.f32 %v2495, %v2532
        %v2565 = vadd.f32 %v2496, %v2533
        %v2566 = vadd.f32 %v2497, %v2534
        %v2567 = vadd.f32 %v2498, %v2535
        %v2568 = vadd.f32 %v2499, %v2536
        %v2569 = vadd.f32 %v2500, %v2537
        %v2570 = vadd.f32 %v2501, %v2538
        %v2571 = vadd.f32 %v2502, %v2539
        %v2572 = vadd.f32 %v2503, %v2540
        %v2573 = vadd.f32 %v2504, %v2541
        %v2574 = vadd.f32 %v2505, %v2542
        %v2575 = vadd.f32 %v2506, %v2543
        %v2576 = vadd.f32 %v2507, %v2544
        %v2577 = vadd.f32 %v2508, %v2545
        %v2578 = vadd.f32 %v2509, %v2546
        %v2579 = vadd.f32 %v2510, %v2547
        %v2580 = vadd.f32 %v2511, %v2548
        %v2581 = vadd.f32 %v2512, %v2549
        %v2582 = vadd.f32 %v2513, %v2550
        %v2583 = vadd.f32 %v2514, %v2551
        %v2584 = vadd.f32 %v2515, %v2552
        %v2585 = vadd.f32 %v2516, %v2553
        %v2586 = vadd.f32 %v2517, %v2554
        %v2587 = vadd.f32 %v2518, %v2555
        %v2588 = vadd.f32 %v2519, %v2556
        %v2589 = vadd.f32 %v2520, %v2557
        %v2590 = vadd.f32 %v2521, %v2558
        %v2591 = vadd.f32 %v2522, %v2559
        %v2592 = vld [vmem:[#allocation2 + $0x2a] sm:$0xff]
        %v2593 = vld [vmem:[#allocation2 + $0x32] sm:$0xff]
        %v2594 = vld [vmem:[#allocation2 + $0x3a] sm:$0xff]
        %v2595 = vld [vmem:[#allocation2 + $0x42] sm:$0xff]
        %v2596 = vld [vmem:[#allocation2 + $0x4a] sm:$0xff]
        %v2597 = vld [vmem:[#allocation2 + $0x52] sm:$0xff]
        %v2598 = vld [vmem:[#allocation2 + $0x5a] sm:$0xff]
        %v2599 = vld [vmem:[#allocation2 + $0x62] sm:$0xff]
        %v2600 = vld [vmem:[#allocation2 + $0x6a] sm:$0xff]
        %v2601 = vld [vmem:[#allocation2 + $0x72] sm:$0xff]
        %v2602 = vld [vmem:[#allocation2 + $0x7a] sm:$0xff]
        %v2603 = vld [vmem:[#allocation2 + $0x82] sm:$0xff]
        %v2604 = vld [vmem:[#allocation2 + $0x8a] sm:$0xff]
        %v2605 = vld [vmem:[#allocation2 + $0x92] sm:$0xff]
        %v2606 = vld [vmem:[#allocation2 + $0x9a] sm:$0xff]
        %v2607 = vld [vmem:[#allocation2 + $0xa2] sm:$0xff]
        %v2608 = vld [vmem:[#allocation2 + $0xaa] sm:$0xff]
        %v2609 = vld [vmem:[#allocation2 + $0xb2] sm:$0xff]
        %v2610 = vld [vmem:[#allocation2 + $0xba] sm:$0xff]
        %v2611 = vld [vmem:[#allocation2 + $0xc2] sm:$0xff]
        %v2612 = vld [vmem:[#allocation2 + $0xca] sm:$0xff]
        %v2613 = vld [vmem:[#allocation2 + $0xd2] sm:$0xff]
        %v2614 = vld [vmem:[#allocation2 + $0xda] sm:$0xff]
        %v2615 = vld [vmem:[#allocation2 + $0xe2] sm:$0xff]
        %v2616 = vld [vmem:[#allocation2 + $0xea] sm:$0xff]
        %v2617 = vld [vmem:[#allocation2 + $0xf2] sm:$0xff]
        %v2618 = vld [vmem:[#allocation2 + $0xfa] sm:$0xff]
        %v2619 = vld [vmem:[#allocation2 + $0x102] sm:$0xff]
        %v2620 = vld [vmem:[#allocation2 + $0x10a] sm:$0xff]
        %v2621 = vld [vmem:[#allocation2 + $0x112] sm:$0xff]
        %v2622 = vld [vmem:[#allocation2 + $0x11a] sm:$0xff]
        %v2623 = vld [vmem:[#allocation2 + $0x122] sm:$0xff]
        %v2624 = vperm.slane %v2184, 2
        %v2625 = vmul.f32 %v2592, %v2624
        %v2626 = vmul.f32 %v2593, %v2624
        %v2627 = vmul.f32 %v2594, %v2624
        %v2628 = vmul.f32 %v2595, %v2624
        %v2629 = vmul.f32 %v2596, %v2624
        %v2630 = vmul.f32 %v2597, %v2624
        %v2631 = vmul.f32 %v2598, %v2624
        %v2632 = vmul.f32 %v2599, %v2624
        %v2633 = vmul.f32 %v2600, %v2624
        %v2634 = vmul.f32 %v2601, %v2624
        %v2635 = vmul.f32 %v2602, %v2624
        %v2636 = vmul.f32 %v2603, %v2624
        %v2637 = vmul.f32 %v2604, %v2624
        %v2638 = vmul.f32 %v2605, %v2624
        %v2639 = vmul.f32 %v2606, %v2624
        %v2640 = vmul.f32 %v2607, %v2624
        %v2641 = vmul.f32 %v2608, %v2624
        %v2642 = vmul.f32 %v2609, %v2624
        %v2643 = vmul.f32 %v2610, %v2624
        %v2644 = vmul.f32 %v2611, %v2624
        %v2645 = vmul.f32 %v2612, %v2624
        %v2646 = vmul.f32 %v2613, %v2624
        %v2647 = vmul.f32 %v2614, %v2624
        %v2648 = vmul.f32 %v2615, %v2624
        %v2649 = vmul.f32 %v2616, %v2624
        %v2650 = vmul.f32 %v2617, %v2624
        %v2651 = vmul.f32 %v2618, %v2624
        %v2652 = vmul.f32 %v2619, %v2624
        %v2653 = vmul.f32 %v2620, %v2624
        %v2654 = vmul.f32 %v2621, %v2624
        %v2655 = vmul.f32 %v2622, %v2624
        %v2656 = vmul.f32 %v2623, %v2624
        %v2657 = vld [vmem:[#allocation2 + $0x12a] sm:$0xff]
        %v2658 = vld [vmem:[#allocation2 + $0x132] sm:$0xff]
        %v2659 = vld [vmem:[#allocation2 + $0x13a] sm:$0xff]
        %v2660 = vld [vmem:[#allocation2 + $0x142] sm:$0xff]
        %v2661 = vperm.slane %v2184, 5
        %v2662 = vmul.f32 %v2596, %v2661
        %v2663 = vmul.f32 %v2597, %v2661
        %v2664 = vmul.f32 %v2598, %v2661
        %v2665 = vmul.f32 %v2599, %v2661
        %v2666 = vmul.f32 %v2600, %v2661
        %v2667 = vmul.f32 %v2601, %v2661
        %v2668 = vmul.f32 %v2602, %v2661
        %v2669 = vmul.f32 %v2603, %v2661
        %v2670 = vmul.f32 %v2604, %v2661
        %v2671 = vmul.f32 %v2605, %v2661
        %v2672 = vmul.f32 %v2606, %v2661
        %v2673 = vmul.f32 %v2607, %v2661
        %v2674 = vmul.f32 %v2608, %v2661
        %v2675 = vmul.f32 %v2609, %v2661
        %v2676 = vmul.f32 %v2610, %v2661
        %v2677 = vmul.f32 %v2611, %v2661
        %v2678 = vmul.f32 %v2612, %v2661
        %v2679 = vmul.f32 %v2613, %v2661
        %v2680 = vmul.f32 %v2614, %v2661
        %v2681 = vmul.f32 %v2615, %v2661
        %v2682 = vmul.f32 %v2616, %v2661
        %v2683 = vmul.f32 %v2617, %v2661
        %v2684 = vmul.f32 %v2618, %v2661
        %v2685 = vmul.f32 %v2619, %v2661
        %v2686 = vmul.f32 %v2620, %v2661
        %v2687 = vmul.f32 %v2621, %v2661
        %v2688 = vmul.f32 %v2622, %v2661
        %v2689 = vmul.f32 %v2623, %v2661
        %v2690 = vmul.f32 %v2657, %v2661
        %v2691 = vmul.f32 %v2658, %v2661
        %v2692 = vmul.f32 %v2659, %v2661
        %v2693 = vmul.f32 %v2660, %v2661
        %v2694 = vadd.f32 %v2625, %v2662
        %v2695 = vadd.f32 %v2626, %v2663
        %v2696 = vadd.f32 %v2627, %v2664
        %v2697 = vadd.f32 %v2628, %v2665
        %v2698 = vadd.f32 %v2629, %v2666
        %v2699 = vadd.f32 %v2630, %v2667
        %v2700 = vadd.f32 %v2631, %v2668
        %v2701 = vadd.f32 %v2632, %v2669
        %v2702 = vadd.f32 %v2633, %v2670
        %v2703 = vadd.f32 %v2634, %v2671
        %v2704 = vadd.f32 %v2635, %v2672
        %v2705 = vadd.f32 %v2636, %v2673
        %v2706 = vadd.f32 %v2637, %v2674
        %v2707 = vadd.f32 %v2638, %v2675
        %v2708 = vadd.f32 %v2639, %v2676
        %v2709 = vadd.f32 %v2640, %v2677
        %v2710 = vadd.f32 %v2641, %v2678
        %v2711 = vadd.f32 %v2642, %v2679
        %v2712 = vadd.f32 %v2643, %v2680
        %v2713 = vadd.f32 %v2644, %v2681
        %v2714 = vadd.f32 %v2645, %v2682
        %v2715 = vadd.f32 %v2646, %v2683
        %v2716 = vadd.f32 %v2647, %v2684
        %v2717 = vadd.f32 %v2648, %v2685
        %v2718 = vadd.f32 %v2649, %v2686
        %v2719 = vadd.f32 %v2650, %v2687
        %v2720 = vadd.f32 %v2651, %v2688
        %v2721 = vadd.f32 %v2652, %v2689
        %v2722 = vadd.f32 %v2653, %v2690
        %v2723 = vadd.f32 %v2654, %v2691
        %v2724 = vadd.f32 %v2655, %v2692
        %v2725 = vadd.f32 %v2656, %v2693
        %v2726 = vld [vmem:[#allocation2 + $0x14a] sm:$0xff]
        %v2727 = vld [vmem:[#allocation2 + $0x152] sm:$0xff]
        %v2728 = vld [vmem:[#allocation2 + $0x15a] sm:$0xff]
        %v2729 = vld [vmem:[#allocation2 + $0x162] sm:$0xff]
        %v2730 = vperm.slane %v2185, 0
        %v2731 = vmul.f32 %v2600, %v2730
        %v2732 = vmul.f32 %v2601, %v2730
        %v2733 = vmul.f32 %v2602, %v2730
        %v2734 = vmul.f32 %v2603, %v2730
        %v2735 = vmul.f32 %v2604, %v2730
        %v2736 = vmul.f32 %v2605, %v2730
        %v2737 = vmul.f32 %v2606, %v2730
        %v2738 = vmul.f32 %v2607, %v2730
        %v2739 = vmul.f32 %v2608, %v2730
        %v2740 = vmul.f32 %v2609, %v2730
        %v2741 = vmul.f32 %v2610, %v2730
        %v2742 = vmul.f32 %v2611, %v2730
        %v2743 = vmul.f32 %v2612, %v2730
        %v2744 = vmul.f32 %v2613, %v2730
        %v2745 = vmul.f32 %v2614, %v2730
        %v2746 = vmul.f32 %v2615, %v2730
        %v2747 = vmul.f32 %v2616, %v2730
        %v2748 = vmul.f32 %v2617, %v2730
        %v2749 = vmul.f32 %v2618, %v2730
        %v2750 = vmul.f32 %v2619, %v2730
        %v2751 = vmul.f32 %v2620, %v2730
        %v2752 = vmul.f32 %v2621, %v2730
        %v2753 = vmul.f32 %v2622, %v2730
        %v2754 = vmul.f32 %v2623, %v2730
        %v2755 = vmul.f32 %v2657, %v2730
        %v2756 = vmul.f32 %v2658, %v2730
        %v2757 = vmul.f32 %v2659, %v2730
        %v2758 = vmul.f32 %v2660, %v2730
        %v2759 = vmul.f32 %v2726, %v2730
        %v2760 = vmul.f32 %v2727, %v2730
        %v2761 = vmul.f32 %v2728, %v2730
        %v2762 = vmul.f32 %v2729, %v2730
        %v2763 = vadd.f32 %v2694, %v2731
        %v2764 = vadd.f32 %v2695, %v2732
        %v2765 = vadd.f32 %v2696, %v2733
        %v2766 = vadd.f32 %v2697, %v2734
        %v2767 = vadd.f32 %v2698, %v2735
        %v2768 = vadd.f32 %v2699, %v2736
        %v2769 = vadd.f32 %v2700, %v2737
        %v2770 = vadd.f32 %v2701, %v2738
        %v2771 = vadd.f32 %v2702, %v2739
        %v2772 = vadd.f32 %v2703, %v2740
        %v2773 = vadd.f32 %v2704, %v2741
        %v2774 = vadd.f32 %v2705, %v2742
        %v2775 = vadd.f32 %v2706, %v2743
        %v2776 = vadd.f32 %v2707, %v2744
        %v2777 = vadd.f32 %v2708, %v2745
        %v2778 = vadd.f32 %v2709, %v2746
        %v2779 = vadd.f32 %v2710, %v2747
        %v2780 = vadd.f32 %v2711, %v2748
        %v2781 = vadd.f32 %v2712, %v2749
        %v2782 = vadd.f32 %v2713, %v2750
        %v2783 = vadd.f32 %v2714, %v2751
        %v2784 = vadd.f32 %v2715, %v2752
        %v2785 = vadd.f32 %v2716, %v2753
        %v2786 = vadd.f32 %v2717, %v2754
        %v2787 = vadd.f32 %v2718, %v2755
        %v2788 = vadd.f32 %v2719, %v2756
        %v2789 = vadd.f32 %v2720, %v2757
        %v2790 = vadd.f32 %v2721, %v2758
        %v2791 = vadd.f32 %v2722, %v2759
        %v2792 = vadd.f32 %v2723, %v2760
        %v2793 = vadd.f32 %v2724, %v2761
        %v2794 = vadd.f32 %v2725, %v2762
        %v2795 = vmul.f32 %v2357, %v1400
        %v2796 = vmul.f32 %v2358, %v1401
        %v2797 = vmul.f32 %v2359, %v1402
        %v2798 = vmul.f32 %v2360, %v1403
        %v2799 = vmul.f32 %v2361, %v1404
        %v2800 = vmul.f32 %v2362, %v1405
        %v2801 = vmul.f32 %v2363, %v1406
        %v2802 = vmul.f32 %v2364, %v1407
        %v2803 = vmul.f32 %v2365, %v1408
        %v2804 = vmul.f32 %v2366, %v1409
        %v2805 = vmul.f32 %v2367, %v1410
        %v2806 = vmul.f32 %v2368, %v1411
        %v2807 = vmul.f32 %v2369, %v1412
        %v2808 = vmul.f32 %v2370, %v1413
        %v2809 = vmul.f32 %v2371, %v1414
        %v2810 = vmul.f32 %v2372, %v1415
        %v2811 = vmul.f32 %v2373, %v1416
        %v2812 = vmul.f32 %v2374, %v1417
        %v2813 = vmul.f32 %v2375, %v1418
        %v2814 = vmul.f32 %v2376, %v1419
        %v2815 = vmul.f32 %v2377, %v1420
        %v2816 = vmul.f32 %v2378, %v1421
        %v2817 = vmul.f32 %v2379, %v1422
        %v2818 = vmul.f32 %v2380, %v1423
        %v2819 = vmul.f32 %v2381, %v1424
        %v2820 = vmul.f32 %v2382, %v1425
        %v2821 = vmul.f32 %v2383, %v1426
        %v2822 = vmul.f32 %v2384, %v1427
        %v2823 = vmul.f32 %v2385, %v1428
        %v2824 = vmul.f32 %v2386, %v1429
        %v2825 = vmul.f32 %v2387, %v1430
        %v2826 = vmul.f32 %v2388, %v1431
        %v2827 = vadd.f32 %v2795, %v2560
        %v2828 = vadd.f32 %v2796, %v2561
        %v2829 = vadd.f32 %v2797, %v2562
        %v2830 = vadd.f32 %v2798, %v2563
        %v2831 = vadd.f32 %v2799, %v2564
        %v2832 = vadd.f32 %v2800, %v2565
        %v2833 = vadd.f32 %v2801, %v2566
        %v2834 = vadd.f32 %v2802, %v2567
        %v2835 = vadd.f32 %v2803, %v2568
        %v2836 = vadd.f32 %v2804, %v2569
        %v2837 = vadd.f32 %v2805, %v2570
        %v2838 = vadd.f32 %v2806, %v2571
        %v2839 = vadd.f32 %v2807, %v2572
        %v2840 = vadd.f32 %v2808, %v2573
        %v2841 = vadd.f32 %v2809, %v2574
        %v2842 = vadd.f32 %v2810, %v2575
        %v2843 = vadd.f32 %v2811, %v2576
        %v2844 = vadd.f32 %v2812, %v2577
        %v2845 = vadd.f32 %v2813, %v2578
        %v2846 = vadd.f32 %v2814, %v2579
        %v2847 = vadd.f32 %v2815, %v2580
        %v2848 = vadd.f32 %v2816, %v2581
        %v2849 = vadd.f32 %v2817, %v2582
        %v2850 = vadd.f32 %v2818, %v2583
        %v2851 = vadd.f32 %v2819, %v2584
        %v2852 = vadd.f32 %v2820, %v2585
        %v2853 = vadd.f32 %v2821, %v2586
        %v2854 = vadd.f32 %v2822, %v2587
        %v2855 = vadd.f32 %v2823, %v2588
        %v2856 = vadd.f32 %v2824, %v2589
        %v2857 = vadd.f32 %v2825, %v2590
        %v2858 = vadd.f32 %v2826, %v2591
        %v2859 = vmul.f32 %v2763, %v1496
        %v2860 = vmul.f32 %v2764, %v1497
        %v2861 = vmul.f32 %v2765, %v1498
        %v2862 = vmul.f32 %v2766, %v1499
        %v2863 = vmul.f32 %v2767, %v1500
        %v2864 = vmul.f32 %v2768, %v1501
        %v2865 = vmul.f32 %v2769, %v1502
        %v2866 = vmul.f32 %v2770, %v1503
        %v2867 = vmul.f32 %v2771, %v1504
        %v2868 = vmul.f32 %v2772, %v1505
        %v2869 = vmul.f32 %v2773, %v1506
        %v2870 = vmul.f32 %v2774, %v1507
        %v2871 = vmul.f32 %v2775, %v1508
        %v2872 = vmul.f32 %v2776, %v1509
        %v2873 = vmul.f32 %v2777, %v1510
        %v2874 = vmul.f32 %v2778, %v1511
        %v2875 = vmul.f32 %v2779, %v1512
        %v2876 = vmul.f32 %v2780, %v1513
        %v2877 = vmul.f32 %v2781, %v1514
        %v2878 = vmul.f32 %v2782, %v1515
        %v2879 = vmul.f32 %v2783, %v1516
        %v2880 = vmul.f32 %v2784, %v1517
        %v2881 = vmul.f32 %v2785, %v1518
        %v2882 = vmul.f32 %v2786, %v1519
        %v2883 = vmul.f32 %v2787, %v1520
        %v2884 = vmul.f32 %v2788, %v1521
        %v2885 = vmul.f32 %v2789, %v1522
        %v2886 = vmul.f32 %v2790, %v1523
        %v2887 = vmul.f32 %v2791, %v1524
        %v2888 = vmul.f32 %v2792, %v1525
        %v2889 = vmul.f32 %v2793, %v1526
        %v2890 = vmul.f32 %v2794, %v1527
        %v2891 = vadd.f32 %v2827, %v2859
        %v2892 = vadd.f32 %v2828, %v2860
        %v2893 = vadd.f32 %v2829, %v2861
        %v2894 = vadd.f32 %v2830, %v2862
        %v2895 = vadd.f32 %v2831, %v2863
        %v2896 = vadd.f32 %v2832, %v2864
        %v2897 = vadd.f32 %v2833, %v2865
        %v2898 = vadd.f32 %v2834, %v2866
        %v2899 = vadd.f32 %v2835, %v2867
        %v2900 = vadd.f32 %v2836, %v2868
        %v2901 = vadd.f32 %v2837, %v2869
        %v2902 = vadd.f32 %v2838, %v2870
        %v2903 = vadd.f32 %v2839, %v2871
        %v2904 = vadd.f32 %v2840, %v2872
        %v2905 = vadd.f32 %v2841, %v2873
        %v2906 = vadd.f32 %v2842, %v2874
        %v2907 = vadd.f32 %v2843, %v2875
        %v2908 = vadd.f32 %v2844, %v2876
        %v2909 = vadd.f32 %v2845, %v2877
        %v2910 = vadd.f32 %v2846, %v2878
        %v2911 = vadd.f32 %v2847, %v2879
        %v2912 = vadd.f32 %v2848, %v2880
        %v2913 = vadd.f32 %v2849, %v2881
        %v2914 = vadd.f32 %v2850, %v2882
        %v2915 = vadd.f32 %v2851, %v2883
        %v2916 = vadd.f32 %v2852, %v2884
        %v2917 = vadd.f32 %v2853, %v2885
        %v2918 = vadd.f32 %v2854, %v2886
        %v2919 = vadd.f32 %v2855, %v2887
        %v2920 = vadd.f32 %v2856, %v2888
        %v2921 = vadd.f32 %v2857, %v2889
        %v2922 = vadd.f32 %v2858, %v2890
        %2955 = vrot.lane.b32.xlu0 %v2891, 64
        %v2956 = vpop.permute.xlu0 %2955
        %2957 = vrot.lane.b32.xlu0 %v2892, 64
        %v2958 = vpop.permute.xlu0 %2957
        %2959 = vrot.lane.b32.xlu0 %v2893, 64
        %v2960 = vpop.permute.xlu0 %2959
        %2961 = vrot.lane.b32.xlu0 %v2894, 64
        %v2962 = vpop.permute.xlu0 %2961
        %2963 = vrot.lane.b32.xlu0 %v2895, 64
        %v2964 = vpop.permute.xlu0 %2963
        %2965 = vrot.lane.b32.xlu0 %v2896, 64
        %v2966 = vpop.permute.xlu0 %2965
        %2967 = vrot.lane.b32.xlu0 %v2897, 64
        %v2968 = vpop.permute.xlu0 %2967
        %2969 = vrot.lane.b32.xlu0 %v2898, 64
        %v2970 = vpop.permute.xlu0 %2969
        %2971 = vrot.lane.b32.xlu0 %v2899, 64
        %v2972 = vpop.permute.xlu0 %2971
        %2973 = vrot.lane.b32.xlu0 %v2900, 64
        %v2974 = vpop.permute.xlu0 %2973
        %2975 = vrot.lane.b32.xlu0 %v2901, 64
        %v2976 = vpop.permute.xlu0 %2975
        %2977 = vrot.lane.b32.xlu0 %v2902, 64
        %v2978 = vpop.permute.xlu0 %2977
        %2979 = vrot.lane.b32.xlu0 %v2903, 64
        %v2980 = vpop.permute.xlu0 %2979
        %2981 = vrot.lane.b32.xlu0 %v2904, 64
        %v2982 = vpop.permute.xlu0 %2981
        %2983 = vrot.lane.b32.xlu0 %v2905, 64
        %v2984 = vpop.permute.xlu0 %2983
        %2985 = vrot.lane.b32.xlu0 %v2906, 64
        %v2986 = vpop.permute.xlu0 %2985
        %2987 = vrot.lane.b32.xlu0 %v2907, 64
        %v2988 = vpop.permute.xlu0 %2987
        %2989 = vrot.lane.b32.xlu0 %v2908, 64
        %v2990 = vpop.permute.xlu0 %2989
        %2991 = vrot.lane.b32.xlu0 %v2909, 64
        %v2992 = vpop.permute.xlu0 %2991
        %2993 = vrot.lane.b32.xlu0 %v2910, 64
        %v2994 = vpop.permute.xlu0 %2993
        %2995 = vrot.lane.b32.xlu0 %v2911, 64
        %v2996 = vpop.permute.xlu0 %2995
        %2997 = vrot.lane.b32.xlu0 %v2912, 64
        %v2998 = vpop.permute.xlu0 %2997
        %2999 = vrot.lane.b32.xlu0 %v2913, 64
        %v3000 = vpop.permute.xlu0 %2999
        %3001 = vrot.lane.b32.xlu0 %v2914, 64
        %v3002 = vpop.permute.xlu0 %3001
        %3003 = vrot.lane.b32.xlu0 %v2915, 64
        %v3004 = vpop.permute.xlu0 %3003
        %3005 = vrot.lane.b32.xlu0 %v2916, 64
        %v3006 = vpop.permute.xlu0 %3005
        %3007 = vrot.lane.b32.xlu0 %v2917, 64
        %v3008 = vpop.permute.xlu0 %3007
        %3009 = vrot.lane.b32.xlu0 %v2918, 64
        %v3010 = vpop.permute.xlu0 %3009
        %3011 = vrot.lane.b32.xlu0 %v2919, 64
        %v3012 = vpop.permute.xlu0 %3011
        %3013 = vrot.lane.b32.xlu0 %v2920, 64
        %v3014 = vpop.permute.xlu0 %3013
        %3015 = vrot.lane.b32.xlu0 %v2921, 64
        %v3016 = vpop.permute.xlu0 %3015
        %3017 = vrot.lane.b32.xlu0 %v2922, 64
        %v3018 = vpop.permute.xlu0 %3017
        %v3051 = vadd.f32 %v2891, %v2956
        %v3052 = vadd.f32 %v2892, %v2958
        %v3053 = vadd.f32 %v2893, %v2960
        %v3054 = vadd.f32 %v2894, %v2962
        %v3055 = vadd.f32 %v2895, %v2964
        %v3056 = vadd.f32 %v2896, %v2966
        %v3057 = vadd.f32 %v2897, %v2968
        %v3058 = vadd.f32 %v2898, %v2970
        %v3059 = vadd.f32 %v2899, %v2972
        %v3060 = vadd.f32 %v2900, %v2974
        %v3061 = vadd.f32 %v2901, %v2976
        %v3062 = vadd.f32 %v2902, %v2978
        %v3063 = vadd.f32 %v2903, %v2980
        %v3064 = vadd.f32 %v2904, %v2982
        %v3065 = vadd.f32 %v2905, %v2984
        %v3066 = vadd.f32 %v2906, %v2986
        %v3067 = vadd.f32 %v2907, %v2988
        %v3068 = vadd.f32 %v2908, %v2990
        %v3069 = vadd.f32 %v2909, %v2992
        %v3070 = vadd.f32 %v2910, %v2994
        %v3071 = vadd.f32 %v2911, %v2996
        %v3072 = vadd.f32 %v2912, %v2998
        %v3073 = vadd.f32 %v2913, %v3000
        %v3074 = vadd.f32 %v2914, %v3002
        %v3075 = vadd.f32 %v2915, %v3004
        %v3076 = vadd.f32 %v2916, %v3006
        %v3077 = vadd.f32 %v2917, %v3008
        %v3078 = vadd.f32 %v2918, %v3010
        %v3079 = vadd.f32 %v2919, %v3012
        %v3080 = vadd.f32 %v2920, %v3014
        %v3081 = vadd.f32 %v2921, %v3016
        %v3082 = vadd.f32 %v2922, %v3018
        %v3083 = vld [vmem:[#allocation8] sm:$0x1]
        %v3085 = vperm.slane %v3083, 0
        %v3087 = vadd.f32 %v3051, %v3085
        %v3088 = vadd.f32 %v3052, %v3085
        %v3089 = vadd.f32 %v3053, %v3085
        %v3090 = vadd.f32 %v3054, %v3085
        %v3091 = vadd.f32 %v3055, %v3085
        %v3092 = vadd.f32 %v3056, %v3085
        %v3093 = vadd.f32 %v3057, %v3085
        %v3094 = vadd.f32 %v3058, %v3085
        %v3095 = vadd.f32 %v3059, %v3085
        %v3096 = vadd.f32 %v3060, %v3085
        %v3097 = vadd.f32 %v3061, %v3085
        %v3098 = vadd.f32 %v3062, %v3085
        %v3099 = vadd.f32 %v3063, %v3085
        %v3100 = vadd.f32 %v3064, %v3085
        %v3101 = vadd.f32 %v3065, %v3085
        %v3102 = vadd.f32 %v3066, %v3085
        %v3103 = vadd.f32 %v3067, %v3085
        %v3104 = vadd.f32 %v3068, %v3085
        %v3105 = vadd.f32 %v3069, %v3085
        %v3106 = vadd.f32 %v3070, %v3085
        %v3107 = vadd.f32 %v3071, %v3085
        %v3108 = vadd.f32 %v3072, %v3085
        %v3109 = vadd.f32 %v3073, %v3085
        %v3110 = vadd.f32 %v3074, %v3085
        %v3111 = vadd.f32 %v3075, %v3085
        %v3112 = vadd.f32 %v3076, %v3085
        %v3113 = vadd.f32 %v3077, %v3085
        %v3114 = vadd.f32 %v3078, %v3085
        %v3115 = vadd.f32 %v3079, %v3085
        %v3116 = vadd.f32 %v3080, %v3085
        %v3117 = vadd.f32 %v3081, %v3085
        %v3118 = vadd.f32 %v3082, %v3085
        %v3119 = vmax.f32 %v3087, 0.0
        %v3120 = vmax.f32 %v3088, 0.0
        %v3121 = vmax.f32 %v3089, 0.0
        %v3122 = vmax.f32 %v3090, 0.0
        %v3123 = vmax.f32 %v3091, 0.0
        %v3124 = vmax.f32 %v3092, 0.0
        %v3125 = vmax.f32 %v3093, 0.0
        %v3126 = vmax.f32 %v3094, 0.0
        %v3127 = vmax.f32 %v3095, 0.0
        %v3128 = vmax.f32 %v3096, 0.0
        %v3129 = vmax.f32 %v3097, 0.0
        %v3130 = vmax.f32 %v3098, 0.0
        %v3131 = vmax.f32 %v3099, 0.0
        %v3132 = vmax.f32 %v3100, 0.0
        %v3133 = vmax.f32 %v3101, 0.0
        %v3134 = vmax.f32 %v3102, 0.0
        %v3135 = vmax.f32 %v3103, 0.0
        %v3136 = vmax.f32 %v3104, 0.0
        %v3137 = vmax.f32 %v3105, 0.0
        %v3138 = vmax.f32 %v3106, 0.0
        %v3139 = vmax.f32 %v3107, 0.0
        %v3140 = vmax.f32 %v3108, 0.0
        %v3141 = vmax.f32 %v3109, 0.0
        %v3142 = vmax.f32 %v3110, 0.0
        %v3143 = vmax.f32 %v3111, 0.0
        %v3144 = vmax.f32 %v3112, 0.0
        %v3145 = vmax.f32 %v3113, 0.0
        %v3146 = vmax.f32 %v3114, 0.0
        %v3147 = vmax.f32 %v3115, 0.0
        %v3148 = vmax.f32 %v3116, 0.0
        %v3149 = vmax.f32 %v3117, 0.0
        %v3150 = vmax.f32 %v3118, 0.0
        %v3151 = vpack.c.bf16 %v3120, %v3119
        %v3152 = vpack.c.bf16 %v3122, %v3121
        %v3153 = vpack.c.bf16 %v3124, %v3123
        %v3154 = vpack.c.bf16 %v3126, %v3125
        %v3155 = vpack.c.bf16 %v3128, %v3127
        %v3156 = vpack.c.bf16 %v3130, %v3129
        %v3157 = vpack.c.bf16 %v3132, %v3131
        %v3158 = vpack.c.bf16 %v3134, %v3133
        %v3159 = vpack.c.bf16 %v3136, %v3135
        %v3160 = vpack.c.bf16 %v3138, %v3137
        %v3161 = vpack.c.bf16 %v3140, %v3139
        %v3162 = vpack.c.bf16 %v3142, %v3141
        %v3163 = vpack.c.bf16 %v3144, %v3143
        %v3164 = vpack.c.bf16 %v3146, %v3145
        %v3165 = vpack.c.bf16 %v3148, %v3147
        %v3166 = vpack.c.bf16 %v3150, %v3149
        %v3167 = vld [vmem:[#allocation9] sm:$0xf]
        %v3168 = vld [vmem:[#allocation9 + $0x4] sm:$0xf]
        %v3169 = vld [vmem:[#allocation9 + $0x8] sm:$0xf]
        %v3170 = vld [vmem:[#allocation9 + $0xc] sm:$0xf]
        %v3171 = vld [vmem:[#allocation9 + $0x10] sm:$0xf]
        %v3172 = vld [vmem:[#allocation9 + $0x14] sm:$0xf]
        %v3173 = vld [vmem:[#allocation9 + $0x18] sm:$0xf]
        %v3174 = vld [vmem:[#allocation9 + $0x1c] sm:$0xf]
        %v3175 = vld [vmem:[#allocation11] sm:$0x1]
        %v3177 = vperm.slane %v3175, 0
        %v3187 = vunpack.c.l.b16 %v3167
        %v3188 = vunpack.c.l.b16 %v3168
        %v3189 = vunpack.c.l.b16 %v3169
        %v3190 = vunpack.c.l.b16 %v3170
        %v3191 = vunpack.c.l.b16 %v3171
        %v3192 = vunpack.c.l.b16 %v3172
        %v3193 = vunpack.c.l.b16 %v3173
        %v3194 = vunpack.c.l.b16 %v3174
        %v3195 = vpack.c.b16 %v3188, %v3187
        %v3196 = vpack.c.b16 %v3190, %v3189
        %v3197 = vpack.c.b16 %v3192, %v3191
        %v3198 = vpack.c.b16 %v3194, %v3193
        %v3204 = vsel %vm1982, %v3151, 0
        %v3207 = vsel %vm1982, %v3152, 0
        %v3210 = vsel %vm1982, %v3153, 0
        %v3213 = vsel %vm1982, %v3154, 0
        %v3216 = vsel %vm1982, %v3155, 0
        %v3219 = vsel %vm1982, %v3156, 0
        %v3222 = vsel %vm1982, %v3157, 0
        %v3225 = vsel %vm1982, %v3158, 0
        %v3228 = vsel %vm1982, %v3159, 0
        %v3231 = vsel %vm1982, %v3160, 0
        %v3234 = vsel %vm1982, %v3161, 0
        %v3237 = vsel %vm1982, %v3162, 0
        %v3240 = vsel %vm1982, %v3163, 0
        %v3243 = vsel %vm1982, %v3164, 0
        %v3246 = vsel %vm1982, %v3165, 0
        %v3249 = vsel %vm1982, %v3166, 0
        %3251 = vmatpush.bf16.msra.mxu0 0
        %3252 = vmatpush.bf16.msra.mxu0 0
        %3253 = vmatpush.bf16.msra.mxu0 0
        %3254 = vmatpush.bf16.msra.mxu0 0
        %3255 = vmatpush.bf16.msra.mxu0 %v3198
        %3256 = vmatpush.bf16.msra.mxu0 %v3197
        %3257 = vmatpush.bf16.msra.mxu0 %v3196
        %3258 = vmatpush.bf16.msra.mxu0 %v3195
        %3259 = vmatmul.bf16.gmra.mxu0 %v3204
        %v3260 = vpop.f32.mrf.mxu0
        %v3261 = vadd.f32 %v3177, %v3260
        %v3262 = vpop.f32.mrf.mxu0
        %v3263 = vadd.f32 %v3177, %v3262
        %3264 = vmatmul.bf16.gmra.mxu0 %v3207
        %v3265 = vpop.f32.mrf.mxu0
        %v3266 = vadd.f32 %v3177, %v3265
        %v3267 = vpop.f32.mrf.mxu0
        %v3268 = vadd.f32 %v3177, %v3267
        %3269 = vmatmul.bf16.gmra.mxu0 %v3210
        %v3270 = vpop.f32.mrf.mxu0
        %v3271 = vadd.f32 %v3177, %v3270
        %v3272 = vpop.f32.mrf.mxu0
        %v3273 = vadd.f32 %v3177, %v3272
        %3274 = vmatmul.bf16.gmra.mxu0 %v3213
        %v3275 = vpop.f32.mrf.mxu0
        %v3276 = vadd.f32 %v3177, %v3275
        %v3277 = vpop.f32.mrf.mxu0
        %v3278 = vadd.f32 %v3177, %v3277
        %3279 = vmatmul.bf16.gmra.mxu0 %v3216
        %v3280 = vpop.f32.mrf.mxu0
        %v3281 = vadd.f32 %v3177, %v3280
        %v3282 = vpop.f32.mrf.mxu0
        %v3283 = vadd.f32 %v3177, %v3282
        %3284 = vmatmul.bf16.gmra.mxu0 %v3219
        %v3285 = vpop.f32.mrf.mxu0
        %v3286 = vadd.f32 %v3177, %v3285
        %v3287 = vpop.f32.mrf.mxu0
        %v3288 = vadd.f32 %v3177, %v3287
        %3289 = vmatmul.bf16.gmra.mxu0 %v3222
        %v3290 = vpop.f32.mrf.mxu0
        %v3291 = vadd.f32 %v3177, %v3290
        %v3292 = vpop.f32.mrf.mxu0
        %v3293 = vadd.f32 %v3177, %v3292
        %3294 = vmatmul.bf16.gmra.mxu0 %v3225
        %v3295 = vpop.f32.mrf.mxu0
        %v3296 = vadd.f32 %v3177, %v3295
        %v3297 = vpop.f32.mrf.mxu0
        %v3298 = vadd.f32 %v3177, %v3297
        %3299 = vmatmul.bf16.gmra.mxu0 %v3228
        %v3300 = vpop.f32.mrf.mxu0
        %v3301 = vadd.f32 %v3177, %v3300
        %v3302 = vpop.f32.mrf.mxu0
        %v3303 = vadd.f32 %v3177, %v3302
        %3304 = vmatmul.bf16.gmra.mxu0 %v3231
        %v3305 = vpop.f32.mrf.mxu0
        %v3306 = vadd.f32 %v3177, %v3305
        %v3307 = vpop.f32.mrf.mxu0
        %v3308 = vadd.f32 %v3177, %v3307
        %3309 = vmatmul.bf16.gmra.mxu0 %v3234
        %v3310 = vpop.f32.mrf.mxu0
        %v3311 = vadd.f32 %v3177, %v3310
        %v3312 = vpop.f32.mrf.mxu0
        %v3313 = vadd.f32 %v3177, %v3312
        %3314 = vmatmul.bf16.gmra.mxu0 %v3237
        %v3315 = vpop.f32.mrf.mxu0
        %v3316 = vadd.f32 %v3177, %v3315
        %v3317 = vpop.f32.mrf.mxu0
        %v3318 = vadd.f32 %v3177, %v3317
        %3319 = vmatmul.bf16.gmra.mxu0 %v3240
        %v3320 = vpop.f32.mrf.mxu0
        %v3321 = vadd.f32 %v3177, %v3320
        %v3322 = vpop.f32.mrf.mxu0
        %v3323 = vadd.f32 %v3177, %v3322
        %3324 = vmatmul.bf16.gmra.mxu0 %v3243
        %v3325 = vpop.f32.mrf.mxu0
        %v3326 = vadd.f32 %v3177, %v3325
        %v3327 = vpop.f32.mrf.mxu0
        %v3328 = vadd.f32 %v3177, %v3327
        %3329 = vmatmul.bf16.gmra.mxu0 %v3246
        %v3330 = vpop.f32.mrf.mxu0
        %v3331 = vadd.f32 %v3177, %v3330
        %v3332 = vpop.f32.mrf.mxu0
        %v3333 = vadd.f32 %v3177, %v3332
        %3334 = vmatmul.bf16.gmra.mxu0 %v3249
        %v3335 = vpop.f32.mrf.mxu0
        %v3336 = vadd.f32 %v3177, %v3335
        %v3337 = vpop.f32.mrf.mxu0
        %v3338 = vadd.f32 %v3177, %v3337
        %3339 = vdwg.mxu0
        %v3340 = vadd.f32 %v3261, %v871
        %v3341 = vadd.f32 %v3263, %v872
        %v3342 = vadd.f32 %v3266, %v873
        %v3343 = vadd.f32 %v3268, %v874
        %v3344 = vadd.f32 %v3271, %v875
        %v3345 = vadd.f32 %v3273, %v876
        %v3346 = vadd.f32 %v3276, %v877
        %v3347 = vadd.f32 %v3278, %v878
        %v3348 = vadd.f32 %v3281, %v879
        %v3349 = vadd.f32 %v3283, %v880
        %v3350 = vadd.f32 %v3286, %v881
        %v3351 = vadd.f32 %v3288, %v882
        %v3352 = vadd.f32 %v3291, %v883
        %v3353 = vadd.f32 %v3293, %v884
        %v3354 = vadd.f32 %v3296, %v885
        %v3355 = vadd.f32 %v3298, %v886
        %v3356 = vadd.f32 %v3301, %v903
        %v3357 = vadd.f32 %v3303, %v904
        %v3358 = vadd.f32 %v3306, %v905
        %v3359 = vadd.f32 %v3308, %v906
        %v3360 = vadd.f32 %v3311, %v907
        %v3361 = vadd.f32 %v3313, %v908
        %v3362 = vadd.f32 %v3316, %v909
        %v3363 = vadd.f32 %v3318, %v910
        %v3364 = vadd.f32 %v3321, %v911
        %v3365 = vadd.f32 %v3323, %v912
        %v3366 = vadd.f32 %v3326, %v913
        %v3367 = vadd.f32 %v3328, %v914
        %v3368 = vadd.f32 %v3331, %v915
        %v3369 = vadd.f32 %v3333, %v916
        %v3370 = vadd.f32 %v3336, %v917
        %v3371 = vadd.f32 %v3338, %v918
        %v3372 = vmax.f32 %v3340, 0.0
        %v3373 = vmax.f32 %v3341, 0.0
        %v3374 = vmax.f32 %v3342, 0.0
        %v3375 = vmax.f32 %v3343, 0.0
        %v3376 = vmax.f32 %v3344, 0.0
        %v3377 = vmax.f32 %v3345, 0.0
        %v3378 = vmax.f32 %v3346, 0.0
        %v3379 = vmax.f32 %v3347, 0.0
        %v3380 = vmax.f32 %v3348, 0.0
        %v3381 = vmax.f32 %v3349, 0.0
        %v3382 = vmax.f32 %v3350, 0.0
        %v3383 = vmax.f32 %v3351, 0.0
        %v3384 = vmax.f32 %v3352, 0.0
        %v3385 = vmax.f32 %v3353, 0.0
        %v3386 = vmax.f32 %v3354, 0.0
        %v3387 = vmax.f32 %v3355, 0.0
        %v3388 = vmax.f32 %v3356, 0.0
        %v3389 = vmax.f32 %v3357, 0.0
        %v3390 = vmax.f32 %v3358, 0.0
        %v3391 = vmax.f32 %v3359, 0.0
        %v3392 = vmax.f32 %v3360, 0.0
        %v3393 = vmax.f32 %v3361, 0.0
        %v3394 = vmax.f32 %v3362, 0.0
        %v3395 = vmax.f32 %v3363, 0.0
        %v3396 = vmax.f32 %v3364, 0.0
        %v3397 = vmax.f32 %v3365, 0.0
        %v3398 = vmax.f32 %v3366, 0.0
        %v3399 = vmax.f32 %v3367, 0.0
        %v3400 = vmax.f32 %v3368, 0.0
        %v3401 = vmax.f32 %v3369, 0.0
        %v3402 = vmax.f32 %v3370, 0.0
        %v3403 = vmax.f32 %v3371, 0.0
        %v3404 = vpack.c.bf16 %v3373, %v3372
        %v3405 = vpack.c.bf16 %v3375, %v3374
        %v3406 = vpack.c.bf16 %v3377, %v3376
        %v3407 = vpack.c.bf16 %v3379, %v3378
        %v3408 = vpack.c.bf16 %v3381, %v3380
        %v3409 = vpack.c.bf16 %v3383, %v3382
        %v3410 = vpack.c.bf16 %v3385, %v3384
        %v3411 = vpack.c.bf16 %v3387, %v3386
        %v3412 = vpack.c.bf16 %v3389, %v3388
        %v3413 = vpack.c.bf16 %v3391, %v3390
        %v3414 = vpack.c.bf16 %v3393, %v3392
        %v3415 = vpack.c.bf16 %v3395, %v3394
        %v3416 = vpack.c.bf16 %v3397, %v3396
        %v3417 = vpack.c.bf16 %v3399, %v3398
        %v3418 = vpack.c.bf16 %v3401, %v3400
        %v3419 = vpack.c.bf16 %v3403, %v3402
        %v3420 = vld [vmem:[#allocation12] sm:$0xf]
        %v3421 = vld [vmem:[#allocation12 + $0x4] sm:$0xf]
        %v3422 = vld [vmem:[#allocation12 + $0x8] sm:$0xf]
        %v3423 = vld [vmem:[#allocation12 + $0xc] sm:$0xf]
        %v3424 = vld [vmem:[#allocation12 + $0x10] sm:$0xf]
        %v3425 = vld [vmem:[#allocation12 + $0x14] sm:$0xf]
        %v3426 = vld [vmem:[#allocation12 + $0x18] sm:$0xf]
        %v3427 = vld [vmem:[#allocation12 + $0x1c] sm:$0xf]
        %v3428 = vld [vmem:[#allocation14] sm:$0x1]
        %v3430 = vperm.slane %v3428, 0
        %v3440 = vunpack.c.l.b16 %v3420
        %v3441 = vunpack.c.l.b16 %v3421
        %v3442 = vunpack.c.l.b16 %v3422
        %v3443 = vunpack.c.l.b16 %v3423
        %v3444 = vunpack.c.l.b16 %v3424
        %v3445 = vunpack.c.l.b16 %v3425
        %v3446 = vunpack.c.l.b16 %v3426
        %v3447 = vunpack.c.l.b16 %v3427
        %v3448 = vpack.c.b16 %v3441, %v3440
        %v3449 = vpack.c.b16 %v3443, %v3442
        %v3450 = vpack.c.b16 %v3445, %v3444
        %v3451 = vpack.c.b16 %v3447, %v3446
        %v3457 = vsel %vm1982, %v3404, 0
        %v3460 = vsel %vm1982, %v3405, 0
        %v3463 = vsel %vm1982, %v3406, 0
        %v3466 = vsel %vm1982, %v3407, 0
        %v3469 = vsel %vm1982, %v3408, 0
        %v3472 = vsel %vm1982, %v3409, 0
        %v3475 = vsel %vm1982, %v3410, 0
        %v3478 = vsel %vm1982, %v3411, 0
        %v3481 = vsel %vm1982, %v3412, 0
        %v3484 = vsel %vm1982, %v3413, 0
        %v3487 = vsel %vm1982, %v3414, 0
        %v3490 = vsel %vm1982, %v3415, 0
        %v3493 = vsel %vm1982, %v3416, 0
        %v3496 = vsel %vm1982, %v3417, 0
        %v3499 = vsel %vm1982, %v3418, 0
        %v3502 = vsel %vm1982, %v3419, 0
        %3504 = vmatpush.bf16.msra.mxu0 0
        %3505 = vmatpush.bf16.msra.mxu0 0
        %3506 = vmatpush.bf16.msra.mxu0 0
        %3507 = vmatpush.bf16.msra.mxu0 0
        %3508 = vmatpush.bf16.msra.mxu0 %v3451
        %3509 = vmatpush.bf16.msra.mxu0 %v3450
        %3510 = vmatpush.bf16.msra.mxu0 %v3449
        %3511 = vmatpush.bf16.msra.mxu0 %v3448
        %3512 = vmatmul.bf16.gmra.mxu0 %v3457
        %v3513 = vpop.f32.mrf.mxu0
        %v3514 = vadd.f32 %v3430, %v3513
        %v3515 = vpop.f32.mrf.mxu0
        %v3516 = vadd.f32 %v3430, %v3515
        %3517 = vmatmul.bf16.gmra.mxu0 %v3460
        %v3518 = vpop.f32.mrf.mxu0
        %v3519 = vadd.f32 %v3430, %v3518
        %v3520 = vpop.f32.mrf.mxu0
        %v3521 = vadd.f32 %v3430, %v3520
        %3522 = vmatmul.bf16.gmra.mxu0 %v3463
        %v3523 = vpop.f32.mrf.mxu0
        %v3524 = vadd.f32 %v3430, %v3523
        %v3525 = vpop.f32.mrf.mxu0
        %v3526 = vadd.f32 %v3430, %v3525
        %3527 = vmatmul.bf16.gmra.mxu0 %v3466
        %v3528 = vpop.f32.mrf.mxu0
        %v3529 = vadd.f32 %v3430, %v3528
        %v3530 = vpop.f32.mrf.mxu0
        %v3531 = vadd.f32 %v3430, %v3530
        %3532 = vmatmul.bf16.gmra.mxu0 %v3469
        %v3533 = vpop.f32.mrf.mxu0
        %v3534 = vadd.f32 %v3430, %v3533
        %v3535 = vpop.f32.mrf.mxu0
        %v3536 = vadd.f32 %v3430, %v3535
        %3537 = vmatmul.bf16.gmra.mxu0 %v3472
        %v3538 = vpop.f32.mrf.mxu0
        %v3539 = vadd.f32 %v3430, %v3538
        %v3540 = vpop.f32.mrf.mxu0
        %v3541 = vadd.f32 %v3430, %v3540
        %3542 = vmatmul.bf16.gmra.mxu0 %v3475
        %v3543 = vpop.f32.mrf.mxu0
        %v3544 = vadd.f32 %v3430, %v3543
        %v3545 = vpop.f32.mrf.mxu0
        %v3546 = vadd.f32 %v3430, %v3545
        %3547 = vmatmul.bf16.gmra.mxu0 %v3478
        %v3548 = vpop.f32.mrf.mxu0
        %v3549 = vadd.f32 %v3430, %v3548
        %v3550 = vpop.f32.mrf.mxu0
        %v3551 = vadd.f32 %v3430, %v3550
        %3552 = vmatmul.bf16.gmra.mxu0 %v3481
        %v3553 = vpop.f32.mrf.mxu0
        %v3554 = vadd.f32 %v3430, %v3553
        %v3555 = vpop.f32.mrf.mxu0
        %v3556 = vadd.f32 %v3430, %v3555
        %3557 = vmatmul.bf16.gmra.mxu0 %v3484
        %v3558 = vpop.f32.mrf.mxu0
        %v3559 = vadd.f32 %v3430, %v3558
        %v3560 = vpop.f32.mrf.mxu0
        %v3561 = vadd.f32 %v3430, %v3560
        %3562 = vmatmul.bf16.gmra.mxu0 %v3487
        %v3563 = vpop.f32.mrf.mxu0
        %v3564 = vadd.f32 %v3430, %v3563
        %v3565 = vpop.f32.mrf.mxu0
        %v3566 = vadd.f32 %v3430, %v3565
        %3567 = vmatmul.bf16.gmra.mxu0 %v3490
        %v3568 = vpop.f32.mrf.mxu0
        %v3569 = vadd.f32 %v3430, %v3568
        %v3570 = vpop.f32.mrf.mxu0
        %v3571 = vadd.f32 %v3430, %v3570
        %3572 = vmatmul.bf16.gmra.mxu0 %v3493
        %v3573 = vpop.f32.mrf.mxu0
        %v3574 = vadd.f32 %v3430, %v3573
        %v3575 = vpop.f32.mrf.mxu0
        %v3576 = vadd.f32 %v3430, %v3575
        %3577 = vmatmul.bf16.gmra.mxu0 %v3496
        %v3578 = vpop.f32.mrf.mxu0
        %v3579 = vadd.f32 %v3430, %v3578
        %v3580 = vpop.f32.mrf.mxu0
        %v3581 = vadd.f32 %v3430, %v3580
        %3582 = vmatmul.bf16.gmra.mxu0 %v3499
        %v3583 = vpop.f32.mrf.mxu0
        %v3584 = vadd.f32 %v3430, %v3583
        %v3585 = vpop.f32.mrf.mxu0
        %v3586 = vadd.f32 %v3430, %v3585
        %3587 = vmatmul.bf16.gmra.mxu0 %v3502
        %v3588 = vpop.f32.mrf.mxu0
        %v3589 = vadd.f32 %v3430, %v3588
        %v3590 = vpop.f32.mrf.mxu0
        %v3591 = vadd.f32 %v3430, %v3590
        %3592 = vdwg.mxu0
        %v3593 = vmax.f32 %v3514, 0.0
        %v3594 = vmax.f32 %v3516, 0.0
        %v3595 = vmax.f32 %v3519, 0.0
        %v3596 = vmax.f32 %v3521, 0.0
        %v3597 = vmax.f32 %v3524, 0.0
        %v3598 = vmax.f32 %v3526, 0.0
        %v3599 = vmax.f32 %v3529, 0.0
        %v3600 = vmax.f32 %v3531, 0.0
        %v3601 = vmax.f32 %v3534, 0.0
        %v3602 = vmax.f32 %v3536, 0.0
        %v3603 = vmax.f32 %v3539, 0.0
        %v3604 = vmax.f32 %v3541, 0.0
        %v3605 = vmax.f32 %v3544, 0.0
        %v3606 = vmax.f32 %v3546, 0.0
        %v3607 = vmax.f32 %v3549, 0.0
        %v3608 = vmax.f32 %v3551, 0.0
        %v3609 = vmax.f32 %v3554, 0.0
        %v3610 = vmax.f32 %v3556, 0.0
        %v3611 = vmax.f32 %v3559, 0.0
        %v3612 = vmax.f32 %v3561, 0.0
        %v3613 = vmax.f32 %v3564, 0.0
        %v3614 = vmax.f32 %v3566, 0.0
        %v3615 = vmax.f32 %v3569, 0.0
        %v3616 = vmax.f32 %v3571, 0.0
        %v3617 = vmax.f32 %v3574, 0.0
        %v3618 = vmax.f32 %v3576, 0.0
        %v3619 = vmax.f32 %v3579, 0.0
        %v3620 = vmax.f32 %v3581, 0.0
        %v3621 = vmax.f32 %v3584, 0.0
        %v3622 = vmax.f32 %v3586, 0.0
        %v3623 = vmax.f32 %v3589, 0.0
        %v3624 = vmax.f32 %v3591, 0.0
        %3625 = vst [vmem:[#allocation2 + $0x48] sm:$0xff] %v3593
        %3626 = vst [vmem:[#allocation2 + $0x50] sm:$0xff] %v3594
        %3627 = vst [vmem:[#allocation2 + $0x58] sm:$0xff] %v3595
        %3628 = vst [vmem:[#allocation2 + $0x60] sm:$0xff] %v3596
        %3629 = vst [vmem:[#allocation2 + $0x68] sm:$0xff] %v3597
        %3630 = vst [vmem:[#allocation2 + $0x70] sm:$0xff] %v3598
        %3631 = vst [vmem:[#allocation2 + $0x78] sm:$0xff] %v3599
        %3632 = vst [vmem:[#allocation2 + $0x80] sm:$0xff] %v3600
        %3633 = vst [vmem:[#allocation2 + $0x88] sm:$0xff] %v3601
        %3634 = vst [vmem:[#allocation2 + $0x90] sm:$0xff] %v3602
        %3635 = vst [vmem:[#allocation2 + $0x98] sm:$0xff] %v3603
        %3636 = vst [vmem:[#allocation2 + $0xa0] sm:$0xff] %v3604
        %3637 = vst [vmem:[#allocation2 + $0xa8] sm:$0xff] %v3605
        %3638 = vst [vmem:[#allocation2 + $0xb0] sm:$0xff] %v3606
        %3639 = vst [vmem:[#allocation2 + $0xb8] sm:$0xff] %v3607
        %3640 = vst [vmem:[#allocation2 + $0xc0] sm:$0xff] %v3608
        %3641 = vst [vmem:[#allocation2 + $0xc8] sm:$0xff] %v3609
        %3642 = vst [vmem:[#allocation2 + $0xd0] sm:$0xff] %v3610
        %3643 = vst [vmem:[#allocation2 + $0xd8] sm:$0xff] %v3611
        %3644 = vst [vmem:[#allocation2 + $0xe0] sm:$0xff] %v3612
        %3645 = vst [vmem:[#allocation2 + $0xe8] sm:$0xff] %v3613
        %3646 = vst [vmem:[#allocation2 + $0xf0] sm:$0xff] %v3614
        %3647 = vst [vmem:[#allocation2 + $0xf8] sm:$0xff] %v3615
        %3648 = vst [vmem:[#allocation2 + $0x100] sm:$0xff] %v3616
        %3649 = vst [vmem:[#allocation2 + $0x108] sm:$0xff] %v3617
        %3650 = vst [vmem:[#allocation2 + $0x110] sm:$0xff] %v3618
        %3651 = vst [vmem:[#allocation2 + $0x118] sm:$0xff] %v3619
        %3652 = vst [vmem:[#allocation2 + $0x120] sm:$0xff] %v3620
        %3653 = vst [vmem:[#allocation2 + $0x128] sm:$0xff] %v3621
        %3654 = vst [vmem:[#allocation2 + $0x130] sm:$0xff] %v3622
        %3655 = vst [vmem:[#allocation2 + $0x138] sm:$0xff] %v3623
        %3656 = vst [vmem:[#allocation2 + $0x140] sm:$0xff] %v3624
        %v3657 = vld [vmem:[#allocation15] sm:$0xff]
        %v3658 = vld [vmem:[#allocation15 + $0x8] sm:$0x1]
        %v3659 = vld [vmem:[#allocation2 + $0x15] sm:$0xff]
        %v3660 = vld [vmem:[#allocation2 + $0x1d] sm:$0xff]
        %v3661 = vld [vmem:[#allocation2 + $0x25] sm:$0xff]
        %v3662 = vld [vmem:[#allocation2 + $0x2d] sm:$0xff]
        %v3663 = vld [vmem:[#allocation2 + $0x35] sm:$0xff]
        %v3664 = vld [vmem:[#allocation2 + $0x3d] sm:$0xff]
        %v3665 = vld [vmem:[#allocation2 + $0x45] sm:$0xff]
        %v3666 = vld [vmem:[#allocation2 + $0x4d] sm:$0xff]
        %v3667 = vld [vmem:[#allocation2 + $0x55] sm:$0xff]
        %v3668 = vld [vmem:[#allocation2 + $0x5d] sm:$0xff]
        %v3669 = vld [vmem:[#allocation2 + $0x65] sm:$0xff]
        %v3670 = vld [vmem:[#allocation2 + $0x6d] sm:$0xff]
        %v3671 = vld [vmem:[#allocation2 + $0x75] sm:$0xff]
        %v3672 = vld [vmem:[#allocation2 + $0x7d] sm:$0xff]
        %v3673 = vld [vmem:[#allocation2 + $0x85] sm:$0xff]
        %v3674 = vld [vmem:[#allocation2 + $0x8d] sm:$0xff]
        %v3675 = vld [vmem:[#allocation2 + $0x95] sm:$0xff]
        %v3676 = vld [vmem:[#allocation2 + $0x9d] sm:$0xff]
        %v3677 = vld [vmem:[#allocation2 + $0xa5] sm:$0xff]
        %v3678 = vld [vmem:[#allocation2 + $0xad] sm:$0xff]
        %v3679 = vld [vmem:[#allocation2 + $0xb5] sm:$0xff]
        %v3680 = vld [vmem:[#allocation2 + $0xbd] sm:$0xff]
        %v3681 = vld [vmem:[#allocation2 + $0xc5] sm:$0xff]
        %v3682 = vld [vmem:[#allocation2 + $0xcd] sm:$0xff]
        %v3683 = vld [vmem:[#allocation2 + $0xd5] sm:$0xff]
        %v3684 = vld [vmem:[#allocation2 + $0xdd] sm:$0xff]
        %v3685 = vld [vmem:[#allocation2 + $0xe5] sm:$0xff]
        %v3686 = vld [vmem:[#allocation2 + $0xed] sm:$0xff]
        %v3687 = vld [vmem:[#allocation2 + $0xf5] sm:$0xff]
        %v3688 = vld [vmem:[#allocation2 + $0xfd] sm:$0xff]
        %v3689 = vld [vmem:[#allocation2 + $0x105] sm:$0xff]
        %v3690 = vld [vmem:[#allocation2 + $0x10d] sm:$0xff]
        %v3691 = vperm.slane %v3657, 0
        %v3692 = vmul.f32 %v3659, %v3691
        %v3693 = vmul.f32 %v3660, %v3691
        %v3694 = vmul.f32 %v3661, %v3691
        %v3695 = vmul.f32 %v3662, %v3691
        %v3696 = vmul.f32 %v3663, %v3691
        %v3697 = vmul.f32 %v3664, %v3691
        %v3698 = vmul.f32 %v3665, %v3691
        %v3699 = vmul.f32 %v3666, %v3691
        %v3700 = vmul.f32 %v3667, %v3691
        %v3701 = vmul.f32 %v3668, %v3691
        %v3702 = vmul.f32 %v3669, %v3691
        %v3703 = vmul.f32 %v3670, %v3691
        %v3704 = vmul.f32 %v3671, %v3691
        %v3705 = vmul.f32 %v3672, %v3691
        %v3706 = vmul.f32 %v3673, %v3691
        %v3707 = vmul.f32 %v3674, %v3691
        %v3708 = vmul.f32 %v3675, %v3691
        %v3709 = vmul.f32 %v3676, %v3691
        %v3710 = vmul.f32 %v3677, %v3691
        %v3711 = vmul.f32 %v3678, %v3691
        %v3712 = vmul.f32 %v3679, %v3691
        %v3713 = vmul.f32 %v3680, %v3691
        %v3714 = vmul.f32 %v3681, %v3691
        %v3715 = vmul.f32 %v3682, %v3691
        %v3716 = vmul.f32 %v3683, %v3691
        %v3717 = vmul.f32 %v3684, %v3691
        %v3718 = vmul.f32 %v3685, %v3691
        %v3719 = vmul.f32 %v3686, %v3691
        %v3720 = vmul.f32 %v3687, %v3691
        %v3721 = vmul.f32 %v3688, %v3691
        %v3722 = vmul.f32 %v3689, %v3691
        %v3723 = vmul.f32 %v3690, %v3691
        %v3724 = vld [vmem:[#allocation2 + $0x115] sm:$0xff]
        %v3725 = vld [vmem:[#allocation2 + $0x11d] sm:$0xff]
        %v3726 = vld [vmem:[#allocation2 + $0x125] sm:$0xff]
        %v3727 = vld [vmem:[#allocation2 + $0x12d] sm:$0xff]
        %v3728 = vld [vmem:[#allocation2 + $0x135] sm:$0xff]
        %v3729 = vld [vmem:[#allocation2 + $0x13d] sm:$0xff]
        %v3730 = vperm.slane %v3657, 3
        %v3731 = vmul.f32 %v3665, %v3730
        %v3732 = vmul.f32 %v3666, %v3730
        %v3733 = vmul.f32 %v3667, %v3730
        %v3734 = vmul.f32 %v3668, %v3730
        %v3735 = vmul.f32 %v3669, %v3730
        %v3736 = vmul.f32 %v3670, %v3730
        %v3737 = vmul.f32 %v3671, %v3730
        %v3738 = vmul.f32 %v3672, %v3730
        %v3739 = vmul.f32 %v3673, %v3730
        %v3740 = vmul.f32 %v3674, %v3730
        %v3741 = vmul.f32 %v3675, %v3730
        %v3742 = vmul.f32 %v3676, %v3730
        %v3743 = vmul.f32 %v3677, %v3730
        %v3744 = vmul.f32 %v3678, %v3730
        %v3745 = vmul.f32 %v3679, %v3730
        %v3746 = vmul.f32 %v3680, %v3730
        %v3747 = vmul.f32 %v3681, %v3730
        %v3748 = vmul.f32 %v3682, %v3730
        %v3749 = vmul.f32 %v3683, %v3730
        %v3750 = vmul.f32 %v3684, %v3730
        %v3751 = vmul.f32 %v3685, %v3730
        %v3752 = vmul.f32 %v3686, %v3730
        %v3753 = vmul.f32 %v3687, %v3730
        %v3754 = vmul.f32 %v3688, %v3730
        %v3755 = vmul.f32 %v3689, %v3730
        %v3756 = vmul.f32 %v3690, %v3730
        %v3757 = vmul.f32 %v3724, %v3730
        %v3758 = vmul.f32 %v3725, %v3730
        %v3759 = vmul.f32 %v3726, %v3730
        %v3760 = vmul.f32 %v3727, %v3730
        %v3761 = vmul.f32 %v3728, %v3730
        %v3762 = vmul.f32 %v3729, %v3730
        %v3763 = vadd.f32 %v3692, %v3731
        %v3764 = vadd.f32 %v3693, %v3732
        %v3765 = vadd.f32 %v3694, %v3733
        %v3766 = vadd.f32 %v3695, %v3734
        %v3767 = vadd.f32 %v3696, %v3735
        %v3768 = vadd.f32 %v3697, %v3736
        %v3769 = vadd.f32 %v3698, %v3737
        %v3770 = vadd.f32 %v3699, %v3738
        %v3771 = vadd.f32 %v3700, %v3739
        %v3772 = vadd.f32 %v3701, %v3740
        %v3773 = vadd.f32 %v3702, %v3741
        %v3774 = vadd.f32 %v3703, %v3742
        %v3775 = vadd.f32 %v3704, %v3743
        %v3776 = vadd.f32 %v3705, %v3744
        %v3777 = vadd.f32 %v3706, %v3745
        %v3778 = vadd.f32 %v3707, %v3746
        %v3779 = vadd.f32 %v3708, %v3747
        %v3780 = vadd.f32 %v3709, %v3748
        %v3781 = vadd.f32 %v3710, %v3749
        %v3782 = vadd.f32 %v3711, %v3750
        %v3783 = vadd.f32 %v3712, %v3751
        %v3784 = vadd.f32 %v3713, %v3752
        %v3785 = vadd.f32 %v3714, %v3753
        %v3786 = vadd.f32 %v3715, %v3754
        %v3787 = vadd.f32 %v3716, %v3755
        %v3788 = vadd.f32 %v3717, %v3756
        %v3789 = vadd.f32 %v3718, %v3757
        %v3790 = vadd.f32 %v3719, %v3758
        %v3791 = vadd.f32 %v3720, %v3759
        %v3792 = vadd.f32 %v3721, %v3760
        %v3793 = vadd.f32 %v3722, %v3761
        %v3794 = vadd.f32 %v3723, %v3762
        %v3795 = vld [vmem:[#allocation2 + $0x145] sm:$0xff]
        %v3796 = vld [vmem:[#allocation2 + $0x14d] sm:$0xff]
        %v3797 = vld [vmem:[#allocation2 + $0x155] sm:$0xff]
        %v3798 = vld [vmem:[#allocation2 + $0x15d] sm:$0xff]
        %v3799 = vld [vmem:[#allocation2 + $0x165] sm:$0xff]
        %v3800 = vld [vmem:[#allocation2 + $0x16d] sm:$0xff]
        %v3801 = vperm.slane %v3657, 6
        %v3802 = vmul.f32 %v3671, %v3801
        %v3803 = vmul.f32 %v3672, %v3801
        %v3804 = vmul.f32 %v3673, %v3801
        %v3805 = vmul.f32 %v3674, %v3801
        %v3806 = vmul.f32 %v3675, %v3801
        %v3807 = vmul.f32 %v3676, %v3801
        %v3808 = vmul.f32 %v3677, %v3801
        %v3809 = vmul.f32 %v3678, %v3801
        %v3810 = vmul.f32 %v3679, %v3801
        %v3811 = vmul.f32 %v3680, %v3801
        %v3812 = vmul.f32 %v3681, %v3801
        %v3813 = vmul.f32 %v3682, %v3801
        %v3814 = vmul.f32 %v3683, %v3801
        %v3815 = vmul.f32 %v3684, %v3801
        %v3816 = vmul.f32 %v3685, %v3801
        %v3817 = vmul.f32 %v3686, %v3801
        %v3818 = vmul.f32 %v3687, %v3801
        %v3819 = vmul.f32 %v3688, %v3801
        %v3820 = vmul.f32 %v3689, %v3801
        %v3821 = vmul.f32 %v3690, %v3801
        %v3822 = vmul.f32 %v3724, %v3801
        %v3823 = vmul.f32 %v3725, %v3801
        %v3824 = vmul.f32 %v3726, %v3801
        %v3825 = vmul.f32 %v3727, %v3801
        %v3826 = vmul.f32 %v3728, %v3801
        %v3827 = vmul.f32 %v3729, %v3801
        %v3828 = vmul.f32 %v3795, %v3801
        %v3829 = vmul.f32 %v3796, %v3801
        %v3830 = vmul.f32 %v3797, %v3801
        %v3831 = vmul.f32 %v3798, %v3801
        %v3832 = vmul.f32 %v3799, %v3801
        %v3833 = vmul.f32 %v3800, %v3801
        %v3834 = vadd.f32 %v3763, %v3802
        %v3835 = vadd.f32 %v3764, %v3803
        %v3836 = vadd.f32 %v3765, %v3804
        %v3837 = vadd.f32 %v3766, %v3805
        %v3838 = vadd.f32 %v3767, %v3806
        %v3839 = vadd.f32 %v3768, %v3807
        %v3840 = vadd.f32 %v3769, %v3808
        %v3841 = vadd.f32 %v3770, %v3809
        %v3842 = vadd.f32 %v3771, %v3810
        %v3843 = vadd.f32 %v3772, %v3811
        %v3844 = vadd.f32 %v3773, %v3812
        %v3845 = vadd.f32 %v3774, %v3813
        %v3846 = vadd.f32 %v3775, %v3814
        %v3847 = vadd.f32 %v3776, %v3815
        %v3848 = vadd.f32 %v3777, %v3816
        %v3849 = vadd.f32 %v3778, %v3817
        %v3850 = vadd.f32 %v3779, %v3818
        %v3851 = vadd.f32 %v3780, %v3819
        %v3852 = vadd.f32 %v3781, %v3820
        %v3853 = vadd.f32 %v3782, %v3821
        %v3854 = vadd.f32 %v3783, %v3822
        %v3855 = vadd.f32 %v3784, %v3823
        %v3856 = vadd.f32 %v3785, %v3824
        %v3857 = vadd.f32 %v3786, %v3825
        %v3858 = vadd.f32 %v3787, %v3826
        %v3859 = vadd.f32 %v3788, %v3827
        %v3860 = vadd.f32 %v3789, %v3828
        %v3861 = vadd.f32 %v3790, %v3829
        %v3862 = vadd.f32 %v3791, %v3830
        %v3863 = vadd.f32 %v3792, %v3831
        %v3864 = vadd.f32 %v3793, %v3832
        %v3865 = vadd.f32 %v3794, %v3833
        %v3866 = vld [vmem:[#allocation2 + $0x18] sm:$0xff]
        %v3867 = vld [vmem:[#allocation2 + $0x20] sm:$0xff]
        %v3868 = vld [vmem:[#allocation2 + $0x28] sm:$0xff]
        %v3869 = vld [vmem:[#allocation2 + $0x30] sm:$0xff]
        %v3870 = vld [vmem:[#allocation2 + $0x38] sm:$0xff]
        %v3871 = vld [vmem:[#allocation2 + $0x40] sm:$0xff]
        %v3872 = vld [vmem:[#allocation2 + $0x48] sm:$0xff]
        %v3873 = vld [vmem:[#allocation2 + $0x50] sm:$0xff]
        %v3874 = vld [vmem:[#allocation2 + $0x58] sm:$0xff]
        %v3875 = vld [vmem:[#allocation2 + $0x60] sm:$0xff]
        %v3876 = vld [vmem:[#allocation2 + $0x68] sm:$0xff]
        %v3877 = vld [vmem:[#allocation2 + $0x70] sm:$0xff]
        %v3878 = vld [vmem:[#allocation2 + $0x78] sm:$0xff]
        %v3879 = vld [vmem:[#allocation2 + $0x80] sm:$0xff]
        %v3880 = vld [vmem:[#allocation2 + $0x88] sm:$0xff]
        %v3881 = vld [vmem:[#allocation2 + $0x90] sm:$0xff]
        %v3882 = vld [vmem:[#allocation2 + $0x98] sm:$0xff]
        %v3883 = vld [vmem:[#allocation2 + $0xa0] sm:$0xff]
        %v3884 = vld [vmem:[#allocation2 + $0xa8] sm:$0xff]
        %v3885 = vld [vmem:[#allocation2 + $0xb0] sm:$0xff]
        %v3886 = vld [vmem:[#allocation2 + $0xb8] sm:$0xff]
        %v3887 = vld [vmem:[#allocation2 + $0xc0] sm:$0xff]
        %v3888 = vld [vmem:[#allocation2 + $0xc8] sm:$0xff]
        %v3889 = vld [vmem:[#allocation2 + $0xd0] sm:$0xff]
        %v3890 = vld [vmem:[#allocation2 + $0xd8] sm:$0xff]
        %v3891 = vld [vmem:[#allocation2 + $0xe0] sm:$0xff]
        %v3892 = vld [vmem:[#allocation2 + $0xe8] sm:$0xff]
        %v3893 = vld [vmem:[#allocation2 + $0xf0] sm:$0xff]
        %v3894 = vld [vmem:[#allocation2 + $0xf8] sm:$0xff]
        %v3895 = vld [vmem:[#allocation2 + $0x100] sm:$0xff]
        %v3896 = vld [vmem:[#allocation2 + $0x108] sm:$0xff]
        %v3897 = vld [vmem:[#allocation2 + $0x110] sm:$0xff]
        %v3898 = vperm.slane %v3657, 1
        %v3899 = vmul.f32 %v3866, %v3898
        %v3900 = vmul.f32 %v3867, %v3898
        %v3901 = vmul.f32 %v3868, %v3898
        %v3902 = vmul.f32 %v3869, %v3898
        %v3903 = vmul.f32 %v3870, %v3898
        %v3904 = vmul.f32 %v3871, %v3898
        %v3905 = vmul.f32 %v3872, %v3898
        %v3906 = vmul.f32 %v3873, %v3898
        %v3907 = vmul.f32 %v3874, %v3898
        %v3908 = vmul.f32 %v3875, %v3898
        %v3909 = vmul.f32 %v3876, %v3898
        %v3910 = vmul.f32 %v3877, %v3898
        %v3911 = vmul.f32 %v3878, %v3898
        %v3912 = vmul.f32 %v3879, %v3898
        %v3913 = vmul.f32 %v3880, %v3898
        %v3914 = vmul.f32 %v3881, %v3898
        %v3915 = vmul.f32 %v3882, %v3898
        %v3916 = vmul.f32 %v3883, %v3898
        %v3917 = vmul.f32 %v3884, %v3898
        %v3918 = vmul.f32 %v3885, %v3898
        %v3919 = vmul.f32 %v3886, %v3898
        %v3920 = vmul.f32 %v3887, %v3898
        %v3921 = vmul.f32 %v3888, %v3898
        %v3922 = vmul.f32 %v3889, %v3898
        %v3923 = vmul.f32 %v3890, %v3898
        %v3924 = vmul.f32 %v3891, %v3898
        %v3925 = vmul.f32 %v3892, %v3898
        %v3926 = vmul.f32 %v3893, %v3898
        %v3927 = vmul.f32 %v3894, %v3898
        %v3928 = vmul.f32 %v3895, %v3898
        %v3929 = vmul.f32 %v3896, %v3898
        %v3930 = vmul.f32 %v3897, %v3898
        %v3931 = vld [vmem:[#allocation2 + $0x118] sm:$0xff]
        %v3932 = vld [vmem:[#allocation2 + $0x120] sm:$0xff]
        %v3933 = vld [vmem:[#allocation2 + $0x128] sm:$0xff]
        %v3934 = vld [vmem:[#allocation2 + $0x130] sm:$0xff]
        %v3935 = vld [vmem:[#allocation2 + $0x138] sm:$0xff]
        %v3936 = vld [vmem:[#allocation2 + $0x140] sm:$0xff]
        %v3937 = vperm.slane %v3657, 4
        %v3938 = vmul.f32 %v3872, %v3937
        %v3939 = vmul.f32 %v3873, %v3937
        %v3940 = vmul.f32 %v3874, %v3937
        %v3941 = vmul.f32 %v3875, %v3937
        %v3942 = vmul.f32 %v3876, %v3937
        %v3943 = vmul.f32 %v3877, %v3937
        %v3944 = vmul.f32 %v3878, %v3937
        %v3945 = vmul.f32 %v3879, %v3937
        %v3946 = vmul.f32 %v3880, %v3937
        %v3947 = vmul.f32 %v3881, %v3937
        %v3948 = vmul.f32 %v3882, %v3937
        %v3949 = vmul.f32 %v3883, %v3937
        %v3950 = vmul.f32 %v3884, %v3937
        %v3951 = vmul.f32 %v3885, %v3937
        %v3952 = vmul.f32 %v3886, %v3937
        %v3953 = vmul.f32 %v3887, %v3937
        %v3954 = vmul.f32 %v3888, %v3937
        %v3955 = vmul.f32 %v3889, %v3937
        %v3956 = vmul.f32 %v3890, %v3937
        %v3957 = vmul.f32 %v3891, %v3937
        %v3958 = vmul.f32 %v3892, %v3937
        %v3959 = vmul.f32 %v3893, %v3937
        %v3960 = vmul.f32 %v3894, %v3937
        %v3961 = vmul.f32 %v3895, %v3937
        %v3962 = vmul.f32 %v3896, %v3937
        %v3963 = vmul.f32 %v3897, %v3937
        %v3964 = vmul.f32 %v3931, %v3937
        %v3965 = vmul.f32 %v3932, %v3937
        %v3966 = vmul.f32 %v3933, %v3937
        %v3967 = vmul.f32 %v3934, %v3937
        %v3968 = vmul.f32 %v3935, %v3937
        %v3969 = vmul.f32 %v3936, %v3937
        %v3970 = vadd.f32 %v3899, %v3938
        %v3971 = vadd.f32 %v3900, %v3939
        %v3972 = vadd.f32 %v3901, %v3940
        %v3973 = vadd.f32 %v3902, %v3941
        %v3974 = vadd.f32 %v3903, %v3942
        %v3975 = vadd.f32 %v3904, %v3943
        %v3976 = vadd.f32 %v3905, %v3944
        %v3977 = vadd.f32 %v3906, %v3945
        %v3978 = vadd.f32 %v3907, %v3946
        %v3979 = vadd.f32 %v3908, %v3947
        %v3980 = vadd.f32 %v3909, %v3948
        %v3981 = vadd.f32 %v3910, %v3949
        %v3982 = vadd.f32 %v3911, %v3950
        %v3983 = vadd.f32 %v3912, %v3951
        %v3984 = vadd.f32 %v3913, %v3952
        %v3985 = vadd.f32 %v3914, %v3953
        %v3986 = vadd.f32 %v3915, %v3954
        %v3987 = vadd.f32 %v3916, %v3955
        %v3988 = vadd.f32 %v3917, %v3956
        %v3989 = vadd.f32 %v3918, %v3957
        %v3990 = vadd.f32 %v3919, %v3958
        %v3991 = vadd.f32 %v3920, %v3959
        %v3992 = vadd.f32 %v3921, %v3960
        %v3993 = vadd.f32 %v3922, %v3961
        %v3994 = vadd.f32 %v3923, %v3962
        %v3995 = vadd.f32 %v3924, %v3963
        %v3996 = vadd.f32 %v3925, %v3964
        %v3997 = vadd.f32 %v3926, %v3965
        %v3998 = vadd.f32 %v3927, %v3966
        %v3999 = vadd.f32 %v3928, %v3967
        %v4000 = vadd.f32 %v3929, %v3968
        %v4001 = vadd.f32 %v3930, %v3969
        %v4002 = vld [vmem:[#allocation2 + $0x148] sm:$0xff]
        %v4003 = vld [vmem:[#allocation2 + $0x150] sm:$0xff]
        %v4004 = vld [vmem:[#allocation2 + $0x158] sm:$0xff]
        %v4005 = vld [vmem:[#allocation2 + $0x160] sm:$0xff]
        %v4006 = vld [vmem:[#allocation2 + $0x168] sm:$0xff]
        %v4007 = vld [vmem:[#allocation2 + $0x170] sm:$0xff]
        %v4008 = vperm.slane %v3657, 7
        %v4009 = vmul.f32 %v3878, %v4008
        %v4010 = vmul.f32 %v3879, %v4008
        %v4011 = vmul.f32 %v3880, %v4008
        %v4012 = vmul.f32 %v3881, %v4008
        %v4013 = vmul.f32 %v3882, %v4008
        %v4014 = vmul.f32 %v3883, %v4008
        %v4015 = vmul.f32 %v3884, %v4008
        %v4016 = vmul.f32 %v3885, %v4008
        %v4017 = vmul.f32 %v3886, %v4008
        %v4018 = vmul.f32 %v3887, %v4008
        %v4019 = vmul.f32 %v3888, %v4008
        %v4020 = vmul.f32 %v3889, %v4008
        %v4021 = vmul.f32 %v3890, %v4008
        %v4022 = vmul.f32 %v3891, %v4008
        %v4023 = vmul.f32 %v3892, %v4008
        %v4024 = vmul.f32 %v3893, %v4008
        %v4025 = vmul.f32 %v3894, %v4008
        %v4026 = vmul.f32 %v3895, %v4008
        %v4027 = vmul.f32 %v3896, %v4008
        %v4028 = vmul.f32 %v3897, %v4008
        %v4029 = vmul.f32 %v3931, %v4008
        %v4030 = vmul.f32 %v3932, %v4008
        %v4031 = vmul.f32 %v3933, %v4008
        %v4032 = vmul.f32 %v3934, %v4008
        %v4033 = vmul.f32 %v3935, %v4008
        %v4034 = vmul.f32 %v3936, %v4008
        %v4035 = vmul.f32 %v4002, %v4008
        %v4036 = vmul.f32 %v4003, %v4008
        %v4037 = vmul.f32 %v4004, %v4008
        %v4038 = vmul.f32 %v4005, %v4008
        %v4039 = vmul.f32 %v4006, %v4008
        %v4040 = vmul.f32 %v4007, %v4008
        %v4041 = vadd.f32 %v3970, %v4009
        %v4042 = vadd.f32 %v3971, %v4010
        %v4043 = vadd.f32 %v3972, %v4011
        %v4044 = vadd.f32 %v3973, %v4012
        %v4045 = vadd.f32 %v3974, %v4013
        %v4046 = vadd.f32 %v3975, %v4014
        %v4047 = vadd.f32 %v3976, %v4015
        %v4048 = vadd.f32 %v3977, %v4016
        %v4049 = vadd.f32 %v3978, %v4017
        %v4050 = vadd.f32 %v3979, %v4018
        %v4051 = vadd.f32 %v3980, %v4019
        %v4052 = vadd.f32 %v3981, %v4020
        %v4053 = vadd.f32 %v3982, %v4021
        %v4054 = vadd.f32 %v3983, %v4022
        %v4055 = vadd.f32 %v3984, %v4023
        %v4056 = vadd.f32 %v3985, %v4024
        %v4057 = vadd.f32 %v3986, %v4025
        %v4058 = vadd.f32 %v3987, %v4026
        %v4059 = vadd.f32 %v3988, %v4027
        %v4060 = vadd.f32 %v3989, %v4028
        %v4061 = vadd.f32 %v3990, %v4029
        %v4062 = vadd.f32 %v3991, %v4030
        %v4063 = vadd.f32 %v3992, %v4031
        %v4064 = vadd.f32 %v3993, %v4032
        %v4065 = vadd.f32 %v3994, %v4033
        %v4066 = vadd.f32 %v3995, %v4034
        %v4067 = vadd.f32 %v3996, %v4035
        %v4068 = vadd.f32 %v3997, %v4036
        %v4069 = vadd.f32 %v3998, %v4037
        %v4070 = vadd.f32 %v3999, %v4038
        %v4071 = vadd.f32 %v4000, %v4039
        %v4072 = vadd.f32 %v4001, %v4040
        %v4073 = vld [vmem:[#allocation2 + $0x1b] sm:$0xff]
        %v4074 = vld [vmem:[#allocation2 + $0x23] sm:$0xff]
        %v4075 = vld [vmem:[#allocation2 + $0x2b] sm:$0xff]
        %v4076 = vld [vmem:[#allocation2 + $0x33] sm:$0xff]
        %v4077 = vld [vmem:[#allocation2 + $0x3b] sm:$0xff]
        %v4078 = vld [vmem:[#allocation2 + $0x43] sm:$0xff]
        %v4079 = vld [vmem:[#allocation2 + $0x4b] sm:$0xff]
        %v4080 = vld [vmem:[#allocation2 + $0x53] sm:$0xff]
        %v4081 = vld [vmem:[#allocation2 + $0x5b] sm:$0xff]
        %v4082 = vld [vmem:[#allocation2 + $0x63] sm:$0xff]
        %v4083 = vld [vmem:[#allocation2 + $0x6b] sm:$0xff]
        %v4084 = vld [vmem:[#allocation2 + $0x73] sm:$0xff]
        %v4085 = vld [vmem:[#allocation2 + $0x7b] sm:$0xff]
        %v4086 = vld [vmem:[#allocation2 + $0x83] sm:$0xff]
        %v4087 = vld [vmem:[#allocation2 + $0x8b] sm:$0xff]
        %v4088 = vld [vmem:[#allocation2 + $0x93] sm:$0xff]
        %v4089 = vld [vmem:[#allocation2 + $0x9b] sm:$0xff]
        %v4090 = vld [vmem:[#allocation2 + $0xa3] sm:$0xff]
        %v4091 = vld [vmem:[#allocation2 + $0xab] sm:$0xff]
        %v4092 = vld [vmem:[#allocation2 + $0xb3] sm:$0xff]
        %v4093 = vld [vmem:[#allocation2 + $0xbb] sm:$0xff]
        %v4094 = vld [vmem:[#allocation2 + $0xc3] sm:$0xff]
        %v4095 = vld [vmem:[#allocation2 + $0xcb] sm:$0xff]
        %v4096 = vld [vmem:[#allocation2 + $0xd3] sm:$0xff]
        %v4097 = vld [vmem:[#allocation2 + $0xdb] sm:$0xff]
        %v4098 = vld [vmem:[#allocation2 + $0xe3] sm:$0xff]
        %v4099 = vld [vmem:[#allocation2 + $0xeb] sm:$0xff]
        %v4100 = vld [vmem:[#allocation2 + $0xf3] sm:$0xff]
        %v4101 = vld [vmem:[#allocation2 + $0xfb] sm:$0xff]
        %v4102 = vld [vmem:[#allocation2 + $0x103] sm:$0xff]
        %v4103 = vld [vmem:[#allocation2 + $0x10b] sm:$0xff]
        %v4104 = vld [vmem:[#allocation2 + $0x113] sm:$0xff]
        %v4105 = vperm.slane %v3657, 2
        %v4106 = vmul.f32 %v4073, %v4105
        %v4107 = vmul.f32 %v4074, %v4105
        %v4108 = vmul.f32 %v4075, %v4105
        %v4109 = vmul.f32 %v4076, %v4105
        %v4110 = vmul.f32 %v4077, %v4105
        %v4111 = vmul.f32 %v4078, %v4105
        %v4112 = vmul.f32 %v4079, %v4105
        %v4113 = vmul.f32 %v4080, %v4105
        %v4114 = vmul.f32 %v4081, %v4105
        %v4115 = vmul.f32 %v4082, %v4105
        %v4116 = vmul.f32 %v4083, %v4105
        %v4117 = vmul.f32 %v4084, %v4105
        %v4118 = vmul.f32 %v4085, %v4105
        %v4119 = vmul.f32 %v4086, %v4105
        %v4120 = vmul.f32 %v4087, %v4105
        %v4121 = vmul.f32 %v4088, %v4105
        %v4122 = vmul.f32 %v4089, %v4105
        %v4123 = vmul.f32 %v4090, %v4105
        %v4124 = vmul.f32 %v4091, %v4105
        %v4125 = vmul.f32 %v4092, %v4105
        %v4126 = vmul.f32 %v4093, %v4105
        %v4127 = vmul.f32 %v4094, %v4105
        %v4128 = vmul.f32 %v4095, %v4105
        %v4129 = vmul.f32 %v4096, %v4105
        %v4130 = vmul.f32 %v4097, %v4105
        %v4131 = vmul.f32 %v4098, %v4105
        %v4132 = vmul.f32 %v4099, %v4105
        %v4133 = vmul.f32 %v4100, %v4105
        %v4134 = vmul.f32 %v4101, %v4105
        %v4135 = vmul.f32 %v4102, %v4105
        %v4136 = vmul.f32 %v4103, %v4105
        %v4137 = vmul.f32 %v4104, %v4105
        %v4138 = vld [vmem:[#allocation2 + $0x11b] sm:$0xff]
        %v4139 = vld [vmem:[#allocation2 + $0x123] sm:$0xff]
        %v4140 = vld [vmem:[#allocation2 + $0x12b] sm:$0xff]
        %v4141 = vld [vmem:[#allocation2 + $0x133] sm:$0xff]
        %v4142 = vld [vmem:[#allocation2 + $0x13b] sm:$0xff]
        %v4143 = vld [vmem:[#allocation2 + $0x143] sm:$0xff]
        %v4144 = vperm.slane %v3657, 5
        %v4145 = vmul.f32 %v4079, %v4144
        %v4146 = vmul.f32 %v4080, %v4144
        %v4147 = vmul.f32 %v4081, %v4144
        %v4148 = vmul.f32 %v4082, %v4144
        %v4149 = vmul.f32 %v4083, %v4144
        %v4150 = vmul.f32 %v4084, %v4144
        %v4151 = vmul.f32 %v4085, %v4144
        %v4152 = vmul.f32 %v4086, %v4144
        %v4153 = vmul.f32 %v4087, %v4144
        %v4154 = vmul.f32 %v4088, %v4144
        %v4155 = vmul.f32 %v4089, %v4144
        %v4156 = vmul.f32 %v4090, %v4144
        %v4157 = vmul.f32 %v4091, %v4144
        %v4158 = vmul.f32 %v4092, %v4144
        %v4159 = vmul.f32 %v4093, %v4144
        %v4160 = vmul.f32 %v4094, %v4144
        %v4161 = vmul.f32 %v4095, %v4144
        %v4162 = vmul.f32 %v4096, %v4144
        %v4163 = vmul.f32 %v4097, %v4144
        %v4164 = vmul.f32 %v4098, %v4144
        %v4165 = vmul.f32 %v4099, %v4144
        %v4166 = vmul.f32 %v4100, %v4144
        %v4167 = vmul.f32 %v4101, %v4144
        %v4168 = vmul.f32 %v4102, %v4144
        %v4169 = vmul.f32 %v4103, %v4144
        %v4170 = vmul.f32 %v4104, %v4144
        %v4171 = vmul.f32 %v4138, %v4144
        %v4172 = vmul.f32 %v4139, %v4144
        %v4173 = vmul.f32 %v4140, %v4144
        %v4174 = vmul.f32 %v4141, %v4144
        %v4175 = vmul.f32 %v4142, %v4144
        %v4176 = vmul.f32 %v4143, %v4144
        %v4177 = vadd.f32 %v4106, %v4145
        %v4178 = vadd.f32 %v4107, %v4146
        %v4179 = vadd.f32 %v4108, %v4147
        %v4180 = vadd.f32 %v4109, %v4148
        %v4181 = vadd.f32 %v4110, %v4149
        %v4182 = vadd.f32 %v4111, %v4150
        %v4183 = vadd.f32 %v4112, %v4151
        %v4184 = vadd.f32 %v4113, %v4152
        %v4185 = vadd.f32 %v4114, %v4153
        %v4186 = vadd.f32 %v4115, %v4154
        %v4187 = vadd.f32 %v4116, %v4155
        %v4188 = vadd.f32 %v4117, %v4156
        %v4189 = vadd.f32 %v4118, %v4157
        %v4190 = vadd.f32 %v4119, %v4158
        %v4191 = vadd.f32 %v4120, %v4159
        %v4192 = vadd.f32 %v4121, %v4160
        %v4193 = vadd.f32 %v4122, %v4161
        %v4194 = vadd.f32 %v4123, %v4162
        %v4195 = vadd.f32 %v4124, %v4163
        %v4196 = vadd.f32 %v4125, %v4164
        %v4197 = vadd.f32 %v4126, %v4165
        %v4198 = vadd.f32 %v4127, %v4166
        %v4199 = vadd.f32 %v4128, %v4167
        %v4200 = vadd.f32 %v4129, %v4168
        %v4201 = vadd.f32 %v4130, %v4169
        %v4202 = vadd.f32 %v4131, %v4170
        %v4203 = vadd.f32 %v4132, %v4171
        %v4204 = vadd.f32 %v4133, %v4172
        %v4205 = vadd.f32 %v4134, %v4173
        %v4206 = vadd.f32 %v4135, %v4174
        %v4207 = vadd.f32 %v4136, %v4175
        %v4208 = vadd.f32 %v4137, %v4176
        %v4209 = vld [vmem:[#allocation2 + $0x14b] sm:$0xff]
        %v4210 = vld [vmem:[#allocation2 + $0x153] sm:$0xff]
        %v4211 = vld [vmem:[#allocation2 + $0x15b] sm:$0xff]
        %v4212 = vld [vmem:[#allocation2 + $0x163] sm:$0xff]
        %v4213 = vld [vmem:[#allocation2 + $0x16b] sm:$0xff]
        %v4214 = vld [vmem:[#allocation2 + $0x173] sm:$0xff]
        %v4215 = vperm.slane %v3658, 0
        %v4216 = vmul.f32 %v4085, %v4215
        %v4217 = vmul.f32 %v4086, %v4215
        %v4218 = vmul.f32 %v4087, %v4215
        %v4219 = vmul.f32 %v4088, %v4215
        %v4220 = vmul.f32 %v4089, %v4215
        %v4221 = vmul.f32 %v4090, %v4215
        %v4222 = vmul.f32 %v4091, %v4215
        %v4223 = vmul.f32 %v4092, %v4215
        %v4224 = vmul.f32 %v4093, %v4215
        %v4225 = vmul.f32 %v4094, %v4215
        %v4226 = vmul.f32 %v4095, %v4215
        %v4227 = vmul.f32 %v4096, %v4215
        %v4228 = vmul.f32 %v4097, %v4215
        %v4229 = vmul.f32 %v4098, %v4215
        %v4230 = vmul.f32 %v4099, %v4215
        %v4231 = vmul.f32 %v4100, %v4215
        %v4232 = vmul.f32 %v4101, %v4215
        %v4233 = vmul.f32 %v4102, %v4215
        %v4234 = vmul.f32 %v4103, %v4215
        %v4235 = vmul.f32 %v4104, %v4215
        %v4236 = vmul.f32 %v4138, %v4215
        %v4237 = vmul.f32 %v4139, %v4215
        %v4238 = vmul.f32 %v4140, %v4215
        %v4239 = vmul.f32 %v4141, %v4215
        %v4240 = vmul.f32 %v4142, %v4215
        %v4241 = vmul.f32 %v4143, %v4215
        %v4242 = vmul.f32 %v4209, %v4215
        %v4243 = vmul.f32 %v4210, %v4215
        %v4244 = vmul.f32 %v4211, %v4215
        %v4245 = vmul.f32 %v4212, %v4215
        %v4246 = vmul.f32 %v4213, %v4215
        %v4247 = vmul.f32 %v4214, %v4215
        %v4248 = vadd.f32 %v4177, %v4216
        %v4249 = vadd.f32 %v4178, %v4217
        %v4250 = vadd.f32 %v4179, %v4218
        %v4251 = vadd.f32 %v4180, %v4219
        %v4252 = vadd.f32 %v4181, %v4220
        %v4253 = vadd.f32 %v4182, %v4221
        %v4254 = vadd.f32 %v4183, %v4222
        %v4255 = vadd.f32 %v4184, %v4223
        %v4256 = vadd.f32 %v4185, %v4224
        %v4257 = vadd.f32 %v4186, %v4225
        %v4258 = vadd.f32 %v4187, %v4226
        %v4259 = vadd.f32 %v4188, %v4227
        %v4260 = vadd.f32 %v4189, %v4228
        %v4261 = vadd.f32 %v4190, %v4229
        %v4262 = vadd.f32 %v4191, %v4230
        %v4263 = vadd.f32 %v4192, %v4231
        %v4264 = vadd.f32 %v4193, %v4232
        %v4265 = vadd.f32 %v4194, %v4233
        %v4266 = vadd.f32 %v4195, %v4234
        %v4267 = vadd.f32 %v4196, %v4235
        %v4268 = vadd.f32 %v4197, %v4236
        %v4269 = vadd.f32 %v4198, %v4237
        %v4270 = vadd.f32 %v4199, %v4238
        %v4271 = vadd.f32 %v4200, %v4239
        %v4272 = vadd.f32 %v4201, %v4240
        %v4273 = vadd.f32 %v4202, %v4241
        %v4274 = vadd.f32 %v4203, %v4242
        %v4275 = vadd.f32 %v4204, %v4243
        %v4276 = vadd.f32 %v4205, %v4244
        %v4277 = vadd.f32 %v4206, %v4245
        %v4278 = vadd.f32 %v4207, %v4246
        %v4279 = vadd.f32 %v4208, %v4247
        %v4280 = vmul.f32 %v3834, %v1592
        %v4281 = vmul.f32 %v3835, %v1593
        %v4282 = vmul.f32 %v3836, %v1594
        %v4283 = vmul.f32 %v3837, %v1595
        %v4284 = vmul.f32 %v3838, %v1596
        %v4285 = vmul.f32 %v3839, %v1597
        %v4286 = vmul.f32 %v3840, %v1598
        %v4287 = vmul.f32 %v3841, %v1599
        %v4288 = vmul.f32 %v3842, %v1600
        %v4289 = vmul.f32 %v3843, %v1601
        %v4290 = vmul.f32 %v3844, %v1602
        %v4291 = vmul.f32 %v3845, %v1603
        %v4292 = vmul.f32 %v3846, %v1604
        %v4293 = vmul.f32 %v3847, %v1605
        %v4294 = vmul.f32 %v3848, %v1606
        %v4295 = vmul.f32 %v3849, %v1607
        %v4296 = vmul.f32 %v3850, %v1608
        %v4297 = vmul.f32 %v3851, %v1609
        %v4298 = vmul.f32 %v3852, %v1610
        %v4299 = vmul.f32 %v3853, %v1611
        %v4300 = vmul.f32 %v3854, %v1612
        %v4301 = vmul.f32 %v3855, %v1613
        %v4302 = vmul.f32 %v3856, %v1614
        %v4303 = vmul.f32 %v3857, %v1615
        %v4304 = vmul.f32 %v3858, %v1616
        %v4305 = vmul.f32 %v3859, %v1617
        %v4306 = vmul.f32 %v3860, %v1618
        %v4307 = vmul.f32 %v3861, %v1619
        %v4308 = vmul.f32 %v3862, %v1620
        %v4309 = vmul.f32 %v3863, %v1621
        %v4310 = vmul.f32 %v3864, %v1622
        %v4311 = vmul.f32 %v3865, %v1623
        %v4312 = vadd.f32 %v4280, %v4041
        %v4313 = vadd.f32 %v4281, %v4042
        %v4314 = vadd.f32 %v4282, %v4043
        %v4315 = vadd.f32 %v4283, %v4044
        %v4316 = vadd.f32 %v4284, %v4045
        %v4317 = vadd.f32 %v4285, %v4046
        %v4318 = vadd.f32 %v4286, %v4047
        %v4319 = vadd.f32 %v4287, %v4048
        %v4320 = vadd.f32 %v4288, %v4049
        %v4321 = vadd.f32 %v4289, %v4050
        %v4322 = vadd.f32 %v4290, %v4051
        %v4323 = vadd.f32 %v4291, %v4052
        %v4324 = vadd.f32 %v4292, %v4053
        %v4325 = vadd.f32 %v4293, %v4054
        %v4326 = vadd.f32 %v4294, %v4055
        %v4327 = vadd.f32 %v4295, %v4056
        %v4328 = vadd.f32 %v4296, %v4057
        %v4329 = vadd.f32 %v4297, %v4058
        %v4330 = vadd.f32 %v4298, %v4059
        %v4331 = vadd.f32 %v4299, %v4060
        %v4332 = vadd.f32 %v4300, %v4061
        %v4333 = vadd.f32 %v4301, %v4062
        %v4334 = vadd.f32 %v4302, %v4063
        %v4335 = vadd.f32 %v4303, %v4064
        %v4336 = vadd.f32 %v4304, %v4065
        %v4337 = vadd.f32 %v4305, %v4066
        %v4338 = vadd.f32 %v4306, %v4067
        %v4339 = vadd.f32 %v4307, %v4068
        %v4340 = vadd.f32 %v4308, %v4069
        %v4341 = vadd.f32 %v4309, %v4070
        %v4342 = vadd.f32 %v4310, %v4071
        %v4343 = vadd.f32 %v4311, %v4072
        %v4344 = vmul.f32 %v4248, %v1688
        %v4345 = vmul.f32 %v4249, %v1689
        %v4346 = vmul.f32 %v4250, %v1690
        %v4347 = vmul.f32 %v4251, %v1691
        %v4348 = vmul.f32 %v4252, %v1692
        %v4349 = vmul.f32 %v4253, %v1693
        %v4350 = vmul.f32 %v4254, %v1694
        %v4351 = vmul.f32 %v4255, %v1695
        %v4352 = vmul.f32 %v4256, %v1696
        %v4353 = vmul.f32 %v4257, %v1697
        %v4354 = vmul.f32 %v4258, %v1698
        %v4355 = vmul.f32 %v4259, %v1699
        %v4356 = vmul.f32 %v4260, %v1700
        %v4357 = vmul.f32 %v4261, %v1701
        %v4358 = vmul.f32 %v4262, %v1702
        %v4359 = vmul.f32 %v4263, %v1703
        %v4360 = vmul.f32 %v4264, %v1704
        %v4361 = vmul.f32 %v4265, %v1705
        %v4362 = vmul.f32 %v4266, %v1706
        %v4363 = vmul.f32 %v4267, %v1707
        %v4364 = vmul.f32 %v4268, %v1708
        %v4365 = vmul.f32 %v4269, %v1709
        %v4366 = vmul.f32 %v4270, %v1710
        %v4367 = vmul.f32 %v4271, %v1711
        %v4368 = vmul.f32 %v4272, %v1712
        %v4369 = vmul.f32 %v4273, %v1713
        %v4370 = vmul.f32 %v4274, %v1714
        %v4371 = vmul.f32 %v4275, %v1715
        %v4372 = vmul.f32 %v4276, %v1716
        %v4373 = vmul.f32 %v4277, %v1717
        %v4374 = vmul.f32 %v4278, %v1718
        %v4375 = vmul.f32 %v4279, %v1719
        %v4376 = vadd.f32 %v4312, %v4344
        %v4377 = vadd.f32 %v4313, %v4345
        %v4378 = vadd.f32 %v4314, %v4346
        %v4379 = vadd.f32 %v4315, %v4347
        %v4380 = vadd.f32 %v4316, %v4348
        %v4381 = vadd.f32 %v4317, %v4349
        %v4382 = vadd.f32 %v4318, %v4350
        %v4383 = vadd.f32 %v4319, %v4351
        %v4384 = vadd.f32 %v4320, %v4352
        %v4385 = vadd.f32 %v4321, %v4353
        %v4386 = vadd.f32 %v4322, %v4354
        %v4387 = vadd.f32 %v4323, %v4355
        %v4388 = vadd.f32 %v4324, %v4356
        %v4389 = vadd.f32 %v4325, %v4357
        %v4390 = vadd.f32 %v4326, %v4358
        %v4391 = vadd.f32 %v4327, %v4359
        %v4392 = vadd.f32 %v4328, %v4360
        %v4393 = vadd.f32 %v4329, %v4361
        %v4394 = vadd.f32 %v4330, %v4362
        %v4395 = vadd.f32 %v4331, %v4363
        %v4396 = vadd.f32 %v4332, %v4364
        %v4397 = vadd.f32 %v4333, %v4365
        %v4398 = vadd.f32 %v4334, %v4366
        %v4399 = vadd.f32 %v4335, %v4367
        %v4400 = vadd.f32 %v4336, %v4368
        %v4401 = vadd.f32 %v4337, %v4369
        %v4402 = vadd.f32 %v4338, %v4370
        %v4403 = vadd.f32 %v4339, %v4371
        %v4404 = vadd.f32 %v4340, %v4372
        %v4405 = vadd.f32 %v4341, %v4373
        %v4406 = vadd.f32 %v4342, %v4374
        %v4407 = vadd.f32 %v4343, %v4375
        %4440 = vrot.lane.b32.xlu0 %v4376, 64
        %v4441 = vpop.permute.xlu0 %4440
        %4442 = vrot.lane.b32.xlu0 %v4377, 64
        %v4443 = vpop.permute.xlu0 %4442
        %4444 = vrot.lane.b32.xlu0 %v4378, 64
        %v4445 = vpop.permute.xlu0 %4444
        %4446 = vrot.lane.b32.xlu0 %v4379, 64
        %v4447 = vpop.permute.xlu0 %4446
        %4448 = vrot.lane.b32.xlu0 %v4380, 64
        %v4449 = vpop.permute.xlu0 %4448
        %4450 = vrot.lane.b32.xlu0 %v4381, 64
        %v4451 = vpop.permute.xlu0 %4450
        %4452 = vrot.lane.b32.xlu0 %v4382, 64
        %v4453 = vpop.permute.xlu0 %4452
        %4454 = vrot.lane.b32.xlu0 %v4383, 64
        %v4455 = vpop.permute.xlu0 %4454
        %4456 = vrot.lane.b32.xlu0 %v4384, 64
        %v4457 = vpop.permute.xlu0 %4456
        %4458 = vrot.lane.b32.xlu0 %v4385, 64
        %v4459 = vpop.permute.xlu0 %4458
        %4460 = vrot.lane.b32.xlu0 %v4386, 64
        %v4461 = vpop.permute.xlu0 %4460
        %4462 = vrot.lane.b32.xlu0 %v4387, 64
        %v4463 = vpop.permute.xlu0 %4462
        %4464 = vrot.lane.b32.xlu0 %v4388, 64
        %v4465 = vpop.permute.xlu0 %4464
        %4466 = vrot.lane.b32.xlu0 %v4389, 64
        %v4467 = vpop.permute.xlu0 %4466
        %4468 = vrot.lane.b32.xlu0 %v4390, 64
        %v4469 = vpop.permute.xlu0 %4468
        %4470 = vrot.lane.b32.xlu0 %v4391, 64
        %v4471 = vpop.permute.xlu0 %4470
        %4472 = vrot.lane.b32.xlu0 %v4392, 64
        %v4473 = vpop.permute.xlu0 %4472
        %4474 = vrot.lane.b32.xlu0 %v4393, 64
        %v4475 = vpop.permute.xlu0 %4474
        %4476 = vrot.lane.b32.xlu0 %v4394, 64
        %v4477 = vpop.permute.xlu0 %4476
        %4478 = vrot.lane.b32.xlu0 %v4395, 64
        %v4479 = vpop.permute.xlu0 %4478
        %4480 = vrot.lane.b32.xlu0 %v4396, 64
        %v4481 = vpop.permute.xlu0 %4480
        %4482 = vrot.lane.b32.xlu0 %v4397, 64
        %v4483 = vpop.permute.xlu0 %4482
        %4484 = vrot.lane.b32.xlu0 %v4398, 64
        %v4485 = vpop.permute.xlu0 %4484
        %4486 = vrot.lane.b32.xlu0 %v4399, 64
        %v4487 = vpop.permute.xlu0 %4486
        %4488 = vrot.lane.b32.xlu0 %v4400, 64
        %v4489 = vpop.permute.xlu0 %4488
        %4490 = vrot.lane.b32.xlu0 %v4401, 64
        %v4491 = vpop.permute.xlu0 %4490
        %4492 = vrot.lane.b32.xlu0 %v4402, 64
        %v4493 = vpop.permute.xlu0 %4492
        %4494 = vrot.lane.b32.xlu0 %v4403, 64
        %v4495 = vpop.permute.xlu0 %4494
        %4496 = vrot.lane.b32.xlu0 %v4404, 64
        %v4497 = vpop.permute.xlu0 %4496
        %4498 = vrot.lane.b32.xlu0 %v4405, 64
        %v4499 = vpop.permute.xlu0 %4498
        %4500 = vrot.lane.b32.xlu0 %v4406, 64
        %v4501 = vpop.permute.xlu0 %4500
        %4502 = vrot.lane.b32.xlu0 %v4407, 64
        %v4503 = vpop.permute.xlu0 %4502
        %v4536 = vadd.f32 %v4376, %v4441
        %v4537 = vadd.f32 %v4377, %v4443
        %v4538 = vadd.f32 %v4378, %v4445
        %v4539 = vadd.f32 %v4379, %v4447
        %v4540 = vadd.f32 %v4380, %v4449
        %v4541 = vadd.f32 %v4381, %v4451
        %v4542 = vadd.f32 %v4382, %v4453
        %v4543 = vadd.f32 %v4383, %v4455
        %v4544 = vadd.f32 %v4384, %v4457
        %v4545 = vadd.f32 %v4385, %v4459
        %v4546 = vadd.f32 %v4386, %v4461
        %v4547 = vadd.f32 %v4387, %v4463
        %v4548 = vadd.f32 %v4388, %v4465
        %v4549 = vadd.f32 %v4389, %v4467
        %v4550 = vadd.f32 %v4390, %v4469
        %v4551 = vadd.f32 %v4391, %v4471
        %v4552 = vadd.f32 %v4392, %v4473
        %v4553 = vadd.f32 %v4393, %v4475
        %v4554 = vadd.f32 %v4394, %v4477
        %v4555 = vadd.f32 %v4395, %v4479
        %v4556 = vadd.f32 %v4396, %v4481
        %v4557 = vadd.f32 %v4397, %v4483
        %v4558 = vadd.f32 %v4398, %v4485
        %v4559 = vadd.f32 %v4399, %v4487
        %v4560 = vadd.f32 %v4400, %v4489
        %v4561 = vadd.f32 %v4401, %v4491
        %v4562 = vadd.f32 %v4402, %v4493
        %v4563 = vadd.f32 %v4403, %v4495
        %v4564 = vadd.f32 %v4404, %v4497
        %v4565 = vadd.f32 %v4405, %v4499
        %v4566 = vadd.f32 %v4406, %v4501
        %v4567 = vadd.f32 %v4407, %v4503
        %v4568 = vld [vmem:[#allocation17] sm:$0x1]
        %v4570 = vperm.slane %v4568, 0
        %v4572 = vadd.f32 %v4536, %v4570
        %v4573 = vadd.f32 %v4537, %v4570
        %v4574 = vadd.f32 %v4538, %v4570
        %v4575 = vadd.f32 %v4539, %v4570
        %v4576 = vadd.f32 %v4540, %v4570
        %v4577 = vadd.f32 %v4541, %v4570
        %v4578 = vadd.f32 %v4542, %v4570
        %v4579 = vadd.f32 %v4543, %v4570
        %v4580 = vadd.f32 %v4544, %v4570
        %v4581 = vadd.f32 %v4545, %v4570
        %v4582 = vadd.f32 %v4546, %v4570
        %v4583 = vadd.f32 %v4547, %v4570
        %v4584 = vadd.f32 %v4548, %v4570
        %v4585 = vadd.f32 %v4549, %v4570
        %v4586 = vadd.f32 %v4550, %v4570
        %v4587 = vadd.f32 %v4551, %v4570
        %v4588 = vadd.f32 %v4552, %v4570
        %v4589 = vadd.f32 %v4553, %v4570
        %v4590 = vadd.f32 %v4554, %v4570
        %v4591 = vadd.f32 %v4555, %v4570
        %v4592 = vadd.f32 %v4556, %v4570
        %v4593 = vadd.f32 %v4557, %v4570
        %v4594 = vadd.f32 %v4558, %v4570
        %v4595 = vadd.f32 %v4559, %v4570
        %v4596 = vadd.f32 %v4560, %v4570
        %v4597 = vadd.f32 %v4561, %v4570
        %v4598 = vadd.f32 %v4562, %v4570
        %v4599 = vadd.f32 %v4563, %v4570
        %v4600 = vadd.f32 %v4564, %v4570
        %v4601 = vadd.f32 %v4565, %v4570
        %v4602 = vadd.f32 %v4566, %v4570
        %v4603 = vadd.f32 %v4567, %v4570
        %v4604 = vmax.f32 %v4572, 0.0
        %v4605 = vmax.f32 %v4573, 0.0
        %v4606 = vmax.f32 %v4574, 0.0
        %v4607 = vmax.f32 %v4575, 0.0
        %v4608 = vmax.f32 %v4576, 0.0
        %v4609 = vmax.f32 %v4577, 0.0
        %v4610 = vmax.f32 %v4578, 0.0
        %v4611 = vmax.f32 %v4579, 0.0
        %v4612 = vmax.f32 %v4580, 0.0
        %v4613 = vmax.f32 %v4581, 0.0
        %v4614 = vmax.f32 %v4582, 0.0
        %v4615 = vmax.f32 %v4583, 0.0
        %v4616 = vmax.f32 %v4584, 0.0
        %v4617 = vmax.f32 %v4585, 0.0
        %v4618 = vmax.f32 %v4586, 0.0
        %v4619 = vmax.f32 %v4587, 0.0
        %v4620 = vmax.f32 %v4588, 0.0
        %v4621 = vmax.f32 %v4589, 0.0
        %v4622 = vmax.f32 %v4590, 0.0
        %v4623 = vmax.f32 %v4591, 0.0
        %v4624 = vmax.f32 %v4592, 0.0
        %v4625 = vmax.f32 %v4593, 0.0
        %v4626 = vmax.f32 %v4594, 0.0
        %v4627 = vmax.f32 %v4595, 0.0
        %v4628 = vmax.f32 %v4596, 0.0
        %v4629 = vmax.f32 %v4597, 0.0
        %v4630 = vmax.f32 %v4598, 0.0
        %v4631 = vmax.f32 %v4599, 0.0
        %v4632 = vmax.f32 %v4600, 0.0
        %v4633 = vmax.f32 %v4601, 0.0
        %v4634 = vmax.f32 %v4602, 0.0
        %v4635 = vmax.f32 %v4603, 0.0
        %v4636 = vpack.c.bf16 %v4605, %v4604
        %v4637 = vpack.c.bf16 %v4607, %v4606
        %v4638 = vpack.c.bf16 %v4609, %v4608
        %v4639 = vpack.c.bf16 %v4611, %v4610
        %v4640 = vpack.c.bf16 %v4613, %v4612
        %v4641 = vpack.c.bf16 %v4615, %v4614
        %v4642 = vpack.c.bf16 %v4617, %v4616
        %v4643 = vpack.c.bf16 %v4619, %v4618
        %v4644 = vpack.c.bf16 %v4621, %v4620
        %v4645 = vpack.c.bf16 %v4623, %v4622
        %v4646 = vpack.c.bf16 %v4625, %v4624
        %v4647 = vpack.c.bf16 %v4627, %v4626
        %v4648 = vpack.c.bf16 %v4629, %v4628
        %v4649 = vpack.c.bf16 %v4631, %v4630
        %v4650 = vpack.c.bf16 %v4633, %v4632
        %v4651 = vpack.c.bf16 %v4635, %v4634
        %v4652 = vld [vmem:[#allocation18] sm:$0xf]
        %v4653 = vld [vmem:[#allocation18 + $0x4] sm:$0xf]
        %v4654 = vld [vmem:[#allocation18 + $0x8] sm:$0xf]
        %v4655 = vld [vmem:[#allocation18 + $0xc] sm:$0xf]
        %v4656 = vld [vmem:[#allocation18 + $0x10] sm:$0xf]
        %v4657 = vld [vmem:[#allocation18 + $0x14] sm:$0xf]
        %v4658 = vld [vmem:[#allocation18 + $0x18] sm:$0xf]
        %v4659 = vld [vmem:[#allocation18 + $0x1c] sm:$0xf]
        %v4660 = vld [vmem:[#allocation20] sm:$0x1]
        %v4662 = vperm.slane %v4660, 0
        %v4672 = vunpack.c.l.b16 %v4652
        %v4673 = vunpack.c.l.b16 %v4653
        %v4674 = vunpack.c.l.b16 %v4654
        %v4675 = vunpack.c.l.b16 %v4655
        %v4676 = vunpack.c.l.b16 %v4656
        %v4677 = vunpack.c.l.b16 %v4657
        %v4678 = vunpack.c.l.b16 %v4658
        %v4679 = vunpack.c.l.b16 %v4659
        %v4680 = vpack.c.b16 %v4673, %v4672
        %v4681 = vpack.c.b16 %v4675, %v4674
        %v4682 = vpack.c.b16 %v4677, %v4676
        %v4683 = vpack.c.b16 %v4679, %v4678
        %v4689 = vsel %vm1982, %v4636, 0
        %v4692 = vsel %vm1982, %v4637, 0
        %v4695 = vsel %vm1982, %v4638, 0
        %v4698 = vsel %vm1982, %v4639, 0
        %v4701 = vsel %vm1982, %v4640, 0
        %v4704 = vsel %vm1982, %v4641, 0
        %v4707 = vsel %vm1982, %v4642, 0
        %v4710 = vsel %vm1982, %v4643, 0
        %v4713 = vsel %vm1982, %v4644, 0
        %v4716 = vsel %vm1982, %v4645, 0
        %v4719 = vsel %vm1982, %v4646, 0
        %v4722 = vsel %vm1982, %v4647, 0
        %v4725 = vsel %vm1982, %v4648, 0
        %v4728 = vsel %vm1982, %v4649, 0
        %v4731 = vsel %vm1982, %v4650, 0
        %v4734 = vsel %vm1982, %v4651, 0
        %4736 = vmatpush.bf16.msra.mxu0 0
        %4737 = vmatpush.bf16.msra.mxu0 0
        %4738 = vmatpush.bf16.msra.mxu0 0
        %4739 = vmatpush.bf16.msra.mxu0 0
        %4740 = vmatpush.bf16.msra.mxu0 %v4683
        %4741 = vmatpush.bf16.msra.mxu0 %v4682
        %4742 = vmatpush.bf16.msra.mxu0 %v4681
        %4743 = vmatpush.bf16.msra.mxu0 %v4680
        %4744 = vmatmul.bf16.gmra.mxu0 %v4689
        %v4745 = vpop.f32.mrf.mxu0
        %v4746 = vadd.f32 %v4662, %v4745
        %v4747 = vpop.f32.mrf.mxu0
        %v4748 = vadd.f32 %v4662, %v4747
        %4749 = vmatmul.bf16.gmra.mxu0 %v4692
        %v4750 = vpop.f32.mrf.mxu0
        %v4751 = vadd.f32 %v4662, %v4750
        %v4752 = vpop.f32.mrf.mxu0
        %v4753 = vadd.f32 %v4662, %v4752
        %4754 = vmatmul.bf16.gmra.mxu0 %v4695
        %v4755 = vpop.f32.mrf.mxu0
        %v4756 = vadd.f32 %v4662, %v4755
        %v4757 = vpop.f32.mrf.mxu0
        %v4758 = vadd.f32 %v4662, %v4757
        %4759 = vmatmul.bf16.gmra.mxu0 %v4698
        %v4760 = vpop.f32.mrf.mxu0
        %v4761 = vadd.f32 %v4662, %v4760
        %v4762 = vpop.f32.mrf.mxu0
        %v4763 = vadd.f32 %v4662, %v4762
        %4764 = vmatmul.bf16.gmra.mxu0 %v4701
        %v4765 = vpop.f32.mrf.mxu0
        %v4766 = vadd.f32 %v4662, %v4765
        %v4767 = vpop.f32.mrf.mxu0
        %v4768 = vadd.f32 %v4662, %v4767
        %4769 = vmatmul.bf16.gmra.mxu0 %v4704
        %v4770 = vpop.f32.mrf.mxu0
        %v4771 = vadd.f32 %v4662, %v4770
        %v4772 = vpop.f32.mrf.mxu0
        %v4773 = vadd.f32 %v4662, %v4772
        %4774 = vmatmul.bf16.gmra.mxu0 %v4707
        %v4775 = vpop.f32.mrf.mxu0
        %v4776 = vadd.f32 %v4662, %v4775
        %v4777 = vpop.f32.mrf.mxu0
        %v4778 = vadd.f32 %v4662, %v4777
        %4779 = vmatmul.bf16.gmra.mxu0 %v4710
        %v4780 = vpop.f32.mrf.mxu0
        %v4781 = vadd.f32 %v4662, %v4780
        %v4782 = vpop.f32.mrf.mxu0
        %v4783 = vadd.f32 %v4662, %v4782
        %4784 = vmatmul.bf16.gmra.mxu0 %v4713
        %v4785 = vpop.f32.mrf.mxu0
        %v4786 = vadd.f32 %v4662, %v4785
        %v4787 = vpop.f32.mrf.mxu0
        %v4788 = vadd.f32 %v4662, %v4787
        %4789 = vmatmul.bf16.gmra.mxu0 %v4716
        %v4790 = vpop.f32.mrf.mxu0
        %v4791 = vadd.f32 %v4662, %v4790
        %v4792 = vpop.f32.mrf.mxu0
        %v4793 = vadd.f32 %v4662, %v4792
        %4794 = vmatmul.bf16.gmra.mxu0 %v4719
        %v4795 = vpop.f32.mrf.mxu0
        %v4796 = vadd.f32 %v4662, %v4795
        %v4797 = vpop.f32.mrf.mxu0
        %v4798 = vadd.f32 %v4662, %v4797
        %4799 = vmatmul.bf16.gmra.mxu0 %v4722
        %v4800 = vpop.f32.mrf.mxu0
        %v4801 = vadd.f32 %v4662, %v4800
        %v4802 = vpop.f32.mrf.mxu0
        %v4803 = vadd.f32 %v4662, %v4802
        %4804 = vmatmul.bf16.gmra.mxu0 %v4725
        %v4805 = vpop.f32.mrf.mxu0
        %v4806 = vadd.f32 %v4662, %v4805
        %v4807 = vpop.f32.mrf.mxu0
        %v4808 = vadd.f32 %v4662, %v4807
        %4809 = vmatmul.bf16.gmra.mxu0 %v4728
        %v4810 = vpop.f32.mrf.mxu0
        %v4811 = vadd.f32 %v4662, %v4810
        %v4812 = vpop.f32.mrf.mxu0
        %v4813 = vadd.f32 %v4662, %v4812
        %4814 = vmatmul.bf16.gmra.mxu0 %v4731
        %v4815 = vpop.f32.mrf.mxu0
        %v4816 = vadd.f32 %v4662, %v4815
        %v4817 = vpop.f32.mrf.mxu0
        %v4818 = vadd.f32 %v4662, %v4817
        %4819 = vmatmul.bf16.gmra.mxu0 %v4734
        %v4820 = vpop.f32.mrf.mxu0
        %v4821 = vadd.f32 %v4662, %v4820
        %v4822 = vpop.f32.mrf.mxu0
        %v4823 = vadd.f32 %v4662, %v4822
        %4824 = vdwg.mxu0
        %v4825 = vadd.f32 %v4746, %v3372
        %v4826 = vadd.f32 %v4748, %v3373
        %v4827 = vadd.f32 %v4751, %v3374
        %v4828 = vadd.f32 %v4753, %v3375
        %v4829 = vadd.f32 %v4756, %v3376
        %v4830 = vadd.f32 %v4758, %v3377
        %v4831 = vadd.f32 %v4761, %v3378
        %v4832 = vadd.f32 %v4763, %v3379
        %v4833 = vadd.f32 %v4766, %v3380
        %v4834 = vadd.f32 %v4768, %v3381
        %v4835 = vadd.f32 %v4771, %v3382
        %v4836 = vadd.f32 %v4773, %v3383
        %v4837 = vadd.f32 %v4776, %v3384
        %v4838 = vadd.f32 %v4778, %v3385
        %v4839 = vadd.f32 %v4781, %v3386
        %v4840 = vadd.f32 %v4783, %v3387
        %v4841 = vadd.f32 %v4786, %v3388
        %v4842 = vadd.f32 %v4788, %v3389
        %v4843 = vadd.f32 %v4791, %v3390
        %v4844 = vadd.f32 %v4793, %v3391
        %v4845 = vadd.f32 %v4796, %v3392
        %v4846 = vadd.f32 %v4798, %v3393
        %v4847 = vadd.f32 %v4801, %v3394
        %v4848 = vadd.f32 %v4803, %v3395
        %v4849 = vadd.f32 %v4806, %v3396
        %v4850 = vadd.f32 %v4808, %v3397
        %v4851 = vadd.f32 %v4811, %v3398
        %v4852 = vadd.f32 %v4813, %v3399
        %v4853 = vadd.f32 %v4816, %v3400
        %v4854 = vadd.f32 %v4818, %v3401
        %v4855 = vadd.f32 %v4821, %v3402
        %v4856 = vadd.f32 %v4823, %v3403
        %v4857 = vmax.f32 %v4825, 0.0
        %v4858 = vmax.f32 %v4826, 0.0
        %v4859 = vmax.f32 %v4827, 0.0
        %v4860 = vmax.f32 %v4828, 0.0
        %v4861 = vmax.f32 %v4829, 0.0
        %v4862 = vmax.f32 %v4830, 0.0
        %v4863 = vmax.f32 %v4831, 0.0
        %v4864 = vmax.f32 %v4832, 0.0
        %v4865 = vmax.f32 %v4833, 0.0
        %v4866 = vmax.f32 %v4834, 0.0
        %v4867 = vmax.f32 %v4835, 0.0
        %v4868 = vmax.f32 %v4836, 0.0
        %v4869 = vmax.f32 %v4837, 0.0
        %v4870 = vmax.f32 %v4838, 0.0
        %v4871 = vmax.f32 %v4839, 0.0
        %v4872 = vmax.f32 %v4840, 0.0
        %v4873 = vmax.f32 %v4841, 0.0
        %v4874 = vmax.f32 %v4842, 0.0
        %v4875 = vmax.f32 %v4843, 0.0
        %v4876 = vmax.f32 %v4844, 0.0
        %v4877 = vmax.f32 %v4845, 0.0
        %v4878 = vmax.f32 %v4846, 0.0
        %v4879 = vmax.f32 %v4847, 0.0
        %v4880 = vmax.f32 %v4848, 0.0
        %v4881 = vmax.f32 %v4849, 0.0
        %v4882 = vmax.f32 %v4850, 0.0
        %v4883 = vmax.f32 %v4851, 0.0
        %v4884 = vmax.f32 %v4852, 0.0
        %v4885 = vmax.f32 %v4853, 0.0
        %v4886 = vmax.f32 %v4854, 0.0
        %v4887 = vmax.f32 %v4855, 0.0
        %v4888 = vmax.f32 %v4856, 0.0
        %v4889 = vpack.c.bf16 %v4858, %v4857
        %v4890 = vpack.c.bf16 %v4860, %v4859
        %v4891 = vpack.c.bf16 %v4862, %v4861
        %v4892 = vpack.c.bf16 %v4864, %v4863
        %v4893 = vpack.c.bf16 %v4866, %v4865
        %v4894 = vpack.c.bf16 %v4868, %v4867
        %v4895 = vpack.c.bf16 %v4870, %v4869
        %v4896 = vpack.c.bf16 %v4872, %v4871
        %v4897 = vpack.c.bf16 %v4874, %v4873
        %v4898 = vpack.c.bf16 %v4876, %v4875
        %v4899 = vpack.c.bf16 %v4878, %v4877
        %v4900 = vpack.c.bf16 %v4880, %v4879
        %v4901 = vpack.c.bf16 %v4882, %v4881
        %v4902 = vpack.c.bf16 %v4884, %v4883
        %v4903 = vpack.c.bf16 %v4886, %v4885
        %v4904 = vpack.c.bf16 %v4888, %v4887
        %v4905 = vld [vmem:[#allocation21] sm:$0xff]
        %v4906 = vld [vmem:[#allocation21 + $0x8] sm:$0xff]
        %v4907 = vld [vmem:[#allocation21 + $0x10] sm:$0xff]
        %v4908 = vld [vmem:[#allocation21 + $0x18] sm:$0xff]
        %v4909 = vld [vmem:[#allocation21 + $0x20] sm:$0xff]
        %v4910 = vld [vmem:[#allocation21 + $0x28] sm:$0xff]
        %v4911 = vld [vmem:[#allocation21 + $0x30] sm:$0xff]
        %v4912 = vld [vmem:[#allocation21 + $0x38] sm:$0xff]
        %v4913 = vld [vmem:[#allocation23] sm:$0x3]
        %v4915 = vperm.slane %v4913, 0
        %v4916 = vperm.slane %v4913, 1
        %v4927 = vunpack.c.l.b16 %v4905
        %v4928 = vunpack.c.h.b16 %v4905
        %v4929 = vunpack.c.l.b16 %v4906
        %v4930 = vunpack.c.h.b16 %v4906
        %v4931 = vunpack.c.l.b16 %v4907
        %v4932 = vunpack.c.h.b16 %v4907
        %v4933 = vunpack.c.l.b16 %v4908
        %v4934 = vunpack.c.h.b16 %v4908
        %v4935 = vunpack.c.l.b16 %v4909
        %v4936 = vunpack.c.h.b16 %v4909
        %v4937 = vunpack.c.l.b16 %v4910
        %v4938 = vunpack.c.h.b16 %v4910
        %v4939 = vunpack.c.l.b16 %v4911
        %v4940 = vunpack.c.h.b16 %v4911
        %v4941 = vunpack.c.l.b16 %v4912
        %v4942 = vunpack.c.h.b16 %v4912
        %v4943 = vpack.c.b16 %v4929, %v4927
        %v4944 = vpack.c.b16 %v4930, %v4928
        %v4945 = vpack.c.b16 %v4933, %v4931
        %v4946 = vpack.c.b16 %v4934, %v4932
        %v4947 = vpack.c.b16 %v4937, %v4935
        %v4948 = vpack.c.b16 %v4938, %v4936
        %v4949 = vpack.c.b16 %v4941, %v4939
        %v4950 = vpack.c.b16 %v4942, %v4940
        %v4960 = vsel %vm1982, %v4889, 0
        %v4963 = vsel %vm1982, %v4890, 0
        %v4966 = vsel %vm1982, %v4891, 0
        %v4969 = vsel %vm1982, %v4892, 0
        %v4972 = vsel %vm1982, %v4893, 0
        %v4975 = vsel %vm1982, %v4894, 0
        %v4978 = vsel %vm1982, %v4895, 0
        %v4981 = vsel %vm1982, %v4896, 0
        %v4984 = vsel %vm1982, %v4897, 0
        %v4987 = vsel %vm1982, %v4898, 0
        %v4990 = vsel %vm1982, %v4899, 0
        %v4993 = vsel %vm1982, %v4900, 0
        %v4996 = vsel %vm1982, %v4901, 0
        %v4999 = vsel %vm1982, %v4902, 0
        %v5002 = vsel %vm1982, %v4903, 0
        %v5005 = vsel %vm1982, %v4904, 0
        %5007 = vmatpush.bf16.msra.mxu0 0
        %5008 = vmatpush.bf16.msra.mxu0 0
        %5009 = vmatpush.bf16.msra.mxu0 0
        %5010 = vmatpush.bf16.msra.mxu0 0
        %5011 = vmatpush.bf16.msra.mxu0 %v4949
        %5012 = vmatpush.bf16.msra.mxu0 %v4947
        %5013 = vmatpush.bf16.msra.mxu0 %v4945
        %5014 = vmatpush.bf16.msra.mxu0 %v4943
        %5015 = vmatmul.bf16.gmra.mxu0 %v4960
        %v5016 = vpop.f32.mrf.mxu0
        %v5017 = vadd.f32 %v4915, %v5016
        %v5018 = vpop.f32.mrf.mxu0
        %v5019 = vadd.f32 %v4915, %v5018
        %5020 = vmatmul.bf16.gmra.mxu0 %v4963
        %v5021 = vpop.f32.mrf.mxu0
        %v5022 = vadd.f32 %v4915, %v5021
        %v5023 = vpop.f32.mrf.mxu0
        %v5024 = vadd.f32 %v4915, %v5023
        %5025 = vmatmul.bf16.gmra.mxu0 %v4966
        %v5026 = vpop.f32.mrf.mxu0
        %v5027 = vadd.f32 %v4915, %v5026
        %v5028 = vpop.f32.mrf.mxu0
        %v5029 = vadd.f32 %v4915, %v5028
        %5030 = vmatmul.bf16.gmra.mxu0 %v4969
        %v5031 = vpop.f32.mrf.mxu0
        %v5032 = vadd.f32 %v4915, %v5031
        %v5033 = vpop.f32.mrf.mxu0
        %v5034 = vadd.f32 %v4915, %v5033
        %5035 = vmatmul.bf16.gmra.mxu0 %v4972
        %v5036 = vpop.f32.mrf.mxu0
        %v5037 = vadd.f32 %v4915, %v5036
        %v5038 = vpop.f32.mrf.mxu0
        %v5039 = vadd.f32 %v4915, %v5038
        %5040 = vmatmul.bf16.gmra.mxu0 %v4975
        %v5041 = vpop.f32.mrf.mxu0
        %v5042 = vadd.f32 %v4915, %v5041
        %v5043 = vpop.f32.mrf.mxu0
        %v5044 = vadd.f32 %v4915, %v5043
        %5045 = vmatmul.bf16.gmra.mxu0 %v4978
        %v5046 = vpop.f32.mrf.mxu0
        %v5047 = vadd.f32 %v4915, %v5046
        %v5048 = vpop.f32.mrf.mxu0
        %v5049 = vadd.f32 %v4915, %v5048
        %5050 = vmatmul.bf16.gmra.mxu0 %v4981
        %v5051 = vpop.f32.mrf.mxu0
        %v5052 = vadd.f32 %v4915, %v5051
        %v5053 = vpop.f32.mrf.mxu0
        %v5054 = vadd.f32 %v4915, %v5053
        %5055 = vmatmul.bf16.gmra.mxu0 %v4984
        %v5056 = vpop.f32.mrf.mxu0
        %v5057 = vadd.f32 %v4915, %v5056
        %v5058 = vpop.f32.mrf.mxu0
        %v5059 = vadd.f32 %v4915, %v5058
        %5060 = vmatmul.bf16.gmra.mxu0 %v4987
        %v5061 = vpop.f32.mrf.mxu0
        %v5062 = vadd.f32 %v4915, %v5061
        %v5063 = vpop.f32.mrf.mxu0
        %v5064 = vadd.f32 %v4915, %v5063
        %5065 = vmatmul.bf16.gmra.mxu0 %v4990
        %v5066 = vpop.f32.mrf.mxu0
        %v5067 = vadd.f32 %v4915, %v5066
        %v5068 = vpop.f32.mrf.mxu0
        %v5069 = vadd.f32 %v4915, %v5068
        %5070 = vmatmul.bf16.gmra.mxu0 %v4993
        %v5071 = vpop.f32.mrf.mxu0
        %v5072 = vadd.f32 %v4915, %v5071
        %v5073 = vpop.f32.mrf.mxu0
        %v5074 = vadd.f32 %v4915, %v5073
        %5075 = vmatmul.bf16.gmra.mxu0 %v4996
        %v5076 = vpop.f32.mrf.mxu0
        %v5077 = vadd.f32 %v4915, %v5076
        %v5078 = vpop.f32.mrf.mxu0
        %v5079 = vadd.f32 %v4915, %v5078
        %5080 = vmatmul.bf16.gmra.mxu0 %v4999
        %v5081 = vpop.f32.mrf.mxu0
        %v5082 = vadd.f32 %v4915, %v5081
        %v5083 = vpop.f32.mrf.mxu0
        %v5084 = vadd.f32 %v4915, %v5083
        %5085 = vmatmul.bf16.gmra.mxu0 %v5002
        %v5086 = vpop.f32.mrf.mxu0
        %v5087 = vadd.f32 %v4915, %v5086
        %v5088 = vpop.f32.mrf.mxu0
        %v5089 = vadd.f32 %v4915, %v5088
        %5090 = vmatmul.bf16.gmra.mxu0 %v5005
        %v5091 = vpop.f32.mrf.mxu0
        %v5092 = vadd.f32 %v4915, %v5091
        %v5093 = vpop.f32.mrf.mxu0
        %v5094 = vadd.f32 %v4915, %v5093
        %5095 = vdwg.mxu0
        %5096 = vmatpush.bf16.msra.mxu0 0
        %5097 = vmatpush.bf16.msra.mxu0 0
        %5098 = vmatpush.bf16.msra.mxu0 0
        %5099 = vmatpush.bf16.msra.mxu0 0
        %5100 = vmatpush.bf16.msra.mxu0 %v4950
        %5101 = vmatpush.bf16.msra.mxu0 %v4948
        %5102 = vmatpush.bf16.msra.mxu0 %v4946
        %5103 = vmatpush.bf16.msra.mxu0 %v4944
        %5104 = vmatmul.bf16.gmra.mxu0 %v4960
        %v5105 = vpop.f32.mrf.mxu0
        %v5106 = vadd.f32 %v4916, %v5105
        %v5107 = vpop.f32.mrf.mxu0
        %v5108 = vadd.f32 %v4916, %v5107
        %5109 = vmatmul.bf16.gmra.mxu0 %v4963
        %v5110 = vpop.f32.mrf.mxu0
        %v5111 = vadd.f32 %v4916, %v5110
        %v5112 = vpop.f32.mrf.mxu0
        %v5113 = vadd.f32 %v4916, %v5112
        %5114 = vmatmul.bf16.gmra.mxu0 %v4966
        %v5115 = vpop.f32.mrf.mxu0
        %v5116 = vadd.f32 %v4916, %v5115
        %v5117 = vpop.f32.mrf.mxu0
        %v5118 = vadd.f32 %v4916, %v5117
        %5119 = vmatmul.bf16.gmra.mxu0 %v4969
        %v5120 = vpop.f32.mrf.mxu0
        %v5121 = vadd.f32 %v4916, %v5120
        %v5122 = vpop.f32.mrf.mxu0
        %v5123 = vadd.f32 %v4916, %v5122
        %5124 = vmatmul.bf16.gmra.mxu0 %v4972
        %v5125 = vpop.f32.mrf.mxu0
        %v5126 = vadd.f32 %v4916, %v5125
        %v5127 = vpop.f32.mrf.mxu0
        %v5128 = vadd.f32 %v4916, %v5127
        %5129 = vmatmul.bf16.gmra.mxu0 %v4975
        %v5130 = vpop.f32.mrf.mxu0
        %v5131 = vadd.f32 %v4916, %v5130
        %v5132 = vpop.f32.mrf.mxu0
        %v5133 = vadd.f32 %v4916, %v5132
        %5134 = vmatmul.bf16.gmra.mxu0 %v4978
        %v5135 = vpop.f32.mrf.mxu0
        %v5136 = vadd.f32 %v4916, %v5135
        %v5137 = vpop.f32.mrf.mxu0
        %v5138 = vadd.f32 %v4916, %v5137
        %5139 = vmatmul.bf16.gmra.mxu0 %v4981
        %v5140 = vpop.f32.mrf.mxu0
        %v5141 = vadd.f32 %v4916, %v5140
        %v5142 = vpop.f32.mrf.mxu0
        %v5143 = vadd.f32 %v4916, %v5142
        %5144 = vmatmul.bf16.gmra.mxu0 %v4984
        %v5145 = vpop.f32.mrf.mxu0
        %v5146 = vadd.f32 %v4916, %v5145
        %v5147 = vpop.f32.mrf.mxu0
        %v5148 = vadd.f32 %v4916, %v5147
        %5149 = vmatmul.bf16.gmra.mxu0 %v4987
        %v5150 = vpop.f32.mrf.mxu0
        %v5151 = vadd.f32 %v4916, %v5150
        %v5152 = vpop.f32.mrf.mxu0
        %v5153 = vadd.f32 %v4916, %v5152
        %5154 = vmatmul.bf16.gmra.mxu0 %v4990
        %v5155 = vpop.f32.mrf.mxu0
        %v5156 = vadd.f32 %v4916, %v5155
        %v5157 = vpop.f32.mrf.mxu0
        %v5158 = vadd.f32 %v4916, %v5157
        %5159 = vmatmul.bf16.gmra.mxu0 %v4993
        %v5160 = vpop.f32.mrf.mxu0
        %v5161 = vadd.f32 %v4916, %v5160
        %v5162 = vpop.f32.mrf.mxu0
        %v5163 = vadd.f32 %v4916, %v5162
        %5164 = vmatmul.bf16.gmra.mxu0 %v4996
        %v5165 = vpop.f32.mrf.mxu0
        %v5166 = vadd.f32 %v4916, %v5165
        %v5167 = vpop.f32.mrf.mxu0
        %v5168 = vadd.f32 %v4916, %v5167
        %5169 = vmatmul.bf16.gmra.mxu0 %v4999
        %v5170 = vpop.f32.mrf.mxu0
        %v5171 = vadd.f32 %v4916, %v5170
        %v5172 = vpop.f32.mrf.mxu0
        %v5173 = vadd.f32 %v4916, %v5172
        %5174 = vmatmul.bf16.gmra.mxu0 %v5002
        %v5175 = vpop.f32.mrf.mxu0
        %v5176 = vadd.f32 %v4916, %v5175
        %v5177 = vpop.f32.mrf.mxu0
        %v5178 = vadd.f32 %v4916, %v5177
        %5179 = vmatmul.bf16.gmra.mxu0 %v5005
        %v5180 = vpop.f32.mrf.mxu0
        %v5181 = vadd.f32 %v4916, %v5180
        %v5182 = vpop.f32.mrf.mxu0
        %v5183 = vadd.f32 %v4916, %v5182
        %5184 = vdwg.mxu0
        %v5185 = vmax.f32 %v5017, 0.0
        %v5186 = vmax.f32 %v5019, 0.0
        %v5187 = vmax.f32 %v5022, 0.0
        %v5188 = vmax.f32 %v5024, 0.0
        %v5189 = vmax.f32 %v5027, 0.0
        %v5190 = vmax.f32 %v5029, 0.0
        %v5191 = vmax.f32 %v5032, 0.0
        %v5192 = vmax.f32 %v5034, 0.0
        %v5193 = vmax.f32 %v5037, 0.0
        %v5194 = vmax.f32 %v5039, 0.0
        %v5195 = vmax.f32 %v5042, 0.0
        %v5196 = vmax.f32 %v5044, 0.0
        %v5197 = vmax.f32 %v5047, 0.0
        %v5198 = vmax.f32 %v5049, 0.0
        %v5199 = vmax.f32 %v5052, 0.0
        %v5200 = vmax.f32 %v5054, 0.0
        %v5201 = vmax.f32 %v5057, 0.0
        %v5202 = vmax.f32 %v5059, 0.0
        %v5203 = vmax.f32 %v5062, 0.0
        %v5204 = vmax.f32 %v5064, 0.0
        %v5205 = vmax.f32 %v5067, 0.0
        %v5206 = vmax.f32 %v5069, 0.0
        %v5207 = vmax.f32 %v5072, 0.0
        %v5208 = vmax.f32 %v5074, 0.0
        %v5209 = vmax.f32 %v5077, 0.0
        %v5210 = vmax.f32 %v5079, 0.0
        %v5211 = vmax.f32 %v5082, 0.0
        %v5212 = vmax.f32 %v5084, 0.0
        %v5213 = vmax.f32 %v5087, 0.0
        %v5214 = vmax.f32 %v5089, 0.0
        %v5215 = vmax.f32 %v5092, 0.0
        %v5216 = vmax.f32 %v5094, 0.0
        %5217 = vst [vmem:[#allocation2 + $0x48] sm:$0xff] %v5185
        %5218 = vst [vmem:[#allocation2 + $0x50] sm:$0xff] %v5186
        %5219 = vst [vmem:[#allocation2 + $0x58] sm:$0xff] %v5187
        %5220 = vst [vmem:[#allocation2 + $0x60] sm:$0xff] %v5188
        %5221 = vst [vmem:[#allocation2 + $0x68] sm:$0xff] %v5189
        %5222 = vst [vmem:[#allocation2 + $0x70] sm:$0xff] %v5190
        %5223 = vst [vmem:[#allocation2 + $0x78] sm:$0xff] %v5191
        %5224 = vst [vmem:[#allocation2 + $0x80] sm:$0xff] %v5192
        %5225 = vst [vmem:[#allocation2 + $0x88] sm:$0xff] %v5193
        %5226 = vst [vmem:[#allocation2 + $0x90] sm:$0xff] %v5194
        %5227 = vst [vmem:[#allocation2 + $0x98] sm:$0xff] %v5195
        %5228 = vst [vmem:[#allocation2 + $0xa0] sm:$0xff] %v5196
        %5229 = vst [vmem:[#allocation2 + $0xa8] sm:$0xff] %v5197
        %5230 = vst [vmem:[#allocation2 + $0xb0] sm:$0xff] %v5198
        %5231 = vst [vmem:[#allocation2 + $0xb8] sm:$0xff] %v5199
        %5232 = vst [vmem:[#allocation2 + $0xc0] sm:$0xff] %v5200
        %5233 = vst [vmem:[#allocation2 + $0xc8] sm:$0xff] %v5201
        %5234 = vst [vmem:[#allocation2 + $0xd0] sm:$0xff] %v5202
        %5235 = vst [vmem:[#allocation2 + $0xd8] sm:$0xff] %v5203
        %5236 = vst [vmem:[#allocation2 + $0xe0] sm:$0xff] %v5204
        %5237 = vst [vmem:[#allocation2 + $0xe8] sm:$0xff] %v5205
        %5238 = vst [vmem:[#allocation2 + $0xf0] sm:$0xff] %v5206
        %5239 = vst [vmem:[#allocation2 + $0xf8] sm:$0xff] %v5207
        %5240 = vst [vmem:[#allocation2 + $0x100] sm:$0xff] %v5208
        %5241 = vst [vmem:[#allocation2 + $0x108] sm:$0xff] %v5209
        %5242 = vst [vmem:[#allocation2 + $0x110] sm:$0xff] %v5210
        %5243 = vst [vmem:[#allocation2 + $0x118] sm:$0xff] %v5211
        %5244 = vst [vmem:[#allocation2 + $0x120] sm:$0xff] %v5212
        %5245 = vst [vmem:[#allocation2 + $0x128] sm:$0xff] %v5213
        %5246 = vst [vmem:[#allocation2 + $0x130] sm:$0xff] %v5214
        %5247 = vst [vmem:[#allocation2 + $0x138] sm:$0xff] %v5215
        %5248 = vst [vmem:[#allocation2 + $0x140] sm:$0xff] %v5216
        %v5249 = vld [vmem:[#allocation24] sm:$0xff]
        %v5250 = vld [vmem:[#allocation24 + $0x8] sm:$0x1]
        %v5251 = vld [vmem:[#allocation2 + $0x4] sm:$0xff]
        %v5252 = vld [vmem:[#allocation2 + $0xc] sm:$0xff]
        %v5253 = vld [vmem:[#allocation2 + $0x14] sm:$0xff]
        %v5254 = vld [vmem:[#allocation2 + $0x1c] sm:$0xff]
        %v5255 = vld [vmem:[#allocation2 + $0x24] sm:$0xff]
        %v5256 = vld [vmem:[#allocation2 + $0x2c] sm:$0xff]
        %v5257 = vld [vmem:[#allocation2 + $0x34] sm:$0xff]
        %v5258 = vld [vmem:[#allocation2 + $0x3c] sm:$0xff]
        %v5259 = vld [vmem:[#allocation2 + $0x44] sm:$0xff]
        %v5260 = vld [vmem:[#allocation2 + $0x4c] sm:$0xff]
        %v5261 = vld [vmem:[#allocation2 + $0x54] sm:$0xff]
        %v5262 = vld [vmem:[#allocation2 + $0x5c] sm:$0xff]
        %v5263 = vld [vmem:[#allocation2 + $0x64] sm:$0xff]
        %v5264 = vld [vmem:[#allocation2 + $0x6c] sm:$0xff]
        %v5265 = vld [vmem:[#allocation2 + $0x74] sm:$0xff]
        %v5266 = vld [vmem:[#allocation2 + $0x7c] sm:$0xff]
        %v5267 = vld [vmem:[#allocation2 + $0x84] sm:$0xff]
        %v5268 = vld [vmem:[#allocation2 + $0x8c] sm:$0xff]
        %v5269 = vld [vmem:[#allocation2 + $0x94] sm:$0xff]
        %v5270 = vld [vmem:[#allocation2 + $0x9c] sm:$0xff]
        %v5271 = vld [vmem:[#allocation2 + $0xa4] sm:$0xff]
        %v5272 = vld [vmem:[#allocation2 + $0xac] sm:$0xff]
        %v5273 = vld [vmem:[#allocation2 + $0xb4] sm:$0xff]
        %v5274 = vld [vmem:[#allocation2 + $0xbc] sm:$0xff]
        %v5275 = vld [vmem:[#allocation2 + $0xc4] sm:$0xff]
        %v5276 = vld [vmem:[#allocation2 + $0xcc] sm:$0xff]
        %v5277 = vld [vmem:[#allocation2 + $0xd4] sm:$0xff]
        %v5278 = vld [vmem:[#allocation2 + $0xdc] sm:$0xff]
        %v5279 = vld [vmem:[#allocation2 + $0xe4] sm:$0xff]
        %v5280 = vld [vmem:[#allocation2 + $0xec] sm:$0xff]
        %v5281 = vld [vmem:[#allocation2 + $0xf4] sm:$0xff]
        %v5282 = vld [vmem:[#allocation2 + $0xfc] sm:$0xff]
        %v5283 = vperm.slane %v5249, 0
        %v5284 = vmul.f32 %v5251, %v5283
        %v5285 = vmul.f32 %v5252, %v5283
        %v5286 = vmul.f32 %v5253, %v5283
        %v5287 = vmul.f32 %v5254, %v5283
        %v5288 = vmul.f32 %v5255, %v5283
        %v5289 = vmul.f32 %v5256, %v5283
        %v5290 = vmul.f32 %v5257, %v5283
        %v5291 = vmul.f32 %v5258, %v5283
        %v5292 = vmul.f32 %v5259, %v5283
        %v5293 = vmul.f32 %v5260, %v5283
        %v5294 = vmul.f32 %v5261, %v5283
        %v5295 = vmul.f32 %v5262, %v5283
        %v5296 = vmul.f32 %v5263, %v5283
        %v5297 = vmul.f32 %v5264, %v5283
        %v5298 = vmul.f32 %v5265, %v5283
        %v5299 = vmul.f32 %v5266, %v5283
        %v5300 = vmul.f32 %v5267, %v5283
        %v5301 = vmul.f32 %v5268, %v5283
        %v5302 = vmul.f32 %v5269, %v5283
        %v5303 = vmul.f32 %v5270, %v5283
        %v5304 = vmul.f32 %v5271, %v5283
        %v5305 = vmul.f32 %v5272, %v5283
        %v5306 = vmul.f32 %v5273, %v5283
        %v5307 = vmul.f32 %v5274, %v5283
        %v5308 = vmul.f32 %v5275, %v5283
        %v5309 = vmul.f32 %v5276, %v5283
        %v5310 = vmul.f32 %v5277, %v5283
        %v5311 = vmul.f32 %v5278, %v5283
        %v5312 = vmul.f32 %v5279, %v5283
        %v5313 = vmul.f32 %v5280, %v5283
        %v5314 = vmul.f32 %v5281, %v5283
        %v5315 = vmul.f32 %v5282, %v5283
        %v5316 = vld [vmem:[#allocation2 + $0x104] sm:$0xff]
        %v5317 = vld [vmem:[#allocation2 + $0x10c] sm:$0xff]
        %v5318 = vld [vmem:[#allocation2 + $0x114] sm:$0xff]
        %v5319 = vld [vmem:[#allocation2 + $0x11c] sm:$0xff]
        %v5320 = vld [vmem:[#allocation2 + $0x124] sm:$0xff]
        %v5321 = vld [vmem:[#allocation2 + $0x12c] sm:$0xff]
        %v5322 = vld [vmem:[#allocation2 + $0x134] sm:$0xff]
        %v5323 = vld [vmem:[#allocation2 + $0x13c] sm:$0xff]
        %v5324 = vperm.slane %v5249, 3
        %v5325 = vmul.f32 %v5259, %v5324
        %v5326 = vmul.f32 %v5260, %v5324
        %v5327 = vmul.f32 %v5261, %v5324
        %v5328 = vmul.f32 %v5262, %v5324
        %v5329 = vmul.f32 %v5263, %v5324
        %v5330 = vmul.f32 %v5264, %v5324
        %v5331 = vmul.f32 %v5265, %v5324
        %v5332 = vmul.f32 %v5266, %v5324
        %v5333 = vmul.f32 %v5267, %v5324
        %v5334 = vmul.f32 %v5268, %v5324
        %v5335 = vmul.f32 %v5269, %v5324
        %v5336 = vmul.f32 %v5270, %v5324
        %v5337 = vmul.f32 %v5271, %v5324
        %v5338 = vmul.f32 %v5272, %v5324
        %v5339 = vmul.f32 %v5273, %v5324
        %v5340 = vmul.f32 %v5274, %v5324
        %v5341 = vmul.f32 %v5275, %v5324
        %v5342 = vmul.f32 %v5276, %v5324
        %v5343 = vmul.f32 %v5277, %v5324
        %v5344 = vmul.f32 %v5278, %v5324
        %v5345 = vmul.f32 %v5279, %v5324
        %v5346 = vmul.f32 %v5280, %v5324
        %v5347 = vmul.f32 %v5281, %v5324
        %v5348 = vmul.f32 %v5282, %v5324
        %v5349 = vmul.f32 %v5316, %v5324
        %v5350 = vmul.f32 %v5317, %v5324
        %v5351 = vmul.f32 %v5318, %v5324
        %v5352 = vmul.f32 %v5319, %v5324
        %v5353 = vmul.f32 %v5320, %v5324
        %v5354 = vmul.f32 %v5321, %v5324
        %v5355 = vmul.f32 %v5322, %v5324
        %v5356 = vmul.f32 %v5323, %v5324
        %v5357 = vadd.f32 %v5284, %v5325
        %v5358 = vadd.f32 %v5285, %v5326
        %v5359 = vadd.f32 %v5286, %v5327
        %v5360 = vadd.f32 %v5287, %v5328
        %v5361 = vadd.f32 %v5288, %v5329
        %v5362 = vadd.f32 %v5289, %v5330
        %v5363 = vadd.f32 %v5290, %v5331
        %v5364 = vadd.f32 %v5291, %v5332
        %v5365 = vadd.f32 %v5292, %v5333
        %v5366 = vadd.f32 %v5293, %v5334
        %v5367 = vadd.f32 %v5294, %v5335
        %v5368 = vadd.f32 %v5295, %v5336
        %v5369 = vadd.f32 %v5296, %v5337
        %v5370 = vadd.f32 %v5297, %v5338
        %v5371 = vadd.f32 %v5298, %v5339
        %v5372 = vadd.f32 %v5299, %v5340
        %v5373 = vadd.f32 %v5300, %v5341
        %v5374 = vadd.f32 %v5301, %v5342
        %v5375 = vadd.f32 %v5302, %v5343
        %v5376 = vadd.f32 %v5303, %v5344
        %v5377 = vadd.f32 %v5304, %v5345
        %v5378 = vadd.f32 %v5305, %v5346
        %v5379 = vadd.f32 %v5306, %v5347
        %v5380 = vadd.f32 %v5307, %v5348
        %v5381 = vadd.f32 %v5308, %v5349
        %v5382 = vadd.f32 %v5309, %v5350
        %v5383 = vadd.f32 %v5310, %v5351
        %v5384 = vadd.f32 %v5311, %v5352
        %v5385 = vadd.f32 %v5312, %v5353
        %v5386 = vadd.f32 %v5313, %v5354
        %v5387 = vadd.f32 %v5314, %v5355
        %v5388 = vadd.f32 %v5315, %v5356
        %v5389 = vld [vmem:[#allocation2 + $0x144] sm:$0xff]
        %v5390 = vld [vmem:[#allocation2 + $0x14c] sm:$0xff]
        %v5391 = vld [vmem:[#allocation2 + $0x154] sm:$0xff]
        %v5392 = vld [vmem:[#allocation2 + $0x15c] sm:$0xff]
        %v5393 = vld [vmem:[#allocation2 + $0x164] sm:$0xff]
        %v5394 = vld [vmem:[#allocation2 + $0x16c] sm:$0xff]
        %v5395 = vld [vmem:[#allocation2 + $0x174] sm:$0xff]
        %v5396 = vld [vmem:[#allocation2 + $0x17c] sm:$0xff]
        %v5397 = vperm.slane %v5249, 6
        %v5398 = vmul.f32 %v5267, %v5397
        %v5399 = vmul.f32 %v5268, %v5397
        %v5400 = vmul.f32 %v5269, %v5397
        %v5401 = vmul.f32 %v5270, %v5397
        %v5402 = vmul.f32 %v5271, %v5397
        %v5403 = vmul.f32 %v5272, %v5397
        %v5404 = vmul.f32 %v5273, %v5397
        %v5405 = vmul.f32 %v5274, %v5397
        %v5406 = vmul.f32 %v5275, %v5397
        %v5407 = vmul.f32 %v5276, %v5397
        %v5408 = vmul.f32 %v5277, %v5397
        %v5409 = vmul.f32 %v5278, %v5397
        %v5410 = vmul.f32 %v5279, %v5397
        %v5411 = vmul.f32 %v5280, %v5397
        %v5412 = vmul.f32 %v5281, %v5397
        %v5413 = vmul.f32 %v5282, %v5397
        %v5414 = vmul.f32 %v5316, %v5397
        %v5415 = vmul.f32 %v5317, %v5397
        %v5416 = vmul.f32 %v5318, %v5397
        %v5417 = vmul.f32 %v5319, %v5397
        %v5418 = vmul.f32 %v5320, %v5397
        %v5419 = vmul.f32 %v5321, %v5397
        %v5420 = vmul.f32 %v5322, %v5397
        %v5421 = vmul.f32 %v5323, %v5397
        %v5422 = vmul.f32 %v5389, %v5397
        %v5423 = vmul.f32 %v5390, %v5397
        %v5424 = vmul.f32 %v5391, %v5397
        %v5425 = vmul.f32 %v5392, %v5397
        %v5426 = vmul.f32 %v5393, %v5397
        %v5427 = vmul.f32 %v5394, %v5397
        %v5428 = vmul.f32 %v5395, %v5397
        %v5429 = vmul.f32 %v5396, %v5397
        %v5430 = vadd.f32 %v5357, %v5398
        %v5431 = vadd.f32 %v5358, %v5399
        %v5432 = vadd.f32 %v5359, %v5400
        %v5433 = vadd.f32 %v5360, %v5401
        %v5434 = vadd.f32 %v5361, %v5402
        %v5435 = vadd.f32 %v5362, %v5403
        %v5436 = vadd.f32 %v5363, %v5404
        %v5437 = vadd.f32 %v5364, %v5405
        %v5438 = vadd.f32 %v5365, %v5406
        %v5439 = vadd.f32 %v5366, %v5407
        %v5440 = vadd.f32 %v5367, %v5408
        %v5441 = vadd.f32 %v5368, %v5409
        %v5442 = vadd.f32 %v5369, %v5410
        %v5443 = vadd.f32 %v5370, %v5411
        %v5444 = vadd.f32 %v5371, %v5412
        %v5445 = vadd.f32 %v5372, %v5413
        %v5446 = vadd.f32 %v5373, %v5414
        %v5447 = vadd.f32 %v5374, %v5415
        %v5448 = vadd.f32 %v5375, %v5416
        %v5449 = vadd.f32 %v5376, %v5417
        %v5450 = vadd.f32 %v5377, %v5418
        %v5451 = vadd.f32 %v5378, %v5419
        %v5452 = vadd.f32 %v5379, %v5420
        %v5453 = vadd.f32 %v5380, %v5421
        %v5454 = vadd.f32 %v5381, %v5422
        %v5455 = vadd.f32 %v5382, %v5423
        %v5456 = vadd.f32 %v5383, %v5424
        %v5457 = vadd.f32 %v5384, %v5425
        %v5458 = vadd.f32 %v5385, %v5426
        %v5459 = vadd.f32 %v5386, %v5427
        %v5460 = vadd.f32 %v5387, %v5428
        %v5461 = vadd.f32 %v5388, %v5429
        %v5462 = vld [vmem:[#allocation2 + $0x8] sm:$0xff]
        %v5463 = vld [vmem:[#allocation2 + $0x10] sm:$0xff]
        %v5464 = vld [vmem:[#allocation2 + $0x18] sm:$0xff]
        %v5465 = vld [vmem:[#allocation2 + $0x20] sm:$0xff]
        %v5466 = vld [vmem:[#allocation2 + $0x28] sm:$0xff]
        %v5467 = vld [vmem:[#allocation2 + $0x30] sm:$0xff]
        %v5468 = vld [vmem:[#allocation2 + $0x38] sm:$0xff]
        %v5469 = vld [vmem:[#allocation2 + $0x40] sm:$0xff]
        %v5470 = vld [vmem:[#allocation2 + $0x48] sm:$0xff]
        %v5471 = vld [vmem:[#allocation2 + $0x50] sm:$0xff]
        %v5472 = vld [vmem:[#allocation2 + $0x58] sm:$0xff]
        %v5473 = vld [vmem:[#allocation2 + $0x60] sm:$0xff]
        %v5474 = vld [vmem:[#allocation2 + $0x68] sm:$0xff]
        %v5475 = vld [vmem:[#allocation2 + $0x70] sm:$0xff]
        %v5476 = vld [vmem:[#allocation2 + $0x78] sm:$0xff]
        %v5477 = vld [vmem:[#allocation2 + $0x80] sm:$0xff]
        %v5478 = vld [vmem:[#allocation2 + $0x88] sm:$0xff]
        %v5479 = vld [vmem:[#allocation2 + $0x90] sm:$0xff]
        %v5480 = vld [vmem:[#allocation2 + $0x98] sm:$0xff]
        %v5481 = vld [vmem:[#allocation2 + $0xa0] sm:$0xff]
        %v5482 = vld [vmem:[#allocation2 + $0xa8] sm:$0xff]
        %v5483 = vld [vmem:[#allocation2 + $0xb0] sm:$0xff]
        %v5484 = vld [vmem:[#allocation2 + $0xb8] sm:$0xff]
        %v5485 = vld [vmem:[#allocation2 + $0xc0] sm:$0xff]
        %v5486 = vld [vmem:[#allocation2 + $0xc8] sm:$0xff]
        %v5487 = vld [vmem:[#allocation2 + $0xd0] sm:$0xff]
        %v5488 = vld [vmem:[#allocation2 + $0xd8] sm:$0xff]
        %v5489 = vld [vmem:[#allocation2 + $0xe0] sm:$0xff]
        %v5490 = vld [vmem:[#allocation2 + $0xe8] sm:$0xff]
        %v5491 = vld [vmem:[#allocation2 + $0xf0] sm:$0xff]
        %v5492 = vld [vmem:[#allocation2 + $0xf8] sm:$0xff]
        %v5493 = vld [vmem:[#allocation2 + $0x100] sm:$0xff]
        %v5494 = vperm.slane %v5249, 1
        %v5495 = vmul.f32 %v5462, %v5494
        %v5496 = vmul.f32 %v5463, %v5494
        %v5497 = vmul.f32 %v5464, %v5494
        %v5498 = vmul.f32 %v5465, %v5494
        %v5499 = vmul.f32 %v5466, %v5494
        %v5500 = vmul.f32 %v5467, %v5494
        %v5501 = vmul.f32 %v5468, %v5494
        %v5502 = vmul.f32 %v5469, %v5494
        %v5503 = vmul.f32 %v5470, %v5494
        %v5504 = vmul.f32 %v5471, %v5494
        %v5505 = vmul.f32 %v5472, %v5494
        %v5506 = vmul.f32 %v5473, %v5494
        %v5507 = vmul.f32 %v5474, %v5494
        %v5508 = vmul.f32 %v5475, %v5494
        %v5509 = vmul.f32 %v5476, %v5494
        %v5510 = vmul.f32 %v5477, %v5494
        %v5511 = vmul.f32 %v5478, %v5494
        %v5512 = vmul.f32 %v5479, %v5494
        %v5513 = vmul.f32 %v5480, %v5494
        %v5514 = vmul.f32 %v5481, %v5494
        %v5515 = vmul.f32 %v5482, %v5494
        %v5516 = vmul.f32 %v5483, %v5494
        %v5517 = vmul.f32 %v5484, %v5494
        %v5518 = vmul.f32 %v5485, %v5494
        %v5519 = vmul.f32 %v5486, %v5494
        %v5520 = vmul.f32 %v5487, %v5494
        %v5521 = vmul.f32 %v5488, %v5494
        %v5522 = vmul.f32 %v5489, %v5494
        %v5523 = vmul.f32 %v5490, %v5494
        %v5524 = vmul.f32 %v5491, %v5494
        %v5525 = vmul.f32 %v5492, %v5494
        %v5526 = vmul.f32 %v5493, %v5494
        %v5527 = vld [vmem:[#allocation2 + $0x108] sm:$0xff]
        %v5528 = vld [vmem:[#allocation2 + $0x110] sm:$0xff]
        %v5529 = vld [vmem:[#allocation2 + $0x118] sm:$0xff]
        %v5530 = vld [vmem:[#allocation2 + $0x120] sm:$0xff]
        %v5531 = vld [vmem:[#allocation2 + $0x128] sm:$0xff]
        %v5532 = vld [vmem:[#allocation2 + $0x130] sm:$0xff]
        %v5533 = vld [vmem:[#allocation2 + $0x138] sm:$0xff]
        %v5534 = vld [vmem:[#allocation2 + $0x140] sm:$0xff]
        %v5535 = vperm.slane %v5249, 4
        %v5536 = vmul.f32 %v5470, %v5535
        %v5537 = vmul.f32 %v5471, %v5535
        %v5538 = vmul.f32 %v5472, %v5535
        %v5539 = vmul.f32 %v5473, %v5535
        %v5540 = vmul.f32 %v5474, %v5535
        %v5541 = vmul.f32 %v5475, %v5535
        %v5542 = vmul.f32 %v5476, %v5535
        %v5543 = vmul.f32 %v5477, %v5535
        %v5544 = vmul.f32 %v5478, %v5535
        %v5545 = vmul.f32 %v5479, %v5535
        %v5546 = vmul.f32 %v5480, %v5535
        %v5547 = vmul.f32 %v5481, %v5535
        %v5548 = vmul.f32 %v5482, %v5535
        %v5549 = vmul.f32 %v5483, %v5535
        %v5550 = vmul.f32 %v5484, %v5535
        %v5551 = vmul.f32 %v5485, %v5535
        %v5552 = vmul.f32 %v5486, %v5535
        %v5553 = vmul.f32 %v5487, %v5535
        %v5554 = vmul.f32 %v5488, %v5535
        %v5555 = vmul.f32 %v5489, %v5535
        %v5556 = vmul.f32 %v5490, %v5535
        %v5557 = vmul.f32 %v5491, %v5535
        %v5558 = vmul.f32 %v5492, %v5535
        %v5559 = vmul.f32 %v5493, %v5535
        %v5560 = vmul.f32 %v5527, %v5535
        %v5561 = vmul.f32 %v5528, %v5535
        %v5562 = vmul.f32 %v5529, %v5535
        %v5563 = vmul.f32 %v5530, %v5535
        %v5564 = vmul.f32 %v5531, %v5535
        %v5565 = vmul.f32 %v5532, %v5535
        %v5566 = vmul.f32 %v5533, %v5535
        %v5567 = vmul.f32 %v5534, %v5535
        %v5568 = vadd.f32 %v5495, %v5536
        %v5569 = vadd.f32 %v5496, %v5537
        %v5570 = vadd.f32 %v5497, %v5538
        %v5571 = vadd.f32 %v5498, %v5539
        %v5572 = vadd.f32 %v5499, %v5540
        %v5573 = vadd.f32 %v5500, %v5541
        %v5574 = vadd.f32 %v5501, %v5542
        %v5575 = vadd.f32 %v5502, %v5543
        %v5576 = vadd.f32 %v5503, %v5544
        %v5577 = vadd.f32 %v5504, %v5545
        %v5578 = vadd.f32 %v5505, %v5546
        %v5579 = vadd.f32 %v5506, %v5547
        %v5580 = vadd.f32 %v5507, %v5548
        %v5581 = vadd.f32 %v5508, %v5549
        %v5582 = vadd.f32 %v5509, %v5550
        %v5583 = vadd.f32 %v5510, %v5551
        %v5584 = vadd.f32 %v5511, %v5552
        %v5585 = vadd.f32 %v5512, %v5553
        %v5586 = vadd.f32 %v5513, %v5554
        %v5587 = vadd.f32 %v5514, %v5555
        %v5588 = vadd.f32 %v5515, %v5556
        %v5589 = vadd.f32 %v5516, %v5557
        %v5590 = vadd.f32 %v5517, %v5558
        %v5591 = vadd.f32 %v5518, %v5559
        %v5592 = vadd.f32 %v5519, %v5560
        %v5593 = vadd.f32 %v5520, %v5561
        %v5594 = vadd.f32 %v5521, %v5562
        %v5595 = vadd.f32 %v5522, %v5563
        %v5596 = vadd.f32 %v5523, %v5564
        %v5597 = vadd.f32 %v5524, %v5565
        %v5598 = vadd.f32 %v5525, %v5566
        %v5599 = vadd.f32 %v5526, %v5567
        %v5600 = vld [vmem:[#allocation2 + $0x148] sm:$0xff]
        %v5601 = vld [vmem:[#allocation2 + $0x150] sm:$0xff]
        %v5602 = vld [vmem:[#allocation2 + $0x158] sm:$0xff]
        %v5603 = vld [vmem:[#allocation2 + $0x160] sm:$0xff]
        %v5604 = vld [vmem:[#allocation2 + $0x168] sm:$0xff]
        %v5605 = vld [vmem:[#allocation2 + $0x170] sm:$0xff]
        %v5606 = vld [vmem:[#allocation2 + $0x178] sm:$0xff]
        %v5607 = vld [vmem:[#allocation2 + $0x180] sm:$0xff]
        %v5608 = vperm.slane %v5249, 7
        %v5609 = vmul.f32 %v5478, %v5608
        %v5610 = vmul.f32 %v5479, %v5608
        %v5611 = vmul.f32 %v5480, %v5608
        %v5612 = vmul.f32 %v5481, %v5608
        %v5613 = vmul.f32 %v5482, %v5608
        %v5614 = vmul.f32 %v5483, %v5608
        %v5615 = vmul.f32 %v5484, %v5608
        %v5616 = vmul.f32 %v5485, %v5608
        %v5617 = vmul.f32 %v5486, %v5608
        %v5618 = vmul.f32 %v5487, %v5608
        %v5619 = vmul.f32 %v5488, %v5608
        %v5620 = vmul.f32 %v5489, %v5608
        %v5621 = vmul.f32 %v5490, %v5608
        %v5622 = vmul.f32 %v5491, %v5608
        %v5623 = vmul.f32 %v5492, %v5608
        %v5624 = vmul.f32 %v5493, %v5608
        %v5625 = vmul.f32 %v5527, %v5608
        %v5626 = vmul.f32 %v5528, %v5608
        %v5627 = vmul.f32 %v5529, %v5608
        %v5628 = vmul.f32 %v5530, %v5608
        %v5629 = vmul.f32 %v5531, %v5608
        %v5630 = vmul.f32 %v5532, %v5608
        %v5631 = vmul.f32 %v5533, %v5608
        %v5632 = vmul.f32 %v5534, %v5608
        %v5633 = vmul.f32 %v5600, %v5608
        %v5634 = vmul.f32 %v5601, %v5608
        %v5635 = vmul.f32 %v5602, %v5608
        %v5636 = vmul.f32 %v5603, %v5608
        %v5637 = vmul.f32 %v5604, %v5608
        %v5638 = vmul.f32 %v5605, %v5608
        %v5639 = vmul.f32 %v5606, %v5608
        %v5640 = vmul.f32 %v5607, %v5608
        %v5641 = vadd.f32 %v5568, %v5609
        %v5642 = vadd.f32 %v5569, %v5610
        %v5643 = vadd.f32 %v5570, %v5611
        %v5644 = vadd.f32 %v5571, %v5612
        %v5645 = vadd.f32 %v5572, %v5613
        %v5646 = vadd.f32 %v5573, %v5614
        %v5647 = vadd.f32 %v5574, %v5615
        %v5648 = vadd.f32 %v5575, %v5616
        %v5649 = vadd.f32 %v5576, %v5617
        %v5650 = vadd.f32 %v5577, %v5618
        %v5651 = vadd.f32 %v5578, %v5619
        %v5652 = vadd.f32 %v5579, %v5620
        %v5653 = vadd.f32 %v5580, %v5621
        %v5654 = vadd.f32 %v5581, %v5622
        %v5655 = vadd.f32 %v5582, %v5623
        %v5656 = vadd.f32 %v5583, %v5624
        %v5657 = vadd.f32 %v5584, %v5625
        %v5658 = vadd.f32 %v5585, %v5626
        %v5659 = vadd.f32 %v5586, %v5627
        %v5660 = vadd.f32 %v5587, %v5628
        %v5661 = vadd.f32 %v5588, %v5629
        %v5662 = vadd.f32 %v5589, %v5630
        %v5663 = vadd.f32 %v5590, %v5631
        %v5664 = vadd.f32 %v5591, %v5632
        %v5665 = vadd.f32 %v5592, %v5633
        %v5666 = vadd.f32 %v5593, %v5634
        %v5667 = vadd.f32 %v5594, %v5635
        %v5668 = vadd.f32 %v5595, %v5636
        %v5669 = vadd.f32 %v5596, %v5637
        %v5670 = vadd.f32 %v5597, %v5638
        %v5671 = vadd.f32 %v5598, %v5639
        %v5672 = vadd.f32 %v5599, %v5640
        %v5673 = vperm.slane %v5249, 2
        %v5674 = vmul.f32 %v5252, %v5673
        %v5675 = vmul.f32 %v5253, %v5673
        %v5676 = vmul.f32 %v5254, %v5673
        %v5677 = vmul.f32 %v5255, %v5673
        %v5678 = vmul.f32 %v5256, %v5673
        %v5679 = vmul.f32 %v5257, %v5673
        %v5680 = vmul.f32 %v5258, %v5673
        %v5681 = vmul.f32 %v5259, %v5673
        %v5682 = vmul.f32 %v5260, %v5673
        %v5683 = vmul.f32 %v5261, %v5673
        %v5684 = vmul.f32 %v5262, %v5673
        %v5685 = vmul.f32 %v5263, %v5673
        %v5686 = vmul.f32 %v5264, %v5673
        %v5687 = vmul.f32 %v5265, %v5673
        %v5688 = vmul.f32 %v5266, %v5673
        %v5689 = vmul.f32 %v5267, %v5673
        %v5690 = vmul.f32 %v5268, %v5673
        %v5691 = vmul.f32 %v5269, %v5673
        %v5692 = vmul.f32 %v5270, %v5673
        %v5693 = vmul.f32 %v5271, %v5673
        %v5694 = vmul.f32 %v5272, %v5673
        %v5695 = vmul.f32 %v5273, %v5673
        %v5696 = vmul.f32 %v5274, %v5673
        %v5697 = vmul.f32 %v5275, %v5673
        %v5698 = vmul.f32 %v5276, %v5673
        %v5699 = vmul.f32 %v5277, %v5673
        %v5700 = vmul.f32 %v5278, %v5673
        %v5701 = vmul.f32 %v5279, %v5673
        %v5702 = vmul.f32 %v5280, %v5673
        %v5703 = vmul.f32 %v5281, %v5673
        %v5704 = vmul.f32 %v5282, %v5673
        %v5705 = vmul.f32 %v5316, %v5673
        %v5706 = vperm.slane %v5249, 5
        %v5707 = vmul.f32 %v5260, %v5706
        %v5708 = vmul.f32 %v5261, %v5706
        %v5709 = vmul.f32 %v5262, %v5706
        %v5710 = vmul.f32 %v5263, %v5706
        %v5711 = vmul.f32 %v5264, %v5706
        %v5712 = vmul.f32 %v5265, %v5706
        %v5713 = vmul.f32 %v5266, %v5706
        %v5714 = vmul.f32 %v5267, %v5706
        %v5715 = vmul.f32 %v5268, %v5706
        %v5716 = vmul.f32 %v5269, %v5706
        %v5717 = vmul.f32 %v5270, %v5706
        %v5718 = vmul.f32 %v5271, %v5706
        %v5719 = vmul.f32 %v5272, %v5706
        %v5720 = vmul.f32 %v5273, %v5706
        %v5721 = vmul.f32 %v5274, %v5706
        %v5722 = vmul.f32 %v5275, %v5706
        %v5723 = vmul.f32 %v5276, %v5706
        %v5724 = vmul.f32 %v5277, %v5706
        %v5725 = vmul.f32 %v5278, %v5706
        %v5726 = vmul.f32 %v5279, %v5706
        %v5727 = vmul.f32 %v5280, %v5706
        %v5728 = vmul.f32 %v5281, %v5706
        %v5729 = vmul.f32 %v5282, %v5706
        %v5730 = vmul.f32 %v5316, %v5706
        %v5731 = vmul.f32 %v5317, %v5706
        %v5732 = vmul.f32 %v5318, %v5706
        %v5733 = vmul.f32 %v5319, %v5706
        %v5734 = vmul.f32 %v5320, %v5706
        %v5735 = vmul.f32 %v5321, %v5706
        %v5736 = vmul.f32 %v5322, %v5706
        %v5737 = vmul.f32 %v5323, %v5706
        %v5738 = vmul.f32 %v5389, %v5706
        %v5739 = vadd.f32 %v5674, %v5707
        %v5740 = vadd.f32 %v5675, %v5708
        %v5741 = vadd.f32 %v5676, %v5709
        %v5742 = vadd.f32 %v5677, %v5710
        %v5743 = vadd.f32 %v5678, %v5711
        %v5744 = vadd.f32 %v5679, %v5712
        %v5745 = vadd.f32 %v5680, %v5713
        %v5746 = vadd.f32 %v5681, %v5714
        %v5747 = vadd.f32 %v5682, %v5715
        %v5748 = vadd.f32 %v5683, %v5716
        %v5749 = vadd.f32 %v5684, %v5717
        %v5750 = vadd.f32 %v5685, %v5718
        %v5751 = vadd.f32 %v5686, %v5719
        %v5752 = vadd.f32 %v5687, %v5720
        %v5753 = vadd.f32 %v5688, %v5721
        %v5754 = vadd.f32 %v5689, %v5722
        %v5755 = vadd.f32 %v5690, %v5723
        %v5756 = vadd.f32 %v5691, %v5724
        %v5757 = vadd.f32 %v5692, %v5725
        %v5758 = vadd.f32 %v5693, %v5726
        %v5759 = vadd.f32 %v5694, %v5727
        %v5760 = vadd.f32 %v5695, %v5728
        %v5761 = vadd.f32 %v5696, %v5729
        %v5762 = vadd.f32 %v5697, %v5730
        %v5763 = vadd.f32 %v5698, %v5731
        %v5764 = vadd.f32 %v5699, %v5732
        %v5765 = vadd.f32 %v5700, %v5733
        %v5766 = vadd.f32 %v5701, %v5734
        %v5767 = vadd.f32 %v5702, %v5735
        %v5768 = vadd.f32 %v5703, %v5736
        %v5769 = vadd.f32 %v5704, %v5737
        %v5770 = vadd.f32 %v5705, %v5738
        %v5771 = vld [vmem:[#allocation2 + $0x184] sm:$0xff]
        %v5772 = vperm.slane %v5250, 0
        %v5773 = vmul.f32 %v5268, %v5772
        %v5774 = vmul.f32 %v5269, %v5772
        %v5775 = vmul.f32 %v5270, %v5772
        %v5776 = vmul.f32 %v5271, %v5772
        %v5777 = vmul.f32 %v5272, %v5772
        %v5778 = vmul.f32 %v5273, %v5772
        %v5779 = vmul.f32 %v5274, %v5772
        %v5780 = vmul.f32 %v5275, %v5772
        %v5781 = vmul.f32 %v5276, %v5772
        %v5782 = vmul.f32 %v5277, %v5772
        %v5783 = vmul.f32 %v5278, %v5772
        %v5784 = vmul.f32 %v5279, %v5772
        %v5785 = vmul.f32 %v5280, %v5772
        %v5786 = vmul.f32 %v5281, %v5772
        %v5787 = vmul.f32 %v5282, %v5772
        %v5788 = vmul.f32 %v5316, %v5772
        %v5789 = vmul.f32 %v5317, %v5772
        %v5790 = vmul.f32 %v5318, %v5772
        %v5791 = vmul.f32 %v5319, %v5772
        %v5792 = vmul.f32 %v5320, %v5772
        %v5793 = vmul.f32 %v5321, %v5772
        %v5794 = vmul.f32 %v5322, %v5772
        %v5795 = vmul.f32 %v5323, %v5772
        %v5796 = vmul.f32 %v5389, %v5772
        %v5797 = vmul.f32 %v5390, %v5772
        %v5798 = vmul.f32 %v5391, %v5772
        %v5799 = vmul.f32 %v5392, %v5772
        %v5800 = vmul.f32 %v5393, %v5772
        %v5801 = vmul.f32 %v5394, %v5772
        %v5802 = vmul.f32 %v5395, %v5772
        %v5803 = vmul.f32 %v5396, %v5772
        %v5804 = vmul.f32 %v5771, %v5772
        %v5805 = vadd.f32 %v5739, %v5773
        %v5806 = vadd.f32 %v5740, %v5774
        %v5807 = vadd.f32 %v5741, %v5775
        %v5808 = vadd.f32 %v5742, %v5776
        %v5809 = vadd.f32 %v5743, %v5777
        %v5810 = vadd.f32 %v5744, %v5778
        %v5811 = vadd.f32 %v5745, %v5779
        %v5812 = vadd.f32 %v5746, %v5780
        %v5813 = vadd.f32 %v5747, %v5781
        %v5814 = vadd.f32 %v5748, %v5782
        %v5815 = vadd.f32 %v5749, %v5783
        %v5816 = vadd.f32 %v5750, %v5784
        %v5817 = vadd.f32 %v5751, %v5785
        %v5818 = vadd.f32 %v5752, %v5786
        %v5819 = vadd.f32 %v5753, %v5787
        %v5820 = vadd.f32 %v5754, %v5788
        %v5821 = vadd.f32 %v5755, %v5789
        %v5822 = vadd.f32 %v5756, %v5790
        %v5823 = vadd.f32 %v5757, %v5791
        %v5824 = vadd.f32 %v5758, %v5792
        %v5825 = vadd.f32 %v5759, %v5793
        %v5826 = vadd.f32 %v5760, %v5794
        %v5827 = vadd.f32 %v5761, %v5795
        %v5828 = vadd.f32 %v5762, %v5796
        %v5829 = vadd.f32 %v5763, %v5797
        %v5830 = vadd.f32 %v5764, %v5798
        %v5831 = vadd.f32 %v5765, %v5799
        %v5832 = vadd.f32 %v5766, %v5800
        %v5833 = vadd.f32 %v5767, %v5801
        %v5834 = vadd.f32 %v5768, %v5802
        %v5835 = vadd.f32 %v5769, %v5803
        %v5836 = vadd.f32 %v5770, %v5804
        %v5837 = vmul.f32 %v5430, %v1784
        %v5838 = vmul.f32 %v5431, %v1785
        %v5839 = vmul.f32 %v5432, %v1786
        %v5840 = vmul.f32 %v5433, %v1787
        %v5841 = vmul.f32 %v5434, %v1788
        %v5842 = vmul.f32 %v5435, %v1789
        %v5843 = vmul.f32 %v5436, %v1790
        %v5844 = vmul.f32 %v5437, %v1791
        %v5845 = vmul.f32 %v5438, %v1792
        %v5846 = vmul.f32 %v5439, %v1793
        %v5847 = vmul.f32 %v5440, %v1794
        %v5848 = vmul.f32 %v5441, %v1795
        %v5849 = vmul.f32 %v5442, %v1796
        %v5850 = vmul.f32 %v5443, %v1797
        %v5851 = vmul.f32 %v5444, %v1798
        %v5852 = vmul.f32 %v5445, %v1799
        %v5853 = vmul.f32 %v5446, %v1800
        %v5854 = vmul.f32 %v5447, %v1801
        %v5855 = vmul.f32 %v5448, %v1802
        %v5856 = vmul.f32 %v5449, %v1803
        %v5857 = vmul.f32 %v5450, %v1804
        %v5858 = vmul.f32 %v5451, %v1805
        %v5859 = vmul.f32 %v5452, %v1806
        %v5860 = vmul.f32 %v5453, %v1807
        %v5861 = vmul.f32 %v5454, %v1808
        %v5862 = vmul.f32 %v5455, %v1809
        %v5863 = vmul.f32 %v5456, %v1810
        %v5864 = vmul.f32 %v5457, %v1811
        %v5865 = vmul.f32 %v5458, %v1812
        %v5866 = vmul.f32 %v5459, %v1813
        %v5867 = vmul.f32 %v5460, %v1814
        %v5868 = vmul.f32 %v5461, %v1815
        %v5869 = vadd.f32 %v5837, %v5641
        %v5870 = vadd.f32 %v5838, %v5642
        %v5871 = vadd.f32 %v5839, %v5643
        %v5872 = vadd.f32 %v5840, %v5644
        %v5873 = vadd.f32 %v5841, %v5645
        %v5874 = vadd.f32 %v5842, %v5646
        %v5875 = vadd.f32 %v5843, %v5647
        %v5876 = vadd.f32 %v5844, %v5648
        %v5877 = vadd.f32 %v5845, %v5649
        %v5878 = vadd.f32 %v5846, %v5650
        %v5879 = vadd.f32 %v5847, %v5651
        %v5880 = vadd.f32 %v5848, %v5652
        %v5881 = vadd.f32 %v5849, %v5653
        %v5882 = vadd.f32 %v5850, %v5654
        %v5883 = vadd.f32 %v5851, %v5655
        %v5884 = vadd.f32 %v5852, %v5656
        %v5885 = vadd.f32 %v5853, %v5657
        %v5886 = vadd.f32 %v5854, %v5658
        %v5887 = vadd.f32 %v5855, %v5659
        %v5888 = vadd.f32 %v5856, %v5660
        %v5889 = vadd.f32 %v5857, %v5661
        %v5890 = vadd.f32 %v5858, %v5662
        %v5891 = vadd.f32 %v5859, %v5663
        %v5892 = vadd.f32 %v5860, %v5664
        %v5893 = vadd.f32 %v5861, %v5665
        %v5894 = vadd.f32 %v5862, %v5666
        %v5895 = vadd.f32 %v5863, %v5667
        %v5896 = vadd.f32 %v5864, %v5668
        %v5897 = vadd.f32 %v5865, %v5669
        %v5898 = vadd.f32 %v5866, %v5670
        %v5899 = vadd.f32 %v5867, %v5671
        %v5900 = vadd.f32 %v5868, %v5672
        %v5901 = vmul.f32 %v5805, %v1880
        %v5902 = vmul.f32 %v5806, %v1881
        %v5903 = vmul.f32 %v5807, %v1882
        %v5904 = vmul.f32 %v5808, %v1883
        %v5905 = vmul.f32 %v5809, %v1884
        %v5906 = vmul.f32 %v5810, %v1885
        %v5907 = vmul.f32 %v5811, %v1886
        %v5908 = vmul.f32 %v5812, %v1887
        %v5909 = vmul.f32 %v5813, %v1888
        %v5910 = vmul.f32 %v5814, %v1889
        %v5911 = vmul.f32 %v5815, %v1890
        %v5912 = vmul.f32 %v5816, %v1891
        %v5913 = vmul.f32 %v5817, %v1892
        %v5914 = vmul.f32 %v5818, %v1893
        %v5915 = vmul.f32 %v5819, %v1894
        %v5916 = vmul.f32 %v5820, %v1895
        %v5917 = vmul.f32 %v5821, %v1896
        %v5918 = vmul.f32 %v5822, %v1897
        %v5919 = vmul.f32 %v5823, %v1898
        %v5920 = vmul.f32 %v5824, %v1899
        %v5921 = vmul.f32 %v5825, %v1900
        %v5922 = vmul.f32 %v5826, %v1901
        %v5923 = vmul.f32 %v5827, %v1902
        %v5924 = vmul.f32 %v5828, %v1903
        %v5925 = vmul.f32 %v5829, %v1904
        %v5926 = vmul.f32 %v5830, %v1905
        %v5927 = vmul.f32 %v5831, %v1906
        %v5928 = vmul.f32 %v5832, %v1907
        %v5929 = vmul.f32 %v5833, %v1908
        %v5930 = vmul.f32 %v5834, %v1909
        %v5931 = vmul.f32 %v5835, %v1910
        %v5932 = vmul.f32 %v5836, %v1911
        %v5933 = vadd.f32 %v5869, %v5901
        %v5934 = vadd.f32 %v5870, %v5902
        %v5935 = vadd.f32 %v5871, %v5903
        %v5936 = vadd.f32 %v5872, %v5904
        %v5937 = vadd.f32 %v5873, %v5905
        %v5938 = vadd.f32 %v5874, %v5906
        %v5939 = vadd.f32 %v5875, %v5907
        %v5940 = vadd.f32 %v5876, %v5908
        %v5941 = vadd.f32 %v5877, %v5909
        %v5942 = vadd.f32 %v5878, %v5910
        %v5943 = vadd.f32 %v5879, %v5911
        %v5944 = vadd.f32 %v5880, %v5912
        %v5945 = vadd.f32 %v5881, %v5913
        %v5946 = vadd.f32 %v5882, %v5914
        %v5947 = vadd.f32 %v5883, %v5915
        %v5948 = vadd.f32 %v5884, %v5916
        %v5949 = vadd.f32 %v5885, %v5917
        %v5950 = vadd.f32 %v5886, %v5918
        %v5951 = vadd.f32 %v5887, %v5919
        %v5952 = vadd.f32 %v5888, %v5920
        %v5953 = vadd.f32 %v5889, %v5921
        %v5954 = vadd.f32 %v5890, %v5922
        %v5955 = vadd.f32 %v5891, %v5923
        %v5956 = vadd.f32 %v5892, %v5924
        %v5957 = vadd.f32 %v5893, %v5925
        %v5958 = vadd.f32 %v5894, %v5926
        %v5959 = vadd.f32 %v5895, %v5927
        %v5960 = vadd.f32 %v5896, %v5928
        %v5961 = vadd.f32 %v5897, %v5929
        %v5962 = vadd.f32 %v5898, %v5930
        %v5963 = vadd.f32 %v5899, %v5931
        %v5964 = vadd.f32 %v5900, %v5932
        %5997 = vrot.lane.b32.xlu0 %v5933, 64
        %v5998 = vpop.permute.xlu0 %5997
        %5999 = vrot.lane.b32.xlu0 %v5934, 64
        %v6000 = vpop.permute.xlu0 %5999
        %6001 = vrot.lane.b32.xlu0 %v5935, 64
        %v6002 = vpop.permute.xlu0 %6001
        %6003 = vrot.lane.b32.xlu0 %v5936, 64
        %v6004 = vpop.permute.xlu0 %6003
        %6005 = vrot.lane.b32.xlu0 %v5937, 64
        %v6006 = vpop.permute.xlu0 %6005
        %6007 = vrot.lane.b32.xlu0 %v5938, 64
        %v6008 = vpop.permute.xlu0 %6007
        %6009 = vrot.lane.b32.xlu0 %v5939, 64
        %v6010 = vpop.permute.xlu0 %6009
        %6011 = vrot.lane.b32.xlu0 %v5940, 64
        %v6012 = vpop.permute.xlu0 %6011
        %6013 = vrot.lane.b32.xlu0 %v5941, 64
        %v6014 = vpop.permute.xlu0 %6013
        %6015 = vrot.lane.b32.xlu0 %v5942, 64
        %v6016 = vpop.permute.xlu0 %6015
        %6017 = vrot.lane.b32.xlu0 %v5943, 64
        %v6018 = vpop.permute.xlu0 %6017
        %6019 = vrot.lane.b32.xlu0 %v5944, 64
        %v6020 = vpop.permute.xlu0 %6019
        %6021 = vrot.lane.b32.xlu0 %v5945, 64
        %v6022 = vpop.permute.xlu0 %6021
        %6023 = vrot.lane.b32.xlu0 %v5946, 64
        %v6024 = vpop.permute.xlu0 %6023
        %6025 = vrot.lane.b32.xlu0 %v5947, 64
        %v6026 = vpop.permute.xlu0 %6025
        %6027 = vrot.lane.b32.xlu0 %v5948, 64
        %v6028 = vpop.permute.xlu0 %6027
        %6029 = vrot.lane.b32.xlu0 %v5949, 64
        %v6030 = vpop.permute.xlu0 %6029
        %6031 = vrot.lane.b32.xlu0 %v5950, 64
        %v6032 = vpop.permute.xlu0 %6031
        %6033 = vrot.lane.b32.xlu0 %v5951, 64
        %v6034 = vpop.permute.xlu0 %6033
        %6035 = vrot.lane.b32.xlu0 %v5952, 64
        %v6036 = vpop.permute.xlu0 %6035
        %6037 = vrot.lane.b32.xlu0 %v5953, 64
        %v6038 = vpop.permute.xlu0 %6037
        %6039 = vrot.lane.b32.xlu0 %v5954, 64
        %v6040 = vpop.permute.xlu0 %6039
        %6041 = vrot.lane.b32.xlu0 %v5955, 64
        %v6042 = vpop.permute.xlu0 %6041
        %6043 = vrot.lane.b32.xlu0 %v5956, 64
        %v6044 = vpop.permute.xlu0 %6043
        %6045 = vrot.lane.b32.xlu0 %v5957, 64
        %v6046 = vpop.permute.xlu0 %6045
        %6047 = vrot.lane.b32.xlu0 %v5958, 64
        %v6048 = vpop.permute.xlu0 %6047
        %6049 = vrot.lane.b32.xlu0 %v5959, 64
        %v6050 = vpop.permute.xlu0 %6049
        %6051 = vrot.lane.b32.xlu0 %v5960, 64
        %v6052 = vpop.permute.xlu0 %6051
        %6053 = vrot.lane.b32.xlu0 %v5961, 64
        %v6054 = vpop.permute.xlu0 %6053
        %6055 = vrot.lane.b32.xlu0 %v5962, 64
        %v6056 = vpop.permute.xlu0 %6055
        %6057 = vrot.lane.b32.xlu0 %v5963, 64
        %v6058 = vpop.permute.xlu0 %6057
        %6059 = vrot.lane.b32.xlu0 %v5964, 64
        %v6060 = vpop.permute.xlu0 %6059
        %v6093 = vadd.f32 %v5933, %v5998
        %v6094 = vadd.f32 %v5934, %v6000
        %v6095 = vadd.f32 %v5935, %v6002
        %v6096 = vadd.f32 %v5936, %v6004
        %v6097 = vadd.f32 %v5937, %v6006
        %v6098 = vadd.f32 %v5938, %v6008
        %v6099 = vadd.f32 %v5939, %v6010
        %v6100 = vadd.f32 %v5940, %v6012
        %v6101 = vadd.f32 %v5941, %v6014
        %v6102 = vadd.f32 %v5942, %v6016
        %v6103 = vadd.f32 %v5943, %v6018
        %v6104 = vadd.f32 %v5944, %v6020
        %v6105 = vadd.f32 %v5945, %v6022
        %v6106 = vadd.f32 %v5946, %v6024
        %v6107 = vadd.f32 %v5947, %v6026
        %v6108 = vadd.f32 %v5948, %v6028
        %v6109 = vadd.f32 %v5949, %v6030
        %v6110 = vadd.f32 %v5950, %v6032
        %v6111 = vadd.f32 %v5951, %v6034
        %v6112 = vadd.f32 %v5952, %v6036
        %v6113 = vadd.f32 %v5953, %v6038
        %v6114 = vadd.f32 %v5954, %v6040
        %v6115 = vadd.f32 %v5955, %v6042
        %v6116 = vadd.f32 %v5956, %v6044
        %v6117 = vadd.f32 %v5957, %v6046
        %v6118 = vadd.f32 %v5958, %v6048
        %v6119 = vadd.f32 %v5959, %v6050
        %v6120 = vadd.f32 %v5960, %v6052
        %v6121 = vadd.f32 %v5961, %v6054
        %v6122 = vadd.f32 %v5962, %v6056
        %v6123 = vadd.f32 %v5963, %v6058
        %v6124 = vadd.f32 %v5964, %v6060
        %v6125 = vld [vmem:[#allocation26] sm:$0x1]
        %v6127 = vperm.slane %v6125, 0
        %v6129 = vadd.f32 %v6093, %v6127
        %v6130 = vadd.f32 %v6094, %v6127
        %v6131 = vadd.f32 %v6095, %v6127
        %v6132 = vadd.f32 %v6096, %v6127
        %v6133 = vadd.f32 %v6097, %v6127
        %v6134 = vadd.f32 %v6098, %v6127
        %v6135 = vadd.f32 %v6099, %v6127
        %v6136 = vadd.f32 %v6100, %v6127
        %v6137 = vadd.f32 %v6101, %v6127
        %v6138 = vadd.f32 %v6102, %v6127
        %v6139 = vadd.f32 %v6103, %v6127
        %v6140 = vadd.f32 %v6104, %v6127
        %v6141 = vadd.f32 %v6105, %v6127
        %v6142 = vadd.f32 %v6106, %v6127
        %v6143 = vadd.f32 %v6107, %v6127
        %v6144 = vadd.f32 %v6108, %v6127
        %v6145 = vadd.f32 %v6109, %v6127
        %v6146 = vadd.f32 %v6110, %v6127
        %v6147 = vadd.f32 %v6111, %v6127
        %v6148 = vadd.f32 %v6112, %v6127
        %v6149 = vadd.f32 %v6113, %v6127
        %v6150 = vadd.f32 %v6114, %v6127
        %v6151 = vadd.f32 %v6115, %v6127
        %v6152 = vadd.f32 %v6116, %v6127
        %v6153 = vadd.f32 %v6117, %v6127
        %v6154 = vadd.f32 %v6118, %v6127
        %v6155 = vadd.f32 %v6119, %v6127
        %v6156 = vadd.f32 %v6120, %v6127
        %v6157 = vadd.f32 %v6121, %v6127
        %v6158 = vadd.f32 %v6122, %v6127
        %v6159 = vadd.f32 %v6123, %v6127
        %v6160 = vadd.f32 %v6124, %v6127
        %v6161 = vmax.f32 %v6129, 0.0
        %v6162 = vmax.f32 %v6130, 0.0
        %v6163 = vmax.f32 %v6131, 0.0
        %v6164 = vmax.f32 %v6132, 0.0
        %v6165 = vmax.f32 %v6133, 0.0
        %v6166 = vmax.f32 %v6134, 0.0
        %v6167 = vmax.f32 %v6135, 0.0
        %v6168 = vmax.f32 %v6136, 0.0
        %v6169 = vmax.f32 %v6137, 0.0
        %v6170 = vmax.f32 %v6138, 0.0
        %v6171 = vmax.f32 %v6139, 0.0
        %v6172 = vmax.f32 %v6140, 0.0
        %v6173 = vmax.f32 %v6141, 0.0
        %v6174 = vmax.f32 %v6142, 0.0
        %v6175 = vmax.f32 %v6143, 0.0
        %v6176 = vmax.f32 %v6144, 0.0
        %v6177 = vmax.f32 %v6145, 0.0
        %v6178 = vmax.f32 %v6146, 0.0
        %v6179 = vmax.f32 %v6147, 0.0
        %v6180 = vmax.f32 %v6148, 0.0
        %v6181 = vmax.f32 %v6149, 0.0
        %v6182 = vmax.f32 %v6150, 0.0
        %v6183 = vmax.f32 %v6151, 0.0
        %v6184 = vmax.f32 %v6152, 0.0
        %v6185 = vmax.f32 %v6153, 0.0
        %v6186 = vmax.f32 %v6154, 0.0
        %v6187 = vmax.f32 %v6155, 0.0
        %v6188 = vmax.f32 %v6156, 0.0
        %v6189 = vmax.f32 %v6157, 0.0
        %v6190 = vmax.f32 %v6158, 0.0
        %v6191 = vmax.f32 %v6159, 0.0
        %v6192 = vmax.f32 %v6160, 0.0
        %v6193 = vpack.c.bf16 %v6162, %v6161
        %v6194 = vpack.c.bf16 %v6164, %v6163
        %v6195 = vpack.c.bf16 %v6166, %v6165
        %v6196 = vpack.c.bf16 %v6168, %v6167
        %v6197 = vpack.c.bf16 %v6170, %v6169
        %v6198 = vpack.c.bf16 %v6172, %v6171
        %v6199 = vpack.c.bf16 %v6174, %v6173
        %v6200 = vpack.c.bf16 %v6176, %v6175
        %v6201 = vpack.c.bf16 %v6178, %v6177
        %v6202 = vpack.c.bf16 %v6180, %v6179
        %v6203 = vpack.c.bf16 %v6182, %v6181
        %v6204 = vpack.c.bf16 %v6184, %v6183
        %v6205 = vpack.c.bf16 %v6186, %v6185
        %v6206 = vpack.c.bf16 %v6188, %v6187
        %v6207 = vpack.c.bf16 %v6190, %v6189
        %v6208 = vpack.c.bf16 %v6192, %v6191
        %v6209 = vld [vmem:[%s17] sm:$0xf]
        %v6210 = vld [vmem:[%s17 + $0x4] sm:$0xf]
        %v6211 = vld [vmem:[%s17 + $0x8] sm:$0xf]
        %v6212 = vld [vmem:[%s17 + $0xc] sm:$0xf]
        %v6213 = vld [vmem:[%s17 + $0x10] sm:$0xf]
        %v6214 = vld [vmem:[%s17 + $0x14] sm:$0xf]
        %v6215 = vld [vmem:[%s17 + $0x18] sm:$0xf]
        %v6216 = vld [vmem:[%s17 + $0x1c] sm:$0xf]
        %v6217 = vld [vmem:[%s18] sm:$0x1]
        %v6219 = vperm.slane %v6217, 0
        %v6229 = vunpack.c.l.b16 %v6209
        %v6230 = vunpack.c.l.b16 %v6210
        %v6231 = vunpack.c.l.b16 %v6211
        %v6232 = vunpack.c.l.b16 %v6212
        %v6233 = vunpack.c.l.b16 %v6213
        %v6234 = vunpack.c.l.b16 %v6214
        %v6235 = vunpack.c.l.b16 %v6215
        %v6236 = vunpack.c.l.b16 %v6216
        %v6237 = vpack.c.b16 %v6230, %v6229
        %v6238 = vpack.c.b16 %v6232, %v6231
        %v6239 = vpack.c.b16 %v6234, %v6233
        %v6240 = vpack.c.b16 %v6236, %v6235
        %v6246 = vsel %vm1982, %v6193, 0
        %v6249 = vsel %vm1982, %v6194, 0
        %v6252 = vsel %vm1982, %v6195, 0
        %v6255 = vsel %vm1982, %v6196, 0
        %v6258 = vsel %vm1982, %v6197, 0
        %v6261 = vsel %vm1982, %v6198, 0
        %v6264 = vsel %vm1982, %v6199, 0
        %v6267 = vsel %vm1982, %v6200, 0
        %v6270 = vsel %vm1982, %v6201, 0
        %v6273 = vsel %vm1982, %v6202, 0
        %v6276 = vsel %vm1982, %v6203, 0
        %v6279 = vsel %vm1982, %v6204, 0
        %v6282 = vsel %vm1982, %v6205, 0
        %v6285 = vsel %vm1982, %v6206, 0
        %v6288 = vsel %vm1982, %v6207, 0
        %v6291 = vsel %vm1982, %v6208, 0
        %6293 = vmatpush.bf16.msra.mxu0 0
        %6294 = vmatpush.bf16.msra.mxu0 0
        %6295 = vmatpush.bf16.msra.mxu0 0
        %6296 = vmatpush.bf16.msra.mxu0 0
        %6297 = vmatpush.bf16.msra.mxu0 %v6240
        %6298 = vmatpush.bf16.msra.mxu0 %v6239
        %6299 = vmatpush.bf16.msra.mxu0 %v6238
        %6300 = vmatpush.bf16.msra.mxu0 %v6237
        %6301 = vmatmul.bf16.gmra.mxu0 %v6246
        %v6302 = vpop.f32.mrf.mxu0
        %v6303 = vadd.f32 %v6219, %v6302
        %v6304 = vpop.f32.mrf.mxu0
        %v6305 = vadd.f32 %v6219, %v6304
        %6306 = vmatmul.bf16.gmra.mxu0 %v6249
        %v6307 = vpop.f32.mrf.mxu0
        %v6308 = vadd.f32 %v6219, %v6307
        %v6309 = vpop.f32.mrf.mxu0
        %v6310 = vadd.f32 %v6219, %v6309
        %6311 = vmatmul.bf16.gmra.mxu0 %v6252
        %v6312 = vpop.f32.mrf.mxu0
        %v6313 = vadd.f32 %v6219, %v6312
        %v6314 = vpop.f32.mrf.mxu0
        %v6315 = vadd.f32 %v6219, %v6314
        %6316 = vmatmul.bf16.gmra.mxu0 %v6255
        %v6317 = vpop.f32.mrf.mxu0
        %v6318 = vadd.f32 %v6219, %v6317
        %v6319 = vpop.f32.mrf.mxu0
        %v6320 = vadd.f32 %v6219, %v6319
        %6321 = vmatmul.bf16.gmra.mxu0 %v6258
        %v6322 = vpop.f32.mrf.mxu0
        %v6323 = vadd.f32 %v6219, %v6322
        %v6324 = vpop.f32.mrf.mxu0
        %v6325 = vadd.f32 %v6219, %v6324
        %6326 = vmatmul.bf16.gmra.mxu0 %v6261
        %v6327 = vpop.f32.mrf.mxu0
        %v6328 = vadd.f32 %v6219, %v6327
        %v6329 = vpop.f32.mrf.mxu0
        %v6330 = vadd.f32 %v6219, %v6329
        %6331 = vmatmul.bf16.gmra.mxu0 %v6264
        %v6332 = vpop.f32.mrf.mxu0
        %v6333 = vadd.f32 %v6219, %v6332
        %v6334 = vpop.f32.mrf.mxu0
        %v6335 = vadd.f32 %v6219, %v6334
        %6336 = vmatmul.bf16.gmra.mxu0 %v6267
        %v6337 = vpop.f32.mrf.mxu0
        %v6338 = vadd.f32 %v6219, %v6337
        %v6339 = vpop.f32.mrf.mxu0
        %v6340 = vadd.f32 %v6219, %v6339
        %6341 = vmatmul.bf16.gmra.mxu0 %v6270
        %v6342 = vpop.f32.mrf.mxu0
        %v6343 = vadd.f32 %v6219, %v6342
        %v6344 = vpop.f32.mrf.mxu0
        %v6345 = vadd.f32 %v6219, %v6344
        %6346 = vmatmul.bf16.gmra.mxu0 %v6273
        %v6347 = vpop.f32.mrf.mxu0
        %v6348 = vadd.f32 %v6219, %v6347
        %v6349 = vpop.f32.mrf.mxu0
        %v6350 = vadd.f32 %v6219, %v6349
        %6351 = vmatmul.bf16.gmra.mxu0 %v6276
        %v6352 = vpop.f32.mrf.mxu0
        %v6353 = vadd.f32 %v6219, %v6352
        %v6354 = vpop.f32.mrf.mxu0
        %v6355 = vadd.f32 %v6219, %v6354
        %6356 = vmatmul.bf16.gmra.mxu0 %v6279
        %v6357 = vpop.f32.mrf.mxu0
        %v6358 = vadd.f32 %v6219, %v6357
        %v6359 = vpop.f32.mrf.mxu0
        %v6360 = vadd.f32 %v6219, %v6359
        %6361 = vmatmul.bf16.gmra.mxu0 %v6282
        %v6362 = vpop.f32.mrf.mxu0
        %v6363 = vadd.f32 %v6219, %v6362
        %v6364 = vpop.f32.mrf.mxu0
        %v6365 = vadd.f32 %v6219, %v6364
        %6366 = vmatmul.bf16.gmra.mxu0 %v6285
        %v6367 = vpop.f32.mrf.mxu0
        %v6368 = vadd.f32 %v6219, %v6367
        %v6369 = vpop.f32.mrf.mxu0
        %v6370 = vadd.f32 %v6219, %v6369
        %6371 = vmatmul.bf16.gmra.mxu0 %v6288
        %v6372 = vpop.f32.mrf.mxu0
        %v6373 = vadd.f32 %v6219, %v6372
        %v6374 = vpop.f32.mrf.mxu0
        %v6375 = vadd.f32 %v6219, %v6374
        %6376 = vmatmul.bf16.gmra.mxu0 %v6291
        %v6377 = vpop.f32.mrf.mxu0
        %v6378 = vadd.f32 %v6219, %v6377
        %v6379 = vpop.f32.mrf.mxu0
        %v6380 = vadd.f32 %v6219, %v6379
        %6381 = vdwg.mxu0
        %v6382 = vadd.f32 %v6303, %v5106
        %v6383 = vadd.f32 %v6305, %v5108
        %v6384 = vadd.f32 %v6308, %v5111
        %v6385 = vadd.f32 %v6310, %v5113
        %v6386 = vadd.f32 %v6313, %v5116
        %v6387 = vadd.f32 %v6315, %v5118
        %v6388 = vadd.f32 %v6318, %v5121
        %v6389 = vadd.f32 %v6320, %v5123
        %v6390 = vadd.f32 %v6323, %v5126
        %v6391 = vadd.f32 %v6325, %v5128
        %v6392 = vadd.f32 %v6328, %v5131
        %v6393 = vadd.f32 %v6330, %v5133
        %v6394 = vadd.f32 %v6333, %v5136
        %v6395 = vadd.f32 %v6335, %v5138
        %v6396 = vadd.f32 %v6338, %v5141
        %v6397 = vadd.f32 %v6340, %v5143
        %v6398 = vadd.f32 %v6343, %v5146
        %v6399 = vadd.f32 %v6345, %v5148
        %v6400 = vadd.f32 %v6348, %v5151
        %v6401 = vadd.f32 %v6350, %v5153
        %v6402 = vadd.f32 %v6353, %v5156
        %v6403 = vadd.f32 %v6355, %v5158
        %v6404 = vadd.f32 %v6358, %v5161
        %v6405 = vadd.f32 %v6360, %v5163
        %v6406 = vadd.f32 %v6363, %v5166
        %v6407 = vadd.f32 %v6365, %v5168
        %v6408 = vadd.f32 %v6368, %v5171
        %v6409 = vadd.f32 %v6370, %v5173
        %v6410 = vadd.f32 %v6373, %v5176
        %v6411 = vadd.f32 %v6375, %v5178
        %v6412 = vadd.f32 %v6378, %v5181
        %v6413 = vadd.f32 %v6380, %v5183
        %v6414 = vxor.u32 %v6382, 2147483648
        %v6415 = vxor.u32 %v6383, 2147483648
        %v6416 = vxor.u32 %v6384, 2147483648
        %v6417 = vxor.u32 %v6385, 2147483648
        %v6418 = vxor.u32 %v6386, 2147483648
        %v6419 = vxor.u32 %v6387, 2147483648
        %v6420 = vxor.u32 %v6388, 2147483648
        %v6421 = vxor.u32 %v6389, 2147483648
        %v6422 = vxor.u32 %v6390, 2147483648
        %v6423 = vxor.u32 %v6391, 2147483648
        %v6424 = vxor.u32 %v6392, 2147483648
        %v6425 = vxor.u32 %v6393, 2147483648
        %v6426 = vxor.u32 %v6394, 2147483648
        %v6427 = vxor.u32 %v6395, 2147483648
        %v6428 = vxor.u32 %v6396, 2147483648
        %v6429 = vxor.u32 %v6397, 2147483648
        %v6430 = vxor.u32 %v6398, 2147483648
        %v6431 = vxor.u32 %v6399, 2147483648
        %v6432 = vxor.u32 %v6400, 2147483648
        %v6433 = vxor.u32 %v6401, 2147483648
        %v6434 = vxor.u32 %v6402, 2147483648
        %v6435 = vxor.u32 %v6403, 2147483648
        %v6436 = vxor.u32 %v6404, 2147483648
        %v6437 = vxor.u32 %v6405, 2147483648
        %v6438 = vxor.u32 %v6406, 2147483648
        %v6439 = vxor.u32 %v6407, 2147483648
        %v6440 = vxor.u32 %v6408, 2147483648
        %v6441 = vxor.u32 %v6409, 2147483648
        %v6442 = vxor.u32 %v6410, 2147483648
        %v6443 = vxor.u32 %v6411, 2147483648
        %v6444 = vxor.u32 %v6412, 2147483648
        %v6445 = vxor.u32 %v6413, 2147483648
        %v6446 = vmul.f32 %v6414, 1.442695
        %v6447 = vpow.pop %v6446
        %v6448 = vmul.f32 %v6415, 1.442695
        %v6449 = vpow.pop %v6448
        %v6450 = vmul.f32 %v6416, 1.442695
        %v6451 = vpow.pop %v6450
        %v6452 = vmul.f32 %v6417, 1.442695
        %v6453 = vpow.pop %v6452
        %v6454 = vmul.f32 %v6418, 1.442695
        %v6455 = vpow.pop %v6454
        %v6456 = vmul.f32 %v6419, 1.442695
        %v6457 = vpow.pop %v6456
        %v6458 = vmul.f32 %v6420, 1.442695
        %v6459 = vpow.pop %v6458
        %v6460 = vmul.f32 %v6421, 1.442695
        %v6461 = vpow.pop %v6460
        %v6462 = vmul.f32 %v6422, 1.442695
        %v6463 = vpow.pop %v6462
        %v6464 = vmul.f32 %v6423, 1.442695
        %v6465 = vpow.pop %v6464
        %v6466 = vmul.f32 %v6424, 1.442695
        %v6467 = vpow.pop %v6466
        %v6468 = vmul.f32 %v6425, 1.442695
        %v6469 = vpow.pop %v6468
        %v6470 = vmul.f32 %v6426, 1.442695
        %v6471 = vpow.pop %v6470
        %v6472 = vmul.f32 %v6427, 1.442695
        %v6473 = vpow.pop %v6472
        %v6474 = vmul.f32 %v6428, 1.442695
        %v6475 = vpow.pop %v6474
        %v6476 = vmul.f32 %v6429, 1.442695
        %v6477 = vpow.pop %v6476
        %v6478 = vmul.f32 %v6430, 1.442695
        %v6479 = vpow.pop %v6478
        %v6480 = vmul.f32 %v6431, 1.442695
        %v6481 = vpow.pop %v6480
        %v6482 = vmul.f32 %v6432, 1.442695
        %v6483 = vpow.pop %v6482
        %v6484 = vmul.f32 %v6433, 1.442695
        %v6485 = vpow.pop %v6484
        %v6486 = vmul.f32 %v6434, 1.442695
        %v6487 = vpow.pop %v6486
        %v6488 = vmul.f32 %v6435, 1.442695
        %v6489 = vpow.pop %v6488
        %v6490 = vmul.f32 %v6436, 1.442695
        %v6491 = vpow.pop %v6490
        %v6492 = vmul.f32 %v6437, 1.442695
        %v6493 = vpow.pop %v6492
        %v6494 = vmul.f32 %v6438, 1.442695
        %v6495 = vpow.pop %v6494
        %v6496 = vmul.f32 %v6439, 1.442695
        %v6497 = vpow.pop %v6496
        %v6498 = vmul.f32 %v6440, 1.442695
        %v6499 = vpow.pop %v6498
        %v6500 = vmul.f32 %v6441, 1.442695
        %v6501 = vpow.pop %v6500
        %v6502 = vmul.f32 %v6442, 1.442695
        %v6503 = vpow.pop %v6502
        %v6504 = vmul.f32 %v6443, 1.442695
        %v6505 = vpow.pop %v6504
        %v6506 = vmul.f32 %v6444, 1.442695
        %v6507 = vpow.pop %v6506
        %v6508 = vmul.f32 %v6445, 1.442695
        %v6509 = vpow.pop %v6508
        %v6510 = vadd.f32 %v6447, 1.0
        %v6511 = vadd.f32 %v6449, 1.0
        %v6512 = vadd.f32 %v6451, 1.0
        %v6513 = vadd.f32 %v6453, 1.0
        %v6514 = vadd.f32 %v6455, 1.0
        %v6515 = vadd.f32 %v6457, 1.0
        %v6516 = vadd.f32 %v6459, 1.0
        %v6517 = vadd.f32 %v6461, 1.0
        %v6518 = vadd.f32 %v6463, 1.0
        %v6519 = vadd.f32 %v6465, 1.0
        %v6520 = vadd.f32 %v6467, 1.0
        %v6521 = vadd.f32 %v6469, 1.0
        %v6522 = vadd.f32 %v6471, 1.0
        %v6523 = vadd.f32 %v6473, 1.0
        %v6524 = vadd.f32 %v6475, 1.0
        %v6525 = vadd.f32 %v6477, 1.0
        %v6526 = vadd.f32 %v6479, 1.0
        %v6527 = vadd.f32 %v6481, 1.0
        %v6528 = vadd.f32 %v6483, 1.0
        %v6529 = vadd.f32 %v6485, 1.0
        %v6530 = vadd.f32 %v6487, 1.0
        %v6531 = vadd.f32 %v6489, 1.0
        %v6532 = vadd.f32 %v6491, 1.0
        %v6533 = vadd.f32 %v6493, 1.0
        %v6534 = vadd.f32 %v6495, 1.0
        %v6535 = vadd.f32 %v6497, 1.0
        %v6536 = vadd.f32 %v6499, 1.0
        %v6537 = vadd.f32 %v6501, 1.0
        %v6538 = vadd.f32 %v6503, 1.0
        %v6539 = vadd.f32 %v6505, 1.0
        %v6540 = vadd.f32 %v6507, 1.0
        %v6541 = vadd.f32 %v6509, 1.0
        %v6542 = vrcp.pop %v6510
        %v6543 = vmul.f32 %v6510, %v6542
        %v6544 = vsub.f32 1.0, %v6543
        %v6545 = vmul.f32 %v6542, %v6544
        %v6546 = vadd.f32 %v6542, %v6545
        %vm6547 = vweird.f32 %v6510
        %vm6548 = vweird.f32 %v6542
        %vm6549 = vmor %vm6547, %vm6548
        %v6550 = vsel %vm6549, %v6542, %v6546
        %v6551 = vand.u32 2147483647, %v6510
        %vm6552 = vcmp.eq.f32.partialorder %v6551, 8.507059e+37
        %v6553 = vand.u32 %v6510, 2147483648
        %v6554 = vor.u32 1.1754944e-38, %v6553
        %v6555 = vsel %vm6552, %v6554, %v6550
        %v6556 = vmul.f32 1.0, %v6555
        %v6557 = vrcp.pop %v6511
        %v6558 = vmul.f32 %v6511, %v6557
        %v6559 = vsub.f32 1.0, %v6558
        %v6560 = vmul.f32 %v6557, %v6559
        %v6561 = vadd.f32 %v6557, %v6560
        %vm6562 = vweird.f32 %v6511
        %vm6563 = vweird.f32 %v6557
        %vm6564 = vmor %vm6562, %vm6563
        %v6565 = vsel %vm6564, %v6557, %v6561
        %v6566 = vand.u32 2147483647, %v6511
        %vm6567 = vcmp.eq.f32.partialorder %v6566, 8.507059e+37
        %v6568 = vand.u32 %v6511, 2147483648
        %v6569 = vor.u32 1.1754944e-38, %v6568
        %v6570 = vsel %vm6567, %v6569, %v6565
        %v6571 = vmul.f32 1.0, %v6570
        %v6572 = vrcp.pop %v6512
        %v6573 = vmul.f32 %v6512, %v6572
        %v6574 = vsub.f32 1.0, %v6573
        %v6575 = vmul.f32 %v6572, %v6574
        %v6576 = vadd.f32 %v6572, %v6575
        %vm6577 = vweird.f32 %v6512
        %vm6578 = vweird.f32 %v6572
        %vm6579 = vmor %vm6577, %vm6578
        %v6580 = vsel %vm6579, %v6572, %v6576
        %v6581 = vand.u32 2147483647, %v6512
        %vm6582 = vcmp.eq.f32.partialorder %v6581, 8.507059e+37
        %v6583 = vand.u32 %v6512, 2147483648
        %v6584 = vor.u32 1.1754944e-38, %v6583
        %v6585 = vsel %vm6582, %v6584, %v6580
        %v6586 = vmul.f32 1.0, %v6585
        %v6587 = vrcp.pop %v6513
        %v6588 = vmul.f32 %v6513, %v6587
        %v6589 = vsub.f32 1.0, %v6588
        %v6590 = vmul.f32 %v6587, %v6589
        %v6591 = vadd.f32 %v6587, %v6590
        %vm6592 = vweird.f32 %v6513
        %vm6593 = vweird.f32 %v6587
        %vm6594 = vmor %vm6592, %vm6593
        %v6595 = vsel %vm6594, %v6587, %v6591
        %v6596 = vand.u32 2147483647, %v6513
        %vm6597 = vcmp.eq.f32.partialorder %v6596, 8.507059e+37
        %v6598 = vand.u32 %v6513, 2147483648
        %v6599 = vor.u32 1.1754944e-38, %v6598
        %v6600 = vsel %vm6597, %v6599, %v6595
        %v6601 = vmul.f32 1.0, %v6600
        %v6602 = vrcp.pop %v6514
        %v6603 = vmul.f32 %v6514, %v6602
        %v6604 = vsub.f32 1.0, %v6603
        %v6605 = vmul.f32 %v6602, %v6604
        %v6606 = vadd.f32 %v6602, %v6605
        %vm6607 = vweird.f32 %v6514
        %vm6608 = vweird.f32 %v6602
        %vm6609 = vmor %vm6607, %vm6608
        %v6610 = vsel %vm6609, %v6602, %v6606
        %v6611 = vand.u32 2147483647, %v6514
        %vm6612 = vcmp.eq.f32.partialorder %v6611, 8.507059e+37
        %v6613 = vand.u32 %v6514, 2147483648
        %v6614 = vor.u32 1.1754944e-38, %v6613
        %v6615 = vsel %vm6612, %v6614, %v6610
        %v6616 = vmul.f32 1.0, %v6615
        %v6617 = vrcp.pop %v6515
        %v6618 = vmul.f32 %v6515, %v6617
        %v6619 = vsub.f32 1.0, %v6618
        %v6620 = vmul.f32 %v6617, %v6619
        %v6621 = vadd.f32 %v6617, %v6620
        %vm6622 = vweird.f32 %v6515
        %vm6623 = vweird.f32 %v6617
        %vm6624 = vmor %vm6622, %vm6623
        %v6625 = vsel %vm6624, %v6617, %v6621
        %v6626 = vand.u32 2147483647, %v6515
        %vm6627 = vcmp.eq.f32.partialorder %v6626, 8.507059e+37
        %v6628 = vand.u32 %v6515, 2147483648
        %v6629 = vor.u32 1.1754944e-38, %v6628
        %v6630 = vsel %vm6627, %v6629, %v6625
        %v6631 = vmul.f32 1.0, %v6630
        %v6632 = vrcp.pop %v6516
        %v6633 = vmul.f32 %v6516, %v6632
        %v6634 = vsub.f32 1.0, %v6633
        %v6635 = vmul.f32 %v6632, %v6634
        %v6636 = vadd.f32 %v6632, %v6635
        %vm6637 = vweird.f32 %v6516
        %vm6638 = vweird.f32 %v6632
        %vm6639 = vmor %vm6637, %vm6638
        %v6640 = vsel %vm6639, %v6632, %v6636
        %v6641 = vand.u32 2147483647, %v6516
        %vm6642 = vcmp.eq.f32.partialorder %v6641, 8.507059e+37
        %v6643 = vand.u32 %v6516, 2147483648
        %v6644 = vor.u32 1.1754944e-38, %v6643
        %v6645 = vsel %vm6642, %v6644, %v6640
        %v6646 = vmul.f32 1.0, %v6645
        %v6647 = vrcp.pop %v6517
        %v6648 = vmul.f32 %v6517, %v6647
        %v6649 = vsub.f32 1.0, %v6648
        %v6650 = vmul.f32 %v6647, %v6649
        %v6651 = vadd.f32 %v6647, %v6650
        %vm6652 = vweird.f32 %v6517
        %vm6653 = vweird.f32 %v6647
        %vm6654 = vmor %vm6652, %vm6653
        %v6655 = vsel %vm6654, %v6647, %v6651
        %v6656 = vand.u32 2147483647, %v6517
        %vm6657 = vcmp.eq.f32.partialorder %v6656, 8.507059e+37
        %v6658 = vand.u32 %v6517, 2147483648
        %v6659 = vor.u32 1.1754944e-38, %v6658
        %v6660 = vsel %vm6657, %v6659, %v6655
        %v6661 = vmul.f32 1.0, %v6660
        %v6662 = vrcp.pop %v6518
        %v6663 = vmul.f32 %v6518, %v6662
        %v6664 = vsub.f32 1.0, %v6663
        %v6665 = vmul.f32 %v6662, %v6664
        %v6666 = vadd.f32 %v6662, %v6665
        %vm6667 = vweird.f32 %v6518
        %vm6668 = vweird.f32 %v6662
        %vm6669 = vmor %vm6667, %vm6668
        %v6670 = vsel %vm6669, %v6662, %v6666
        %v6671 = vand.u32 2147483647, %v6518
        %vm6672 = vcmp.eq.f32.partialorder %v6671, 8.507059e+37
        %v6673 = vand.u32 %v6518, 2147483648
        %v6674 = vor.u32 1.1754944e-38, %v6673
        %v6675 = vsel %vm6672, %v6674, %v6670
        %v6676 = vmul.f32 1.0, %v6675
        %v6677 = vrcp.pop %v6519
        %v6678 = vmul.f32 %v6519, %v6677
        %v6679 = vsub.f32 1.0, %v6678
        %v6680 = vmul.f32 %v6677, %v6679
        %v6681 = vadd.f32 %v6677, %v6680
        %vm6682 = vweird.f32 %v6519
        %vm6683 = vweird.f32 %v6677
        %vm6684 = vmor %vm6682, %vm6683
        %v6685 = vsel %vm6684, %v6677, %v6681
        %v6686 = vand.u32 2147483647, %v6519
        %vm6687 = vcmp.eq.f32.partialorder %v6686, 8.507059e+37
        %v6688 = vand.u32 %v6519, 2147483648
        %v6689 = vor.u32 1.1754944e-38, %v6688
        %v6690 = vsel %vm6687, %v6689, %v6685
        %v6691 = vmul.f32 1.0, %v6690
        %v6692 = vrcp.pop %v6520
        %v6693 = vmul.f32 %v6520, %v6692
        %v6694 = vsub.f32 1.0, %v6693
        %v6695 = vmul.f32 %v6692, %v6694
        %v6696 = vadd.f32 %v6692, %v6695
        %vm6697 = vweird.f32 %v6520
        %vm6698 = vweird.f32 %v6692
        %vm6699 = vmor %vm6697, %vm6698
        %v6700 = vsel %vm6699, %v6692, %v6696
        %v6701 = vand.u32 2147483647, %v6520
        %vm6702 = vcmp.eq.f32.partialorder %v6701, 8.507059e+37
        %v6703 = vand.u32 %v6520, 2147483648
        %v6704 = vor.u32 1.1754944e-38, %v6703
        %v6705 = vsel %vm6702, %v6704, %v6700
        %v6706 = vmul.f32 1.0, %v6705
        %v6707 = vrcp.pop %v6521
        %v6708 = vmul.f32 %v6521, %v6707
        %v6709 = vsub.f32 1.0, %v6708
        %v6710 = vmul.f32 %v6707, %v6709
        %v6711 = vadd.f32 %v6707, %v6710
        %vm6712 = vweird.f32 %v6521
        %vm6713 = vweird.f32 %v6707
        %vm6714 = vmor %vm6712, %vm6713
        %v6715 = vsel %vm6714, %v6707, %v6711
        %v6716 = vand.u32 2147483647, %v6521
        %vm6717 = vcmp.eq.f32.partialorder %v6716, 8.507059e+37
        %v6718 = vand.u32 %v6521, 2147483648
        %v6719 = vor.u32 1.1754944e-38, %v6718
        %v6720 = vsel %vm6717, %v6719, %v6715
        %v6721 = vmul.f32 1.0, %v6720
        %v6722 = vrcp.pop %v6522
        %v6723 = vmul.f32 %v6522, %v6722
        %v6724 = vsub.f32 1.0, %v6723
        %v6725 = vmul.f32 %v6722, %v6724
        %v6726 = vadd.f32 %v6722, %v6725
        %vm6727 = vweird.f32 %v6522
        %vm6728 = vweird.f32 %v6722
        %vm6729 = vmor %vm6727, %vm6728
        %v6730 = vsel %vm6729, %v6722, %v6726
        %v6731 = vand.u32 2147483647, %v6522
        %vm6732 = vcmp.eq.f32.partialorder %v6731, 8.507059e+37
        %v6733 = vand.u32 %v6522, 2147483648
        %v6734 = vor.u32 1.1754944e-38, %v6733
        %v6735 = vsel %vm6732, %v6734, %v6730
        %v6736 = vmul.f32 1.0, %v6735
        %v6737 = vrcp.pop %v6523
        %v6738 = vmul.f32 %v6523, %v6737
        %v6739 = vsub.f32 1.0, %v6738
        %v6740 = vmul.f32 %v6737, %v6739
        %v6741 = vadd.f32 %v6737, %v6740
        %vm6742 = vweird.f32 %v6523
        %vm6743 = vweird.f32 %v6737
        %vm6744 = vmor %vm6742, %vm6743
        %v6745 = vsel %vm6744, %v6737, %v6741
        %v6746 = vand.u32 2147483647, %v6523
        %vm6747 = vcmp.eq.f32.partialorder %v6746, 8.507059e+37
        %v6748 = vand.u32 %v6523, 2147483648
        %v6749 = vor.u32 1.1754944e-38, %v6748
        %v6750 = vsel %vm6747, %v6749, %v6745
        %v6751 = vmul.f32 1.0, %v6750
        %v6752 = vrcp.pop %v6524
        %v6753 = vmul.f32 %v6524, %v6752
        %v6754 = vsub.f32 1.0, %v6753
        %v6755 = vmul.f32 %v6752, %v6754
        %v6756 = vadd.f32 %v6752, %v6755
        %vm6757 = vweird.f32 %v6524
        %vm6758 = vweird.f32 %v6752
        %vm6759 = vmor %vm6757, %vm6758
        %v6760 = vsel %vm6759, %v6752, %v6756
        %v6761 = vand.u32 2147483647, %v6524
        %vm6762 = vcmp.eq.f32.partialorder %v6761, 8.507059e+37
        %v6763 = vand.u32 %v6524, 2147483648
        %v6764 = vor.u32 1.1754944e-38, %v6763
        %v6765 = vsel %vm6762, %v6764, %v6760
        %v6766 = vmul.f32 1.0, %v6765
        %v6767 = vrcp.pop %v6525
        %v6768 = vmul.f32 %v6525, %v6767
        %v6769 = vsub.f32 1.0, %v6768
        %v6770 = vmul.f32 %v6767, %v6769
        %v6771 = vadd.f32 %v6767, %v6770
        %vm6772 = vweird.f32 %v6525
        %vm6773 = vweird.f32 %v6767
        %vm6774 = vmor %vm6772, %vm6773
        %v6775 = vsel %vm6774, %v6767, %v6771
        %v6776 = vand.u32 2147483647, %v6525
        %vm6777 = vcmp.eq.f32.partialorder %v6776, 8.507059e+37
        %v6778 = vand.u32 %v6525, 2147483648
        %v6779 = vor.u32 1.1754944e-38, %v6778
        %v6780 = vsel %vm6777, %v6779, %v6775
        %v6781 = vmul.f32 1.0, %v6780
        %v6782 = vrcp.pop %v6526
        %v6783 = vmul.f32 %v6526, %v6782
        %v6784 = vsub.f32 1.0, %v6783
        %v6785 = vmul.f32 %v6782, %v6784
        %v6786 = vadd.f32 %v6782, %v6785
        %vm6787 = vweird.f32 %v6526
        %vm6788 = vweird.f32 %v6782
        %vm6789 = vmor %vm6787, %vm6788
        %v6790 = vsel %vm6789, %v6782, %v6786
        %v6791 = vand.u32 2147483647, %v6526
        %vm6792 = vcmp.eq.f32.partialorder %v6791, 8.507059e+37
        %v6793 = vand.u32 %v6526, 2147483648
        %v6794 = vor.u32 1.1754944e-38, %v6793
        %v6795 = vsel %vm6792, %v6794, %v6790
        %v6796 = vmul.f32 1.0, %v6795
        %v6797 = vrcp.pop %v6527
        %v6798 = vmul.f32 %v6527, %v6797
        %v6799 = vsub.f32 1.0, %v6798
        %v6800 = vmul.f32 %v6797, %v6799
        %v6801 = vadd.f32 %v6797, %v6800
        %vm6802 = vweird.f32 %v6527
        %vm6803 = vweird.f32 %v6797
        %vm6804 = vmor %vm6802, %vm6803
        %v6805 = vsel %vm6804, %v6797, %v6801
        %v6806 = vand.u32 2147483647, %v6527
        %vm6807 = vcmp.eq.f32.partialorder %v6806, 8.507059e+37
        %v6808 = vand.u32 %v6527, 2147483648
        %v6809 = vor.u32 1.1754944e-38, %v6808
        %v6810 = vsel %vm6807, %v6809, %v6805
        %v6811 = vmul.f32 1.0, %v6810
        %v6812 = vrcp.pop %v6528
        %v6813 = vmul.f32 %v6528, %v6812
        %v6814 = vsub.f32 1.0, %v6813
        %v6815 = vmul.f32 %v6812, %v6814
        %v6816 = vadd.f32 %v6812, %v6815
        %vm6817 = vweird.f32 %v6528
        %vm6818 = vweird.f32 %v6812
        %vm6819 = vmor %vm6817, %vm6818
        %v6820 = vsel %vm6819, %v6812, %v6816
        %v6821 = vand.u32 2147483647, %v6528
        %vm6822 = vcmp.eq.f32.partialorder %v6821, 8.507059e+37
        %v6823 = vand.u32 %v6528, 2147483648
        %v6824 = vor.u32 1.1754944e-38, %v6823
        %v6825 = vsel %vm6822, %v6824, %v6820
        %v6826 = vmul.f32 1.0, %v6825
        %v6827 = vrcp.pop %v6529
        %v6828 = vmul.f32 %v6529, %v6827
        %v6829 = vsub.f32 1.0, %v6828
        %v6830 = vmul.f32 %v6827, %v6829
        %v6831 = vadd.f32 %v6827, %v6830
        %vm6832 = vweird.f32 %v6529
        %vm6833 = vweird.f32 %v6827
        %vm6834 = vmor %vm6832, %vm6833
        %v6835 = vsel %vm6834, %v6827, %v6831
        %v6836 = vand.u32 2147483647, %v6529
        %vm6837 = vcmp.eq.f32.partialorder %v6836, 8.507059e+37
        %v6838 = vand.u32 %v6529, 2147483648
        %v6839 = vor.u32 1.1754944e-38, %v6838
        %v6840 = vsel %vm6837, %v6839, %v6835
        %v6841 = vmul.f32 1.0, %v6840
        %v6842 = vrcp.pop %v6530
        %v6843 = vmul.f32 %v6530, %v6842
        %v6844 = vsub.f32 1.0, %v6843
        %v6845 = vmul.f32 %v6842, %v6844
        %v6846 = vadd.f32 %v6842, %v6845
        %vm6847 = vweird.f32 %v6530
        %vm6848 = vweird.f32 %v6842
        %vm6849 = vmor %vm6847, %vm6848
        %v6850 = vsel %vm6849, %v6842, %v6846
        %v6851 = vand.u32 2147483647, %v6530
        %vm6852 = vcmp.eq.f32.partialorder %v6851, 8.507059e+37
        %v6853 = vand.u32 %v6530, 2147483648
        %v6854 = vor.u32 1.1754944e-38, %v6853
        %v6855 = vsel %vm6852, %v6854, %v6850
        %v6856 = vmul.f32 1.0, %v6855
        %v6857 = vrcp.pop %v6531
        %v6858 = vmul.f32 %v6531, %v6857
        %v6859 = vsub.f32 1.0, %v6858
        %v6860 = vmul.f32 %v6857, %v6859
        %v6861 = vadd.f32 %v6857, %v6860
        %vm6862 = vweird.f32 %v6531
        %vm6863 = vweird.f32 %v6857
        %vm6864 = vmor %vm6862, %vm6863
        %v6865 = vsel %vm6864, %v6857, %v6861
        %v6866 = vand.u32 2147483647, %v6531
        %vm6867 = vcmp.eq.f32.partialorder %v6866, 8.507059e+37
        %v6868 = vand.u32 %v6531, 2147483648
        %v6869 = vor.u32 1.1754944e-38, %v6868
        %v6870 = vsel %vm6867, %v6869, %v6865
        %v6871 = vmul.f32 1.0, %v6870
        %v6872 = vrcp.pop %v6532
        %v6873 = vmul.f32 %v6532, %v6872
        %v6874 = vsub.f32 1.0, %v6873
        %v6875 = vmul.f32 %v6872, %v6874
        %v6876 = vadd.f32 %v6872, %v6875
        %vm6877 = vweird.f32 %v6532
        %vm6878 = vweird.f32 %v6872
        %vm6879 = vmor %vm6877, %vm6878
        %v6880 = vsel %vm6879, %v6872, %v6876
        %v6881 = vand.u32 2147483647, %v6532
        %vm6882 = vcmp.eq.f32.partialorder %v6881, 8.507059e+37
        %v6883 = vand.u32 %v6532, 2147483648
        %v6884 = vor.u32 1.1754944e-38, %v6883
        %v6885 = vsel %vm6882, %v6884, %v6880
        %v6886 = vmul.f32 1.0, %v6885
        %v6887 = vrcp.pop %v6533
        %v6888 = vmul.f32 %v6533, %v6887
        %v6889 = vsub.f32 1.0, %v6888
        %v6890 = vmul.f32 %v6887, %v6889
        %v6891 = vadd.f32 %v6887, %v6890
        %vm6892 = vweird.f32 %v6533
        %vm6893 = vweird.f32 %v6887
        %vm6894 = vmor %vm6892, %vm6893
        %v6895 = vsel %vm6894, %v6887, %v6891
        %v6896 = vand.u32 2147483647, %v6533
        %vm6897 = vcmp.eq.f32.partialorder %v6896, 8.507059e+37
        %v6898 = vand.u32 %v6533, 2147483648
        %v6899 = vor.u32 1.1754944e-38, %v6898
        %v6900 = vsel %vm6897, %v6899, %v6895
        %v6901 = vmul.f32 1.0, %v6900
        %v6902 = vrcp.pop %v6534
        %v6903 = vmul.f32 %v6534, %v6902
        %v6904 = vsub.f32 1.0, %v6903
        %v6905 = vmul.f32 %v6902, %v6904
        %v6906 = vadd.f32 %v6902, %v6905
        %vm6907 = vweird.f32 %v6534
        %vm6908 = vweird.f32 %v6902
        %vm6909 = vmor %vm6907, %vm6908
        %v6910 = vsel %vm6909, %v6902, %v6906
        %v6911 = vand.u32 2147483647, %v6534
        %vm6912 = vcmp.eq.f32.partialorder %v6911, 8.507059e+37
        %v6913 = vand.u32 %v6534, 2147483648
        %v6914 = vor.u32 1.1754944e-38, %v6913
        %v6915 = vsel %vm6912, %v6914, %v6910
        %v6916 = vmul.f32 1.0, %v6915
        %v6917 = vrcp.pop %v6535
        %v6918 = vmul.f32 %v6535, %v6917
        %v6919 = vsub.f32 1.0, %v6918
        %v6920 = vmul.f32 %v6917, %v6919
        %v6921 = vadd.f32 %v6917, %v6920
        %vm6922 = vweird.f32 %v6535
        %vm6923 = vweird.f32 %v6917
        %vm6924 = vmor %vm6922, %vm6923
        %v6925 = vsel %vm6924, %v6917, %v6921
        %v6926 = vand.u32 2147483647, %v6535
        %vm6927 = vcmp.eq.f32.partialorder %v6926, 8.507059e+37
        %v6928 = vand.u32 %v6535, 2147483648
        %v6929 = vor.u32 1.1754944e-38, %v6928
        %v6930 = vsel %vm6927, %v6929, %v6925
        %v6931 = vmul.f32 1.0, %v6930
        %v6932 = vrcp.pop %v6536
        %v6933 = vmul.f32 %v6536, %v6932
        %v6934 = vsub.f32 1.0, %v6933
        %v6935 = vmul.f32 %v6932, %v6934
        %v6936 = vadd.f32 %v6932, %v6935
        %vm6937 = vweird.f32 %v6536
        %vm6938 = vweird.f32 %v6932
        %vm6939 = vmor %vm6937, %vm6938
        %v6940 = vsel %vm6939, %v6932, %v6936
        %v6941 = vand.u32 2147483647, %v6536
        %vm6942 = vcmp.eq.f32.partialorder %v6941, 8.507059e+37
        %v6943 = vand.u32 %v6536, 2147483648
        %v6944 = vor.u32 1.1754944e-38, %v6943
        %v6945 = vsel %vm6942, %v6944, %v6940
        %v6946 = vmul.f32 1.0, %v6945
        %v6947 = vrcp.pop %v6537
        %v6948 = vmul.f32 %v6537, %v6947
        %v6949 = vsub.f32 1.0, %v6948
        %v6950 = vmul.f32 %v6947, %v6949
        %v6951 = vadd.f32 %v6947, %v6950
        %vm6952 = vweird.f32 %v6537
        %vm6953 = vweird.f32 %v6947
        %vm6954 = vmor %vm6952, %vm6953
        %v6955 = vsel %vm6954, %v6947, %v6951
        %v6956 = vand.u32 2147483647, %v6537
        %vm6957 = vcmp.eq.f32.partialorder %v6956, 8.507059e+37
        %v6958 = vand.u32 %v6537, 2147483648
        %v6959 = vor.u32 1.1754944e-38, %v6958
        %v6960 = vsel %vm6957, %v6959, %v6955
        %v6961 = vmul.f32 1.0, %v6960
        %v6962 = vrcp.pop %v6538
        %v6963 = vmul.f32 %v6538, %v6962
        %v6964 = vsub.f32 1.0, %v6963
        %v6965 = vmul.f32 %v6962, %v6964
        %v6966 = vadd.f32 %v6962, %v6965
        %vm6967 = vweird.f32 %v6538
        %vm6968 = vweird.f32 %v6962
        %vm6969 = vmor %vm6967, %vm6968
        %v6970 = vsel %vm6969, %v6962, %v6966
        %v6971 = vand.u32 2147483647, %v6538
        %vm6972 = vcmp.eq.f32.partialorder %v6971, 8.507059e+37
        %v6973 = vand.u32 %v6538, 2147483648
        %v6974 = vor.u32 1.1754944e-38, %v6973
        %v6975 = vsel %vm6972, %v6974, %v6970
        %v6976 = vmul.f32 1.0, %v6975
        %v6977 = vrcp.pop %v6539
        %v6978 = vmul.f32 %v6539, %v6977
        %v6979 = vsub.f32 1.0, %v6978
        %v6980 = vmul.f32 %v6977, %v6979
        %v6981 = vadd.f32 %v6977, %v6980
        %vm6982 = vweird.f32 %v6539
        %vm6983 = vweird.f32 %v6977
        %vm6984 = vmor %vm6982, %vm6983
        %v6985 = vsel %vm6984, %v6977, %v6981
        %v6986 = vand.u32 2147483647, %v6539
        %vm6987 = vcmp.eq.f32.partialorder %v6986, 8.507059e+37
        %v6988 = vand.u32 %v6539, 2147483648
        %v6989 = vor.u32 1.1754944e-38, %v6988
        %v6990 = vsel %vm6987, %v6989, %v6985
        %v6991 = vmul.f32 1.0, %v6990
        %v6992 = vrcp.pop %v6540
        %v6993 = vmul.f32 %v6540, %v6992
        %v6994 = vsub.f32 1.0, %v6993
        %v6995 = vmul.f32 %v6992, %v6994
        %v6996 = vadd.f32 %v6992, %v6995
        %vm6997 = vweird.f32 %v6540
        %vm6998 = vweird.f32 %v6992
        %vm6999 = vmor %vm6997, %vm6998
        %v7000 = vsel %vm6999, %v6992, %v6996
        %v7001 = vand.u32 2147483647, %v6540
        %vm7002 = vcmp.eq.f32.partialorder %v7001, 8.507059e+37
        %v7003 = vand.u32 %v6540, 2147483648
        %v7004 = vor.u32 1.1754944e-38, %v7003
        %v7005 = vsel %vm7002, %v7004, %v7000
        %v7006 = vmul.f32 1.0, %v7005
        %v7007 = vrcp.pop %v6541
        %v7008 = vmul.f32 %v6541, %v7007
        %v7009 = vsub.f32 1.0, %v7008
        %v7010 = vmul.f32 %v7007, %v7009
        %v7011 = vadd.f32 %v7007, %v7010
        %vm7012 = vweird.f32 %v6541
        %vm7013 = vweird.f32 %v7007
        %vm7014 = vmor %vm7012, %vm7013
        %v7015 = vsel %vm7014, %v7007, %v7011
        %v7016 = vand.u32 2147483647, %v6541
        %vm7017 = vcmp.eq.f32.partialorder %v7016, 8.507059e+37
        %v7018 = vand.u32 %v6541, 2147483648
        %v7019 = vor.u32 1.1754944e-38, %v7018
        %v7020 = vsel %vm7017, %v7019, %v7015
        %v7021 = vmul.f32 1.0, %v7020
        %7022 = vxpose.xlu0.b32.start [1/16] %v6556, 128
        %7023 = vxpose.xlu0.b32.cont [2/16] %v6571, 128
        %7024 = vxpose.xlu0.b32.cont [3/16] %v6586, 128
        %7025 = vxpose.xlu0.b32.cont [4/16] %v6601, 128
        %7026 = vxpose.xlu0.b32.cont [5/16] %v6616, 128
        %7027 = vxpose.xlu0.b32.cont [6/16] %v6631, 128
        %7028 = vxpose.xlu0.b32.cont [7/16] %v6646, 128
        %7029 = vxpose.xlu0.b32.cont [8/16] %v6661, 128
        %7030 = vxpose.xlu0.b32.cont [9/16] %v6676, 128
        %7031 = vxpose.xlu0.b32.cont [10/16] %v6691, 128
        %7032 = vxpose.xlu0.b32.cont [11/16] %v6706, 128
        %7033 = vxpose.xlu0.b32.cont [12/16] %v6721, 128
        %7034 = vxpose.xlu0.b32.cont [13/16] %v6736, 128
        %7035 = vxpose.xlu0.b32.cont [14/16] %v6751, 128
        %7036 = vxpose.xlu0.b32.cont [15/16] %v6766, 128
        %7037 = vxpose.xlu0.b32.end [16/16] %v6781, 128
        %v7038 = vpop.trf.xlu0
        %v7039 = vpop.trf.xlu0
        %v7040 = vpop.trf.xlu0
        %v7041 = vpop.trf.xlu0
        %v7042 = vpop.trf.xlu0
        %v7043 = vpop.trf.xlu0
        %v7044 = vpop.trf.xlu0
        %v7045 = vpop.trf.xlu0
        %v7046 = vpop.trf.xlu0
        %v7047 = vpop.trf.xlu0
        %v7048 = vpop.trf.xlu0
        %v7049 = vpop.trf.xlu0
        %v7050 = vpop.trf.xlu0
        %v7051 = vpop.trf.xlu0
        %v7052 = vpop.trf.xlu0
        %v7053 = vpop.trf.xlu0
        %7054 = vxpose.xlu0.b32.start [1/16] %v6796, 128
        %7055 = vxpose.xlu0.b32.cont [2/16] %v6811, 128
        %7056 = vxpose.xlu0.b32.cont [3/16] %v6826, 128
        %7057 = vxpose.xlu0.b32.cont [4/16] %v6841, 128
        %7058 = vxpose.xlu0.b32.cont [5/16] %v6856, 128
        %7059 = vxpose.xlu0.b32.cont [6/16] %v6871, 128
        %7060 = vxpose.xlu0.b32.cont [7/16] %v6886, 128
        %7061 = vxpose.xlu0.b32.cont [8/16] %v6901, 128
        %7062 = vxpose.xlu0.b32.cont [9/16] %v6916, 128
        %7063 = vxpose.xlu0.b32.cont [10/16] %v6931, 128
        %7064 = vxpose.xlu0.b32.cont [11/16] %v6946, 128
        %7065 = vxpose.xlu0.b32.cont [12/16] %v6961, 128
        %7066 = vxpose.xlu0.b32.cont [13/16] %v6976, 128
        %7067 = vxpose.xlu0.b32.cont [14/16] %v6991, 128
        %7068 = vxpose.xlu0.b32.cont [15/16] %v7006, 128
        %7069 = vxpose.xlu0.b32.end [16/16] %v7021, 128
        %v7070 = vpop.trf.xlu0
        %v7071 = vpop.trf.xlu0
        %v7072 = vpop.trf.xlu0
        %v7073 = vpop.trf.xlu0
        %v7074 = vpop.trf.xlu0
        %v7075 = vpop.trf.xlu0
        %v7076 = vpop.trf.xlu0
        %v7077 = vpop.trf.xlu0
        %v7078 = vpop.trf.xlu0
        %v7079 = vpop.trf.xlu0
        %v7080 = vpop.trf.xlu0
        %v7081 = vpop.trf.xlu0
        %v7082 = vpop.trf.xlu0
        %v7083 = vpop.trf.xlu0
        %v7084 = vpop.trf.xlu0
        %v7085 = vpop.trf.xlu0
        %7086 = vst [vmem:[%s837] sm:$0xff] %v7038
        %7087 = vst [vmem:[%s837 + $0x8] sm:$0xff] %v7070
        %7088 = vst [vmem:[%s837 + $0x10] sm:$0xff] %v7039
        %7089 = vst [vmem:[%s837 + $0x18] sm:$0xff] %v7071
        %7090 = vst [vmem:[%s837 + $0x20] sm:$0xff] %v7040
        %7091 = vst [vmem:[%s837 + $0x28] sm:$0xff] %v7072
        %7092 = vst [vmem:[%s837 + $0x30] sm:$0xff] %v7041
        %7093 = vst [vmem:[%s837 + $0x38] sm:$0xff] %v7073
        %s7094 = sand.u32 %s455, 1
        %s7095 = scalar_lea.sflag [#allocation5], %s7094
        %s7096 = sand.u32 %s455, 1
        %s7097 = smul.addr %s7096, 64
        %s7098 = scalar_lea.vmem [#allocation27], %s7097
        // Predicated region
        $region157: #{tpu_custom_call.1} parent=95 // pred_check
          %p7099 = pneg %p465
        $region158: #{tpu_custom_call.1} parent=95 // pred_check_branch
          %7101 = sbr.rel (%p7099) target = $region160
        $region159: #{tpu_custom_call.1} parent=95 // pred_region
          %7103 = vsyncadd %s7095, 0
          %s7104 = smul.addr %s43, 8
          %s7105 = smul.addr %s7104, 8
          %s7106 = scalar_lea.hbm %s19, %s7105
          %s7107 = sshll.u32 %s7098, 4
          %s7108 = int_to_ptr.vmem [resolvable:$true] %s7107
          %s7109 = sshll.u32 %s7106, 4
          %s7110 = int_to_ptr.hbm [resolvable:$true] %s7109
          %7115 = dma.vmem_to_hbm [thread:$0]  %s7108, 1024, %s7110, %s7095, 256, 256, 16
        $region160: #{tpu_custom_call.1} parent=95 // pred_fallthru
          _
      $region96: #{tpu_custom_call.1} parent=5 // pred_fallthru
        _
      %p7116 = scmp.le.s32.totalorder 2, %s38
      // Predicated region
      $region161: #{tpu_custom_call.1} parent=5 // pred_check
        %p7117 = pneg %p7116
      $region162: #{tpu_custom_call.1} parent=5 // pred_check_branch
        %7119 = sbr.rel (%p7117) target = $region164
      $region163: #{tpu_custom_call.1} parent=5 // pred_region
        %s7120 = ssub.s32 %s38, 2
        // Predicated region
        $region165: #{tpu_custom_call.1} parent=163 // pred_check
          %p7121 = pneg %p471
        $region166: #{tpu_custom_call.1} parent=163 // pred_check_branch
          %7123 = sbr.rel (%p7121) target = $region168
        $region167: #{tpu_custom_call.1} parent=163 // pred_region
          %s7124 = sand.u32 %s456, 1
          %s7125 = scalar_lea.sflag [#allocation5], %s7124
          %s7126 = sand.u32 %s456, 1
          %s7127 = smul.addr %s7126, 64
          %s7128 = scalar_lea.vmem [#allocation27], %s7127
          %7130 = dma.done %s7125, 1024
        $region168: #{tpu_custom_call.1} parent=163 // pred_fallthru
          _
      $region164: #{tpu_custom_call.1} parent=5 // pred_fallthru
        _
    $region6: #{tpu_custom_call.1} parent=1 // loop_footer
      %s42 = sadd.s32 1, %s38
    $region7: #{tpu_custom_call.1} parent=1 // loop_footer_branch
      %37 = sbr.rel target = $region3
    $region8: #{tpu_custom_call.1} parent=1 // loop_exit
      _
    %7131 = vsyncpa [#allocation4], 1
    %s7132 = scalar_lea.sflag [#allocation4], 1
    %7133 = vsyncpa %s7132, 1
    %7134 = vsyncpa [#allocation7], 1
    %7135 = vsyncpa [#allocation10], 1
    %7136 = vsyncpa [#allocation13], 1
    %7137 = vsyncpa [#allocation16], 1
    %7138 = vsyncpa [#allocation19], 1
    %7139 = vsyncpa [#allocation22], 1
    %7140 = vsyncpa [#allocation25], 1
    %7141 = vsyncpa [#allocation5], 1
    %s7142 = scalar_lea.sflag [#allocation5], 1
    %7143 = vsyncpa %s7142, 1

</llo_original>
